<compile_context>
chip_gen: v6e
topology: v6e:2x2x1
jax: 0.10.0
libtpu: 0.0.40
codegen_flags: <defaults>
</compile_context>

<pallas_src>
import numpy as np
import jax
import jax.numpy as jnp
from jax.experimental import pallas as pl
from jax.experimental.pallas import tpu as pltpu


def _make_head_kernel(quantized):
    def kernel(x_ref, s_ref, t_ref, w_ref, wscale_ref, b_ref, feat_ref, out_ref):
        """Grid axis 0 tiles the K reduction of the fc Linear.

        x_ref      : (Bp, tk)  f32        flattened backbone features (K tile)
        s_ref      : (1,  tk)  f32        BN eval scale = gamma / sqrt(var + eps)
        t_ref      : (1,  tk)  f32        BN eval shift = beta - mean * scale
        w_ref      : (tk, NCp) bf16|int8  fc weight tile (transposed, NC padded)
        wscale_ref : (1,  NCp) f32        per-column dequant scale (int8 path only)
        b_ref      : (1,  NCp) f32        fc bias (padded)
        feat_ref   : (Bp, tk)  f32        BN'd feature (first module return value)
        out_ref    : (Bp, NCp) f32        logits; resident f32 accumulator
        """
        k = pl.program_id(0)

        # BatchNorm1d (eval mode) as a per-feature affine; this *is* `feature`.
        # NOTE: padded batch rows get feat == t (BN shift), sliced off in wrapper.
        feat = x_ref[...] * s_ref[...] + t_ref[...]
        feat_ref[...] = feat

        if quantized:
            @pl.when(k == 0)
            def _():
                out_ref[...] = jnp.zeros_like(out_ref)

            # int8 weights: accumulate un-scaled int products in f32, dequant once
            # (per output column) in the epilogue together with the bias.
            out_ref[...] += jnp.dot(feat.astype(jnp.bfloat16),
                                    w_ref[...].astype(jnp.bfloat16),
                                    preferred_element_type=jnp.float32)

            @pl.when(k == pl.num_programs(0) - 1)
            def _():
                out_ref[...] = out_ref[...] * wscale_ref[...] + b_ref[...]
        else:
            @pl.when(k == 0)
            def _():
                # Bias-initialise the resident accumulator: no separate epilogue.
                out_ref[...] = jnp.broadcast_to(b_ref[...], out_ref.shape)

            # fc_layer: bf16 weights streamed from HBM, f32 accumulation on MXU.
            out_ref[...] += jnp.dot(feat.astype(w_ref.dtype), w_ref[...],
                                    preferred_element_type=jnp.float32)

    return kernel


def prepare_head_params(params, *, weight_format="bf16", eps=1e-5):
    """One-time prep of all x-independent tensors.  Call ONCE, reuse per call."""
    K, NC = params["w_fc"].shape
    NCp = ((NC + 127) // 128) * 128          # lane-dense, unmasked-vst output

    # BatchNorm1d (eval) folded to a per-feature affine.
    s = params["bn_g"] / jnp.sqrt(params["bn_rv"] + eps)
    t = params["bn_b"] - params["bn_rm"] * s

    b = jnp.zeros((1, NCp), jnp.float32).at[:, :NC].set(
        params["b_fc"].astype(jnp.float32).reshape(1, NC))

    w_f32 = params["w_fc"].astype(jnp.float32)
    if weight_format == "int8":
        col_max = jnp.max(jnp.abs(w_f32), axis=0)              # (NC,)
        scale = jnp.where(col_max > 0, col_max / 127.0, 1.0)
        w_q = jnp.clip(jnp.round(w_f32 / scale), -127.0, 127.0).astype(jnp.int8)
        w = jnp.zeros((K, NCp), jnp.int8).at[:, :NC].set(w_q)
        wscale = jnp.ones((1, NCp), jnp.float32).at[:, :NC].set(
            scale.reshape(1, NC))
    elif weight_format == "bf16":
        w = jnp.zeros((K, NCp), jnp.bfloat16).at[:, :NC].set(
            w_f32.astype(jnp.bfloat16))
        wscale = jnp.ones((1, NCp), jnp.float32)               # unused in kernel
    else:
        raise ValueError(f"unsupported weight_format: {weight_format}")

    return {
        "s": s.reshape(1, K).astype(jnp.float32),
        "t": t.reshape(1, K).astype(jnp.float32),
        "w": w,
        "wscale": wscale,
        "b": b,
        "K": int(K),
        "NC": int(NC),
        "NCp": int(NCp),
        "weight_format": weight_format,
    }


def vgg16_head(feat_map, prepared, *, tk=2048):
    """feat_map: (B, 512, 2, 2) backbone output (NCHW). Returns (feature, res).

    `prepared` is the output of prepare_head_params (computed once).
    tk: reduction tile.  Default covers K in one grid step (v6e/v7x); on v5e
    use tk=512 or 1024 so the next weight-tile DMA overlaps the MXU work.
    """
    B = feat_map.shape[0]
    K, NC, NCp = prepared["K"], prepared["NC"], prepared["NCp"]
    assert int(np.prod(feat_map.shape[1:])) == K, (feat_map.shape, K)
    quantized = prepared["weight_format"] == "int8"

    # Flatten exactly like torch `view(B, -1)` on NCHW; pad batch to full f32
    # sublanes (padded rows yield feat == BN shift, sliced off below).
    Bp = ((max(B, 1) + 7) // 8) * 8
    x = feat_map.reshape(B, K).astype(jnp.float32)
    x_p = jnp.zeros((Bp, K), jnp.float32).at[:B].set(x)

    tk = min(tk, K)
    assert K % tk == 0 and tk % 128 == 0, (K, tk)
    n_k = K // tk

    # With a single grid step the second weight pipeline buffer is dead weight.
    w_spec = pl.BlockSpec(
        (tk, NCp), lambda k: (k, 0),
        pipeline_mode=pl.Buffered(buffer_count=1) if n_k == 1 else None)

    w_bytes = K * NCp * prepared["w"].dtype.itemsize
    bytes_accessed = (w_bytes                     # dominant: fc weight stream
                      + Bp * K * 4 * 2            # x in + feature out
                      + Bp * NCp * 4              # logits out
                      + 2 * K * 4                 # BN scale/shift
                      + 2 * NCp * 4)              # bias + dequant scale
    cost = pl.CostEstimate(flops=2 * Bp * K * NCp,
                           transcendentals=0,
                           bytes_accessed=int(bytes_accessed))

    feat_p, out_p = pl.pallas_call(
        _make_head_kernel(quantized),
        out_shape=(jax.ShapeDtypeStruct((Bp, K), jnp.float32),
                   jax.ShapeDtypeStruct((Bp, NCp), jnp.float32)),
        grid_spec=pltpu.PrefetchScalarGridSpec(
            num_scalar_prefetch=0,
            grid=(n_k,),
            in_specs=[
                pl.BlockSpec((Bp, tk), lambda k: (0, k)),     # x tile
                pl.BlockSpec((1, tk), lambda k: (0, k)),      # BN scale
                pl.BlockSpec((1, tk), lambda k: (0, k)),      # BN shift
                w_spec,                                        # fc weight tile
                pl.BlockSpec((1, NCp), lambda k: (0, 0)),     # dequant scale
                pl.BlockSpec((1, NCp), lambda k: (0, 0)),     # fc bias
            ],
            out_specs=[
                pl.BlockSpec((Bp, tk), lambda k: (0, k)),     # feature
                pl.BlockSpec((Bp, NCp), lambda k: (0, 0)),    # logits (resident)
            ],
        ),
        compiler_params=pltpu.CompilerParams(
            dimension_semantics=("arbitrary",),
            vmem_limit_bytes=16 << 20,
        ),
        cost_estimate=cost,
    )(x_p, prepared["s"], prepared["t"], prepared["w"], prepared["wscale"],
      prepared["b"])

    return feat_p[:B], out_p[:B, :NC]


def _reference(feat_map, params, *, emulate_bf16=False):
    """Pure-JAX reference matching the PyTorch eval-mode forward.

    With emulate_bf16=True the fc matmul operands are rounded to bf16 first,
    matching the kernel's default mixed-precision path exactly.
    """
    B = feat_map.shape[0]
    eps = 1e-5
    x = feat_map.reshape(B, -1).astype(jnp.float32)
    feat = ((x - params["bn_rm"]) / jnp.sqrt(params["bn_rv"] + eps)
            * params["bn_g"] + params["bn_b"])
    if emulate_bf16:
        a = feat.astype(jnp.bfloat16).astype(jnp.float32)
        w = params["w_fc"].astype(jnp.bfloat16).astype(jnp.float32)
    else:
        a, w = feat, params["w_fc"]
    res = a @ w + params["b_fc"]
    return feat, res


def _init_params(key, feat_dim, n_classes):
    ks = jax.random.split(key, 5)
    return {
        # BatchNorm1d(feat_dim); bias frozen at its zero init
        # (self.bn.bias.requires_grad_(False) in the module).
        "bn_g": 1.0 + 0.1 * jax.random.normal(ks[0], (feat_dim,), jnp.float32),
        "bn_b": jnp.zeros((feat_dim,), jnp.float32),
        "bn_rm": 0.1 * jax.random.normal(ks[1], (feat_dim,), jnp.float32),
        "bn_rv": jnp.abs(jax.random.normal(ks[2], (feat_dim,), jnp.float32)) + 0.5,
        # fc_layer Linear(feat_dim, n_classes) -- stored transposed (K, NC).
        "w_fc": jax.random.normal(ks[3], (feat_dim, n_classes), jnp.float32)
                / np.sqrt(feat_dim),
        "b_fc": 0.01 * jax.random.normal(ks[4], (n_classes,), jnp.float32),
    }


if __name__ == "__main__":
    key = jax.random.PRNGKey(0)
    k_x, k_p = jax.random.split(key)

    B, C, H, W = 2, 512, 2, 2            # vgg16_bn feature-map shape for celeba
    N_CLASSES = 1000

    feat_map = jax.random.normal(k_x, (B, C, H, W), jnp.float32)
    params = _init_params(k_p, C * H * W, N_CLASSES)

    feat_f32, res_f32 = _reference(feat_map, params, emulate_bf16=False)
    _, res_bf16 = _reference(feat_map, params, emulate_bf16=True)

    # ---- default bf16 weight stream ---------------------------------------
    prep_bf16 = prepare_head_params(params, weight_format="bf16")
    feat, res = vgg16_head(feat_map, prep_bf16)
    feat, res = jax.block_until_ready((feat, res))
    assert feat.shape == (B, C * H * W) and res.shape == (B, N_CLASSES)

    # BatchNorm1d output is computed fully in f32 -> tight check.
    np.testing.assert_allclose(np.asarray(feat), np.asarray(feat_f32),
                               rtol=1e-4, atol=1e-4)
    # Logits: bf16 weights/activations with f32 accum -> tight vs bf16-emulating
    # reference, loose vs full f32.
    np.testing.assert_allclose(np.asarray(res), np.asarray(res_bf16),
                               rtol=2e-3, atol=2e-3)
    np.testing.assert_allclose(np.asarray(res), np.asarray(res_f32),
                               rtol=3e-2, atol=3e-2)

    # ---- int8 weight stream (v5e/v6e option; per-column dequant) -----------
    prep_i8 = prepare_head_params(params, weight_format="int8")
    feat_q, res_q = vgg16_head(feat_map, prep_i8)
    feat_q, res_q = jax.block_until_ready((feat_q, res_q))

    # Emulate the quantised path in plain JAX (bf16-rounded activations,
    # per-column-dequantised int8 weights) -> tight check; loose vs full f32.
    a = feat_f32.astype(jnp.bfloat16).astype(jnp.float32)
    w_deq = (prep_i8["w"][:, :N_CLASSES].astype(jnp.float32)
             * prep_i8["wscale"][0, :N_CLASSES])
    res_q_ref = a @ w_deq + params["b_fc"]

    np.testing.assert_allclose(np.asarray(feat_q), np.asarray(feat_f32),
                               rtol=1e-4, atol=1e-4)
    np.testing.assert_allclose(np.asarray(res_q), np.asarray(res_q_ref),
                               rtol=2e-3, atol=2e-3)
    np.testing.assert_allclose(np.asarray(res_q), np.asarray(res_f32),
                               rtol=5e-2, atol=1e-1)

    print("KERNEL_OK")
</pallas_src>

<mosaic_0001>
module attributes {stable_mosaic.version = 11 : i64} {
  func.func @kernel(%arg0: i32, %arg1: memref<8x2048xf32, #tpu.memory_space<vmem>>, %arg2: memref<1x2048xf32, #tpu.memory_space<vmem>>, %arg3: memref<1x2048xf32, #tpu.memory_space<vmem>>, %arg4: memref<2048x1024xbf16, #tpu.memory_space<vmem>>, %arg5: memref<1x1024xf32, #tpu.memory_space<vmem>>, %arg6: memref<1x1024xf32, #tpu.memory_space<vmem>>, %arg7: memref<8x2048xf32, #tpu.memory_space<vmem>>, %arg8: memref<8x1024xf32, #tpu.memory_space<vmem>>) attributes {dimension_semantics = [#tpu.dimension_semantics<arbitrary>], iteration_bounds = array<i64: 1>, scalar_prefetch = 0 : i64, scratch_operands = 0 : i64, tpu.core_type = #tpu.core_type<tc>, window_params = [{transform_indices = @transform_0, window_bounds = array<i64: 8, 2048>}, {transform_indices = @transform_1, window_bounds = array<i64: 1, 2048>}, {transform_indices = @transform_2, window_bounds = array<i64: 1, 2048>}, {pipeline_mode = #tpu.pipeline_mode<synchronous>, transform_indices = @transform_3, window_bounds = array<i64: 2048, 1024>}, {pipeline_mode = #tpu.pipeline_mode<synchronous>, transform_indices = @transform_4, window_bounds = array<i64: 1, 1024>}, {pipeline_mode = #tpu.pipeline_mode<synchronous>, transform_indices = @transform_5, window_bounds = array<i64: 1, 1024>}, {transform_indices = @transform_6, window_bounds = array<i64: 8, 2048>}, {pipeline_mode = #tpu.pipeline_mode<synchronous>, transform_indices = @transform_7, window_bounds = array<i64: 8, 1024>}]} {
    %c0 = arith.constant 0 : index
    %c0_0 = arith.constant 0 : index
    %0 = vector.load %arg1[%c0, %c0_0] : memref<8x2048xf32, #tpu.memory_space<vmem>>, vector<8x2048xf32>
    %c0_1 = arith.constant 0 : index
    %c0_2 = arith.constant 0 : index
    %1 = vector.load %arg2[%c0_1, %c0_2] : memref<1x2048xf32, #tpu.memory_space<vmem>>, vector<1x2048xf32>
    %2 = vector.broadcast %1 : vector<1x2048xf32> to vector<8x2048xf32>
    %3 = arith.mulf %0, %2 : vector<8x2048xf32>
    %c0_3 = arith.constant 0 : index
    %c0_4 = arith.constant 0 : index
    %4 = vector.load %arg3[%c0_3, %c0_4] : memref<1x2048xf32, #tpu.memory_space<vmem>>, vector<1x2048xf32>
    %5 = vector.broadcast %4 : vector<1x2048xf32> to vector<8x2048xf32>
    %6 = arith.addf %3, %5 : vector<8x2048xf32>
    %c0_5 = arith.constant 0 : index
    %c0_6 = arith.constant 0 : index
    %7 = vector.load %arg7[%c0_5, %c0_6] : memref<8x2048xf32, #tpu.memory_space<vmem>>, vector<8x2048xf32>
    tpu.vector_store %arg7[%c0_5, %c0_6], %6 {strides = array<i32>} : memref<8x2048xf32, #tpu.memory_space<vmem>>, vector<8x2048xf32>,
    %c0_i32 = arith.constant 0 : i32
    %8 = arith.cmpi eq, %arg0, %c0_i32 : i32
    %9 = arith.extui %8 : i1 to i32
    %c0_i32_7 = arith.constant 0 : i32
    %10 = arith.cmpi ne, %9, %c0_i32_7 : i32
    scf.if %10 {
      %c0_14 = arith.constant 0 : index
      %c0_15 = arith.constant 0 : index
      %17 = vector.load %arg6[%c0_14, %c0_15] : memref<1x1024xf32, #tpu.memory_space<vmem>>, vector<1x1024xf32>
      %18 = vector.shape_cast %17 : vector<1x1024xf32> to vector<1x1024xf32>
      %19 = vector.broadcast %18 : vector<1x1024xf32> to vector<8x1024xf32>
      %c0_16 = arith.constant 0 : index
      %c0_17 = arith.constant 0 : index
      %20 = vector.load %arg8[%c0_16, %c0_17] : memref<8x1024xf32, #tpu.memory_space<vmem>>, vector<8x1024xf32>
      tpu.vector_store %arg8[%c0_16, %c0_17], %19 {strides = array<i32>} : memref<8x1024xf32, #tpu.memory_space<vmem>>, vector<8x1024xf32>,
    } else {
    }
    %c0_8 = arith.constant 0 : index
    %c0_9 = arith.constant 0 : index
    %11 = vector.load %arg8[%c0_8, %c0_9] : memref<8x1024xf32, #tpu.memory_space<vmem>>, vector<8x1024xf32>
    %12 = arith.truncf %6 : vector<8x2048xf32> to vector<8x2048xbf16>
    %c0_10 = arith.constant 0 : index
    %c0_11 = arith.constant 0 : index
    %13 = vector.load %arg4[%c0_10, %c0_11] : memref<2048x1024xbf16, #tpu.memory_space<vmem>>, vector<2048x1024xbf16>
    %cst = arith.constant dense<0.000000e+00> : vector<8x1024xf32>
    %14 = tpu.matmul %12, %13, %cst {dimension_numbers = #tpu.dot_dimension_numbers<[1], [0], [0], [1], [0, 0, 1, 1], [], []>} : vector<8x2048xbf16>, vector<2048x1024xbf16>, vector<8x1024xf32> -> vector<8x1024xf32>
    %15 = arith.addf %11, %14 : vector<8x1024xf32>
    %c0_12 = arith.constant 0 : index
    %c0_13 = arith.constant 0 : index
    %16 = vector.load %arg8[%c0_12, %c0_13] : memref<8x1024xf32, #tpu.memory_space<vmem>>, vector<8x1024xf32>
    tpu.vector_store %arg8[%c0_12, %c0_13], %15 {strides = array<i32>} : memref<8x1024xf32, #tpu.memory_space<vmem>>, vector<8x1024xf32>,
    return
  }
  func.func @transform_0(%arg0: i32) -> (i32, i32) {
    %c0_i32 = arith.constant 0 : i32
    %c0_i32_0 = arith.constant 0 : i32
    return %c0_i32, %arg0 : i32, i32
  }
  func.func @transform_1(%arg0: i32) -> (i32, i32) {
    %c0_i32 = arith.constant 0 : i32
    %c0_i32_0 = arith.constant 0 : i32
    return %c0_i32, %arg0 : i32, i32
  }
  func.func @transform_2(%arg0: i32) -> (i32, i32) {
    %c0_i32 = arith.constant 0 : i32
    %c0_i32_0 = arith.constant 0 : i32
    return %c0_i32, %arg0 : i32, i32
  }
  func.func @transform_3(%arg0: i32) -> (i32, i32) {
    %c0_i32 = arith.constant 0 : i32
    %c0_i32_0 = arith.constant 0 : i32
    return %arg0, %c0_i32 : i32, i32
  }
  func.func @transform_4(%arg0: i32) -> (i32, i32) {
    %c0_i32 = arith.constant 0 : i32
    %c0_i32_0 = arith.constant 0 : i32
    %c0_i32_1 = arith.constant 0 : i32
    return %c0_i32, %c0_i32_0 : i32, i32
  }
  func.func @transform_5(%arg0: i32) -> (i32, i32) {
    %c0_i32 = arith.constant 0 : i32
    %c0_i32_0 = arith.constant 0 : i32
    %c0_i32_1 = arith.constant 0 : i32
    return %c0_i32, %c0_i32_0 : i32, i32
  }
  func.func @transform_6(%arg0: i32) -> (i32, i32) {
    %c0_i32 = arith.constant 0 : i32
    %c0_i32_0 = arith.constant 0 : i32
    return %c0_i32, %arg0 : i32, i32
  }
  func.func @transform_7(%arg0: i32) -> (i32, i32) {
    %c0_i32 = arith.constant 0 : i32
    %c0_i32_0 = arith.constant 0 : i32
    %c0_i32_1 = arith.constant 0 : i32
    return %c0_i32, %c0_i32_0 : i32, i32
  }
}

</mosaic_0001>

<llo_original>
// kernel: tpu_custom_call.1
$region0: #{tpu_custom_call.1}
  #allocation0 [shape = 'u32[]', space=smem, size = 0x4, offset = 0x4, fixed_abs, tag = 'smem constant byte address 0x4 - core index']
  #allocation1 [shape = 'u32[144,128]{1,0:T(1,128)}', space=vmem, size = 0x12000, scoped, tag = 'internal scratch']
  %s0 = inlined_call_operand.hbm [shape: f32[8,2048], index: 0, kind: input, shape index: {}]
  %s1 = inlined_call_operand.hbm [shape: f32[1,2048], index: 1, kind: input, shape index: {}]
  %s2 = inlined_call_operand.hbm [shape: f32[1,2048], index: 2, kind: input, shape index: {}]
  %s3 = inlined_call_operand.hbm [shape: bf16[2048,1024], index: 3, kind: input, shape index: {}]
  %s4 = inlined_call_operand.hbm [shape: f32[1,1024], index: 4, kind: input, shape index: {}]
  %s5 = inlined_call_operand.hbm [shape: f32[1,1024], index: 5, kind: input, shape index: {}]
  %s6 = inlined_call_operand.hbm [shape: f32[8,2048], index: 6, kind: output, shape index: {0}]
  %s7 = inlined_call_operand.hbm [shape: f32[8,1024], index: 7, kind: output, shape index: {1}]
  %8 = xla_tuple %s6, %s7
  %s9 = sld [smem:[#allocation0]]
  $region70: #{tpu_custom_call.1} parent=0
    _
  %s11 = ssub.s32 1, %s9
  %s12 = scalar_select 0, %s11, %s9
  $region1: #{tpu_custom_call.1} parent=0
    #allocation2 [shape = 'u8[65536]{0}', space=vmem, size = 0x10000, scoped, tag = 'input window, operand 0, single buffered']
    #allocation3 [shape = 's32[1]{0}', space=sflag, size = 0x4, scoped, tag = 'scoped memory for tpu_custom_call.1']
    #allocation4 [shape = 's32[1]{0}', space=sflag, size = 0x4, scoped, tag = 'scoped memory for tpu_custom_call.1']
    #allocation5 [shape = 'u8[8192]{0}', space=vmem, size = 0x2000, scoped, tag = 'input window, operand 1, single buffered']
    #allocation6 [shape = 's32[1]{0}', space=sflag, size = 0x4, scoped, tag = 'scoped memory for tpu_custom_call.1']
    #allocation7 [shape = 'u8[8192]{0}', space=vmem, size = 0x2000, scoped, tag = 'input window, operand 2, single buffered']
    #allocation8 [shape = 'u8[4194304]{0}', space=vmem, size = 0x400000, scoped, tag = 'input window, operand 3, single buffered']
    #allocation9 [shape = 's32[1]{0}', space=sflag, size = 0x4, scoped, tag = 'scoped memory for tpu_custom_call.1']
    #allocation10 [shape = 'u8[4096]{0}', space=vmem, size = 0x1000, scoped, tag = 'input window, operand 4, single buffered']
    #allocation11 [shape = 'u8[4096]{0}', space=vmem, size = 0x1000, scoped, tag = 'input window, operand 5, single buffered']
    #allocation12 [shape = 's32[1]{0}', space=sflag, size = 0x4, scoped, tag = 'scoped memory for tpu_custom_call.1']
    #allocation13 [shape = 'u8[65536]{0}', space=vmem, size = 0x10000, scoped, tag = 'output window, operand 0, single buffered']
    #allocation14 [shape = 'u8[32768]{0}', space=vmem, size = 0x8000, scoped, tag = 'output window, operand 1, single buffered']
    #allocation15 [shape = 's32[1]{0}', space=sflag, size = 0x4, scoped, tag = 'scoped memory for tpu_custom_call.1']
    %13 = vsyncpa [#allocation3], 0
    %14 = vsyncpa [#allocation6], 0
    %15 = vsyncpa [#allocation9], 0
    %16 = vsyncpa [#allocation12], 0
    %17 = vsyncpa [#allocation4], 0
    %18 = vsyncpa [#allocation15], 0
    // Predicated region
    $region2: #{tpu_custom_call.1} parent=1 // pred_check
      _
    $region3: #{tpu_custom_call.1} parent=1 // pred_check_branch
      %20 = sbr.rel (0) target = $region5
    $region4: #{tpu_custom_call.1} parent=1 // pred_region
      %s22 = ssub.s32 2048, 2048
      %23 = vsyncadd [#allocation3], %s22
      %s25 = sshll.u32 [#allocation2], 4
      %s26 = int_to_ptr.vmem [resolvable:$true] %s25
      %28 = dma.hbm_to_vmem [thread:$0]  %s0, 2048, %s26, [#allocation3]
    $region5: #{tpu_custom_call.1} parent=1 // pred_fallthru
      _
    // Predicated region
    $region6: #{tpu_custom_call.1} parent=1 // pred_check
      _
    $region7: #{tpu_custom_call.1} parent=1 // pred_check_branch
      %30 = sbr.rel (0) target = $region9
    $region8: #{tpu_custom_call.1} parent=1 // pred_region
      %s32 = ssub.s32 256, 256
      %33 = vsyncadd [#allocation6], %s32
      %s35 = sshll.u32 [#allocation5], 4
      %s36 = int_to_ptr.vmem [resolvable:$true] %s35
      %38 = dma.hbm_to_vmem [thread:$0]  %s1, 256, %s36, [#allocation6]
    $region9: #{tpu_custom_call.1} parent=1 // pred_fallthru
      _
    // Predicated region
    $region10: #{tpu_custom_call.1} parent=1 // pred_check
      _
    $region11: #{tpu_custom_call.1} parent=1 // pred_check_branch
      %40 = sbr.rel (0) target = $region13
    $region12: #{tpu_custom_call.1} parent=1 // pred_region
      %s42 = ssub.s32 256, 256
      %43 = vsyncadd [#allocation6], %s42
      %s45 = sshll.u32 [#allocation7], 4
      %s46 = int_to_ptr.vmem [resolvable:$true] %s45
      %48 = dma.hbm_to_vmem [thread:$0]  %s2, 256, %s46, [#allocation6]
    $region13: #{tpu_custom_call.1} parent=1 // pred_fallthru
      _
    // Predicated region
    $region14: #{tpu_custom_call.1} parent=1 // pred_check
      _
    $region15: #{tpu_custom_call.1} parent=1 // pred_check_branch
      %50 = sbr.rel (0) target = $region17
    $region16: #{tpu_custom_call.1} parent=1 // pred_region
      %s52 = ssub.s32 131072, 131072
      %53 = vsyncadd [#allocation9], %s52
      %s54 = sshll.u32 [#allocation8], 4
      %s55 = int_to_ptr.vmem [resolvable:$true] %s54
      %60 = dma.hbm_to_vmem [thread:$0]  %s3, 131072, %s55, [#allocation9], 512, 512, 32
    $region17: #{tpu_custom_call.1} parent=1 // pred_fallthru
      _
    // Predicated region
    $region18: #{tpu_custom_call.1} parent=1 // pred_check
      _
    $region19: #{tpu_custom_call.1} parent=1 // pred_check_branch
      %62 = sbr.rel (0) target = $region21
    $region20: #{tpu_custom_call.1} parent=1 // pred_region
      %s64 = ssub.s32 128, 128
      %65 = vsyncadd [#allocation9], %s64
      %s67 = sshll.u32 [#allocation10], 4
      %s68 = int_to_ptr.vmem [resolvable:$true] %s67
      %70 = dma.hbm_to_vmem [thread:$0]  %s4, 128, %s68, [#allocation9]
    $region21: #{tpu_custom_call.1} parent=1 // pred_fallthru
      _
    // Predicated region
    $region22: #{tpu_custom_call.1} parent=1 // pred_check
      _
    $region23: #{tpu_custom_call.1} parent=1 // pred_check_branch
      %72 = sbr.rel (0) target = $region25
    $region24: #{tpu_custom_call.1} parent=1 // pred_region
      %s74 = ssub.s32 128, 128
      %75 = vsyncadd [#allocation12], %s74
      %s77 = sshll.u32 [#allocation11], 4
      %s78 = int_to_ptr.vmem [resolvable:$true] %s77
      %80 = dma.hbm_to_vmem [thread:$0]  %s5, 128, %s78, [#allocation12]
    $region25: #{tpu_custom_call.1} parent=1 // pred_fallthru
      _
    // Predicated region
    $region26: #{tpu_custom_call.1} parent=1 // pred_check
      _
    $region27: #{tpu_custom_call.1} parent=1 // pred_check_branch
      %82 = sbr.rel (0) target = $region29
    $region28: #{tpu_custom_call.1} parent=1 // pred_region
      %83 = dma.done [#allocation3], 2048
    $region29: #{tpu_custom_call.1} parent=1 // pred_fallthru
      _
    // Predicated region
    $region30: #{tpu_custom_call.1} parent=1 // pred_check
      _
    $region31: #{tpu_custom_call.1} parent=1 // pred_check_branch
      %85 = sbr.rel (0) target = $region33
    $region32: #{tpu_custom_call.1} parent=1 // pred_region
      %86 = dma.done [#allocation6], 256
    $region33: #{tpu_custom_call.1} parent=1 // pred_fallthru
      _
    // Predicated region
    $region34: #{tpu_custom_call.1} parent=1 // pred_check
      _
    $region35: #{tpu_custom_call.1} parent=1 // pred_check_branch
      %88 = sbr.rel (0) target = $region37
    $region36: #{tpu_custom_call.1} parent=1 // pred_region
      %89 = dma.done [#allocation6], 256
    $region37: #{tpu_custom_call.1} parent=1 // pred_fallthru
      _
    // Predicated region
    $region38: #{tpu_custom_call.1} parent=1 // pred_check
      _
    $region39: #{tpu_custom_call.1} parent=1 // pred_check_branch
      %91 = sbr.rel (0) target = $region41
    $region40: #{tpu_custom_call.1} parent=1 // pred_region
      %92 = dma.done [#allocation9], 131072
    $region41: #{tpu_custom_call.1} parent=1 // pred_fallthru
      _
    // Predicated region
    $region42: #{tpu_custom_call.1} parent=1 // pred_check
      _
    $region43: #{tpu_custom_call.1} parent=1 // pred_check_branch
      %94 = sbr.rel (0) target = $region45
    $region44: #{tpu_custom_call.1} parent=1 // pred_region
      %95 = dma.done [#allocation9], 128
    $region45: #{tpu_custom_call.1} parent=1 // pred_fallthru
      _
    // Predicated region
    $region46: #{tpu_custom_call.1} parent=1 // pred_check
      _
    $region47: #{tpu_custom_call.1} parent=1 // pred_check_branch
      %97 = sbr.rel (0) target = $region49
    $region48: #{tpu_custom_call.1} parent=1 // pred_region
      %98 = dma.done [#allocation12], 128
    $region49: #{tpu_custom_call.1} parent=1 // pred_fallthru
      _
    %v99 = vld [vmem:[#allocation2] sm:$0xff]
    %v100 = vld [vmem:[#allocation2 + $0x8] sm:$0xff]
    %v101 = vld [vmem:[#allocation2 + $0x10] sm:$0xff]
    %v102 = vld [vmem:[#allocation2 + $0x18] sm:$0xff]
    %v103 = vld [vmem:[#allocation2 + $0x20] sm:$0xff]
    %v104 = vld [vmem:[#allocation2 + $0x28] sm:$0xff]
    %v105 = vld [vmem:[#allocation2 + $0x30] sm:$0xff]
    %v106 = vld [vmem:[#allocation2 + $0x38] sm:$0xff]
    %v107 = vld [vmem:[#allocation2 + $0x40] sm:$0xff]
    %v108 = vld [vmem:[#allocation2 + $0x48] sm:$0xff]
    %v109 = vld [vmem:[#allocation2 + $0x50] sm:$0xff]
    %v110 = vld [vmem:[#allocation2 + $0x58] sm:$0xff]
    %v111 = vld [vmem:[#allocation2 + $0x60] sm:$0xff]
    %v112 = vld [vmem:[#allocation2 + $0x68] sm:$0xff]
    %v113 = vld [vmem:[#allocation2 + $0x70] sm:$0xff]
    %v114 = vld [vmem:[#allocation2 + $0x78] sm:$0xff]
    %v115 = vld [vmem:[#allocation5] sm:$0xff]
    %v116 = vld [vmem:[#allocation5 + $0x8] sm:$0xff]
    %v119 = vlaneseq
    %v120 = vshrl.u32 %v119, 7
    %v121 = vsub.s32 0, %v120
    %v122 = vrot.slane %v115, %v121
    %v123 = vlaneseq
    %v124 = vshrl.u32 %v123, 7
    %v125 = vsub.s32 1, %v124
    %v126 = vrot.slane %v115, %v125
    %v127 = vlaneseq
    %v128 = vshrl.u32 %v127, 7
    %v129 = vsub.s32 2, %v128
    %v130 = vrot.slane %v115, %v129
    %v131 = vlaneseq
    %v132 = vshrl.u32 %v131, 7
    %v133 = vsub.s32 3, %v132
    %v134 = vrot.slane %v115, %v133
    %v135 = vlaneseq
    %v136 = vshrl.u32 %v135, 7
    %v137 = vsub.s32 4, %v136
    %v138 = vrot.slane %v115, %v137
    %v139 = vlaneseq
    %v140 = vshrl.u32 %v139, 7
    %v141 = vsub.s32 5, %v140
    %v142 = vrot.slane %v115, %v141
    %v143 = vlaneseq
    %v144 = vshrl.u32 %v143, 7
    %v145 = vsub.s32 6, %v144
    %v146 = vrot.slane %v115, %v145
    %v147 = vlaneseq
    %v148 = vshrl.u32 %v147, 7
    %v149 = vsub.s32 7, %v148
    %v150 = vrot.slane %v115, %v149
    %v151 = vlaneseq
    %v152 = vshrl.u32 %v151, 7
    %v153 = vsub.s32 0, %v152
    %v154 = vrot.slane %v116, %v153
    %v155 = vlaneseq
    %v156 = vshrl.u32 %v155, 7
    %v157 = vsub.s32 1, %v156
    %v158 = vrot.slane %v116, %v157
    %v159 = vlaneseq
    %v160 = vshrl.u32 %v159, 7
    %v161 = vsub.s32 2, %v160
    %v162 = vrot.slane %v116, %v161
    %v163 = vlaneseq
    %v164 = vshrl.u32 %v163, 7
    %v165 = vsub.s32 3, %v164
    %v166 = vrot.slane %v116, %v165
    %v167 = vlaneseq
    %v168 = vshrl.u32 %v167, 7
    %v169 = vsub.s32 4, %v168
    %v170 = vrot.slane %v116, %v169
    %v171 = vlaneseq
    %v172 = vshrl.u32 %v171, 7
    %v173 = vsub.s32 5, %v172
    %v174 = vrot.slane %v116, %v173
    %v175 = vlaneseq
    %v176 = vshrl.u32 %v175, 7
    %v177 = vsub.s32 6, %v176
    %v178 = vrot.slane %v116, %v177
    %v179 = vlaneseq
    %v180 = vshrl.u32 %v179, 7
    %v181 = vsub.s32 7, %v180
    %v182 = vrot.slane %v116, %v181
    %v199 = vmul.f32 %v99, %v122
    %v200 = vmul.f32 %v100, %v126
    %v201 = vmul.f32 %v101, %v130
    %v202 = vmul.f32 %v102, %v134
    %v203 = vmul.f32 %v103, %v138
    %v204 = vmul.f32 %v104, %v142
    %v205 = vmul.f32 %v105, %v146
    %v206 = vmul.f32 %v106, %v150
    %v207 = vmul.f32 %v107, %v154
    %v208 = vmul.f32 %v108, %v158
    %v209 = vmul.f32 %v109, %v162
    %v210 = vmul.f32 %v110, %v166
    %v211 = vmul.f32 %v111, %v170
    %v212 = vmul.f32 %v112, %v174
    %v213 = vmul.f32 %v113, %v178
    %v214 = vmul.f32 %v114, %v182
    %v215 = vld [vmem:[#allocation7] sm:$0xff]
    %v216 = vld [vmem:[#allocation7 + $0x8] sm:$0xff]
    %v219 = vlaneseq
    %v220 = vshrl.u32 %v219, 7
    %v221 = vsub.s32 0, %v220
    %v222 = vrot.slane %v215, %v221
    %v223 = vlaneseq
    %v224 = vshrl.u32 %v223, 7
    %v225 = vsub.s32 1, %v224
    %v226 = vrot.slane %v215, %v225
    %v227 = vlaneseq
    %v228 = vshrl.u32 %v227, 7
    %v229 = vsub.s32 2, %v228
    %v230 = vrot.slane %v215, %v229
    %v231 = vlaneseq
    %v232 = vshrl.u32 %v231, 7
    %v233 = vsub.s32 3, %v232
    %v234 = vrot.slane %v215, %v233
    %v235 = vlaneseq
    %v236 = vshrl.u32 %v235, 7
    %v237 = vsub.s32 4, %v236
    %v238 = vrot.slane %v215, %v237
    %v239 = vlaneseq
    %v240 = vshrl.u32 %v239, 7
    %v241 = vsub.s32 5, %v240
    %v242 = vrot.slane %v215, %v241
    %v243 = vlaneseq
    %v244 = vshrl.u32 %v243, 7
    %v245 = vsub.s32 6, %v244
    %v246 = vrot.slane %v215, %v245
    %v247 = vlaneseq
    %v248 = vshrl.u32 %v247, 7
    %v249 = vsub.s32 7, %v248
    %v250 = vrot.slane %v215, %v249
    %v251 = vlaneseq
    %v252 = vshrl.u32 %v251, 7
    %v253 = vsub.s32 0, %v252
    %v254 = vrot.slane %v216, %v253
    %v255 = vlaneseq
    %v256 = vshrl.u32 %v255, 7
    %v257 = vsub.s32 1, %v256
    %v258 = vrot.slane %v216, %v257
    %v259 = vlaneseq
    %v260 = vshrl.u32 %v259, 7
    %v261 = vsub.s32 2, %v260
    %v262 = vrot.slane %v216, %v261
    %v263 = vlaneseq
    %v264 = vshrl.u32 %v263, 7
    %v265 = vsub.s32 3, %v264
    %v266 = vrot.slane %v216, %v265
    %v267 = vlaneseq
    %v268 = vshrl.u32 %v267, 7
    %v269 = vsub.s32 4, %v268
    %v270 = vrot.slane %v216, %v269
    %v271 = vlaneseq
    %v272 = vshrl.u32 %v271, 7
    %v273 = vsub.s32 5, %v272
    %v274 = vrot.slane %v216, %v273
    %v275 = vlaneseq
    %v276 = vshrl.u32 %v275, 7
    %v277 = vsub.s32 6, %v276
    %v278 = vrot.slane %v216, %v277
    %v279 = vlaneseq
    %v280 = vshrl.u32 %v279, 7
    %v281 = vsub.s32 7, %v280
    %v282 = vrot.slane %v216, %v281
    %v299 = vadd.f32 %v199, %v222
    %v300 = vadd.f32 %v200, %v226
    %v301 = vadd.f32 %v201, %v230
    %v302 = vadd.f32 %v202, %v234
    %v303 = vadd.f32 %v203, %v238
    %v304 = vadd.f32 %v204, %v242
    %v305 = vadd.f32 %v205, %v246
    %v306 = vadd.f32 %v206, %v250
    %v307 = vadd.f32 %v207, %v254
    %v308 = vadd.f32 %v208, %v258
    %v309 = vadd.f32 %v209, %v262
    %v310 = vadd.f32 %v210, %v266
    %v311 = vadd.f32 %v211, %v270
    %v312 = vadd.f32 %v212, %v274
    %v313 = vadd.f32 %v213, %v278
    %v314 = vadd.f32 %v214, %v282
    %315 = vst [vmem:[#allocation13] sm:$0xff] %v299
    %316 = vst [vmem:[#allocation13 + $0x8] sm:$0xff] %v300
    %317 = vst [vmem:[#allocation13 + $0x10] sm:$0xff] %v301
    %318 = vst [vmem:[#allocation13 + $0x18] sm:$0xff] %v302
    %319 = vst [vmem:[#allocation13 + $0x20] sm:$0xff] %v303
    %320 = vst [vmem:[#allocation13 + $0x28] sm:$0xff] %v304
    %321 = vst [vmem:[#allocation13 + $0x30] sm:$0xff] %v305
    %322 = vst [vmem:[#allocation13 + $0x38] sm:$0xff] %v306
    %323 = vst [vmem:[#allocation13 + $0x40] sm:$0xff] %v307
    %324 = vst [vmem:[#allocation13 + $0x48] sm:$0xff] %v308
    %325 = vst [vmem:[#allocation13 + $0x50] sm:$0xff] %v309
    %326 = vst [vmem:[#allocation13 + $0x58] sm:$0xff] %v310
    %327 = vst [vmem:[#allocation13 + $0x60] sm:$0xff] %v311
    %328 = vst [vmem:[#allocation13 + $0x68] sm:$0xff] %v312
    %329 = vst [vmem:[#allocation13 + $0x70] sm:$0xff] %v313
    %330 = vst [vmem:[#allocation13 + $0x78] sm:$0xff] %v314
    %p331 = scmp.eq.s32.totalorder 0, 0
    // Predicated region
    $region50: #{tpu_custom_call.1} parent=1 // pred_check
      %p332 = pneg %p331
    $region51: #{tpu_custom_call.1} parent=1 // pred_check_branch
      %334 = sbr.rel (%p332) target = $region53
    $region52: #{tpu_custom_call.1} parent=1 // pred_region
      %v335 = vld [vmem:[#allocation11] sm:$0xff]
      %v337 = vlaneseq
      %v338 = vshrl.u32 %v337, 7
      %v339 = vsub.s32 0, %v338
      %v340 = vrot.slane %v335, %v339
      %v341 = vlaneseq
      %v342 = vshrl.u32 %v341, 7
      %v343 = vsub.s32 1, %v342
      %v344 = vrot.slane %v335, %v343
      %v345 = vlaneseq
      %v346 = vshrl.u32 %v345, 7
      %v347 = vsub.s32 2, %v346
      %v348 = vrot.slane %v335, %v347
      %v349 = vlaneseq
      %v350 = vshrl.u32 %v349, 7
      %v351 = vsub.s32 3, %v350
      %v352 = vrot.slane %v335, %v351
      %v353 = vlaneseq
      %v354 = vshrl.u32 %v353, 7
      %v355 = vsub.s32 4, %v354
      %v356 = vrot.slane %v335, %v355
      %v357 = vlaneseq
      %v358 = vshrl.u32 %v357, 7
      %v359 = vsub.s32 5, %v358
      %v360 = vrot.slane %v335, %v359
      %v361 = vlaneseq
      %v362 = vshrl.u32 %v361, 7
      %v363 = vsub.s32 6, %v362
      %v364 = vrot.slane %v335, %v363
      %v365 = vlaneseq
      %v366 = vshrl.u32 %v365, 7
      %v367 = vsub.s32 7, %v366
      %v368 = vrot.slane %v335, %v367
      %377 = vst [vmem:[#allocation14] sm:$0xff] %v340
      %378 = vst [vmem:[#allocation14 + $0x8] sm:$0xff] %v344
      %379 = vst [vmem:[#allocation14 + $0x10] sm:$0xff] %v348
      %380 = vst [vmem:[#allocation14 + $0x18] sm:$0xff] %v352
      %381 = vst [vmem:[#allocation14 + $0x20] sm:$0xff] %v356
      %382 = vst [vmem:[#allocation14 + $0x28] sm:$0xff] %v360
      %383 = vst [vmem:[#allocation14 + $0x30] sm:$0xff] %v364
      %384 = vst [vmem:[#allocation14 + $0x38] sm:$0xff] %v368
    $region53: #{tpu_custom_call.1} parent=1 // pred_fallthru
      _
    %v385 = vld [vmem:[#allocation14] sm:$0xff]
    %v386 = vld [vmem:[#allocation14 + $0x8] sm:$0xff]
    %v387 = vld [vmem:[#allocation14 + $0x10] sm:$0xff]
    %v388 = vld [vmem:[#allocation14 + $0x18] sm:$0xff]
    %v389 = vld [vmem:[#allocation14 + $0x20] sm:$0xff]
    %v390 = vld [vmem:[#allocation14 + $0x28] sm:$0xff]
    %v391 = vld [vmem:[#allocation14 + $0x30] sm:$0xff]
    %v392 = vld [vmem:[#allocation14 + $0x38] sm:$0xff]
    %v393 = vpack.c.bf16 %v299, %v299
    %v394 = vpack.c.bf16 %v300, %v300
    %v395 = vpack.c.bf16 %v301, %v301
    %v396 = vpack.c.bf16 %v302, %v302
    %v397 = vpack.c.bf16 %v303, %v303
    %v398 = vpack.c.bf16 %v304, %v304
    %v399 = vpack.c.bf16 %v305, %v305
    %v400 = vpack.c.bf16 %v306, %v306
    %v401 = vpack.c.bf16 %v307, %v307
    %v402 = vpack.c.bf16 %v308, %v308
    %v403 = vpack.c.bf16 %v309, %v309
    %v404 = vpack.c.bf16 %v310, %v310
    %v405 = vpack.c.bf16 %v311, %v311
    %v406 = vpack.c.bf16 %v312, %v312
    %v407 = vpack.c.bf16 %v313, %v313
    %v408 = vpack.c.bf16 %v314, %v314
    %v409 = vld [vmem:[#allocation8] sm:$0xff]
    %v410 = vld [vmem:[#allocation8 + $0x8] sm:$0xff]
    %v411 = vld [vmem:[#allocation8 + $0x10] sm:$0xff]
    %v412 = vld [vmem:[#allocation8 + $0x18] sm:$0xff]
    %v413 = vld [vmem:[#allocation8 + $0x20] sm:$0xff]
    %v414 = vld [vmem:[#allocation8 + $0x28] sm:$0xff]
    %v415 = vld [vmem:[#allocation8 + $0x30] sm:$0xff]
    %v416 = vld [vmem:[#allocation8 + $0x38] sm:$0xff]
    %v417 = vld [vmem:[#allocation8 + $0x40] sm:$0xff]
    %v418 = vld [vmem:[#allocation8 + $0x48] sm:$0xff]
    %v419 = vld [vmem:[#allocation8 + $0x50] sm:$0xff]
    %v420 = vld [vmem:[#allocation8 + $0x58] sm:$0xff]
    %v421 = vld [vmem:[#allocation8 + $0x60] sm:$0xff]
    %v422 = vld [vmem:[#allocation8 + $0x68] sm:$0xff]
    %v423 = vld [vmem:[#allocation8 + $0x70] sm:$0xff]
    %v424 = vld [vmem:[#allocation8 + $0x78] sm:$0xff]
    %v425 = vld [vmem:[#allocation8 + $0x80] sm:$0xff]
    %v426 = vld [vmem:[#allocation8 + $0x88] sm:$0xff]
    %v427 = vld [vmem:[#allocation8 + $0x90] sm:$0xff]
    %v428 = vld [vmem:[#allocation8 + $0x98] sm:$0xff]
    %v429 = vld [vmem:[#allocation8 + $0xa0] sm:$0xff]
    %v430 = vld [vmem:[#allocation8 + $0xa8] sm:$0xff]
    %v431 = vld [vmem:[#allocation8 + $0xb0] sm:$0xff]
    %v432 = vld [vmem:[#allocation8 + $0xb8] sm:$0xff]
    %v433 = vld [vmem:[#allocation8 + $0xc0] sm:$0xff]
    %v434 = vld [vmem:[#allocation8 + $0xc8] sm:$0xff]
    %v435 = vld [vmem:[#allocation8 + $0xd0] sm:$0xff]
    %v436 = vld [vmem:[#allocation8 + $0xd8] sm:$0xff]
    %v437 = vld [vmem:[#allocation8 + $0xe0] sm:$0xff]
    %v438 = vld [vmem:[#allocation8 + $0xe8] sm:$0xff]
    %v439 = vld [vmem:[#allocation8 + $0xf0] sm:$0xff]
    %v440 = vld [vmem:[#allocation8 + $0xf8] sm:$0xff]
    %v441 = vld [vmem:[#allocation8 + $0x100] sm:$0xff]
    %v442 = vld [vmem:[#allocation8 + $0x108] sm:$0xff]
    %v443 = vld [vmem:[#allocation8 + $0x110] sm:$0xff]
    %v444 = vld [vmem:[#allocation8 + $0x118] sm:$0xff]
    %v445 = vld [vmem:[#allocation8 + $0x120] sm:$0xff]
    %v446 = vld [vmem:[#allocation8 + $0x128] sm:$0xff]
    %v447 = vld [vmem:[#allocation8 + $0x130] sm:$0xff]
    %v448 = vld [vmem:[#allocation8 + $0x138] sm:$0xff]
    %v449 = vld [vmem:[#allocation8 + $0x140] sm:$0xff]
    %v450 = vld [vmem:[#allocation8 + $0x148] sm:$0xff]
    %v451 = vld [vmem:[#allocation8 + $0x150] sm:$0xff]
    %v452 = vld [vmem:[#allocation8 + $0x158] sm:$0xff]
    %v453 = vld [vmem:[#allocation8 + $0x160] sm:$0xff]
    %v454 = vld [vmem:[#allocation8 + $0x168] sm:$0xff]
    %v455 = vld [vmem:[#allocation8 + $0x170] sm:$0xff]
    %v456 = vld [vmem:[#allocation8 + $0x178] sm:$0xff]
    %v457 = vld [vmem:[#allocation8 + $0x180] sm:$0xff]
    %v458 = vld [vmem:[#allocation8 + $0x188] sm:$0xff]
    %v459 = vld [vmem:[#allocation8 + $0x190] sm:$0xff]
    %v460 = vld [vmem:[#allocation8 + $0x198] sm:$0xff]
    %v461 = vld [vmem:[#allocation8 + $0x1a0] sm:$0xff]
    %v462 = vld [vmem:[#allocation8 + $0x1a8] sm:$0xff]
    %v463 = vld [vmem:[#allocation8 + $0x1b0] sm:$0xff]
    %v464 = vld [vmem:[#allocation8 + $0x1b8] sm:$0xff]
    %v465 = vld [vmem:[#allocation8 + $0x1c0] sm:$0xff]
    %v466 = vld [vmem:[#allocation8 + $0x1c8] sm:$0xff]
    %v467 = vld [vmem:[#allocation8 + $0x1d0] sm:$0xff]
    %v468 = vld [vmem:[#allocation8 + $0x1d8] sm:$0xff]
    %v469 = vld [vmem:[#allocation8 + $0x1e0] sm:$0xff]
    %v470 = vld [vmem:[#allocation8 + $0x1e8] sm:$0xff]
    %v471 = vld [vmem:[#allocation8 + $0x1f0] sm:$0xff]
    %v472 = vld [vmem:[#allocation8 + $0x1f8] sm:$0xff]
    %v473 = vld [vmem:[#allocation8 + $0x200] sm:$0xff]
    %v474 = vld [vmem:[#allocation8 + $0x208] sm:$0xff]
    %v475 = vld [vmem:[#allocation8 + $0x210] sm:$0xff]
    %v476 = vld [vmem:[#allocation8 + $0x218] sm:$0xff]
    %v477 = vld [vmem:[#allocation8 + $0x220] sm:$0xff]
    %v478 = vld [vmem:[#allocation8 + $0x228] sm:$0xff]
    %v479 = vld [vmem:[#allocation8 + $0x230] sm:$0xff]
    %v480 = vld [vmem:[#allocation8 + $0x238] sm:$0xff]
    %v481 = vld [vmem:[#allocation8 + $0x240] sm:$0xff]
    %v482 = vld [vmem:[#allocation8 + $0x248] sm:$0xff]
    %v483 = vld [vmem:[#allocation8 + $0x250] sm:$0xff]
    %v484 = vld [vmem:[#allocation8 + $0x258] sm:$0xff]
    %v485 = vld [vmem:[#allocation8 + $0x260] sm:$0xff]
    %v486 = vld [vmem:[#allocation8 + $0x268] sm:$0xff]
    %v487 = vld [vmem:[#allocation8 + $0x270] sm:$0xff]
    %v488 = vld [vmem:[#allocation8 + $0x278] sm:$0xff]
    %v489 = vld [vmem:[#allocation8 + $0x280] sm:$0xff]
    %v490 = vld [vmem:[#allocation8 + $0x288] sm:$0xff]
    %v491 = vld [vmem:[#allocation8 + $0x290] sm:$0xff]
    %v492 = vld [vmem:[#allocation8 + $0x298] sm:$0xff]
    %v493 = vld [vmem:[#allocation8 + $0x2a0] sm:$0xff]
    %v494 = vld [vmem:[#allocation8 + $0x2a8] sm:$0xff]
    %v495 = vld [vmem:[#allocation8 + $0x2b0] sm:$0xff]
    %v496 = vld [vmem:[#allocation8 + $0x2b8] sm:$0xff]
    %v497 = vld [vmem:[#allocation8 + $0x2c0] sm:$0xff]
    %v498 = vld [vmem:[#allocation8 + $0x2c8] sm:$0xff]
    %v499 = vld [vmem:[#allocation8 + $0x2d0] sm:$0xff]
    %v500 = vld [vmem:[#allocation8 + $0x2d8] sm:$0xff]
    %v501 = vld [vmem:[#allocation8 + $0x2e0] sm:$0xff]
    %v502 = vld [vmem:[#allocation8 + $0x2e8] sm:$0xff]
    %v503 = vld [vmem:[#allocation8 + $0x2f0] sm:$0xff]
    %v504 = vld [vmem:[#allocation8 + $0x2f8] sm:$0xff]
    %v505 = vld [vmem:[#allocation8 + $0x300] sm:$0xff]
    %v506 = vld [vmem:[#allocation8 + $0x308] sm:$0xff]
    %v507 = vld [vmem:[#allocation8 + $0x310] sm:$0xff]
    %v508 = vld [vmem:[#allocation8 + $0x318] sm:$0xff]
    %v509 = vld [vmem:[#allocation8 + $0x320] sm:$0xff]
    %v510 = vld [vmem:[#allocation8 + $0x328] sm:$0xff]
    %v511 = vld [vmem:[#allocation8 + $0x330] sm:$0xff]
    %v512 = vld [vmem:[#allocation8 + $0x338] sm:$0xff]
    %v513 = vld [vmem:[#allocation8 + $0x340] sm:$0xff]
    %v514 = vld [vmem:[#allocation8 + $0x348] sm:$0xff]
    %v515 = vld [vmem:[#allocation8 + $0x350] sm:$0xff]
    %v516 = vld [vmem:[#allocation8 + $0x358] sm:$0xff]
    %v517 = vld [vmem:[#allocation8 + $0x360] sm:$0xff]
    %v518 = vld [vmem:[#allocation8 + $0x368] sm:$0xff]
    %v519 = vld [vmem:[#allocation8 + $0x370] sm:$0xff]
    %v520 = vld [vmem:[#allocation8 + $0x378] sm:$0xff]
    %v521 = vld [vmem:[#allocation8 + $0x380] sm:$0xff]
    %v522 = vld [vmem:[#allocation8 + $0x388] sm:$0xff]
    %v523 = vld [vmem:[#allocation8 + $0x390] sm:$0xff]
    %v524 = vld [vmem:[#allocation8 + $0x398] sm:$0xff]
    %v525 = vld [vmem:[#allocation8 + $0x3a0] sm:$0xff]
    %v526 = vld [vmem:[#allocation8 + $0x3a8] sm:$0xff]
    %v527 = vld [vmem:[#allocation8 + $0x3b0] sm:$0xff]
    %v528 = vld [vmem:[#allocation8 + $0x3b8] sm:$0xff]
    %v529 = vld [vmem:[#allocation8 + $0x3c0] sm:$0xff]
    %v530 = vld [vmem:[#allocation8 + $0x3c8] sm:$0xff]
    %v531 = vld [vmem:[#allocation8 + $0x3d0] sm:$0xff]
    %v532 = vld [vmem:[#allocation8 + $0x3d8] sm:$0xff]
    %v533 = vld [vmem:[#allocation8 + $0x3e0] sm:$0xff]
    %v534 = vld [vmem:[#allocation8 + $0x3e8] sm:$0xff]
    %v535 = vld [vmem:[#allocation8 + $0x3f0] sm:$0xff]
    %v536 = vld [vmem:[#allocation8 + $0x3f8] sm:$0xff]
    %v537 = vld [vmem:[#allocation8 + $0x400] sm:$0xff]
    %v538 = vld [vmem:[#allocation8 + $0x408] sm:$0xff]
    %v539 = vld [vmem:[#allocation8 + $0x410] sm:$0xff]
    %v540 = vld [vmem:[#allocation8 + $0x418] sm:$0xff]
    %v541 = vld [vmem:[#allocation8 + $0x420] sm:$0xff]
    %v542 = vld [vmem:[#allocation8 + $0x428] sm:$0xff]
    %v543 = vld [vmem:[#allocation8 + $0x430] sm:$0xff]
    %v544 = vld [vmem:[#allocation8 + $0x438] sm:$0xff]
    %v545 = vld [vmem:[#allocation8 + $0x440] sm:$0xff]
    %v546 = vld [vmem:[#allocation8 + $0x448] sm:$0xff]
    %v547 = vld [vmem:[#allocation8 + $0x450] sm:$0xff]
    %v548 = vld [vmem:[#allocation8 + $0x458] sm:$0xff]
    %v549 = vld [vmem:[#allocation8 + $0x460] sm:$0xff]
    %v550 = vld [vmem:[#allocation8 + $0x468] sm:$0xff]
    %v551 = vld [vmem:[#allocation8 + $0x470] sm:$0xff]
    %v552 = vld [vmem:[#allocation8 + $0x478] sm:$0xff]
    %v553 = vld [vmem:[#allocation8 + $0x480] sm:$0xff]
    %v554 = vld [vmem:[#allocation8 + $0x488] sm:$0xff]
    %v555 = vld [vmem:[#allocation8 + $0x490] sm:$0xff]
    %v556 = vld [vmem:[#allocation8 + $0x498] sm:$0xff]
    %v557 = vld [vmem:[#allocation8 + $0x4a0] sm:$0xff]
    %v558 = vld [vmem:[#allocation8 + $0x4a8] sm:$0xff]
    %v559 = vld [vmem:[#allocation8 + $0x4b0] sm:$0xff]
    %v560 = vld [vmem:[#allocation8 + $0x4b8] sm:$0xff]
    %v561 = vld [vmem:[#allocation8 + $0x4c0] sm:$0xff]
    %v562 = vld [vmem:[#allocation8 + $0x4c8] sm:$0xff]
    %v563 = vld [vmem:[#allocation8 + $0x4d0] sm:$0xff]
    %v564 = vld [vmem:[#allocation8 + $0x4d8] sm:$0xff]
    %v565 = vld [vmem:[#allocation8 + $0x4e0] sm:$0xff]
    %v566 = vld [vmem:[#allocation8 + $0x4e8] sm:$0xff]
    %v567 = vld [vmem:[#allocation8 + $0x4f0] sm:$0xff]
    %v568 = vld [vmem:[#allocation8 + $0x4f8] sm:$0xff]
    %v569 = vld [vmem:[#allocation8 + $0x500] sm:$0xff]
    %v570 = vld [vmem:[#allocation8 + $0x508] sm:$0xff]
    %v571 = vld [vmem:[#allocation8 + $0x510] sm:$0xff]
    %v572 = vld [vmem:[#allocation8 + $0x518] sm:$0xff]
    %v573 = vld [vmem:[#allocation8 + $0x520] sm:$0xff]
    %v574 = vld [vmem:[#allocation8 + $0x528] sm:$0xff]
    %v575 = vld [vmem:[#allocation8 + $0x530] sm:$0xff]
    %v576 = vld [vmem:[#allocation8 + $0x538] sm:$0xff]
    %v577 = vld [vmem:[#allocation8 + $0x540] sm:$0xff]
    %v578 = vld [vmem:[#allocation8 + $0x548] sm:$0xff]
    %v579 = vld [vmem:[#allocation8 + $0x550] sm:$0xff]
    %v580 = vld [vmem:[#allocation8 + $0x558] sm:$0xff]
    %v581 = vld [vmem:[#allocation8 + $0x560] sm:$0xff]
    %v582 = vld [vmem:[#allocation8 + $0x568] sm:$0xff]
    %v583 = vld [vmem:[#allocation8 + $0x570] sm:$0xff]
    %v584 = vld [vmem:[#allocation8 + $0x578] sm:$0xff]
    %v585 = vld [vmem:[#allocation8 + $0x580] sm:$0xff]
    %v586 = vld [vmem:[#allocation8 + $0x588] sm:$0xff]
    %v587 = vld [vmem:[#allocation8 + $0x590] sm:$0xff]
    %v588 = vld [vmem:[#allocation8 + $0x598] sm:$0xff]
    %v589 = vld [vmem:[#allocation8 + $0x5a0] sm:$0xff]
    %v590 = vld [vmem:[#allocation8 + $0x5a8] sm:$0xff]
    %v591 = vld [vmem:[#allocation8 + $0x5b0] sm:$0xff]
    %v592 = vld [vmem:[#allocation8 + $0x5b8] sm:$0xff]
    %v593 = vld [vmem:[#allocation8 + $0x5c0] sm:$0xff]
    %v594 = vld [vmem:[#allocation8 + $0x5c8] sm:$0xff]
    %v595 = vld [vmem:[#allocation8 + $0x5d0] sm:$0xff]
    %v596 = vld [vmem:[#allocation8 + $0x5d8] sm:$0xff]
    %v597 = vld [vmem:[#allocation8 + $0x5e0] sm:$0xff]
    %v598 = vld [vmem:[#allocation8 + $0x5e8] sm:$0xff]
    %v599 = vld [vmem:[#allocation8 + $0x5f0] sm:$0xff]
    %v600 = vld [vmem:[#allocation8 + $0x5f8] sm:$0xff]
    %v601 = vld [vmem:[#allocation8 + $0x600] sm:$0xff]
    %v602 = vld [vmem:[#allocation8 + $0x608] sm:$0xff]
    %v603 = vld [vmem:[#allocation8 + $0x610] sm:$0xff]
    %v604 = vld [vmem:[#allocation8 + $0x618] sm:$0xff]
    %v605 = vld [vmem:[#allocation8 + $0x620] sm:$0xff]
    %v606 = vld [vmem:[#allocation8 + $0x628] sm:$0xff]
    %v607 = vld [vmem:[#allocation8 + $0x630] sm:$0xff]
    %v608 = vld [vmem:[#allocation8 + $0x638] sm:$0xff]
    %v609 = vld [vmem:[#allocation8 + $0x640] sm:$0xff]
    %v610 = vld [vmem:[#allocation8 + $0x648] sm:$0xff]
    %v611 = vld [vmem:[#allocation8 + $0x650] sm:$0xff]
    %v612 = vld [vmem:[#allocation8 + $0x658] sm:$0xff]
    %v613 = vld [vmem:[#allocation8 + $0x660] sm:$0xff]
    %v614 = vld [vmem:[#allocation8 + $0x668] sm:$0xff]
    %v615 = vld [vmem:[#allocation8 + $0x670] sm:$0xff]
    %v616 = vld [vmem:[#allocation8 + $0x678] sm:$0xff]
    %v617 = vld [vmem:[#allocation8 + $0x680] sm:$0xff]
    %v618 = vld [vmem:[#allocation8 + $0x688] sm:$0xff]
    %v619 = vld [vmem:[#allocation8 + $0x690] sm:$0xff]
    %v620 = vld [vmem:[#allocation8 + $0x698] sm:$0xff]
    %v621 = vld [vmem:[#allocation8 + $0x6a0] sm:$0xff]
    %v622 = vld [vmem:[#allocation8 + $0x6a8] sm:$0xff]
    %v623 = vld [vmem:[#allocation8 + $0x6b0] sm:$0xff]
    %v624 = vld [vmem:[#allocation8 + $0x6b8] sm:$0xff]
    %v625 = vld [vmem:[#allocation8 + $0x6c0] sm:$0xff]
    %v626 = vld [vmem:[#allocation8 + $0x6c8] sm:$0xff]
    %v627 = vld [vmem:[#allocation8 + $0x6d0] sm:$0xff]
    %v628 = vld [vmem:[#allocation8 + $0x6d8] sm:$0xff]
    %v629 = vld [vmem:[#allocation8 + $0x6e0] sm:$0xff]
    %v630 = vld [vmem:[#allocation8 + $0x6e8] sm:$0xff]
    %v631 = vld [vmem:[#allocation8 + $0x6f0] sm:$0xff]
    %v632 = vld [vmem:[#allocation8 + $0x6f8] sm:$0xff]
    %v633 = vld [vmem:[#allocation8 + $0x700] sm:$0xff]
    %v634 = vld [vmem:[#allocation8 + $0x708] sm:$0xff]
    %v635 = vld [vmem:[#allocation8 + $0x710] sm:$0xff]
    %v636 = vld [vmem:[#allocation8 + $0x718] sm:$0xff]
    %v637 = vld [vmem:[#allocation8 + $0x720] sm:$0xff]
    %v638 = vld [vmem:[#allocation8 + $0x728] sm:$0xff]
    %v639 = vld [vmem:[#allocation8 + $0x730] sm:$0xff]
    %v640 = vld [vmem:[#allocation8 + $0x738] sm:$0xff]
    %v641 = vld [vmem:[#allocation8 + $0x740] sm:$0xff]
    %v642 = vld [vmem:[#allocation8 + $0x748] sm:$0xff]
    %v643 = vld [vmem:[#allocation8 + $0x750] sm:$0xff]
    %v644 = vld [vmem:[#allocation8 + $0x758] sm:$0xff]
    %v645 = vld [vmem:[#allocation8 + $0x760] sm:$0xff]
    %v646 = vld [vmem:[#allocation8 + $0x768] sm:$0xff]
    %v647 = vld [vmem:[#allocation8 + $0x770] sm:$0xff]
    %v648 = vld [vmem:[#allocation8 + $0x778] sm:$0xff]
    %v649 = vld [vmem:[#allocation8 + $0x780] sm:$0xff]
    %v650 = vld [vmem:[#allocation8 + $0x788] sm:$0xff]
    %v651 = vld [vmem:[#allocation8 + $0x790] sm:$0xff]
    %v652 = vld [vmem:[#allocation8 + $0x798] sm:$0xff]
    %v653 = vld [vmem:[#allocation8 + $0x7a0] sm:$0xff]
    %v654 = vld [vmem:[#allocation8 + $0x7a8] sm:$0xff]
    %v655 = vld [vmem:[#allocation8 + $0x7b0] sm:$0xff]
    %v656 = vld [vmem:[#allocation8 + $0x7b8] sm:$0xff]
    %v657 = vld [vmem:[#allocation8 + $0x7c0] sm:$0xff]
    %v658 = vld [vmem:[#allocation8 + $0x7c8] sm:$0xff]
    %v659 = vld [vmem:[#allocation8 + $0x7d0] sm:$0xff]
    %v660 = vld [vmem:[#allocation8 + $0x7d8] sm:$0xff]
    %v661 = vld [vmem:[#allocation8 + $0x7e0] sm:$0xff]
    %v662 = vld [vmem:[#allocation8 + $0x7e8] sm:$0xff]
    %v663 = vld [vmem:[#allocation8 + $0x7f0] sm:$0xff]
    %v664 = vld [vmem:[#allocation8 + $0x7f8] sm:$0xff]
    %v665 = vld [vmem:[#allocation8 + $0x800] sm:$0xff]
    %v666 = vld [vmem:[#allocation8 + $0x808] sm:$0xff]
    %v667 = vld [vmem:[#allocation8 + $0x810] sm:$0xff]
    %v668 = vld [vmem:[#allocation8 + $0x818] sm:$0xff]
    %v669 = vld [vmem:[#allocation8 + $0x820] sm:$0xff]
    %v670 = vld [vmem:[#allocation8 + $0x828] sm:$0xff]
    %v671 = vld [vmem:[#allocation8 + $0x830] sm:$0xff]
    %v672 = vld [vmem:[#allocation8 + $0x838] sm:$0xff]
    %v673 = vld [vmem:[#allocation8 + $0x840] sm:$0xff]
    %v674 = vld [vmem:[#allocation8 + $0x848] sm:$0xff]
    %v675 = vld [vmem:[#allocation8 + $0x850] sm:$0xff]
    %v676 = vld [vmem:[#allocation8 + $0x858] sm:$0xff]
    %v677 = vld [vmem:[#allocation8 + $0x860] sm:$0xff]
    %v678 = vld [vmem:[#allocation8 + $0x868] sm:$0xff]
    %v679 = vld [vmem:[#allocation8 + $0x870] sm:$0xff]
    %v680 = vld [vmem:[#allocation8 + $0x878] sm:$0xff]
    %v681 = vld [vmem:[#allocation8 + $0x880] sm:$0xff]
    %v682 = vld [vmem:[#allocation8 + $0x888] sm:$0xff]
    %v683 = vld [vmem:[#allocation8 + $0x890] sm:$0xff]
    %v684 = vld [vmem:[#allocation8 + $0x898] sm:$0xff]
    %v685 = vld [vmem:[#allocation8 + $0x8a0] sm:$0xff]
    %v686 = vld [vmem:[#allocation8 + $0x8a8] sm:$0xff]
    %v687 = vld [vmem:[#allocation8 + $0x8b0] sm:$0xff]
    %v688 = vld [vmem:[#allocation8 + $0x8b8] sm:$0xff]
    %v689 = vld [vmem:[#allocation8 + $0x8c0] sm:$0xff]
    %v690 = vld [vmem:[#allocation8 + $0x8c8] sm:$0xff]
    %v691 = vld [vmem:[#allocation8 + $0x8d0] sm:$0xff]
    %v692 = vld [vmem:[#allocation8 + $0x8d8] sm:$0xff]
    %v693 = vld [vmem:[#allocation8 + $0x8e0] sm:$0xff]
    %v694 = vld [vmem:[#allocation8 + $0x8e8] sm:$0xff]
    %v695 = vld [vmem:[#allocation8 + $0x8f0] sm:$0xff]
    %v696 = vld [vmem:[#allocation8 + $0x8f8] sm:$0xff]
    %v697 = vld [vmem:[#allocation8 + $0x900] sm:$0xff]
    %v698 = vld [vmem:[#allocation8 + $0x908] sm:$0xff]
    %v699 = vld [vmem:[#allocation8 + $0x910] sm:$0xff]
    %v700 = vld [vmem:[#allocation8 + $0x918] sm:$0xff]
    %v701 = vld [vmem:[#allocation8 + $0x920] sm:$0xff]
    %v702 = vld [vmem:[#allocation8 + $0x928] sm:$0xff]
    %v703 = vld [vmem:[#allocation8 + $0x930] sm:$0xff]
    %v704 = vld [vmem:[#allocation8 + $0x938] sm:$0xff]
    %v705 = vld [vmem:[#allocation8 + $0x940] sm:$0xff]
    %v706 = vld [vmem:[#allocation8 + $0x948] sm:$0xff]
    %v707 = vld [vmem:[#allocation8 + $0x950] sm:$0xff]
    %v708 = vld [vmem:[#allocation8 + $0x958] sm:$0xff]
    %v709 = vld [vmem:[#allocation8 + $0x960] sm:$0xff]
    %v710 = vld [vmem:[#allocation8 + $0x968] sm:$0xff]
    %v711 = vld [vmem:[#allocation8 + $0x970] sm:$0xff]
    %v712 = vld [vmem:[#allocation8 + $0x978] sm:$0xff]
    %v713 = vld [vmem:[#allocation8 + $0x980] sm:$0xff]
    %v714 = vld [vmem:[#allocation8 + $0x988] sm:$0xff]
    %v715 = vld [vmem:[#allocation8 + $0x990] sm:$0xff]
    %v716 = vld [vmem:[#allocation8 + $0x998] sm:$0xff]
    %v717 = vld [vmem:[#allocation8 + $0x9a0] sm:$0xff]
    %v718 = vld [vmem:[#allocation8 + $0x9a8] sm:$0xff]
    %v719 = vld [vmem:[#allocation8 + $0x9b0] sm:$0xff]
    %v720 = vld [vmem:[#allocation8 + $0x9b8] sm:$0xff]
    %v721 = vld [vmem:[#allocation8 + $0x9c0] sm:$0xff]
    %v722 = vld [vmem:[#allocation8 + $0x9c8] sm:$0xff]
    %v723 = vld [vmem:[#allocation8 + $0x9d0] sm:$0xff]
    %v724 = vld [vmem:[#allocation8 + $0x9d8] sm:$0xff]
    %v725 = vld [vmem:[#allocation8 + $0x9e0] sm:$0xff]
    %v726 = vld [vmem:[#allocation8 + $0x9e8] sm:$0xff]
    %v727 = vld [vmem:[#allocation8 + $0x9f0] sm:$0xff]
    %v728 = vld [vmem:[#allocation8 + $0x9f8] sm:$0xff]
    %v729 = vld [vmem:[#allocation8 + $0xa00] sm:$0xff]
    %v730 = vld [vmem:[#allocation8 + $0xa08] sm:$0xff]
    %v731 = vld [vmem:[#allocation8 + $0xa10] sm:$0xff]
    %v732 = vld [vmem:[#allocation8 + $0xa18] sm:$0xff]
    %v733 = vld [vmem:[#allocation8 + $0xa20] sm:$0xff]
    %v734 = vld [vmem:[#allocation8 + $0xa28] sm:$0xff]
    %v735 = vld [vmem:[#allocation8 + $0xa30] sm:$0xff]
    %v736 = vld [vmem:[#allocation8 + $0xa38] sm:$0xff]
    %v737 = vld [vmem:[#allocation8 + $0xa40] sm:$0xff]
    %v738 = vld [vmem:[#allocation8 + $0xa48] sm:$0xff]
    %v739 = vld [vmem:[#allocation8 + $0xa50] sm:$0xff]
    %v740 = vld [vmem:[#allocation8 + $0xa58] sm:$0xff]
    %v741 = vld [vmem:[#allocation8 + $0xa60] sm:$0xff]
    %v742 = vld [vmem:[#allocation8 + $0xa68] sm:$0xff]
    %v743 = vld [vmem:[#allocation8 + $0xa70] sm:$0xff]
    %v744 = vld [vmem:[#allocation8 + $0xa78] sm:$0xff]
    %v745 = vld [vmem:[#allocation8 + $0xa80] sm:$0xff]
    %v746 = vld [vmem:[#allocation8 + $0xa88] sm:$0xff]
    %v747 = vld [vmem:[#allocation8 + $0xa90] sm:$0xff]
    %v748 = vld [vmem:[#allocation8 + $0xa98] sm:$0xff]
    %v749 = vld [vmem:[#allocation8 + $0xaa0] sm:$0xff]
    %v750 = vld [vmem:[#allocation8 + $0xaa8] sm:$0xff]
    %v751 = vld [vmem:[#allocation8 + $0xab0] sm:$0xff]
    %v752 = vld [vmem:[#allocation8 + $0xab8] sm:$0xff]
    %v753 = vld [vmem:[#allocation8 + $0xac0] sm:$0xff]
    %v754 = vld [vmem:[#allocation8 + $0xac8] sm:$0xff]
    %v755 = vld [vmem:[#allocation8 + $0xad0] sm:$0xff]
    %v756 = vld [vmem:[#allocation8 + $0xad8] sm:$0xff]
    %v757 = vld [vmem:[#allocation8 + $0xae0] sm:$0xff]
    %v758 = vld [vmem:[#allocation8 + $0xae8] sm:$0xff]
    %v759 = vld [vmem:[#allocation8 + $0xaf0] sm:$0xff]
    %v760 = vld [vmem:[#allocation8 + $0xaf8] sm:$0xff]
    %v761 = vld [vmem:[#allocation8 + $0xb00] sm:$0xff]
    %v762 = vld [vmem:[#allocation8 + $0xb08] sm:$0xff]
    %v763 = vld [vmem:[#allocation8 + $0xb10] sm:$0xff]
    %v764 = vld [vmem:[#allocation8 + $0xb18] sm:$0xff]
    %v765 = vld [vmem:[#allocation8 + $0xb20] sm:$0xff]
    %v766 = vld [vmem:[#allocation8 + $0xb28] sm:$0xff]
    %v767 = vld [vmem:[#allocation8 + $0xb30] sm:$0xff]
    %v768 = vld [vmem:[#allocation8 + $0xb38] sm:$0xff]
    %v769 = vld [vmem:[#allocation8 + $0xb40] sm:$0xff]
    %v770 = vld [vmem:[#allocation8 + $0xb48] sm:$0xff]
    %v771 = vld [vmem:[#allocation8 + $0xb50] sm:$0xff]
    %v772 = vld [vmem:[#allocation8 + $0xb58] sm:$0xff]
    %v773 = vld [vmem:[#allocation8 + $0xb60] sm:$0xff]
    %v774 = vld [vmem:[#allocation8 + $0xb68] sm:$0xff]
    %v775 = vld [vmem:[#allocation8 + $0xb70] sm:$0xff]
    %v776 = vld [vmem:[#allocation8 + $0xb78] sm:$0xff]
    %v777 = vld [vmem:[#allocation8 + $0xb80] sm:$0xff]
    %v778 = vld [vmem:[#allocation8 + $0xb88] sm:$0xff]
    %v779 = vld [vmem:[#allocation8 + $0xb90] sm:$0xff]
    %v780 = vld [vmem:[#allocation8 + $0xb98] sm:$0xff]
    %v781 = vld [vmem:[#allocation8 + $0xba0] sm:$0xff]
    %v782 = vld [vmem:[#allocation8 + $0xba8] sm:$0xff]
    %v783 = vld [vmem:[#allocation8 + $0xbb0] sm:$0xff]
    %v784 = vld [vmem:[#allocation8 + $0xbb8] sm:$0xff]
    %v785 = vld [vmem:[#allocation8 + $0xbc0] sm:$0xff]
    %v786 = vld [vmem:[#allocation8 + $0xbc8] sm:$0xff]
    %v787 = vld [vmem:[#allocation8 + $0xbd0] sm:$0xff]
    %v788 = vld [vmem:[#allocation8 + $0xbd8] sm:$0xff]
    %v789 = vld [vmem:[#allocation8 + $0xbe0] sm:$0xff]
    %v790 = vld [vmem:[#allocation8 + $0xbe8] sm:$0xff]
    %v791 = vld [vmem:[#allocation8 + $0xbf0] sm:$0xff]
    %v792 = vld [vmem:[#allocation8 + $0xbf8] sm:$0xff]
    %v793 = vld [vmem:[#allocation8 + $0xc00] sm:$0xff]
    %v794 = vld [vmem:[#allocation8 + $0xc08] sm:$0xff]
    %v795 = vld [vmem:[#allocation8 + $0xc10] sm:$0xff]
    %v796 = vld [vmem:[#allocation8 + $0xc18] sm:$0xff]
    %v797 = vld [vmem:[#allocation8 + $0xc20] sm:$0xff]
    %v798 = vld [vmem:[#allocation8 + $0xc28] sm:$0xff]
    %v799 = vld [vmem:[#allocation8 + $0xc30] sm:$0xff]
    %v800 = vld [vmem:[#allocation8 + $0xc38] sm:$0xff]
    %v801 = vld [vmem:[#allocation8 + $0xc40] sm:$0xff]
    %v802 = vld [vmem:[#allocation8 + $0xc48] sm:$0xff]
    %v803 = vld [vmem:[#allocation8 + $0xc50] sm:$0xff]
    %v804 = vld [vmem:[#allocation8 + $0xc58] sm:$0xff]
    %v805 = vld [vmem:[#allocation8 + $0xc60] sm:$0xff]
    %v806 = vld [vmem:[#allocation8 + $0xc68] sm:$0xff]
    %v807 = vld [vmem:[#allocation8 + $0xc70] sm:$0xff]
    %v808 = vld [vmem:[#allocation8 + $0xc78] sm:$0xff]
    %v809 = vld [vmem:[#allocation8 + $0xc80] sm:$0xff]
    %v810 = vld [vmem:[#allocation8 + $0xc88] sm:$0xff]
    %v811 = vld [vmem:[#allocation8 + $0xc90] sm:$0xff]
    %v812 = vld [vmem:[#allocation8 + $0xc98] sm:$0xff]
    %v813 = vld [vmem:[#allocation8 + $0xca0] sm:$0xff]
    %v814 = vld [vmem:[#allocation8 + $0xca8] sm:$0xff]
    %v815 = vld [vmem:[#allocation8 + $0xcb0] sm:$0xff]
    %v816 = vld [vmem:[#allocation8 + $0xcb8] sm:$0xff]
    %v817 = vld [vmem:[#allocation8 + $0xcc0] sm:$0xff]
    %v818 = vld [vmem:[#allocation8 + $0xcc8] sm:$0xff]
    %v819 = vld [vmem:[#allocation8 + $0xcd0] sm:$0xff]
    %v820 = vld [vmem:[#allocation8 + $0xcd8] sm:$0xff]
    %v821 = vld [vmem:[#allocation8 + $0xce0] sm:$0xff]
    %v822 = vld [vmem:[#allocation8 + $0xce8] sm:$0xff]
    %v823 = vld [vmem:[#allocation8 + $0xcf0] sm:$0xff]
    %v824 = vld [vmem:[#allocation8 + $0xcf8] sm:$0xff]
    %v825 = vld [vmem:[#allocation8 + $0xd00] sm:$0xff]
    %v826 = vld [vmem:[#allocation8 + $0xd08] sm:$0xff]
    %v827 = vld [vmem:[#allocation8 + $0xd10] sm:$0xff]
    %v828 = vld [vmem:[#allocation8 + $0xd18] sm:$0xff]
    %v829 = vld [vmem:[#allocation8 + $0xd20] sm:$0xff]
    %v830 = vld [vmem:[#allocation8 + $0xd28] sm:$0xff]
    %v831 = vld [vmem:[#allocation8 + $0xd30] sm:$0xff]
    %v832 = vld [vmem:[#allocation8 + $0xd38] sm:$0xff]
    %v833 = vld [vmem:[#allocation8 + $0xd40] sm:$0xff]
    %v834 = vld [vmem:[#allocation8 + $0xd48] sm:$0xff]
    %v835 = vld [vmem:[#allocation8 + $0xd50] sm:$0xff]
    %v836 = vld [vmem:[#allocation8 + $0xd58] sm:$0xff]
    %v837 = vld [vmem:[#allocation8 + $0xd60] sm:$0xff]
    %v838 = vld [vmem:[#allocation8 + $0xd68] sm:$0xff]
    %v839 = vld [vmem:[#allocation8 + $0xd70] sm:$0xff]
    %v840 = vld [vmem:[#allocation8 + $0xd78] sm:$0xff]
    %v841 = vld [vmem:[#allocation8 + $0xd80] sm:$0xff]
    %v842 = vld [vmem:[#allocation8 + $0xd88] sm:$0xff]
    %v843 = vld [vmem:[#allocation8 + $0xd90] sm:$0xff]
    %v844 = vld [vmem:[#allocation8 + $0xd98] sm:$0xff]
    %v845 = vld [vmem:[#allocation8 + $0xda0] sm:$0xff]
    %v846 = vld [vmem:[#allocation8 + $0xda8] sm:$0xff]
    %v847 = vld [vmem:[#allocation8 + $0xdb0] sm:$0xff]
    %v848 = vld [vmem:[#allocation8 + $0xdb8] sm:$0xff]
    %v849 = vld [vmem:[#allocation8 + $0xdc0] sm:$0xff]
    %v850 = vld [vmem:[#allocation8 + $0xdc8] sm:$0xff]
    %v851 = vld [vmem:[#allocation8 + $0xdd0] sm:$0xff]
    %v852 = vld [vmem:[#allocation8 + $0xdd8] sm:$0xff]
    %v853 = vld [vmem:[#allocation8 + $0xde0] sm:$0xff]
    %v854 = vld [vmem:[#allocation8 + $0xde8] sm:$0xff]
    %v855 = vld [vmem:[#allocation8 + $0xdf0] sm:$0xff]
    %v856 = vld [vmem:[#allocation8 + $0xdf8] sm:$0xff]
    %v857 = vld [vmem:[#allocation8 + $0xe00] sm:$0xff]
    %v858 = vld [vmem:[#allocation8 + $0xe08] sm:$0xff]
    %v859 = vld [vmem:[#allocation8 + $0xe10] sm:$0xff]
    %v860 = vld [vmem:[#allocation8 + $0xe18] sm:$0xff]
    %v861 = vld [vmem:[#allocation8 + $0xe20] sm:$0xff]
    %v862 = vld [vmem:[#allocation8 + $0xe28] sm:$0xff]
    %v863 = vld [vmem:[#allocation8 + $0xe30] sm:$0xff]
    %v864 = vld [vmem:[#allocation8 + $0xe38] sm:$0xff]
    %v865 = vld [vmem:[#allocation8 + $0xe40] sm:$0xff]
    %v866 = vld [vmem:[#allocation8 + $0xe48] sm:$0xff]
    %v867 = vld [vmem:[#allocation8 + $0xe50] sm:$0xff]
    %v868 = vld [vmem:[#allocation8 + $0xe58] sm:$0xff]
    %v869 = vld [vmem:[#allocation8 + $0xe60] sm:$0xff]
    %v870 = vld [vmem:[#allocation8 + $0xe68] sm:$0xff]
    %v871 = vld [vmem:[#allocation8 + $0xe70] sm:$0xff]
    %v872 = vld [vmem:[#allocation8 + $0xe78] sm:$0xff]
    %v873 = vld [vmem:[#allocation8 + $0xe80] sm:$0xff]
    %v874 = vld [vmem:[#allocation8 + $0xe88] sm:$0xff]
    %v875 = vld [vmem:[#allocation8 + $0xe90] sm:$0xff]
    %v876 = vld [vmem:[#allocation8 + $0xe98] sm:$0xff]
    %v877 = vld [vmem:[#allocation8 + $0xea0] sm:$0xff]
    %v878 = vld [vmem:[#allocation8 + $0xea8] sm:$0xff]
    %v879 = vld [vmem:[#allocation8 + $0xeb0] sm:$0xff]
    %v880 = vld [vmem:[#allocation8 + $0xeb8] sm:$0xff]
    %v881 = vld [vmem:[#allocation8 + $0xec0] sm:$0xff]
    %v882 = vld [vmem:[#allocation8 + $0xec8] sm:$0xff]
    %v883 = vld [vmem:[#allocation8 + $0xed0] sm:$0xff]
    %v884 = vld [vmem:[#allocation8 + $0xed8] sm:$0xff]
    %v885 = vld [vmem:[#allocation8 + $0xee0] sm:$0xff]
    %v886 = vld [vmem:[#allocation8 + $0xee8] sm:$0xff]
    %v887 = vld [vmem:[#allocation8 + $0xef0] sm:$0xff]
    %v888 = vld [vmem:[#allocation8 + $0xef8] sm:$0xff]
    %v889 = vld [vmem:[#allocation8 + $0xf00] sm:$0xff]
    %v890 = vld [vmem:[#allocation8 + $0xf08] sm:$0xff]
    %v891 = vld [vmem:[#allocation8 + $0xf10] sm:$0xff]
    %v892 = vld [vmem:[#allocation8 + $0xf18] sm:$0xff]
    %v893 = vld [vmem:[#allocation8 + $0xf20] sm:$0xff]
    %v894 = vld [vmem:[#allocation8 + $0xf28] sm:$0xff]
    %v895 = vld [vmem:[#allocation8 + $0xf30] sm:$0xff]
    %v896 = vld [vmem:[#allocation8 + $0xf38] sm:$0xff]
    %v897 = vld [vmem:[#allocation8 + $0xf40] sm:$0xff]
    %v898 = vld [vmem:[#allocation8 + $0xf48] sm:$0xff]
    %v899 = vld [vmem:[#allocation8 + $0xf50] sm:$0xff]
    %v900 = vld [vmem:[#allocation8 + $0xf58] sm:$0xff]
    %v901 = vld [vmem:[#allocation8 + $0xf60] sm:$0xff]
    %v902 = vld [vmem:[#allocation8 + $0xf68] sm:$0xff]
    %v903 = vld [vmem:[#allocation8 + $0xf70] sm:$0xff]
    %v904 = vld [vmem:[#allocation8 + $0xf78] sm:$0xff]
    %v905 = vld [vmem:[#allocation8 + $0xf80] sm:$0xff]
    %v906 = vld [vmem:[#allocation8 + $0xf88] sm:$0xff]
    %v907 = vld [vmem:[#allocation8 + $0xf90] sm:$0xff]
    %v908 = vld [vmem:[#allocation8 + $0xf98] sm:$0xff]
    %v909 = vld [vmem:[#allocation8 + $0xfa0] sm:$0xff]
    %v910 = vld [vmem:[#allocation8 + $0xfa8] sm:$0xff]
    %v911 = vld [vmem:[#allocation8 + $0xfb0] sm:$0xff]
    %v912 = vld [vmem:[#allocation8 + $0xfb8] sm:$0xff]
    %v913 = vld [vmem:[#allocation8 + $0xfc0] sm:$0xff]
    %v914 = vld [vmem:[#allocation8 + $0xfc8] sm:$0xff]
    %v915 = vld [vmem:[#allocation8 + $0xfd0] sm:$0xff]
    %v916 = vld [vmem:[#allocation8 + $0xfd8] sm:$0xff]
    %v917 = vld [vmem:[#allocation8 + $0xfe0] sm:$0xff]
    %v918 = vld [vmem:[#allocation8 + $0xfe8] sm:$0xff]
    %v919 = vld [vmem:[#allocation8 + $0xff0] sm:$0xff]
    %v920 = vld [vmem:[#allocation8 + $0xff8] sm:$0xff]
    %v921 = vld [vmem:[#allocation8 + $0x1000] sm:$0xff]
    %v922 = vld [vmem:[#allocation8 + $0x1008] sm:$0xff]
    %v923 = vld [vmem:[#allocation8 + $0x1010] sm:$0xff]
    %v924 = vld [vmem:[#allocation8 + $0x1018] sm:$0xff]
    %v925 = vld [vmem:[#allocation8 + $0x1020] sm:$0xff]
    %v926 = vld [vmem:[#allocation8 + $0x1028] sm:$0xff]
    %v927 = vld [vmem:[#allocation8 + $0x1030] sm:$0xff]
    %v928 = vld [vmem:[#allocation8 + $0x1038] sm:$0xff]
    %v929 = vld [vmem:[#allocation8 + $0x1040] sm:$0xff]
    %v930 = vld [vmem:[#allocation8 + $0x1048] sm:$0xff]
    %v931 = vld [vmem:[#allocation8 + $0x1050] sm:$0xff]
    %v932 = vld [vmem:[#allocation8 + $0x1058] sm:$0xff]
    %v933 = vld [vmem:[#allocation8 + $0x1060] sm:$0xff]
    %v934 = vld [vmem:[#allocation8 + $0x1068] sm:$0xff]
    %v935 = vld [vmem:[#allocation8 + $0x1070] sm:$0xff]
    %v936 = vld [vmem:[#allocation8 + $0x1078] sm:$0xff]
    %v937 = vld [vmem:[#allocation8 + $0x1080] sm:$0xff]
    %v938 = vld [vmem:[#allocation8 + $0x1088] sm:$0xff]
    %v939 = vld [vmem:[#allocation8 + $0x1090] sm:$0xff]
    %v940 = vld [vmem:[#allocation8 + $0x1098] sm:$0xff]
    %v941 = vld [vmem:[#allocation8 + $0x10a0] sm:$0xff]
    %v942 = vld [vmem:[#allocation8 + $0x10a8] sm:$0xff]
    %v943 = vld [vmem:[#allocation8 + $0x10b0] sm:$0xff]
    %v944 = vld [vmem:[#allocation8 + $0x10b8] sm:$0xff]
    %v945 = vld [vmem:[#allocation8 + $0x10c0] sm:$0xff]
    %v946 = vld [vmem:[#allocation8 + $0x10c8] sm:$0xff]
    %v947 = vld [vmem:[#allocation8 + $0x10d0] sm:$0xff]
    %v948 = vld [vmem:[#allocation8 + $0x10d8] sm:$0xff]
    %v949 = vld [vmem:[#allocation8 + $0x10e0] sm:$0xff]
    %v950 = vld [vmem:[#allocation8 + $0x10e8] sm:$0xff]
    %v951 = vld [vmem:[#allocation8 + $0x10f0] sm:$0xff]
    %v952 = vld [vmem:[#allocation8 + $0x10f8] sm:$0xff]
    %v953 = vld [vmem:[#allocation8 + $0x1100] sm:$0xff]
    %v954 = vld [vmem:[#allocation8 + $0x1108] sm:$0xff]
    %v955 = vld [vmem:[#allocation8 + $0x1110] sm:$0xff]
    %v956 = vld [vmem:[#allocation8 + $0x1118] sm:$0xff]
    %v957 = vld [vmem:[#allocation8 + $0x1120] sm:$0xff]
    %v958 = vld [vmem:[#allocation8 + $0x1128] sm:$0xff]
    %v959 = vld [vmem:[#allocation8 + $0x1130] sm:$0xff]
    %v960 = vld [vmem:[#allocation8 + $0x1138] sm:$0xff]
    %v961 = vld [vmem:[#allocation8 + $0x1140] sm:$0xff]
    %v962 = vld [vmem:[#allocation8 + $0x1148] sm:$0xff]
    %v963 = vld [vmem:[#allocation8 + $0x1150] sm:$0xff]
    %v964 = vld [vmem:[#allocation8 + $0x1158] sm:$0xff]
    %v965 = vld [vmem:[#allocation8 + $0x1160] sm:$0xff]
    %v966 = vld [vmem:[#allocation8 + $0x1168] sm:$0xff]
    %v967 = vld [vmem:[#allocation8 + $0x1170] sm:$0xff]
    %v968 = vld [vmem:[#allocation8 + $0x1178] sm:$0xff]
    %v969 = vld [vmem:[#allocation8 + $0x1180] sm:$0xff]
    %v970 = vld [vmem:[#allocation8 + $0x1188] sm:$0xff]
    %v971 = vld [vmem:[#allocation8 + $0x1190] sm:$0xff]
    %v972 = vld [vmem:[#allocation8 + $0x1198] sm:$0xff]
    %v973 = vld [vmem:[#allocation8 + $0x11a0] sm:$0xff]
    %v974 = vld [vmem:[#allocation8 + $0x11a8] sm:$0xff]
    %v975 = vld [vmem:[#allocation8 + $0x11b0] sm:$0xff]
    %v976 = vld [vmem:[#allocation8 + $0x11b8] sm:$0xff]
    %v977 = vld [vmem:[#allocation8 + $0x11c0] sm:$0xff]
    %v978 = vld [vmem:[#allocation8 + $0x11c8] sm:$0xff]
    %v979 = vld [vmem:[#allocation8 + $0x11d0] sm:$0xff]
    %v980 = vld [vmem:[#allocation8 + $0x11d8] sm:$0xff]
    %v981 = vld [vmem:[#allocation8 + $0x11e0] sm:$0xff]
    %v982 = vld [vmem:[#allocation8 + $0x11e8] sm:$0xff]
    %v983 = vld [vmem:[#allocation8 + $0x11f0] sm:$0xff]
    %v984 = vld [vmem:[#allocation8 + $0x11f8] sm:$0xff]
    %v985 = vld [vmem:[#allocation8 + $0x1200] sm:$0xff]
    %v986 = vld [vmem:[#allocation8 + $0x1208] sm:$0xff]
    %v987 = vld [vmem:[#allocation8 + $0x1210] sm:$0xff]
    %v988 = vld [vmem:[#allocation8 + $0x1218] sm:$0xff]
    %v989 = vld [vmem:[#allocation8 + $0x1220] sm:$0xff]
    %v990 = vld [vmem:[#allocation8 + $0x1228] sm:$0xff]
    %v991 = vld [vmem:[#allocation8 + $0x1230] sm:$0xff]
    %v992 = vld [vmem:[#allocation8 + $0x1238] sm:$0xff]
    %v993 = vld [vmem:[#allocation8 + $0x1240] sm:$0xff]
    %v994 = vld [vmem:[#allocation8 + $0x1248] sm:$0xff]
    %v995 = vld [vmem:[#allocation8 + $0x1250] sm:$0xff]
    %v996 = vld [vmem:[#allocation8 + $0x1258] sm:$0xff]
    %v997 = vld [vmem:[#allocation8 + $0x1260] sm:$0xff]
    %v998 = vld [vmem:[#allocation8 + $0x1268] sm:$0xff]
    %v999 = vld [vmem:[#allocation8 + $0x1270] sm:$0xff]
    %v1000 = vld [vmem:[#allocation8 + $0x1278] sm:$0xff]
    %v1001 = vld [vmem:[#allocation8 + $0x1280] sm:$0xff]
    %v1002 = vld [vmem:[#allocation8 + $0x1288] sm:$0xff]
    %v1003 = vld [vmem:[#allocation8 + $0x1290] sm:$0xff]
    %v1004 = vld [vmem:[#allocation8 + $0x1298] sm:$0xff]
    %v1005 = vld [vmem:[#allocation8 + $0x12a0] sm:$0xff]
    %v1006 = vld [vmem:[#allocation8 + $0x12a8] sm:$0xff]
    %v1007 = vld [vmem:[#allocation8 + $0x12b0] sm:$0xff]
    %v1008 = vld [vmem:[#allocation8 + $0x12b8] sm:$0xff]
    %v1009 = vld [vmem:[#allocation8 + $0x12c0] sm:$0xff]
    %v1010 = vld [vmem:[#allocation8 + $0x12c8] sm:$0xff]
    %v1011 = vld [vmem:[#allocation8 + $0x12d0] sm:$0xff]
    %v1012 = vld [vmem:[#allocation8 + $0x12d8] sm:$0xff]
    %v1013 = vld [vmem:[#allocation8 + $0x12e0] sm:$0xff]
    %v1014 = vld [vmem:[#allocation8 + $0x12e8] sm:$0xff]
    %v1015 = vld [vmem:[#allocation8 + $0x12f0] sm:$0xff]
    %v1016 = vld [vmem:[#allocation8 + $0x12f8] sm:$0xff]
    %v1017 = vld [vmem:[#allocation8 + $0x1300] sm:$0xff]
    %v1018 = vld [vmem:[#allocation8 + $0x1308] sm:$0xff]
    %v1019 = vld [vmem:[#allocation8 + $0x1310] sm:$0xff]
    %v1020 = vld [vmem:[#allocation8 + $0x1318] sm:$0xff]
    %v1021 = vld [vmem:[#allocation8 + $0x1320] sm:$0xff]
    %v1022 = vld [vmem:[#allocation8 + $0x1328] sm:$0xff]
    %v1023 = vld [vmem:[#allocation8 + $0x1330] sm:$0xff]
    %v1024 = vld [vmem:[#allocation8 + $0x1338] sm:$0xff]
    %v1025 = vld [vmem:[#allocation8 + $0x1340] sm:$0xff]
    %v1026 = vld [vmem:[#allocation8 + $0x1348] sm:$0xff]
    %v1027 = vld [vmem:[#allocation8 + $0x1350] sm:$0xff]
    %v1028 = vld [vmem:[#allocation8 + $0x1358] sm:$0xff]
    %v1029 = vld [vmem:[#allocation8 + $0x1360] sm:$0xff]
    %v1030 = vld [vmem:[#allocation8 + $0x1368] sm:$0xff]
    %v1031 = vld [vmem:[#allocation8 + $0x1370] sm:$0xff]
    %v1032 = vld [vmem:[#allocation8 + $0x1378] sm:$0xff]
    %v1033 = vld [vmem:[#allocation8 + $0x1380] sm:$0xff]
    %v1034 = vld [vmem:[#allocation8 + $0x1388] sm:$0xff]
    %v1035 = vld [vmem:[#allocation8 + $0x1390] sm:$0xff]
    %v1036 = vld [vmem:[#allocation8 + $0x1398] sm:$0xff]
    %v1037 = vld [vmem:[#allocation8 + $0x13a0] sm:$0xff]
    %v1038 = vld [vmem:[#allocation8 + $0x13a8] sm:$0xff]
    %v1039 = vld [vmem:[#allocation8 + $0x13b0] sm:$0xff]
    %v1040 = vld [vmem:[#allocation8 + $0x13b8] sm:$0xff]
    %v1041 = vld [vmem:[#allocation8 + $0x13c0] sm:$0xff]
    %v1042 = vld [vmem:[#allocation8 + $0x13c8] sm:$0xff]
    %v1043 = vld [vmem:[#allocation8 + $0x13d0] sm:$0xff]
    %v1044 = vld [vmem:[#allocation8 + $0x13d8] sm:$0xff]
    %v1045 = vld [vmem:[#allocation8 + $0x13e0] sm:$0xff]
    %v1046 = vld [vmem:[#allocation8 + $0x13e8] sm:$0xff]
    %v1047 = vld [vmem:[#allocation8 + $0x13f0] sm:$0xff]
    %v1048 = vld [vmem:[#allocation8 + $0x13f8] sm:$0xff]
    %v1049 = vld [vmem:[#allocation8 + $0x1400] sm:$0xff]
    %v1050 = vld [vmem:[#allocation8 + $0x1408] sm:$0xff]
    %v1051 = vld [vmem:[#allocation8 + $0x1410] sm:$0xff]
    %v1052 = vld [vmem:[#allocation8 + $0x1418] sm:$0xff]
    %v1053 = vld [vmem:[#allocation8 + $0x1420] sm:$0xff]
    %v1054 = vld [vmem:[#allocation8 + $0x1428] sm:$0xff]
    %v1055 = vld [vmem:[#allocation8 + $0x1430] sm:$0xff]
    %v1056 = vld [vmem:[#allocation8 + $0x1438] sm:$0xff]
    %v1057 = vld [vmem:[#allocation8 + $0x1440] sm:$0xff]
    %v1058 = vld [vmem:[#allocation8 + $0x1448] sm:$0xff]
    %v1059 = vld [vmem:[#allocation8 + $0x1450] sm:$0xff]
    %v1060 = vld [vmem:[#allocation8 + $0x1458] sm:$0xff]
    %v1061 = vld [vmem:[#allocation8 + $0x1460] sm:$0xff]
    %v1062 = vld [vmem:[#allocation8 + $0x1468] sm:$0xff]
    %v1063 = vld [vmem:[#allocation8 + $0x1470] sm:$0xff]
    %v1064 = vld [vmem:[#allocation8 + $0x1478] sm:$0xff]
    %v1065 = vld [vmem:[#allocation8 + $0x1480] sm:$0xff]
    %v1066 = vld [vmem:[#allocation8 + $0x1488] sm:$0xff]
    %v1067 = vld [vmem:[#allocation8 + $0x1490] sm:$0xff]
    %v1068 = vld [vmem:[#allocation8 + $0x1498] sm:$0xff]
    %v1069 = vld [vmem:[#allocation8 + $0x14a0] sm:$0xff]
    %v1070 = vld [vmem:[#allocation8 + $0x14a8] sm:$0xff]
    %v1071 = vld [vmem:[#allocation8 + $0x14b0] sm:$0xff]
    %v1072 = vld [vmem:[#allocation8 + $0x14b8] sm:$0xff]
    %v1073 = vld [vmem:[#allocation8 + $0x14c0] sm:$0xff]
    %v1074 = vld [vmem:[#allocation8 + $0x14c8] sm:$0xff]
    %v1075 = vld [vmem:[#allocation8 + $0x14d0] sm:$0xff]
    %v1076 = vld [vmem:[#allocation8 + $0x14d8] sm:$0xff]
    %v1077 = vld [vmem:[#allocation8 + $0x14e0] sm:$0xff]
    %v1078 = vld [vmem:[#allocation8 + $0x14e8] sm:$0xff]
    %v1079 = vld [vmem:[#allocation8 + $0x14f0] sm:$0xff]
    %v1080 = vld [vmem:[#allocation8 + $0x14f8] sm:$0xff]
    %v1081 = vld [vmem:[#allocation8 + $0x1500] sm:$0xff]
    %v1082 = vld [vmem:[#allocation8 + $0x1508] sm:$0xff]
    %v1083 = vld [vmem:[#allocation8 + $0x1510] sm:$0xff]
    %v1084 = vld [vmem:[#allocation8 + $0x1518] sm:$0xff]
    %v1085 = vld [vmem:[#allocation8 + $0x1520] sm:$0xff]
    %v1086 = vld [vmem:[#allocation8 + $0x1528] sm:$0xff]
    %v1087 = vld [vmem:[#allocation8 + $0x1530] sm:$0xff]
    %v1088 = vld [vmem:[#allocation8 + $0x1538] sm:$0xff]
    %v1089 = vld [vmem:[#allocation8 + $0x1540] sm:$0xff]
    %v1090 = vld [vmem:[#allocation8 + $0x1548] sm:$0xff]
    %v1091 = vld [vmem:[#allocation8 + $0x1550] sm:$0xff]
    %v1092 = vld [vmem:[#allocation8 + $0x1558] sm:$0xff]
    %v1093 = vld [vmem:[#allocation8 + $0x1560] sm:$0xff]
    %v1094 = vld [vmem:[#allocation8 + $0x1568] sm:$0xff]
    %v1095 = vld [vmem:[#allocation8 + $0x1570] sm:$0xff]
    %v1096 = vld [vmem:[#allocation8 + $0x1578] sm:$0xff]
    %v1097 = vld [vmem:[#allocation8 + $0x1580] sm:$0xff]
    %v1098 = vld [vmem:[#allocation8 + $0x1588] sm:$0xff]
    %v1099 = vld [vmem:[#allocation8 + $0x1590] sm:$0xff]
    %v1100 = vld [vmem:[#allocation8 + $0x1598] sm:$0xff]
    %v1101 = vld [vmem:[#allocation8 + $0x15a0] sm:$0xff]
    %v1102 = vld [vmem:[#allocation8 + $0x15a8] sm:$0xff]
    %v1103 = vld [vmem:[#allocation8 + $0x15b0] sm:$0xff]
    %v1104 = vld [vmem:[#allocation8 + $0x15b8] sm:$0xff]
    %v1105 = vld [vmem:[#allocation8 + $0x15c0] sm:$0xff]
    %v1106 = vld [vmem:[#allocation8 + $0x15c8] sm:$0xff]
    %v1107 = vld [vmem:[#allocation8 + $0x15d0] sm:$0xff]
    %v1108 = vld [vmem:[#allocation8 + $0x15d8] sm:$0xff]
    %v1109 = vld [vmem:[#allocation8 + $0x15e0] sm:$0xff]
    %v1110 = vld [vmem:[#allocation8 + $0x15e8] sm:$0xff]
    %v1111 = vld [vmem:[#allocation8 + $0x15f0] sm:$0xff]
    %v1112 = vld [vmem:[#allocation8 + $0x15f8] sm:$0xff]
    %v1113 = vld [vmem:[#allocation8 + $0x1600] sm:$0xff]
    %v1114 = vld [vmem:[#allocation8 + $0x1608] sm:$0xff]
    %v1115 = vld [vmem:[#allocation8 + $0x1610] sm:$0xff]
    %v1116 = vld [vmem:[#allocation8 + $0x1618] sm:$0xff]
    %v1117 = vld [vmem:[#allocation8 + $0x1620] sm:$0xff]
    %v1118 = vld [vmem:[#allocation8 + $0x1628] sm:$0xff]
    %v1119 = vld [vmem:[#allocation8 + $0x1630] sm:$0xff]
    %v1120 = vld [vmem:[#allocation8 + $0x1638] sm:$0xff]
    %v1121 = vld [vmem:[#allocation8 + $0x1640] sm:$0xff]
    %v1122 = vld [vmem:[#allocation8 + $0x1648] sm:$0xff]
    %v1123 = vld [vmem:[#allocation8 + $0x1650] sm:$0xff]
    %v1124 = vld [vmem:[#allocation8 + $0x1658] sm:$0xff]
    %v1125 = vld [vmem:[#allocation8 + $0x1660] sm:$0xff]
    %v1126 = vld [vmem:[#allocation8 + $0x1668] sm:$0xff]
    %v1127 = vld [vmem:[#allocation8 + $0x1670] sm:$0xff]
    %v1128 = vld [vmem:[#allocation8 + $0x1678] sm:$0xff]
    %v1129 = vld [vmem:[#allocation8 + $0x1680] sm:$0xff]
    %v1130 = vld [vmem:[#allocation8 + $0x1688] sm:$0xff]
    %v1131 = vld [vmem:[#allocation8 + $0x1690] sm:$0xff]
    %v1132 = vld [vmem:[#allocation8 + $0x1698] sm:$0xff]
    %v1133 = vld [vmem:[#allocation8 + $0x16a0] sm:$0xff]
    %v1134 = vld [vmem:[#allocation8 + $0x16a8] sm:$0xff]
    %v1135 = vld [vmem:[#allocation8 + $0x16b0] sm:$0xff]
    %v1136 = vld [vmem:[#allocation8 + $0x16b8] sm:$0xff]
    %v1137 = vld [vmem:[#allocation8 + $0x16c0] sm:$0xff]
    %v1138 = vld [vmem:[#allocation8 + $0x16c8] sm:$0xff]
    %v1139 = vld [vmem:[#allocation8 + $0x16d0] sm:$0xff]
    %v1140 = vld [vmem:[#allocation8 + $0x16d8] sm:$0xff]
    %v1141 = vld [vmem:[#allocation8 + $0x16e0] sm:$0xff]
    %v1142 = vld [vmem:[#allocation8 + $0x16e8] sm:$0xff]
    %v1143 = vld [vmem:[#allocation8 + $0x16f0] sm:$0xff]
    %v1144 = vld [vmem:[#allocation8 + $0x16f8] sm:$0xff]
    %v1145 = vld [vmem:[#allocation8 + $0x1700] sm:$0xff]
    %v1146 = vld [vmem:[#allocation8 + $0x1708] sm:$0xff]
    %v1147 = vld [vmem:[#allocation8 + $0x1710] sm:$0xff]
    %v1148 = vld [vmem:[#allocation8 + $0x1718] sm:$0xff]
    %v1149 = vld [vmem:[#allocation8 + $0x1720] sm:$0xff]
    %v1150 = vld [vmem:[#allocation8 + $0x1728] sm:$0xff]
    %v1151 = vld [vmem:[#allocation8 + $0x1730] sm:$0xff]
    %v1152 = vld [vmem:[#allocation8 + $0x1738] sm:$0xff]
    %v1153 = vld [vmem:[#allocation8 + $0x1740] sm:$0xff]
    %v1154 = vld [vmem:[#allocation8 + $0x1748] sm:$0xff]
    %v1155 = vld [vmem:[#allocation8 + $0x1750] sm:$0xff]
    %v1156 = vld [vmem:[#allocation8 + $0x1758] sm:$0xff]
    %v1157 = vld [vmem:[#allocation8 + $0x1760] sm:$0xff]
    %v1158 = vld [vmem:[#allocation8 + $0x1768] sm:$0xff]
    %v1159 = vld [vmem:[#allocation8 + $0x1770] sm:$0xff]
    %v1160 = vld [vmem:[#allocation8 + $0x1778] sm:$0xff]
    %v1161 = vld [vmem:[#allocation8 + $0x1780] sm:$0xff]
    %v1162 = vld [vmem:[#allocation8 + $0x1788] sm:$0xff]
    %v1163 = vld [vmem:[#allocation8 + $0x1790] sm:$0xff]
    %v1164 = vld [vmem:[#allocation8 + $0x1798] sm:$0xff]
    %v1165 = vld [vmem:[#allocation8 + $0x17a0] sm:$0xff]
    %v1166 = vld [vmem:[#allocation8 + $0x17a8] sm:$0xff]
    %v1167 = vld [vmem:[#allocation8 + $0x17b0] sm:$0xff]
    %v1168 = vld [vmem:[#allocation8 + $0x17b8] sm:$0xff]
    %v1169 = vld [vmem:[#allocation8 + $0x17c0] sm:$0xff]
    %v1170 = vld [vmem:[#allocation8 + $0x17c8] sm:$0xff]
    %v1171 = vld [vmem:[#allocation8 + $0x17d0] sm:$0xff]
    %v1172 = vld [vmem:[#allocation8 + $0x17d8] sm:$0xff]
    %v1173 = vld [vmem:[#allocation8 + $0x17e0] sm:$0xff]
    %v1174 = vld [vmem:[#allocation8 + $0x17e8] sm:$0xff]
    %v1175 = vld [vmem:[#allocation8 + $0x17f0] sm:$0xff]
    %v1176 = vld [vmem:[#allocation8 + $0x17f8] sm:$0xff]
    %v1177 = vld [vmem:[#allocation8 + $0x1800] sm:$0xff]
    %v1178 = vld [vmem:[#allocation8 + $0x1808] sm:$0xff]
    %v1179 = vld [vmem:[#allocation8 + $0x1810] sm:$0xff]
    %v1180 = vld [vmem:[#allocation8 + $0x1818] sm:$0xff]
    %v1181 = vld [vmem:[#allocation8 + $0x1820] sm:$0xff]
    %v1182 = vld [vmem:[#allocation8 + $0x1828] sm:$0xff]
    %v1183 = vld [vmem:[#allocation8 + $0x1830] sm:$0xff]
    %v1184 = vld [vmem:[#allocation8 + $0x1838] sm:$0xff]
    %v1185 = vld [vmem:[#allocation8 + $0x1840] sm:$0xff]
    %v1186 = vld [vmem:[#allocation8 + $0x1848] sm:$0xff]
    %v1187 = vld [vmem:[#allocation8 + $0x1850] sm:$0xff]
    %v1188 = vld [vmem:[#allocation8 + $0x1858] sm:$0xff]
    %v1189 = vld [vmem:[#allocation8 + $0x1860] sm:$0xff]
    %v1190 = vld [vmem:[#allocation8 + $0x1868] sm:$0xff]
    %v1191 = vld [vmem:[#allocation8 + $0x1870] sm:$0xff]
    %v1192 = vld [vmem:[#allocation8 + $0x1878] sm:$0xff]
    %v1193 = vld [vmem:[#allocation8 + $0x1880] sm:$0xff]
    %v1194 = vld [vmem:[#allocation8 + $0x1888] sm:$0xff]
    %v1195 = vld [vmem:[#allocation8 + $0x1890] sm:$0xff]
    %v1196 = vld [vmem:[#allocation8 + $0x1898] sm:$0xff]
    %v1197 = vld [vmem:[#allocation8 + $0x18a0] sm:$0xff]
    %v1198 = vld [vmem:[#allocation8 + $0x18a8] sm:$0xff]
    %v1199 = vld [vmem:[#allocation8 + $0x18b0] sm:$0xff]
    %v1200 = vld [vmem:[#allocation8 + $0x18b8] sm:$0xff]
    %v1201 = vld [vmem:[#allocation8 + $0x18c0] sm:$0xff]
    %v1202 = vld [vmem:[#allocation8 + $0x18c8] sm:$0xff]
    %v1203 = vld [vmem:[#allocation8 + $0x18d0] sm:$0xff]
    %v1204 = vld [vmem:[#allocation8 + $0x18d8] sm:$0xff]
    %v1205 = vld [vmem:[#allocation8 + $0x18e0] sm:$0xff]
    %v1206 = vld [vmem:[#allocation8 + $0x18e8] sm:$0xff]
    %v1207 = vld [vmem:[#allocation8 + $0x18f0] sm:$0xff]
    %v1208 = vld [vmem:[#allocation8 + $0x18f8] sm:$0xff]
    %v1209 = vld [vmem:[#allocation8 + $0x1900] sm:$0xff]
    %v1210 = vld [vmem:[#allocation8 + $0x1908] sm:$0xff]
    %v1211 = vld [vmem:[#allocation8 + $0x1910] sm:$0xff]
    %v1212 = vld [vmem:[#allocation8 + $0x1918] sm:$0xff]
    %v1213 = vld [vmem:[#allocation8 + $0x1920] sm:$0xff]
    %v1214 = vld [vmem:[#allocation8 + $0x1928] sm:$0xff]
    %v1215 = vld [vmem:[#allocation8 + $0x1930] sm:$0xff]
    %v1216 = vld [vmem:[#allocation8 + $0x1938] sm:$0xff]
    %v1217 = vld [vmem:[#allocation8 + $0x1940] sm:$0xff]
    %v1218 = vld [vmem:[#allocation8 + $0x1948] sm:$0xff]
    %v1219 = vld [vmem:[#allocation8 + $0x1950] sm:$0xff]
    %v1220 = vld [vmem:[#allocation8 + $0x1958] sm:$0xff]
    %v1221 = vld [vmem:[#allocation8 + $0x1960] sm:$0xff]
    %v1222 = vld [vmem:[#allocation8 + $0x1968] sm:$0xff]
    %v1223 = vld [vmem:[#allocation8 + $0x1970] sm:$0xff]
    %v1224 = vld [vmem:[#allocation8 + $0x1978] sm:$0xff]
    %v1225 = vld [vmem:[#allocation8 + $0x1980] sm:$0xff]
    %v1226 = vld [vmem:[#allocation8 + $0x1988] sm:$0xff]
    %v1227 = vld [vmem:[#allocation8 + $0x1990] sm:$0xff]
    %v1228 = vld [vmem:[#allocation8 + $0x1998] sm:$0xff]
    %v1229 = vld [vmem:[#allocation8 + $0x19a0] sm:$0xff]
    %v1230 = vld [vmem:[#allocation8 + $0x19a8] sm:$0xff]
    %v1231 = vld [vmem:[#allocation8 + $0x19b0] sm:$0xff]
    %v1232 = vld [vmem:[#allocation8 + $0x19b8] sm:$0xff]
    %v1233 = vld [vmem:[#allocation8 + $0x19c0] sm:$0xff]
    %v1234 = vld [vmem:[#allocation8 + $0x19c8] sm:$0xff]
    %v1235 = vld [vmem:[#allocation8 + $0x19d0] sm:$0xff]
    %v1236 = vld [vmem:[#allocation8 + $0x19d8] sm:$0xff]
    %v1237 = vld [vmem:[#allocation8 + $0x19e0] sm:$0xff]
    %v1238 = vld [vmem:[#allocation8 + $0x19e8] sm:$0xff]
    %v1239 = vld [vmem:[#allocation8 + $0x19f0] sm:$0xff]
    %v1240 = vld [vmem:[#allocation8 + $0x19f8] sm:$0xff]
    %v1241 = vld [vmem:[#allocation8 + $0x1a00] sm:$0xff]
    %v1242 = vld [vmem:[#allocation8 + $0x1a08] sm:$0xff]
    %v1243 = vld [vmem:[#allocation8 + $0x1a10] sm:$0xff]
    %v1244 = vld [vmem:[#allocation8 + $0x1a18] sm:$0xff]
    %v1245 = vld [vmem:[#allocation8 + $0x1a20] sm:$0xff]
    %v1246 = vld [vmem:[#allocation8 + $0x1a28] sm:$0xff]
    %v1247 = vld [vmem:[#allocation8 + $0x1a30] sm:$0xff]
    %v1248 = vld [vmem:[#allocation8 + $0x1a38] sm:$0xff]
    %v1249 = vld [vmem:[#allocation8 + $0x1a40] sm:$0xff]
    %v1250 = vld [vmem:[#allocation8 + $0x1a48] sm:$0xff]
    %v1251 = vld [vmem:[#allocation8 + $0x1a50] sm:$0xff]
    %v1252 = vld [vmem:[#allocation8 + $0x1a58] sm:$0xff]
    %v1253 = vld [vmem:[#allocation8 + $0x1a60] sm:$0xff]
    %v1254 = vld [vmem:[#allocation8 + $0x1a68] sm:$0xff]
    %v1255 = vld [vmem:[#allocation8 + $0x1a70] sm:$0xff]
    %v1256 = vld [vmem:[#allocation8 + $0x1a78] sm:$0xff]
    %v1257 = vld [vmem:[#allocation8 + $0x1a80] sm:$0xff]
    %v1258 = vld [vmem:[#allocation8 + $0x1a88] sm:$0xff]
    %v1259 = vld [vmem:[#allocation8 + $0x1a90] sm:$0xff]
    %v1260 = vld [vmem:[#allocation8 + $0x1a98] sm:$0xff]
    %v1261 = vld [vmem:[#allocation8 + $0x1aa0] sm:$0xff]
    %v1262 = vld [vmem:[#allocation8 + $0x1aa8] sm:$0xff]
    %v1263 = vld [vmem:[#allocation8 + $0x1ab0] sm:$0xff]
    %v1264 = vld [vmem:[#allocation8 + $0x1ab8] sm:$0xff]
    %v1265 = vld [vmem:[#allocation8 + $0x1ac0] sm:$0xff]
    %v1266 = vld [vmem:[#allocation8 + $0x1ac8] sm:$0xff]
    %v1267 = vld [vmem:[#allocation8 + $0x1ad0] sm:$0xff]
    %v1268 = vld [vmem:[#allocation8 + $0x1ad8] sm:$0xff]
    %v1269 = vld [vmem:[#allocation8 + $0x1ae0] sm:$0xff]
    %v1270 = vld [vmem:[#allocation8 + $0x1ae8] sm:$0xff]
    %v1271 = vld [vmem:[#allocation8 + $0x1af0] sm:$0xff]
    %v1272 = vld [vmem:[#allocation8 + $0x1af8] sm:$0xff]
    %v1273 = vld [vmem:[#allocation8 + $0x1b00] sm:$0xff]
    %v1274 = vld [vmem:[#allocation8 + $0x1b08] sm:$0xff]
    %v1275 = vld [vmem:[#allocation8 + $0x1b10] sm:$0xff]
    %v1276 = vld [vmem:[#allocation8 + $0x1b18] sm:$0xff]
    %v1277 = vld [vmem:[#allocation8 + $0x1b20] sm:$0xff]
    %v1278 = vld [vmem:[#allocation8 + $0x1b28] sm:$0xff]
    %v1279 = vld [vmem:[#allocation8 + $0x1b30] sm:$0xff]
    %v1280 = vld [vmem:[#allocation8 + $0x1b38] sm:$0xff]
    %v1281 = vld [vmem:[#allocation8 + $0x1b40] sm:$0xff]
    %v1282 = vld [vmem:[#allocation8 + $0x1b48] sm:$0xff]
    %v1283 = vld [vmem:[#allocation8 + $0x1b50] sm:$0xff]
    %v1284 = vld [vmem:[#allocation8 + $0x1b58] sm:$0xff]
    %v1285 = vld [vmem:[#allocation8 + $0x1b60] sm:$0xff]
    %v1286 = vld [vmem:[#allocation8 + $0x1b68] sm:$0xff]
    %v1287 = vld [vmem:[#allocation8 + $0x1b70] sm:$0xff]
    %v1288 = vld [vmem:[#allocation8 + $0x1b78] sm:$0xff]
    %v1289 = vld [vmem:[#allocation8 + $0x1b80] sm:$0xff]
    %v1290 = vld [vmem:[#allocation8 + $0x1b88] sm:$0xff]
    %v1291 = vld [vmem:[#allocation8 + $0x1b90] sm:$0xff]
    %v1292 = vld [vmem:[#allocation8 + $0x1b98] sm:$0xff]
    %v1293 = vld [vmem:[#allocation8 + $0x1ba0] sm:$0xff]
    %v1294 = vld [vmem:[#allocation8 + $0x1ba8] sm:$0xff]
    %v1295 = vld [vmem:[#allocation8 + $0x1bb0] sm:$0xff]
    %v1296 = vld [vmem:[#allocation8 + $0x1bb8] sm:$0xff]
    %v1297 = vld [vmem:[#allocation8 + $0x1bc0] sm:$0xff]
    %v1298 = vld [vmem:[#allocation8 + $0x1bc8] sm:$0xff]
    %v1299 = vld [vmem:[#allocation8 + $0x1bd0] sm:$0xff]
    %v1300 = vld [vmem:[#allocation8 + $0x1bd8] sm:$0xff]
    %v1301 = vld [vmem:[#allocation8 + $0x1be0] sm:$0xff]
    %v1302 = vld [vmem:[#allocation8 + $0x1be8] sm:$0xff]
    %v1303 = vld [vmem:[#allocation8 + $0x1bf0] sm:$0xff]
    %v1304 = vld [vmem:[#allocation8 + $0x1bf8] sm:$0xff]
    %v1305 = vld [vmem:[#allocation8 + $0x1c00] sm:$0xff]
    %v1306 = vld [vmem:[#allocation8 + $0x1c08] sm:$0xff]
    %v1307 = vld [vmem:[#allocation8 + $0x1c10] sm:$0xff]
    %v1308 = vld [vmem:[#allocation8 + $0x1c18] sm:$0xff]
    %v1309 = vld [vmem:[#allocation8 + $0x1c20] sm:$0xff]
    %v1310 = vld [vmem:[#allocation8 + $0x1c28] sm:$0xff]
    %v1311 = vld [vmem:[#allocation8 + $0x1c30] sm:$0xff]
    %v1312 = vld [vmem:[#allocation8 + $0x1c38] sm:$0xff]
    %v1313 = vld [vmem:[#allocation8 + $0x1c40] sm:$0xff]
    %v1314 = vld [vmem:[#allocation8 + $0x1c48] sm:$0xff]
    %v1315 = vld [vmem:[#allocation8 + $0x1c50] sm:$0xff]
    %v1316 = vld [vmem:[#allocation8 + $0x1c58] sm:$0xff]
    %v1317 = vld [vmem:[#allocation8 + $0x1c60] sm:$0xff]
    %v1318 = vld [vmem:[#allocation8 + $0x1c68] sm:$0xff]
    %v1319 = vld [vmem:[#allocation8 + $0x1c70] sm:$0xff]
    %v1320 = vld [vmem:[#allocation8 + $0x1c78] sm:$0xff]
    %v1321 = vld [vmem:[#allocation8 + $0x1c80] sm:$0xff]
    %v1322 = vld [vmem:[#allocation8 + $0x1c88] sm:$0xff]
    %v1323 = vld [vmem:[#allocation8 + $0x1c90] sm:$0xff]
    %v1324 = vld [vmem:[#allocation8 + $0x1c98] sm:$0xff]
    %v1325 = vld [vmem:[#allocation8 + $0x1ca0] sm:$0xff]
    %v1326 = vld [vmem:[#allocation8 + $0x1ca8] sm:$0xff]
    %v1327 = vld [vmem:[#allocation8 + $0x1cb0] sm:$0xff]
    %v1328 = vld [vmem:[#allocation8 + $0x1cb8] sm:$0xff]
    %v1329 = vld [vmem:[#allocation8 + $0x1cc0] sm:$0xff]
    %v1330 = vld [vmem:[#allocation8 + $0x1cc8] sm:$0xff]
    %v1331 = vld [vmem:[#allocation8 + $0x1cd0] sm:$0xff]
    %v1332 = vld [vmem:[#allocation8 + $0x1cd8] sm:$0xff]
    %v1333 = vld [vmem:[#allocation8 + $0x1ce0] sm:$0xff]
    %v1334 = vld [vmem:[#allocation8 + $0x1ce8] sm:$0xff]
    %v1335 = vld [vmem:[#allocation8 + $0x1cf0] sm:$0xff]
    %v1336 = vld [vmem:[#allocation8 + $0x1cf8] sm:$0xff]
    %v1337 = vld [vmem:[#allocation8 + $0x1d00] sm:$0xff]
    %v1338 = vld [vmem:[#allocation8 + $0x1d08] sm:$0xff]
    %v1339 = vld [vmem:[#allocation8 + $0x1d10] sm:$0xff]
    %v1340 = vld [vmem:[#allocation8 + $0x1d18] sm:$0xff]
    %v1341 = vld [vmem:[#allocation8 + $0x1d20] sm:$0xff]
    %v1342 = vld [vmem:[#allocation8 + $0x1d28] sm:$0xff]
    %v1343 = vld [vmem:[#allocation8 + $0x1d30] sm:$0xff]
    %v1344 = vld [vmem:[#allocation8 + $0x1d38] sm:$0xff]
    %v1345 = vld [vmem:[#allocation8 + $0x1d40] sm:$0xff]
    %v1346 = vld [vmem:[#allocation8 + $0x1d48] sm:$0xff]
    %v1347 = vld [vmem:[#allocation8 + $0x1d50] sm:$0xff]
    %v1348 = vld [vmem:[#allocation8 + $0x1d58] sm:$0xff]
    %v1349 = vld [vmem:[#allocation8 + $0x1d60] sm:$0xff]
    %v1350 = vld [vmem:[#allocation8 + $0x1d68] sm:$0xff]
    %v1351 = vld [vmem:[#allocation8 + $0x1d70] sm:$0xff]
    %v1352 = vld [vmem:[#allocation8 + $0x1d78] sm:$0xff]
    %v1353 = vld [vmem:[#allocation8 + $0x1d80] sm:$0xff]
    %v1354 = vld [vmem:[#allocation8 + $0x1d88] sm:$0xff]
    %v1355 = vld [vmem:[#allocation8 + $0x1d90] sm:$0xff]
    %v1356 = vld [vmem:[#allocation8 + $0x1d98] sm:$0xff]
    %v1357 = vld [vmem:[#allocation8 + $0x1da0] sm:$0xff]
    %v1358 = vld [vmem:[#allocation8 + $0x1da8] sm:$0xff]
    %v1359 = vld [vmem:[#allocation8 + $0x1db0] sm:$0xff]
    %v1360 = vld [vmem:[#allocation8 + $0x1db8] sm:$0xff]
    %v1361 = vld [vmem:[#allocation8 + $0x1dc0] sm:$0xff]
    %v1362 = vld [vmem:[#allocation8 + $0x1dc8] sm:$0xff]
    %v1363 = vld [vmem:[#allocation8 + $0x1dd0] sm:$0xff]
    %v1364 = vld [vmem:[#allocation8 + $0x1dd8] sm:$0xff]
    %v1365 = vld [vmem:[#allocation8 + $0x1de0] sm:$0xff]
    %v1366 = vld [vmem:[#allocation8 + $0x1de8] sm:$0xff]
    %v1367 = vld [vmem:[#allocation8 + $0x1df0] sm:$0xff]
    %v1368 = vld [vmem:[#allocation8 + $0x1df8] sm:$0xff]
    %v1369 = vld [vmem:[#allocation8 + $0x1e00] sm:$0xff]
    %v1370 = vld [vmem:[#allocation8 + $0x1e08] sm:$0xff]
    %v1371 = vld [vmem:[#allocation8 + $0x1e10] sm:$0xff]
    %v1372 = vld [vmem:[#allocation8 + $0x1e18] sm:$0xff]
    %v1373 = vld [vmem:[#allocation8 + $0x1e20] sm:$0xff]
    %v1374 = vld [vmem:[#allocation8 + $0x1e28] sm:$0xff]
    %v1375 = vld [vmem:[#allocation8 + $0x1e30] sm:$0xff]
    %v1376 = vld [vmem:[#allocation8 + $0x1e38] sm:$0xff]
    %v1377 = vld [vmem:[#allocation8 + $0x1e40] sm:$0xff]
    %v1378 = vld [vmem:[#allocation8 + $0x1e48] sm:$0xff]
    %v1379 = vld [vmem:[#allocation8 + $0x1e50] sm:$0xff]
    %v1380 = vld [vmem:[#allocation8 + $0x1e58] sm:$0xff]
    %v1381 = vld [vmem:[#allocation8 + $0x1e60] sm:$0xff]
    %v1382 = vld [vmem:[#allocation8 + $0x1e68] sm:$0xff]
    %v1383 = vld [vmem:[#allocation8 + $0x1e70] sm:$0xff]
    %v1384 = vld [vmem:[#allocation8 + $0x1e78] sm:$0xff]
    %v1385 = vld [vmem:[#allocation8 + $0x1e80] sm:$0xff]
    %v1386 = vld [vmem:[#allocation8 + $0x1e88] sm:$0xff]
    %v1387 = vld [vmem:[#allocation8 + $0x1e90] sm:$0xff]
    %v1388 = vld [vmem:[#allocation8 + $0x1e98] sm:$0xff]
    %v1389 = vld [vmem:[#allocation8 + $0x1ea0] sm:$0xff]
    %v1390 = vld [vmem:[#allocation8 + $0x1ea8] sm:$0xff]
    %v1391 = vld [vmem:[#allocation8 + $0x1eb0] sm:$0xff]
    %v1392 = vld [vmem:[#allocation8 + $0x1eb8] sm:$0xff]
    %v1393 = vld [vmem:[#allocation8 + $0x1ec0] sm:$0xff]
    %v1394 = vld [vmem:[#allocation8 + $0x1ec8] sm:$0xff]
    %v1395 = vld [vmem:[#allocation8 + $0x1ed0] sm:$0xff]
    %v1396 = vld [vmem:[#allocation8 + $0x1ed8] sm:$0xff]
    %v1397 = vld [vmem:[#allocation8 + $0x1ee0] sm:$0xff]
    %v1398 = vld [vmem:[#allocation8 + $0x1ee8] sm:$0xff]
    %v1399 = vld [vmem:[#allocation8 + $0x1ef0] sm:$0xff]
    %v1400 = vld [vmem:[#allocation8 + $0x1ef8] sm:$0xff]
    %v1401 = vld [vmem:[#allocation8 + $0x1f00] sm:$0xff]
    %v1402 = vld [vmem:[#allocation8 + $0x1f08] sm:$0xff]
    %v1403 = vld [vmem:[#allocation8 + $0x1f10] sm:$0xff]
    %v1404 = vld [vmem:[#allocation8 + $0x1f18] sm:$0xff]
    %v1405 = vld [vmem:[#allocation8 + $0x1f20] sm:$0xff]
    %v1406 = vld [vmem:[#allocation8 + $0x1f28] sm:$0xff]
    %v1407 = vld [vmem:[#allocation8 + $0x1f30] sm:$0xff]
    %v1408 = vld [vmem:[#allocation8 + $0x1f38] sm:$0xff]
    %v1409 = vld [vmem:[#allocation8 + $0x1f40] sm:$0xff]
    %v1410 = vld [vmem:[#allocation8 + $0x1f48] sm:$0xff]
    %v1411 = vld [vmem:[#allocation8 + $0x1f50] sm:$0xff]
    %v1412 = vld [vmem:[#allocation8 + $0x1f58] sm:$0xff]
    %v1413 = vld [vmem:[#allocation8 + $0x1f60] sm:$0xff]
    %v1414 = vld [vmem:[#allocation8 + $0x1f68] sm:$0xff]
    %v1415 = vld [vmem:[#allocation8 + $0x1f70] sm:$0xff]
    %v1416 = vld [vmem:[#allocation8 + $0x1f78] sm:$0xff]
    %v1417 = vld [vmem:[#allocation8 + $0x1f80] sm:$0xff]
    %v1418 = vld [vmem:[#allocation8 + $0x1f88] sm:$0xff]
    %v1419 = vld [vmem:[#allocation8 + $0x1f90] sm:$0xff]
    %v1420 = vld [vmem:[#allocation8 + $0x1f98] sm:$0xff]
    %v1421 = vld [vmem:[#allocation8 + $0x1fa0] sm:$0xff]
    %v1422 = vld [vmem:[#allocation8 + $0x1fa8] sm:$0xff]
    %v1423 = vld [vmem:[#allocation8 + $0x1fb0] sm:$0xff]
    %v1424 = vld [vmem:[#allocation8 + $0x1fb8] sm:$0xff]
    %v1425 = vld [vmem:[#allocation8 + $0x1fc0] sm:$0xff]
    %v1426 = vld [vmem:[#allocation8 + $0x1fc8] sm:$0xff]
    %v1427 = vld [vmem:[#allocation8 + $0x1fd0] sm:$0xff]
    %v1428 = vld [vmem:[#allocation8 + $0x1fd8] sm:$0xff]
    %v1429 = vld [vmem:[#allocation8 + $0x1fe0] sm:$0xff]
    %v1430 = vld [vmem:[#allocation8 + $0x1fe8] sm:$0xff]
    %v1431 = vld [vmem:[#allocation8 + $0x1ff0] sm:$0xff]
    %v1432 = vld [vmem:[#allocation8 + $0x1ff8] sm:$0xff]
    %v2457 = vunpack.c.l.b16 %v409
    %v2458 = vunpack.c.h.b16 %v409
    %v2459 = vunpack.c.l.b16 %v410
    %v2460 = vunpack.c.h.b16 %v410
    %v2461 = vunpack.c.l.b16 %v411
    %v2462 = vunpack.c.h.b16 %v411
    %v2463 = vunpack.c.l.b16 %v412
    %v2464 = vunpack.c.h.b16 %v412
    %v2465 = vunpack.c.l.b16 %v413
    %v2466 = vunpack.c.h.b16 %v413
    %v2467 = vunpack.c.l.b16 %v414
    %v2468 = vunpack.c.h.b16 %v414
    %v2469 = vunpack.c.l.b16 %v415
    %v2470 = vunpack.c.h.b16 %v415
    %v2471 = vunpack.c.l.b16 %v416
    %v2472 = vunpack.c.h.b16 %v416
    %v2473 = vunpack.c.l.b16 %v417
    %v2474 = vunpack.c.h.b16 %v417
    %v2475 = vunpack.c.l.b16 %v418
    %v2476 = vunpack.c.h.b16 %v418
    %v2477 = vunpack.c.l.b16 %v419
    %v2478 = vunpack.c.h.b16 %v419
    %v2479 = vunpack.c.l.b16 %v420
    %v2480 = vunpack.c.h.b16 %v420
    %v2481 = vunpack.c.l.b16 %v421
    %v2482 = vunpack.c.h.b16 %v421
    %v2483 = vunpack.c.l.b16 %v422
    %v2484 = vunpack.c.h.b16 %v422
    %v2485 = vunpack.c.l.b16 %v423
    %v2486 = vunpack.c.h.b16 %v423
    %v2487 = vunpack.c.l.b16 %v424
    %v2488 = vunpack.c.h.b16 %v424
    %v2489 = vunpack.c.l.b16 %v425
    %v2490 = vunpack.c.h.b16 %v425
    %v2491 = vunpack.c.l.b16 %v426
    %v2492 = vunpack.c.h.b16 %v426
    %v2493 = vunpack.c.l.b16 %v427
    %v2494 = vunpack.c.h.b16 %v427
    %v2495 = vunpack.c.l.b16 %v428
    %v2496 = vunpack.c.h.b16 %v428
    %v2497 = vunpack.c.l.b16 %v429
    %v2498 = vunpack.c.h.b16 %v429
    %v2499 = vunpack.c.l.b16 %v430
    %v2500 = vunpack.c.h.b16 %v430
    %v2501 = vunpack.c.l.b16 %v431
    %v2502 = vunpack.c.h.b16 %v431
    %v2503 = vunpack.c.l.b16 %v432
    %v2504 = vunpack.c.h.b16 %v432
    %v2505 = vunpack.c.l.b16 %v433
    %v2506 = vunpack.c.h.b16 %v433
    %v2507 = vunpack.c.l.b16 %v434
    %v2508 = vunpack.c.h.b16 %v434
    %v2509 = vunpack.c.l.b16 %v435
    %v2510 = vunpack.c.h.b16 %v435
    %v2511 = vunpack.c.l.b16 %v436
    %v2512 = vunpack.c.h.b16 %v436
    %v2513 = vunpack.c.l.b16 %v437
    %v2514 = vunpack.c.h.b16 %v437
    %v2515 = vunpack.c.l.b16 %v438
    %v2516 = vunpack.c.h.b16 %v438
    %v2517 = vunpack.c.l.b16 %v439
    %v2518 = vunpack.c.h.b16 %v439
    %v2519 = vunpack.c.l.b16 %v440
    %v2520 = vunpack.c.h.b16 %v440
    %v2521 = vunpack.c.l.b16 %v441
    %v2522 = vunpack.c.h.b16 %v441
    %v2523 = vunpack.c.l.b16 %v442
    %v2524 = vunpack.c.h.b16 %v442
    %v2525 = vunpack.c.l.b16 %v443
    %v2526 = vunpack.c.h.b16 %v443
    %v2527 = vunpack.c.l.b16 %v444
    %v2528 = vunpack.c.h.b16 %v444
    %v2529 = vunpack.c.l.b16 %v445
    %v2530 = vunpack.c.h.b16 %v445
    %v2531 = vunpack.c.l.b16 %v446
    %v2532 = vunpack.c.h.b16 %v446
    %v2533 = vunpack.c.l.b16 %v447
    %v2534 = vunpack.c.h.b16 %v447
    %v2535 = vunpack.c.l.b16 %v448
    %v2536 = vunpack.c.h.b16 %v448
    %v2537 = vunpack.c.l.b16 %v449
    %v2538 = vunpack.c.h.b16 %v449
    %v2539 = vunpack.c.l.b16 %v450
    %v2540 = vunpack.c.h.b16 %v450
    %v2541 = vunpack.c.l.b16 %v451
    %v2542 = vunpack.c.h.b16 %v451
    %v2543 = vunpack.c.l.b16 %v452
    %v2544 = vunpack.c.h.b16 %v452
    %v2545 = vunpack.c.l.b16 %v453
    %v2546 = vunpack.c.h.b16 %v453
    %v2547 = vunpack.c.l.b16 %v454
    %v2548 = vunpack.c.h.b16 %v454
    %v2549 = vunpack.c.l.b16 %v455
    %v2550 = vunpack.c.h.b16 %v455
    %v2551 = vunpack.c.l.b16 %v456
    %v2552 = vunpack.c.h.b16 %v456
    %v2553 = vunpack.c.l.b16 %v457
    %v2554 = vunpack.c.h.b16 %v457
    %v2555 = vunpack.c.l.b16 %v458
    %v2556 = vunpack.c.h.b16 %v458
    %v2557 = vunpack.c.l.b16 %v459
    %v2558 = vunpack.c.h.b16 %v459
    %v2559 = vunpack.c.l.b16 %v460
    %v2560 = vunpack.c.h.b16 %v460
    %v2561 = vunpack.c.l.b16 %v461
    %v2562 = vunpack.c.h.b16 %v461
    %v2563 = vunpack.c.l.b16 %v462
    %v2564 = vunpack.c.h.b16 %v462
    %v2565 = vunpack.c.l.b16 %v463
    %v2566 = vunpack.c.h.b16 %v463
    %v2567 = vunpack.c.l.b16 %v464
    %v2568 = vunpack.c.h.b16 %v464
    %v2569 = vunpack.c.l.b16 %v465
    %v2570 = vunpack.c.h.b16 %v465
    %v2571 = vunpack.c.l.b16 %v466
    %v2572 = vunpack.c.h.b16 %v466
    %v2573 = vunpack.c.l.b16 %v467
    %v2574 = vunpack.c.h.b16 %v467
    %v2575 = vunpack.c.l.b16 %v468
    %v2576 = vunpack.c.h.b16 %v468
    %v2577 = vunpack.c.l.b16 %v469
    %v2578 = vunpack.c.h.b16 %v469
    %v2579 = vunpack.c.l.b16 %v470
    %v2580 = vunpack.c.h.b16 %v470
    %v2581 = vunpack.c.l.b16 %v471
    %v2582 = vunpack.c.h.b16 %v471
    %v2583 = vunpack.c.l.b16 %v472
    %v2584 = vunpack.c.h.b16 %v472
    %v2585 = vunpack.c.l.b16 %v473
    %v2586 = vunpack.c.h.b16 %v473
    %v2587 = vunpack.c.l.b16 %v474
    %v2588 = vunpack.c.h.b16 %v474
    %v2589 = vunpack.c.l.b16 %v475
    %v2590 = vunpack.c.h.b16 %v475
    %v2591 = vunpack.c.l.b16 %v476
    %v2592 = vunpack.c.h.b16 %v476
    %v2593 = vunpack.c.l.b16 %v477
    %v2594 = vunpack.c.h.b16 %v477
    %v2595 = vunpack.c.l.b16 %v478
    %v2596 = vunpack.c.h.b16 %v478
    %v2597 = vunpack.c.l.b16 %v479
    %v2598 = vunpack.c.h.b16 %v479
    %v2599 = vunpack.c.l.b16 %v480
    %v2600 = vunpack.c.h.b16 %v480
    %v2601 = vunpack.c.l.b16 %v481
    %v2602 = vunpack.c.h.b16 %v481
    %v2603 = vunpack.c.l.b16 %v482
    %v2604 = vunpack.c.h.b16 %v482
    %v2605 = vunpack.c.l.b16 %v483
    %v2606 = vunpack.c.h.b16 %v483
    %v2607 = vunpack.c.l.b16 %v484
    %v2608 = vunpack.c.h.b16 %v484
    %v2609 = vunpack.c.l.b16 %v485
    %v2610 = vunpack.c.h.b16 %v485
    %v2611 = vunpack.c.l.b16 %v486
    %v2612 = vunpack.c.h.b16 %v486
    %v2613 = vunpack.c.l.b16 %v487
    %v2614 = vunpack.c.h.b16 %v487
    %v2615 = vunpack.c.l.b16 %v488
    %v2616 = vunpack.c.h.b16 %v488
    %v2617 = vunpack.c.l.b16 %v489
    %v2618 = vunpack.c.h.b16 %v489
    %v2619 = vunpack.c.l.b16 %v490
    %v2620 = vunpack.c.h.b16 %v490
    %v2621 = vunpack.c.l.b16 %v491
    %v2622 = vunpack.c.h.b16 %v491
    %v2623 = vunpack.c.l.b16 %v492
    %v2624 = vunpack.c.h.b16 %v492
    %v2625 = vunpack.c.l.b16 %v493
    %v2626 = vunpack.c.h.b16 %v493
    %v2627 = vunpack.c.l.b16 %v494
    %v2628 = vunpack.c.h.b16 %v494
    %v2629 = vunpack.c.l.b16 %v495
    %v2630 = vunpack.c.h.b16 %v495
    %v2631 = vunpack.c.l.b16 %v496
    %v2632 = vunpack.c.h.b16 %v496
    %v2633 = vunpack.c.l.b16 %v497
    %v2634 = vunpack.c.h.b16 %v497
    %v2635 = vunpack.c.l.b16 %v498
    %v2636 = vunpack.c.h.b16 %v498
    %v2637 = vunpack.c.l.b16 %v499
    %v2638 = vunpack.c.h.b16 %v499
    %v2639 = vunpack.c.l.b16 %v500
    %v2640 = vunpack.c.h.b16 %v500
    %v2641 = vunpack.c.l.b16 %v501
    %v2642 = vunpack.c.h.b16 %v501
    %v2643 = vunpack.c.l.b16 %v502
    %v2644 = vunpack.c.h.b16 %v502
    %v2645 = vunpack.c.l.b16 %v503
    %v2646 = vunpack.c.h.b16 %v503
    %v2647 = vunpack.c.l.b16 %v504
    %v2648 = vunpack.c.h.b16 %v504
    %v2649 = vunpack.c.l.b16 %v505
    %v2650 = vunpack.c.h.b16 %v505
    %v2651 = vunpack.c.l.b16 %v506
    %v2652 = vunpack.c.h.b16 %v506
    %v2653 = vunpack.c.l.b16 %v507
    %v2654 = vunpack.c.h.b16 %v507
    %v2655 = vunpack.c.l.b16 %v508
    %v2656 = vunpack.c.h.b16 %v508
    %v2657 = vunpack.c.l.b16 %v509
    %v2658 = vunpack.c.h.b16 %v509
    %v2659 = vunpack.c.l.b16 %v510
    %v2660 = vunpack.c.h.b16 %v510
    %v2661 = vunpack.c.l.b16 %v511
    %v2662 = vunpack.c.h.b16 %v511
    %v2663 = vunpack.c.l.b16 %v512
    %v2664 = vunpack.c.h.b16 %v512
    %v2665 = vunpack.c.l.b16 %v513
    %v2666 = vunpack.c.h.b16 %v513
    %v2667 = vunpack.c.l.b16 %v514
    %v2668 = vunpack.c.h.b16 %v514
    %v2669 = vunpack.c.l.b16 %v515
    %v2670 = vunpack.c.h.b16 %v515
    %v2671 = vunpack.c.l.b16 %v516
    %v2672 = vunpack.c.h.b16 %v516
    %v2673 = vunpack.c.l.b16 %v517
    %v2674 = vunpack.c.h.b16 %v517
    %v2675 = vunpack.c.l.b16 %v518
    %v2676 = vunpack.c.h.b16 %v518
    %v2677 = vunpack.c.l.b16 %v519
    %v2678 = vunpack.c.h.b16 %v519
    %v2679 = vunpack.c.l.b16 %v520
    %v2680 = vunpack.c.h.b16 %v520
    %v2681 = vunpack.c.l.b16 %v521
    %v2682 = vunpack.c.h.b16 %v521
    %v2683 = vunpack.c.l.b16 %v522
    %v2684 = vunpack.c.h.b16 %v522
    %v2685 = vunpack.c.l.b16 %v523
    %v2686 = vunpack.c.h.b16 %v523
    %v2687 = vunpack.c.l.b16 %v524
    %v2688 = vunpack.c.h.b16 %v524
    %v2689 = vunpack.c.l.b16 %v525
    %v2690 = vunpack.c.h.b16 %v525
    %v2691 = vunpack.c.l.b16 %v526
    %v2692 = vunpack.c.h.b16 %v526
    %v2693 = vunpack.c.l.b16 %v527
    %v2694 = vunpack.c.h.b16 %v527
    %v2695 = vunpack.c.l.b16 %v528
    %v2696 = vunpack.c.h.b16 %v528
    %v2697 = vunpack.c.l.b16 %v529
    %v2698 = vunpack.c.h.b16 %v529
    %v2699 = vunpack.c.l.b16 %v530
    %v2700 = vunpack.c.h.b16 %v530
    %v2701 = vunpack.c.l.b16 %v531
    %v2702 = vunpack.c.h.b16 %v531
    %v2703 = vunpack.c.l.b16 %v532
    %v2704 = vunpack.c.h.b16 %v532
    %v2705 = vunpack.c.l.b16 %v533
    %v2706 = vunpack.c.h.b16 %v533
    %v2707 = vunpack.c.l.b16 %v534
    %v2708 = vunpack.c.h.b16 %v534
    %v2709 = vunpack.c.l.b16 %v535
    %v2710 = vunpack.c.h.b16 %v535
    %v2711 = vunpack.c.l.b16 %v536
    %v2712 = vunpack.c.h.b16 %v536
    %v2713 = vunpack.c.l.b16 %v537
    %v2714 = vunpack.c.h.b16 %v537
    %v2715 = vunpack.c.l.b16 %v538
    %v2716 = vunpack.c.h.b16 %v538
    %v2717 = vunpack.c.l.b16 %v539
    %v2718 = vunpack.c.h.b16 %v539
    %v2719 = vunpack.c.l.b16 %v540
    %v2720 = vunpack.c.h.b16 %v540
    %v2721 = vunpack.c.l.b16 %v541
    %v2722 = vunpack.c.h.b16 %v541
    %v2723 = vunpack.c.l.b16 %v542
    %v2724 = vunpack.c.h.b16 %v542
    %v2725 = vunpack.c.l.b16 %v543
    %v2726 = vunpack.c.h.b16 %v543
    %v2727 = vunpack.c.l.b16 %v544
    %v2728 = vunpack.c.h.b16 %v544
    %v2729 = vunpack.c.l.b16 %v545
    %v2730 = vunpack.c.h.b16 %v545
    %v2731 = vunpack.c.l.b16 %v546
    %v2732 = vunpack.c.h.b16 %v546
    %v2733 = vunpack.c.l.b16 %v547
    %v2734 = vunpack.c.h.b16 %v547
    %v2735 = vunpack.c.l.b16 %v548
    %v2736 = vunpack.c.h.b16 %v548
    %v2737 = vunpack.c.l.b16 %v549
    %v2738 = vunpack.c.h.b16 %v549
    %v2739 = vunpack.c.l.b16 %v550
    %v2740 = vunpack.c.h.b16 %v550
    %v2741 = vunpack.c.l.b16 %v551
    %v2742 = vunpack.c.h.b16 %v551
    %v2743 = vunpack.c.l.b16 %v552
    %v2744 = vunpack.c.h.b16 %v552
    %v2745 = vunpack.c.l.b16 %v553
    %v2746 = vunpack.c.h.b16 %v553
    %v2747 = vunpack.c.l.b16 %v554
    %v2748 = vunpack.c.h.b16 %v554
    %v2749 = vunpack.c.l.b16 %v555
    %v2750 = vunpack.c.h.b16 %v555
    %v2751 = vunpack.c.l.b16 %v556
    %v2752 = vunpack.c.h.b16 %v556
    %v2753 = vunpack.c.l.b16 %v557
    %v2754 = vunpack.c.h.b16 %v557
    %v2755 = vunpack.c.l.b16 %v558
    %v2756 = vunpack.c.h.b16 %v558
    %v2757 = vunpack.c.l.b16 %v559
    %v2758 = vunpack.c.h.b16 %v559
    %v2759 = vunpack.c.l.b16 %v560
    %v2760 = vunpack.c.h.b16 %v560
    %v2761 = vunpack.c.l.b16 %v561
    %v2762 = vunpack.c.h.b16 %v561
    %v2763 = vunpack.c.l.b16 %v562
    %v2764 = vunpack.c.h.b16 %v562
    %v2765 = vunpack.c.l.b16 %v563
    %v2766 = vunpack.c.h.b16 %v563
    %v2767 = vunpack.c.l.b16 %v564
    %v2768 = vunpack.c.h.b16 %v564
    %v2769 = vunpack.c.l.b16 %v565
    %v2770 = vunpack.c.h.b16 %v565
    %v2771 = vunpack.c.l.b16 %v566
    %v2772 = vunpack.c.h.b16 %v566
    %v2773 = vunpack.c.l.b16 %v567
    %v2774 = vunpack.c.h.b16 %v567
    %v2775 = vunpack.c.l.b16 %v568
    %v2776 = vunpack.c.h.b16 %v568
    %v2777 = vunpack.c.l.b16 %v569
    %v2778 = vunpack.c.h.b16 %v569
    %v2779 = vunpack.c.l.b16 %v570
    %v2780 = vunpack.c.h.b16 %v570
    %v2781 = vunpack.c.l.b16 %v571
    %v2782 = vunpack.c.h.b16 %v571
    %v2783 = vunpack.c.l.b16 %v572
    %v2784 = vunpack.c.h.b16 %v572
    %v2785 = vunpack.c.l.b16 %v573
    %v2786 = vunpack.c.h.b16 %v573
    %v2787 = vunpack.c.l.b16 %v574
    %v2788 = vunpack.c.h.b16 %v574
    %v2789 = vunpack.c.l.b16 %v575
    %v2790 = vunpack.c.h.b16 %v575
    %v2791 = vunpack.c.l.b16 %v576
    %v2792 = vunpack.c.h.b16 %v576
    %v2793 = vunpack.c.l.b16 %v577
    %v2794 = vunpack.c.h.b16 %v577
    %v2795 = vunpack.c.l.b16 %v578
    %v2796 = vunpack.c.h.b16 %v578
    %v2797 = vunpack.c.l.b16 %v579
    %v2798 = vunpack.c.h.b16 %v579
    %v2799 = vunpack.c.l.b16 %v580
    %v2800 = vunpack.c.h.b16 %v580
    %v2801 = vunpack.c.l.b16 %v581
    %v2802 = vunpack.c.h.b16 %v581
    %v2803 = vunpack.c.l.b16 %v582
    %v2804 = vunpack.c.h.b16 %v582
    %v2805 = vunpack.c.l.b16 %v583
    %v2806 = vunpack.c.h.b16 %v583
    %v2807 = vunpack.c.l.b16 %v584
    %v2808 = vunpack.c.h.b16 %v584
    %v2809 = vunpack.c.l.b16 %v585
    %v2810 = vunpack.c.h.b16 %v585
    %v2811 = vunpack.c.l.b16 %v586
    %v2812 = vunpack.c.h.b16 %v586
    %v2813 = vunpack.c.l.b16 %v587
    %v2814 = vunpack.c.h.b16 %v587
    %v2815 = vunpack.c.l.b16 %v588
    %v2816 = vunpack.c.h.b16 %v588
    %v2817 = vunpack.c.l.b16 %v589
    %v2818 = vunpack.c.h.b16 %v589
    %v2819 = vunpack.c.l.b16 %v590
    %v2820 = vunpack.c.h.b16 %v590
    %v2821 = vunpack.c.l.b16 %v591
    %v2822 = vunpack.c.h.b16 %v591
    %v2823 = vunpack.c.l.b16 %v592
    %v2824 = vunpack.c.h.b16 %v592
    %v2825 = vunpack.c.l.b16 %v593
    %v2826 = vunpack.c.h.b16 %v593
    %v2827 = vunpack.c.l.b16 %v594
    %v2828 = vunpack.c.h.b16 %v594
    %v2829 = vunpack.c.l.b16 %v595
    %v2830 = vunpack.c.h.b16 %v595
    %v2831 = vunpack.c.l.b16 %v596
    %v2832 = vunpack.c.h.b16 %v596
    %v2833 = vunpack.c.l.b16 %v597
    %v2834 = vunpack.c.h.b16 %v597
    %v2835 = vunpack.c.l.b16 %v598
    %v2836 = vunpack.c.h.b16 %v598
    %v2837 = vunpack.c.l.b16 %v599
    %v2838 = vunpack.c.h.b16 %v599
    %v2839 = vunpack.c.l.b16 %v600
    %v2840 = vunpack.c.h.b16 %v600
    %v2841 = vunpack.c.l.b16 %v601
    %v2842 = vunpack.c.h.b16 %v601
    %v2843 = vunpack.c.l.b16 %v602
    %v2844 = vunpack.c.h.b16 %v602
    %v2845 = vunpack.c.l.b16 %v603
    %v2846 = vunpack.c.h.b16 %v603
    %v2847 = vunpack.c.l.b16 %v604
    %v2848 = vunpack.c.h.b16 %v604
    %v2849 = vunpack.c.l.b16 %v605
    %v2850 = vunpack.c.h.b16 %v605
    %v2851 = vunpack.c.l.b16 %v606
    %v2852 = vunpack.c.h.b16 %v606
    %v2853 = vunpack.c.l.b16 %v607
    %v2854 = vunpack.c.h.b16 %v607
    %v2855 = vunpack.c.l.b16 %v608
    %v2856 = vunpack.c.h.b16 %v608
    %v2857 = vunpack.c.l.b16 %v609
    %v2858 = vunpack.c.h.b16 %v609
    %v2859 = vunpack.c.l.b16 %v610
    %v2860 = vunpack.c.h.b16 %v610
    %v2861 = vunpack.c.l.b16 %v611
    %v2862 = vunpack.c.h.b16 %v611
    %v2863 = vunpack.c.l.b16 %v612
    %v2864 = vunpack.c.h.b16 %v612
    %v2865 = vunpack.c.l.b16 %v613
    %v2866 = vunpack.c.h.b16 %v613
    %v2867 = vunpack.c.l.b16 %v614
    %v2868 = vunpack.c.h.b16 %v614
    %v2869 = vunpack.c.l.b16 %v615
    %v2870 = vunpack.c.h.b16 %v615
    %v2871 = vunpack.c.l.b16 %v616
    %v2872 = vunpack.c.h.b16 %v616
    %v2873 = vunpack.c.l.b16 %v617
    %v2874 = vunpack.c.h.b16 %v617
    %v2875 = vunpack.c.l.b16 %v618
    %v2876 = vunpack.c.h.b16 %v618
    %v2877 = vunpack.c.l.b16 %v619
    %v2878 = vunpack.c.h.b16 %v619
    %v2879 = vunpack.c.l.b16 %v620
    %v2880 = vunpack.c.h.b16 %v620
    %v2881 = vunpack.c.l.b16 %v621
    %v2882 = vunpack.c.h.b16 %v621
    %v2883 = vunpack.c.l.b16 %v622
    %v2884 = vunpack.c.h.b16 %v622
    %v2885 = vunpack.c.l.b16 %v623
    %v2886 = vunpack.c.h.b16 %v623
    %v2887 = vunpack.c.l.b16 %v624
    %v2888 = vunpack.c.h.b16 %v624
    %v2889 = vunpack.c.l.b16 %v625
    %v2890 = vunpack.c.h.b16 %v625
    %v2891 = vunpack.c.l.b16 %v626
    %v2892 = vunpack.c.h.b16 %v626
    %v2893 = vunpack.c.l.b16 %v627
    %v2894 = vunpack.c.h.b16 %v627
    %v2895 = vunpack.c.l.b16 %v628
    %v2896 = vunpack.c.h.b16 %v628
    %v2897 = vunpack.c.l.b16 %v629
    %v2898 = vunpack.c.h.b16 %v629
    %v2899 = vunpack.c.l.b16 %v630
    %v2900 = vunpack.c.h.b16 %v630
    %v2901 = vunpack.c.l.b16 %v631
    %v2902 = vunpack.c.h.b16 %v631
    %v2903 = vunpack.c.l.b16 %v632
    %v2904 = vunpack.c.h.b16 %v632
    %v2905 = vunpack.c.l.b16 %v633
    %v2906 = vunpack.c.h.b16 %v633
    %v2907 = vunpack.c.l.b16 %v634
    %v2908 = vunpack.c.h.b16 %v634
    %v2909 = vunpack.c.l.b16 %v635
    %v2910 = vunpack.c.h.b16 %v635
    %v2911 = vunpack.c.l.b16 %v636
    %v2912 = vunpack.c.h.b16 %v636
    %v2913 = vunpack.c.l.b16 %v637
    %v2914 = vunpack.c.h.b16 %v637
    %v2915 = vunpack.c.l.b16 %v638
    %v2916 = vunpack.c.h.b16 %v638
    %v2917 = vunpack.c.l.b16 %v639
    %v2918 = vunpack.c.h.b16 %v639
    %v2919 = vunpack.c.l.b16 %v640
    %v2920 = vunpack.c.h.b16 %v640
    %v2921 = vunpack.c.l.b16 %v641
    %v2922 = vunpack.c.h.b16 %v641
    %v2923 = vunpack.c.l.b16 %v642
    %v2924 = vunpack.c.h.b16 %v642
    %v2925 = vunpack.c.l.b16 %v643
    %v2926 = vunpack.c.h.b16 %v643
    %v2927 = vunpack.c.l.b16 %v644
    %v2928 = vunpack.c.h.b16 %v644
    %v2929 = vunpack.c.l.b16 %v645
    %v2930 = vunpack.c.h.b16 %v645
    %v2931 = vunpack.c.l.b16 %v646
    %v2932 = vunpack.c.h.b16 %v646
    %v2933 = vunpack.c.l.b16 %v647
    %v2934 = vunpack.c.h.b16 %v647
    %v2935 = vunpack.c.l.b16 %v648
    %v2936 = vunpack.c.h.b16 %v648
    %v2937 = vunpack.c.l.b16 %v649
    %v2938 = vunpack.c.h.b16 %v649
    %v2939 = vunpack.c.l.b16 %v650
    %v2940 = vunpack.c.h.b16 %v650
    %v2941 = vunpack.c.l.b16 %v651
    %v2942 = vunpack.c.h.b16 %v651
    %v2943 = vunpack.c.l.b16 %v652
    %v2944 = vunpack.c.h.b16 %v652
    %v2945 = vunpack.c.l.b16 %v653
    %v2946 = vunpack.c.h.b16 %v653
    %v2947 = vunpack.c.l.b16 %v654
    %v2948 = vunpack.c.h.b16 %v654
    %v2949 = vunpack.c.l.b16 %v655
    %v2950 = vunpack.c.h.b16 %v655
    %v2951 = vunpack.c.l.b16 %v656
    %v2952 = vunpack.c.h.b16 %v656
    %v2953 = vunpack.c.l.b16 %v657
    %v2954 = vunpack.c.h.b16 %v657
    %v2955 = vunpack.c.l.b16 %v658
    %v2956 = vunpack.c.h.b16 %v658
    %v2957 = vunpack.c.l.b16 %v659
    %v2958 = vunpack.c.h.b16 %v659
    %v2959 = vunpack.c.l.b16 %v660
    %v2960 = vunpack.c.h.b16 %v660
    %v2961 = vunpack.c.l.b16 %v661
    %v2962 = vunpack.c.h.b16 %v661
    %v2963 = vunpack.c.l.b16 %v662
    %v2964 = vunpack.c.h.b16 %v662
    %v2965 = vunpack.c.l.b16 %v663
    %v2966 = vunpack.c.h.b16 %v663
    %v2967 = vunpack.c.l.b16 %v664
    %v2968 = vunpack.c.h.b16 %v664
    %v2969 = vunpack.c.l.b16 %v665
    %v2970 = vunpack.c.h.b16 %v665
    %v2971 = vunpack.c.l.b16 %v666
    %v2972 = vunpack.c.h.b16 %v666
    %v2973 = vunpack.c.l.b16 %v667
    %v2974 = vunpack.c.h.b16 %v667
    %v2975 = vunpack.c.l.b16 %v668
    %v2976 = vunpack.c.h.b16 %v668
    %v2977 = vunpack.c.l.b16 %v669
    %v2978 = vunpack.c.h.b16 %v669
    %v2979 = vunpack.c.l.b16 %v670
    %v2980 = vunpack.c.h.b16 %v670
    %v2981 = vunpack.c.l.b16 %v671
    %v2982 = vunpack.c.h.b16 %v671
    %v2983 = vunpack.c.l.b16 %v672
    %v2984 = vunpack.c.h.b16 %v672
    %v2985 = vunpack.c.l.b16 %v673
    %v2986 = vunpack.c.h.b16 %v673
    %v2987 = vunpack.c.l.b16 %v674
    %v2988 = vunpack.c.h.b16 %v674
    %v2989 = vunpack.c.l.b16 %v675
    %v2990 = vunpack.c.h.b16 %v675
    %v2991 = vunpack.c.l.b16 %v676
    %v2992 = vunpack.c.h.b16 %v676
    %v2993 = vunpack.c.l.b16 %v677
    %v2994 = vunpack.c.h.b16 %v677
    %v2995 = vunpack.c.l.b16 %v678
    %v2996 = vunpack.c.h.b16 %v678
    %v2997 = vunpack.c.l.b16 %v679
    %v2998 = vunpack.c.h.b16 %v679
    %v2999 = vunpack.c.l.b16 %v680
    %v3000 = vunpack.c.h.b16 %v680
    %v3001 = vunpack.c.l.b16 %v681
    %v3002 = vunpack.c.h.b16 %v681
    %v3003 = vunpack.c.l.b16 %v682
    %v3004 = vunpack.c.h.b16 %v682
    %v3005 = vunpack.c.l.b16 %v683
    %v3006 = vunpack.c.h.b16 %v683
    %v3007 = vunpack.c.l.b16 %v684
    %v3008 = vunpack.c.h.b16 %v684
    %v3009 = vunpack.c.l.b16 %v685
    %v3010 = vunpack.c.h.b16 %v685
    %v3011 = vunpack.c.l.b16 %v686
    %v3012 = vunpack.c.h.b16 %v686
    %v3013 = vunpack.c.l.b16 %v687
    %v3014 = vunpack.c.h.b16 %v687
    %v3015 = vunpack.c.l.b16 %v688
    %v3016 = vunpack.c.h.b16 %v688
    %v3017 = vunpack.c.l.b16 %v689
    %v3018 = vunpack.c.h.b16 %v689
    %v3019 = vunpack.c.l.b16 %v690
    %v3020 = vunpack.c.h.b16 %v690
    %v3021 = vunpack.c.l.b16 %v691
    %v3022 = vunpack.c.h.b16 %v691
    %v3023 = vunpack.c.l.b16 %v692
    %v3024 = vunpack.c.h.b16 %v692
    %v3025 = vunpack.c.l.b16 %v693
    %v3026 = vunpack.c.h.b16 %v693
    %v3027 = vunpack.c.l.b16 %v694
    %v3028 = vunpack.c.h.b16 %v694
    %v3029 = vunpack.c.l.b16 %v695
    %v3030 = vunpack.c.h.b16 %v695
    %v3031 = vunpack.c.l.b16 %v696
    %v3032 = vunpack.c.h.b16 %v696
    %v3033 = vunpack.c.l.b16 %v697
    %v3034 = vunpack.c.h.b16 %v697
    %v3035 = vunpack.c.l.b16 %v698
    %v3036 = vunpack.c.h.b16 %v698
    %v3037 = vunpack.c.l.b16 %v699
    %v3038 = vunpack.c.h.b16 %v699
    %v3039 = vunpack.c.l.b16 %v700
    %v3040 = vunpack.c.h.b16 %v700
    %v3041 = vunpack.c.l.b16 %v701
    %v3042 = vunpack.c.h.b16 %v701
    %v3043 = vunpack.c.l.b16 %v702
    %v3044 = vunpack.c.h.b16 %v702
    %v3045 = vunpack.c.l.b16 %v703
    %v3046 = vunpack.c.h.b16 %v703
    %v3047 = vunpack.c.l.b16 %v704
    %v3048 = vunpack.c.h.b16 %v704
    %v3049 = vunpack.c.l.b16 %v705
    %v3050 = vunpack.c.h.b16 %v705
    %v3051 = vunpack.c.l.b16 %v706
    %v3052 = vunpack.c.h.b16 %v706
    %v3053 = vunpack.c.l.b16 %v707
    %v3054 = vunpack.c.h.b16 %v707
    %v3055 = vunpack.c.l.b16 %v708
    %v3056 = vunpack.c.h.b16 %v708
    %v3057 = vunpack.c.l.b16 %v709
    %v3058 = vunpack.c.h.b16 %v709
    %v3059 = vunpack.c.l.b16 %v710
    %v3060 = vunpack.c.h.b16 %v710
    %v3061 = vunpack.c.l.b16 %v711
    %v3062 = vunpack.c.h.b16 %v711
    %v3063 = vunpack.c.l.b16 %v712
    %v3064 = vunpack.c.h.b16 %v712
    %v3065 = vunpack.c.l.b16 %v713
    %v3066 = vunpack.c.h.b16 %v713
    %v3067 = vunpack.c.l.b16 %v714
    %v3068 = vunpack.c.h.b16 %v714
    %v3069 = vunpack.c.l.b16 %v715
    %v3070 = vunpack.c.h.b16 %v715
    %v3071 = vunpack.c.l.b16 %v716
    %v3072 = vunpack.c.h.b16 %v716
    %v3073 = vunpack.c.l.b16 %v717
    %v3074 = vunpack.c.h.b16 %v717
    %v3075 = vunpack.c.l.b16 %v718
    %v3076 = vunpack.c.h.b16 %v718
    %v3077 = vunpack.c.l.b16 %v719
    %v3078 = vunpack.c.h.b16 %v719
    %v3079 = vunpack.c.l.b16 %v720
    %v3080 = vunpack.c.h.b16 %v720
    %v3081 = vunpack.c.l.b16 %v721
    %v3082 = vunpack.c.h.b16 %v721
    %v3083 = vunpack.c.l.b16 %v722
    %v3084 = vunpack.c.h.b16 %v722
    %v3085 = vunpack.c.l.b16 %v723
    %v3086 = vunpack.c.h.b16 %v723
    %v3087 = vunpack.c.l.b16 %v724
    %v3088 = vunpack.c.h.b16 %v724
    %v3089 = vunpack.c.l.b16 %v725
    %v3090 = vunpack.c.h.b16 %v725
    %v3091 = vunpack.c.l.b16 %v726
    %v3092 = vunpack.c.h.b16 %v726
    %v3093 = vunpack.c.l.b16 %v727
    %v3094 = vunpack.c.h.b16 %v727
    %v3095 = vunpack.c.l.b16 %v728
    %v3096 = vunpack.c.h.b16 %v728
    %v3097 = vunpack.c.l.b16 %v729
    %v3098 = vunpack.c.h.b16 %v729
    %v3099 = vunpack.c.l.b16 %v730
    %v3100 = vunpack.c.h.b16 %v730
    %v3101 = vunpack.c.l.b16 %v731
    %v3102 = vunpack.c.h.b16 %v731
    %v3103 = vunpack.c.l.b16 %v732
    %v3104 = vunpack.c.h.b16 %v732
    %v3105 = vunpack.c.l.b16 %v733
    %v3106 = vunpack.c.h.b16 %v733
    %v3107 = vunpack.c.l.b16 %v734
    %v3108 = vunpack.c.h.b16 %v734
    %v3109 = vunpack.c.l.b16 %v735
    %v3110 = vunpack.c.h.b16 %v735
    %v3111 = vunpack.c.l.b16 %v736
    %v3112 = vunpack.c.h.b16 %v736
    %v3113 = vunpack.c.l.b16 %v737
    %v3114 = vunpack.c.h.b16 %v737
    %v3115 = vunpack.c.l.b16 %v738
    %v3116 = vunpack.c.h.b16 %v738
    %v3117 = vunpack.c.l.b16 %v739
    %v3118 = vunpack.c.h.b16 %v739
    %v3119 = vunpack.c.l.b16 %v740
    %v3120 = vunpack.c.h.b16 %v740
    %v3121 = vunpack.c.l.b16 %v741
    %v3122 = vunpack.c.h.b16 %v741
    %v3123 = vunpack.c.l.b16 %v742
    %v3124 = vunpack.c.h.b16 %v742
    %v3125 = vunpack.c.l.b16 %v743
    %v3126 = vunpack.c.h.b16 %v743
    %v3127 = vunpack.c.l.b16 %v744
    %v3128 = vunpack.c.h.b16 %v744
    %v3129 = vunpack.c.l.b16 %v745
    %v3130 = vunpack.c.h.b16 %v745
    %v3131 = vunpack.c.l.b16 %v746
    %v3132 = vunpack.c.h.b16 %v746
    %v3133 = vunpack.c.l.b16 %v747
    %v3134 = vunpack.c.h.b16 %v747
    %v3135 = vunpack.c.l.b16 %v748
    %v3136 = vunpack.c.h.b16 %v748
    %v3137 = vunpack.c.l.b16 %v749
    %v3138 = vunpack.c.h.b16 %v749
    %v3139 = vunpack.c.l.b16 %v750
    %v3140 = vunpack.c.h.b16 %v750
    %v3141 = vunpack.c.l.b16 %v751
    %v3142 = vunpack.c.h.b16 %v751
    %v3143 = vunpack.c.l.b16 %v752
    %v3144 = vunpack.c.h.b16 %v752
    %v3145 = vunpack.c.l.b16 %v753
    %v3146 = vunpack.c.h.b16 %v753
    %v3147 = vunpack.c.l.b16 %v754
    %v3148 = vunpack.c.h.b16 %v754
    %v3149 = vunpack.c.l.b16 %v755
    %v3150 = vunpack.c.h.b16 %v755
    %v3151 = vunpack.c.l.b16 %v756
    %v3152 = vunpack.c.h.b16 %v756
    %v3153 = vunpack.c.l.b16 %v757
    %v3154 = vunpack.c.h.b16 %v757
    %v3155 = vunpack.c.l.b16 %v758
    %v3156 = vunpack.c.h.b16 %v758
    %v3157 = vunpack.c.l.b16 %v759
    %v3158 = vunpack.c.h.b16 %v759
    %v3159 = vunpack.c.l.b16 %v760
    %v3160 = vunpack.c.h.b16 %v760
    %v3161 = vunpack.c.l.b16 %v761
    %v3162 = vunpack.c.h.b16 %v761
    %v3163 = vunpack.c.l.b16 %v762
    %v3164 = vunpack.c.h.b16 %v762
    %v3165 = vunpack.c.l.b16 %v763
    %v3166 = vunpack.c.h.b16 %v763
    %v3167 = vunpack.c.l.b16 %v764
    %v3168 = vunpack.c.h.b16 %v764
    %v3169 = vunpack.c.l.b16 %v765
    %v3170 = vunpack.c.h.b16 %v765
    %v3171 = vunpack.c.l.b16 %v766
    %v3172 = vunpack.c.h.b16 %v766
    %v3173 = vunpack.c.l.b16 %v767
    %v3174 = vunpack.c.h.b16 %v767
    %v3175 = vunpack.c.l.b16 %v768
    %v3176 = vunpack.c.h.b16 %v768
    %v3177 = vunpack.c.l.b16 %v769
    %v3178 = vunpack.c.h.b16 %v769
    %v3179 = vunpack.c.l.b16 %v770
    %v3180 = vunpack.c.h.b16 %v770
    %v3181 = vunpack.c.l.b16 %v771
    %v3182 = vunpack.c.h.b16 %v771
    %v3183 = vunpack.c.l.b16 %v772
    %v3184 = vunpack.c.h.b16 %v772
    %v3185 = vunpack.c.l.b16 %v773
    %v3186 = vunpack.c.h.b16 %v773
    %v3187 = vunpack.c.l.b16 %v774
    %v3188 = vunpack.c.h.b16 %v774
    %v3189 = vunpack.c.l.b16 %v775
    %v3190 = vunpack.c.h.b16 %v775
    %v3191 = vunpack.c.l.b16 %v776
    %v3192 = vunpack.c.h.b16 %v776
    %v3193 = vunpack.c.l.b16 %v777
    %v3194 = vunpack.c.h.b16 %v777
    %v3195 = vunpack.c.l.b16 %v778
    %v3196 = vunpack.c.h.b16 %v778
    %v3197 = vunpack.c.l.b16 %v779
    %v3198 = vunpack.c.h.b16 %v779
    %v3199 = vunpack.c.l.b16 %v780
    %v3200 = vunpack.c.h.b16 %v780
    %v3201 = vunpack.c.l.b16 %v781
    %v3202 = vunpack.c.h.b16 %v781
    %v3203 = vunpack.c.l.b16 %v782
    %v3204 = vunpack.c.h.b16 %v782
    %v3205 = vunpack.c.l.b16 %v783
    %v3206 = vunpack.c.h.b16 %v783
    %v3207 = vunpack.c.l.b16 %v784
    %v3208 = vunpack.c.h.b16 %v784
    %v3209 = vunpack.c.l.b16 %v785
    %v3210 = vunpack.c.h.b16 %v785
    %v3211 = vunpack.c.l.b16 %v786
    %v3212 = vunpack.c.h.b16 %v786
    %v3213 = vunpack.c.l.b16 %v787
    %v3214 = vunpack.c.h.b16 %v787
    %v3215 = vunpack.c.l.b16 %v788
    %v3216 = vunpack.c.h.b16 %v788
    %v3217 = vunpack.c.l.b16 %v789
    %v3218 = vunpack.c.h.b16 %v789
    %v3219 = vunpack.c.l.b16 %v790
    %v3220 = vunpack.c.h.b16 %v790
    %v3221 = vunpack.c.l.b16 %v791
    %v3222 = vunpack.c.h.b16 %v791
    %v3223 = vunpack.c.l.b16 %v792
    %v3224 = vunpack.c.h.b16 %v792
    %v3225 = vunpack.c.l.b16 %v793
    %v3226 = vunpack.c.h.b16 %v793
    %v3227 = vunpack.c.l.b16 %v794
    %v3228 = vunpack.c.h.b16 %v794
    %v3229 = vunpack.c.l.b16 %v795
    %v3230 = vunpack.c.h.b16 %v795
    %v3231 = vunpack.c.l.b16 %v796
    %v3232 = vunpack.c.h.b16 %v796
    %v3233 = vunpack.c.l.b16 %v797
    %v3234 = vunpack.c.h.b16 %v797
    %v3235 = vunpack.c.l.b16 %v798
    %v3236 = vunpack.c.h.b16 %v798
    %v3237 = vunpack.c.l.b16 %v799
    %v3238 = vunpack.c.h.b16 %v799
    %v3239 = vunpack.c.l.b16 %v800
    %v3240 = vunpack.c.h.b16 %v800
    %v3241 = vunpack.c.l.b16 %v801
    %v3242 = vunpack.c.h.b16 %v801
    %v3243 = vunpack.c.l.b16 %v802
    %v3244 = vunpack.c.h.b16 %v802
    %v3245 = vunpack.c.l.b16 %v803
    %v3246 = vunpack.c.h.b16 %v803
    %v3247 = vunpack.c.l.b16 %v804
    %v3248 = vunpack.c.h.b16 %v804
    %v3249 = vunpack.c.l.b16 %v805
    %v3250 = vunpack.c.h.b16 %v805
    %v3251 = vunpack.c.l.b16 %v806
    %v3252 = vunpack.c.h.b16 %v806
    %v3253 = vunpack.c.l.b16 %v807
    %v3254 = vunpack.c.h.b16 %v807
    %v3255 = vunpack.c.l.b16 %v808
    %v3256 = vunpack.c.h.b16 %v808
    %v3257 = vunpack.c.l.b16 %v809
    %v3258 = vunpack.c.h.b16 %v809
    %v3259 = vunpack.c.l.b16 %v810
    %v3260 = vunpack.c.h.b16 %v810
    %v3261 = vunpack.c.l.b16 %v811
    %v3262 = vunpack.c.h.b16 %v811
    %v3263 = vunpack.c.l.b16 %v812
    %v3264 = vunpack.c.h.b16 %v812
    %v3265 = vunpack.c.l.b16 %v813
    %v3266 = vunpack.c.h.b16 %v813
    %v3267 = vunpack.c.l.b16 %v814
    %v3268 = vunpack.c.h.b16 %v814
    %v3269 = vunpack.c.l.b16 %v815
    %v3270 = vunpack.c.h.b16 %v815
    %v3271 = vunpack.c.l.b16 %v816
    %v3272 = vunpack.c.h.b16 %v816
    %v3273 = vunpack.c.l.b16 %v817
    %v3274 = vunpack.c.h.b16 %v817
    %v3275 = vunpack.c.l.b16 %v818
    %v3276 = vunpack.c.h.b16 %v818
    %v3277 = vunpack.c.l.b16 %v819
    %v3278 = vunpack.c.h.b16 %v819
    %v3279 = vunpack.c.l.b16 %v820
    %v3280 = vunpack.c.h.b16 %v820
    %v3281 = vunpack.c.l.b16 %v821
    %v3282 = vunpack.c.h.b16 %v821
    %v3283 = vunpack.c.l.b16 %v822
    %v3284 = vunpack.c.h.b16 %v822
    %v3285 = vunpack.c.l.b16 %v823
    %v3286 = vunpack.c.h.b16 %v823
    %v3287 = vunpack.c.l.b16 %v824
    %v3288 = vunpack.c.h.b16 %v824
    %v3289 = vunpack.c.l.b16 %v825
    %v3290 = vunpack.c.h.b16 %v825
    %v3291 = vunpack.c.l.b16 %v826
    %v3292 = vunpack.c.h.b16 %v826
    %v3293 = vunpack.c.l.b16 %v827
    %v3294 = vunpack.c.h.b16 %v827
    %v3295 = vunpack.c.l.b16 %v828
    %v3296 = vunpack.c.h.b16 %v828
    %v3297 = vunpack.c.l.b16 %v829
    %v3298 = vunpack.c.h.b16 %v829
    %v3299 = vunpack.c.l.b16 %v830
    %v3300 = vunpack.c.h.b16 %v830
    %v3301 = vunpack.c.l.b16 %v831
    %v3302 = vunpack.c.h.b16 %v831
    %v3303 = vunpack.c.l.b16 %v832
    %v3304 = vunpack.c.h.b16 %v832
    %v3305 = vunpack.c.l.b16 %v833
    %v3306 = vunpack.c.h.b16 %v833
    %v3307 = vunpack.c.l.b16 %v834
    %v3308 = vunpack.c.h.b16 %v834
    %v3309 = vunpack.c.l.b16 %v835
    %v3310 = vunpack.c.h.b16 %v835
    %v3311 = vunpack.c.l.b16 %v836
    %v3312 = vunpack.c.h.b16 %v836
    %v3313 = vunpack.c.l.b16 %v837
    %v3314 = vunpack.c.h.b16 %v837
    %v3315 = vunpack.c.l.b16 %v838
    %v3316 = vunpack.c.h.b16 %v838
    %v3317 = vunpack.c.l.b16 %v839
    %v3318 = vunpack.c.h.b16 %v839
    %v3319 = vunpack.c.l.b16 %v840
    %v3320 = vunpack.c.h.b16 %v840
    %v3321 = vunpack.c.l.b16 %v841
    %v3322 = vunpack.c.h.b16 %v841
    %v3323 = vunpack.c.l.b16 %v842
    %v3324 = vunpack.c.h.b16 %v842
    %v3325 = vunpack.c.l.b16 %v843
    %v3326 = vunpack.c.h.b16 %v843
    %v3327 = vunpack.c.l.b16 %v844
    %v3328 = vunpack.c.h.b16 %v844
    %v3329 = vunpack.c.l.b16 %v845
    %v3330 = vunpack.c.h.b16 %v845
    %v3331 = vunpack.c.l.b16 %v846
    %v3332 = vunpack.c.h.b16 %v846
    %v3333 = vunpack.c.l.b16 %v847
    %v3334 = vunpack.c.h.b16 %v847
    %v3335 = vunpack.c.l.b16 %v848
    %v3336 = vunpack.c.h.b16 %v848
    %v3337 = vunpack.c.l.b16 %v849
    %v3338 = vunpack.c.h.b16 %v849
    %v3339 = vunpack.c.l.b16 %v850
    %v3340 = vunpack.c.h.b16 %v850
    %v3341 = vunpack.c.l.b16 %v851
    %v3342 = vunpack.c.h.b16 %v851
    %v3343 = vunpack.c.l.b16 %v852
    %v3344 = vunpack.c.h.b16 %v852
    %v3345 = vunpack.c.l.b16 %v853
    %v3346 = vunpack.c.h.b16 %v853
    %v3347 = vunpack.c.l.b16 %v854
    %v3348 = vunpack.c.h.b16 %v854
    %v3349 = vunpack.c.l.b16 %v855
    %v3350 = vunpack.c.h.b16 %v855
    %v3351 = vunpack.c.l.b16 %v856
    %v3352 = vunpack.c.h.b16 %v856
    %v3353 = vunpack.c.l.b16 %v857
    %v3354 = vunpack.c.h.b16 %v857
    %v3355 = vunpack.c.l.b16 %v858
    %v3356 = vunpack.c.h.b16 %v858
    %v3357 = vunpack.c.l.b16 %v859
    %v3358 = vunpack.c.h.b16 %v859
    %v3359 = vunpack.c.l.b16 %v860
    %v3360 = vunpack.c.h.b16 %v860
    %v3361 = vunpack.c.l.b16 %v861
    %v3362 = vunpack.c.h.b16 %v861
    %v3363 = vunpack.c.l.b16 %v862
    %v3364 = vunpack.c.h.b16 %v862
    %v3365 = vunpack.c.l.b16 %v863
    %v3366 = vunpack.c.h.b16 %v863
    %v3367 = vunpack.c.l.b16 %v864
    %v3368 = vunpack.c.h.b16 %v864
    %v3369 = vunpack.c.l.b16 %v865
    %v3370 = vunpack.c.h.b16 %v865
    %v3371 = vunpack.c.l.b16 %v866
    %v3372 = vunpack.c.h.b16 %v866
    %v3373 = vunpack.c.l.b16 %v867
    %v3374 = vunpack.c.h.b16 %v867
    %v3375 = vunpack.c.l.b16 %v868
    %v3376 = vunpack.c.h.b16 %v868
    %v3377 = vunpack.c.l.b16 %v869
    %v3378 = vunpack.c.h.b16 %v869
    %v3379 = vunpack.c.l.b16 %v870
    %v3380 = vunpack.c.h.b16 %v870
    %v3381 = vunpack.c.l.b16 %v871
    %v3382 = vunpack.c.h.b16 %v871
    %v3383 = vunpack.c.l.b16 %v872
    %v3384 = vunpack.c.h.b16 %v872
    %v3385 = vunpack.c.l.b16 %v873
    %v3386 = vunpack.c.h.b16 %v873
    %v3387 = vunpack.c.l.b16 %v874
    %v3388 = vunpack.c.h.b16 %v874
    %v3389 = vunpack.c.l.b16 %v875
    %v3390 = vunpack.c.h.b16 %v875
    %v3391 = vunpack.c.l.b16 %v876
    %v3392 = vunpack.c.h.b16 %v876
    %v3393 = vunpack.c.l.b16 %v877
    %v3394 = vunpack.c.h.b16 %v877
    %v3395 = vunpack.c.l.b16 %v878
    %v3396 = vunpack.c.h.b16 %v878
    %v3397 = vunpack.c.l.b16 %v879
    %v3398 = vunpack.c.h.b16 %v879
    %v3399 = vunpack.c.l.b16 %v880
    %v3400 = vunpack.c.h.b16 %v880
    %v3401 = vunpack.c.l.b16 %v881
    %v3402 = vunpack.c.h.b16 %v881
    %v3403 = vunpack.c.l.b16 %v882
    %v3404 = vunpack.c.h.b16 %v882
    %v3405 = vunpack.c.l.b16 %v883
    %v3406 = vunpack.c.h.b16 %v883
    %v3407 = vunpack.c.l.b16 %v884
    %v3408 = vunpack.c.h.b16 %v884
    %v3409 = vunpack.c.l.b16 %v885
    %v3410 = vunpack.c.h.b16 %v885
    %v3411 = vunpack.c.l.b16 %v886
    %v3412 = vunpack.c.h.b16 %v886
    %v3413 = vunpack.c.l.b16 %v887
    %v3414 = vunpack.c.h.b16 %v887
    %v3415 = vunpack.c.l.b16 %v888
    %v3416 = vunpack.c.h.b16 %v888
    %v3417 = vunpack.c.l.b16 %v889
    %v3418 = vunpack.c.h.b16 %v889
    %v3419 = vunpack.c.l.b16 %v890
    %v3420 = vunpack.c.h.b16 %v890
    %v3421 = vunpack.c.l.b16 %v891
    %v3422 = vunpack.c.h.b16 %v891
    %v3423 = vunpack.c.l.b16 %v892
    %v3424 = vunpack.c.h.b16 %v892
    %v3425 = vunpack.c.l.b16 %v893
    %v3426 = vunpack.c.h.b16 %v893
    %v3427 = vunpack.c.l.b16 %v894
    %v3428 = vunpack.c.h.b16 %v894
    %v3429 = vunpack.c.l.b16 %v895
    %v3430 = vunpack.c.h.b16 %v895
    %v3431 = vunpack.c.l.b16 %v896
    %v3432 = vunpack.c.h.b16 %v896
    %v3433 = vunpack.c.l.b16 %v897
    %v3434 = vunpack.c.h.b16 %v897
    %v3435 = vunpack.c.l.b16 %v898
    %v3436 = vunpack.c.h.b16 %v898
    %v3437 = vunpack.c.l.b16 %v899
    %v3438 = vunpack.c.h.b16 %v899
    %v3439 = vunpack.c.l.b16 %v900
    %v3440 = vunpack.c.h.b16 %v900
    %v3441 = vunpack.c.l.b16 %v901
    %v3442 = vunpack.c.h.b16 %v901
    %v3443 = vunpack.c.l.b16 %v902
    %v3444 = vunpack.c.h.b16 %v902
    %v3445 = vunpack.c.l.b16 %v903
    %v3446 = vunpack.c.h.b16 %v903
    %v3447 = vunpack.c.l.b16 %v904
    %v3448 = vunpack.c.h.b16 %v904
    %v3449 = vunpack.c.l.b16 %v905
    %v3450 = vunpack.c.h.b16 %v905
    %v3451 = vunpack.c.l.b16 %v906
    %v3452 = vunpack.c.h.b16 %v906
    %v3453 = vunpack.c.l.b16 %v907
    %v3454 = vunpack.c.h.b16 %v907
    %v3455 = vunpack.c.l.b16 %v908
    %v3456 = vunpack.c.h.b16 %v908
    %v3457 = vunpack.c.l.b16 %v909
    %v3458 = vunpack.c.h.b16 %v909
    %v3459 = vunpack.c.l.b16 %v910
    %v3460 = vunpack.c.h.b16 %v910
    %v3461 = vunpack.c.l.b16 %v911
    %v3462 = vunpack.c.h.b16 %v911
    %v3463 = vunpack.c.l.b16 %v912
    %v3464 = vunpack.c.h.b16 %v912
    %v3465 = vunpack.c.l.b16 %v913
    %v3466 = vunpack.c.h.b16 %v913
    %v3467 = vunpack.c.l.b16 %v914
    %v3468 = vunpack.c.h.b16 %v914
    %v3469 = vunpack.c.l.b16 %v915
    %v3470 = vunpack.c.h.b16 %v915
    %v3471 = vunpack.c.l.b16 %v916
    %v3472 = vunpack.c.h.b16 %v916
    %v3473 = vunpack.c.l.b16 %v917
    %v3474 = vunpack.c.h.b16 %v917
    %v3475 = vunpack.c.l.b16 %v918
    %v3476 = vunpack.c.h.b16 %v918
    %v3477 = vunpack.c.l.b16 %v919
    %v3478 = vunpack.c.h.b16 %v919
    %v3479 = vunpack.c.l.b16 %v920
    %v3480 = vunpack.c.h.b16 %v920
    %v3481 = vunpack.c.l.b16 %v921
    %v3482 = vunpack.c.h.b16 %v921
    %v3483 = vunpack.c.l.b16 %v922
    %v3484 = vunpack.c.h.b16 %v922
    %v3485 = vunpack.c.l.b16 %v923
    %v3486 = vunpack.c.h.b16 %v923
    %v3487 = vunpack.c.l.b16 %v924
    %v3488 = vunpack.c.h.b16 %v924
    %v3489 = vunpack.c.l.b16 %v925
    %v3490 = vunpack.c.h.b16 %v925
    %v3491 = vunpack.c.l.b16 %v926
    %v3492 = vunpack.c.h.b16 %v926
    %v3493 = vunpack.c.l.b16 %v927
    %v3494 = vunpack.c.h.b16 %v927
    %v3495 = vunpack.c.l.b16 %v928
    %v3496 = vunpack.c.h.b16 %v928
    %v3497 = vunpack.c.l.b16 %v929
    %v3498 = vunpack.c.h.b16 %v929
    %v3499 = vunpack.c.l.b16 %v930
    %v3500 = vunpack.c.h.b16 %v930
    %v3501 = vunpack.c.l.b16 %v931
    %v3502 = vunpack.c.h.b16 %v931
    %v3503 = vunpack.c.l.b16 %v932
    %v3504 = vunpack.c.h.b16 %v932
    %v3505 = vunpack.c.l.b16 %v933
    %v3506 = vunpack.c.h.b16 %v933
    %v3507 = vunpack.c.l.b16 %v934
    %v3508 = vunpack.c.h.b16 %v934
    %v3509 = vunpack.c.l.b16 %v935
    %v3510 = vunpack.c.h.b16 %v935
    %v3511 = vunpack.c.l.b16 %v936
    %v3512 = vunpack.c.h.b16 %v936
    %v3513 = vunpack.c.l.b16 %v937
    %v3514 = vunpack.c.h.b16 %v937
    %v3515 = vunpack.c.l.b16 %v938
    %v3516 = vunpack.c.h.b16 %v938
    %v3517 = vunpack.c.l.b16 %v939
    %v3518 = vunpack.c.h.b16 %v939
    %v3519 = vunpack.c.l.b16 %v940
    %v3520 = vunpack.c.h.b16 %v940
    %v3521 = vunpack.c.l.b16 %v941
    %v3522 = vunpack.c.h.b16 %v941
    %v3523 = vunpack.c.l.b16 %v942
    %v3524 = vunpack.c.h.b16 %v942
    %v3525 = vunpack.c.l.b16 %v943
    %v3526 = vunpack.c.h.b16 %v943
    %v3527 = vunpack.c.l.b16 %v944
    %v3528 = vunpack.c.h.b16 %v944
    %v3529 = vunpack.c.l.b16 %v945
    %v3530 = vunpack.c.h.b16 %v945
    %v3531 = vunpack.c.l.b16 %v946
    %v3532 = vunpack.c.h.b16 %v946
    %v3533 = vunpack.c.l.b16 %v947
    %v3534 = vunpack.c.h.b16 %v947
    %v3535 = vunpack.c.l.b16 %v948
    %v3536 = vunpack.c.h.b16 %v948
    %v3537 = vunpack.c.l.b16 %v949
    %v3538 = vunpack.c.h.b16 %v949
    %v3539 = vunpack.c.l.b16 %v950
    %v3540 = vunpack.c.h.b16 %v950
    %v3541 = vunpack.c.l.b16 %v951
    %v3542 = vunpack.c.h.b16 %v951
    %v3543 = vunpack.c.l.b16 %v952
    %v3544 = vunpack.c.h.b16 %v952
    %v3545 = vunpack.c.l.b16 %v953
    %v3546 = vunpack.c.h.b16 %v953
    %v3547 = vunpack.c.l.b16 %v954
    %v3548 = vunpack.c.h.b16 %v954
    %v3549 = vunpack.c.l.b16 %v955
    %v3550 = vunpack.c.h.b16 %v955
    %v3551 = vunpack.c.l.b16 %v956
    %v3552 = vunpack.c.h.b16 %v956
    %v3553 = vunpack.c.l.b16 %v957
    %v3554 = vunpack.c.h.b16 %v957
    %v3555 = vunpack.c.l.b16 %v958
    %v3556 = vunpack.c.h.b16 %v958
    %v3557 = vunpack.c.l.b16 %v959
    %v3558 = vunpack.c.h.b16 %v959
    %v3559 = vunpack.c.l.b16 %v960
    %v3560 = vunpack.c.h.b16 %v960
    %v3561 = vunpack.c.l.b16 %v961
    %v3562 = vunpack.c.h.b16 %v961
    %v3563 = vunpack.c.l.b16 %v962
    %v3564 = vunpack.c.h.b16 %v962
    %v3565 = vunpack.c.l.b16 %v963
    %v3566 = vunpack.c.h.b16 %v963
    %v3567 = vunpack.c.l.b16 %v964
    %v3568 = vunpack.c.h.b16 %v964
    %v3569 = vunpack.c.l.b16 %v965
    %v3570 = vunpack.c.h.b16 %v965
    %v3571 = vunpack.c.l.b16 %v966
    %v3572 = vunpack.c.h.b16 %v966
    %v3573 = vunpack.c.l.b16 %v967
    %v3574 = vunpack.c.h.b16 %v967
    %v3575 = vunpack.c.l.b16 %v968
    %v3576 = vunpack.c.h.b16 %v968
    %v3577 = vunpack.c.l.b16 %v969
    %v3578 = vunpack.c.h.b16 %v969
    %v3579 = vunpack.c.l.b16 %v970
    %v3580 = vunpack.c.h.b16 %v970
    %v3581 = vunpack.c.l.b16 %v971
    %v3582 = vunpack.c.h.b16 %v971
    %v3583 = vunpack.c.l.b16 %v972
    %v3584 = vunpack.c.h.b16 %v972
    %v3585 = vunpack.c.l.b16 %v973
    %v3586 = vunpack.c.h.b16 %v973
    %v3587 = vunpack.c.l.b16 %v974
    %v3588 = vunpack.c.h.b16 %v974
    %v3589 = vunpack.c.l.b16 %v975
    %v3590 = vunpack.c.h.b16 %v975
    %v3591 = vunpack.c.l.b16 %v976
    %v3592 = vunpack.c.h.b16 %v976
    %v3593 = vunpack.c.l.b16 %v977
    %v3594 = vunpack.c.h.b16 %v977
    %v3595 = vunpack.c.l.b16 %v978
    %v3596 = vunpack.c.h.b16 %v978
    %v3597 = vunpack.c.l.b16 %v979
    %v3598 = vunpack.c.h.b16 %v979
    %v3599 = vunpack.c.l.b16 %v980
    %v3600 = vunpack.c.h.b16 %v980
    %v3601 = vunpack.c.l.b16 %v981
    %v3602 = vunpack.c.h.b16 %v981
    %v3603 = vunpack.c.l.b16 %v982
    %v3604 = vunpack.c.h.b16 %v982
    %v3605 = vunpack.c.l.b16 %v983
    %v3606 = vunpack.c.h.b16 %v983
    %v3607 = vunpack.c.l.b16 %v984
    %v3608 = vunpack.c.h.b16 %v984
    %v3609 = vunpack.c.l.b16 %v985
    %v3610 = vunpack.c.h.b16 %v985
    %v3611 = vunpack.c.l.b16 %v986
    %v3612 = vunpack.c.h.b16 %v986
    %v3613 = vunpack.c.l.b16 %v987
    %v3614 = vunpack.c.h.b16 %v987
    %v3615 = vunpack.c.l.b16 %v988
    %v3616 = vunpack.c.h.b16 %v988
    %v3617 = vunpack.c.l.b16 %v989
    %v3618 = vunpack.c.h.b16 %v989
    %v3619 = vunpack.c.l.b16 %v990
    %v3620 = vunpack.c.h.b16 %v990
    %v3621 = vunpack.c.l.b16 %v991
    %v3622 = vunpack.c.h.b16 %v991
    %v3623 = vunpack.c.l.b16 %v992
    %v3624 = vunpack.c.h.b16 %v992
    %v3625 = vunpack.c.l.b16 %v993
    %v3626 = vunpack.c.h.b16 %v993
    %v3627 = vunpack.c.l.b16 %v994
    %v3628 = vunpack.c.h.b16 %v994
    %v3629 = vunpack.c.l.b16 %v995
    %v3630 = vunpack.c.h.b16 %v995
    %v3631 = vunpack.c.l.b16 %v996
    %v3632 = vunpack.c.h.b16 %v996
    %v3633 = vunpack.c.l.b16 %v997
    %v3634 = vunpack.c.h.b16 %v997
    %v3635 = vunpack.c.l.b16 %v998
    %v3636 = vunpack.c.h.b16 %v998
    %v3637 = vunpack.c.l.b16 %v999
    %v3638 = vunpack.c.h.b16 %v999
    %v3639 = vunpack.c.l.b16 %v1000
    %v3640 = vunpack.c.h.b16 %v1000
    %v3641 = vunpack.c.l.b16 %v1001
    %v3642 = vunpack.c.h.b16 %v1001
    %v3643 = vunpack.c.l.b16 %v1002
    %v3644 = vunpack.c.h.b16 %v1002
    %v3645 = vunpack.c.l.b16 %v1003
    %v3646 = vunpack.c.h.b16 %v1003
    %v3647 = vunpack.c.l.b16 %v1004
    %v3648 = vunpack.c.h.b16 %v1004
    %v3649 = vunpack.c.l.b16 %v1005
    %v3650 = vunpack.c.h.b16 %v1005
    %v3651 = vunpack.c.l.b16 %v1006
    %v3652 = vunpack.c.h.b16 %v1006
    %v3653 = vunpack.c.l.b16 %v1007
    %v3654 = vunpack.c.h.b16 %v1007
    %v3655 = vunpack.c.l.b16 %v1008
    %v3656 = vunpack.c.h.b16 %v1008
    %v3657 = vunpack.c.l.b16 %v1009
    %v3658 = vunpack.c.h.b16 %v1009
    %v3659 = vunpack.c.l.b16 %v1010
    %v3660 = vunpack.c.h.b16 %v1010
    %v3661 = vunpack.c.l.b16 %v1011
    %v3662 = vunpack.c.h.b16 %v1011
    %v3663 = vunpack.c.l.b16 %v1012
    %v3664 = vunpack.c.h.b16 %v1012
    %v3665 = vunpack.c.l.b16 %v1013
    %v3666 = vunpack.c.h.b16 %v1013
    %v3667 = vunpack.c.l.b16 %v1014
    %v3668 = vunpack.c.h.b16 %v1014
    %v3669 = vunpack.c.l.b16 %v1015
    %v3670 = vunpack.c.h.b16 %v1015
    %v3671 = vunpack.c.l.b16 %v1016
    %v3672 = vunpack.c.h.b16 %v1016
    %v3673 = vunpack.c.l.b16 %v1017
    %v3674 = vunpack.c.h.b16 %v1017
    %v3675 = vunpack.c.l.b16 %v1018
    %v3676 = vunpack.c.h.b16 %v1018
    %v3677 = vunpack.c.l.b16 %v1019
    %v3678 = vunpack.c.h.b16 %v1019
    %v3679 = vunpack.c.l.b16 %v1020
    %v3680 = vunpack.c.h.b16 %v1020
    %v3681 = vunpack.c.l.b16 %v1021
    %v3682 = vunpack.c.h.b16 %v1021
    %v3683 = vunpack.c.l.b16 %v1022
    %v3684 = vunpack.c.h.b16 %v1022
    %v3685 = vunpack.c.l.b16 %v1023
    %v3686 = vunpack.c.h.b16 %v1023
    %v3687 = vunpack.c.l.b16 %v1024
    %v3688 = vunpack.c.h.b16 %v1024
    %v3689 = vunpack.c.l.b16 %v1025
    %v3690 = vunpack.c.h.b16 %v1025
    %v3691 = vunpack.c.l.b16 %v1026
    %v3692 = vunpack.c.h.b16 %v1026
    %v3693 = vunpack.c.l.b16 %v1027
    %v3694 = vunpack.c.h.b16 %v1027
    %v3695 = vunpack.c.l.b16 %v1028
    %v3696 = vunpack.c.h.b16 %v1028
    %v3697 = vunpack.c.l.b16 %v1029
    %v3698 = vunpack.c.h.b16 %v1029
    %v3699 = vunpack.c.l.b16 %v1030
    %v3700 = vunpack.c.h.b16 %v1030
    %v3701 = vunpack.c.l.b16 %v1031
    %v3702 = vunpack.c.h.b16 %v1031
    %v3703 = vunpack.c.l.b16 %v1032
    %v3704 = vunpack.c.h.b16 %v1032
    %v3705 = vunpack.c.l.b16 %v1033
    %v3706 = vunpack.c.h.b16 %v1033
    %v3707 = vunpack.c.l.b16 %v1034
    %v3708 = vunpack.c.h.b16 %v1034
    %v3709 = vunpack.c.l.b16 %v1035
    %v3710 = vunpack.c.h.b16 %v1035
    %v3711 = vunpack.c.l.b16 %v1036
    %v3712 = vunpack.c.h.b16 %v1036
    %v3713 = vunpack.c.l.b16 %v1037
    %v3714 = vunpack.c.h.b16 %v1037
    %v3715 = vunpack.c.l.b16 %v1038
    %v3716 = vunpack.c.h.b16 %v1038
    %v3717 = vunpack.c.l.b16 %v1039
    %v3718 = vunpack.c.h.b16 %v1039
    %v3719 = vunpack.c.l.b16 %v1040
    %v3720 = vunpack.c.h.b16 %v1040
    %v3721 = vunpack.c.l.b16 %v1041
    %v3722 = vunpack.c.h.b16 %v1041
    %v3723 = vunpack.c.l.b16 %v1042
    %v3724 = vunpack.c.h.b16 %v1042
    %v3725 = vunpack.c.l.b16 %v1043
    %v3726 = vunpack.c.h.b16 %v1043
    %v3727 = vunpack.c.l.b16 %v1044
    %v3728 = vunpack.c.h.b16 %v1044
    %v3729 = vunpack.c.l.b16 %v1045
    %v3730 = vunpack.c.h.b16 %v1045
    %v3731 = vunpack.c.l.b16 %v1046
    %v3732 = vunpack.c.h.b16 %v1046
    %v3733 = vunpack.c.l.b16 %v1047
    %v3734 = vunpack.c.h.b16 %v1047
    %v3735 = vunpack.c.l.b16 %v1048
    %v3736 = vunpack.c.h.b16 %v1048
    %v3737 = vunpack.c.l.b16 %v1049
    %v3738 = vunpack.c.h.b16 %v1049
    %v3739 = vunpack.c.l.b16 %v1050
    %v3740 = vunpack.c.h.b16 %v1050
    %v3741 = vunpack.c.l.b16 %v1051
    %v3742 = vunpack.c.h.b16 %v1051
    %v3743 = vunpack.c.l.b16 %v1052
    %v3744 = vunpack.c.h.b16 %v1052
    %v3745 = vunpack.c.l.b16 %v1053
    %v3746 = vunpack.c.h.b16 %v1053
    %v3747 = vunpack.c.l.b16 %v1054
    %v3748 = vunpack.c.h.b16 %v1054
    %v3749 = vunpack.c.l.b16 %v1055
    %v3750 = vunpack.c.h.b16 %v1055
    %v3751 = vunpack.c.l.b16 %v1056
    %v3752 = vunpack.c.h.b16 %v1056
    %v3753 = vunpack.c.l.b16 %v1057
    %v3754 = vunpack.c.h.b16 %v1057
    %v3755 = vunpack.c.l.b16 %v1058
    %v3756 = vunpack.c.h.b16 %v1058
    %v3757 = vunpack.c.l.b16 %v1059
    %v3758 = vunpack.c.h.b16 %v1059
    %v3759 = vunpack.c.l.b16 %v1060
    %v3760 = vunpack.c.h.b16 %v1060
    %v3761 = vunpack.c.l.b16 %v1061
    %v3762 = vunpack.c.h.b16 %v1061
    %v3763 = vunpack.c.l.b16 %v1062
    %v3764 = vunpack.c.h.b16 %v1062
    %v3765 = vunpack.c.l.b16 %v1063
    %v3766 = vunpack.c.h.b16 %v1063
    %v3767 = vunpack.c.l.b16 %v1064
    %v3768 = vunpack.c.h.b16 %v1064
    %v3769 = vunpack.c.l.b16 %v1065
    %v3770 = vunpack.c.h.b16 %v1065
    %v3771 = vunpack.c.l.b16 %v1066
    %v3772 = vunpack.c.h.b16 %v1066
    %v3773 = vunpack.c.l.b16 %v1067
    %v3774 = vunpack.c.h.b16 %v1067
    %v3775 = vunpack.c.l.b16 %v1068
    %v3776 = vunpack.c.h.b16 %v1068
    %v3777 = vunpack.c.l.b16 %v1069
    %v3778 = vunpack.c.h.b16 %v1069
    %v3779 = vunpack.c.l.b16 %v1070
    %v3780 = vunpack.c.h.b16 %v1070
    %v3781 = vunpack.c.l.b16 %v1071
    %v3782 = vunpack.c.h.b16 %v1071
    %v3783 = vunpack.c.l.b16 %v1072
    %v3784 = vunpack.c.h.b16 %v1072
    %v3785 = vunpack.c.l.b16 %v1073
    %v3786 = vunpack.c.h.b16 %v1073
    %v3787 = vunpack.c.l.b16 %v1074
    %v3788 = vunpack.c.h.b16 %v1074
    %v3789 = vunpack.c.l.b16 %v1075
    %v3790 = vunpack.c.h.b16 %v1075
    %v3791 = vunpack.c.l.b16 %v1076
    %v3792 = vunpack.c.h.b16 %v1076
    %v3793 = vunpack.c.l.b16 %v1077
    %v3794 = vunpack.c.h.b16 %v1077
    %v3795 = vunpack.c.l.b16 %v1078
    %v3796 = vunpack.c.h.b16 %v1078
    %v3797 = vunpack.c.l.b16 %v1079
    %v3798 = vunpack.c.h.b16 %v1079
    %v3799 = vunpack.c.l.b16 %v1080
    %v3800 = vunpack.c.h.b16 %v1080
    %v3801 = vunpack.c.l.b16 %v1081
    %v3802 = vunpack.c.h.b16 %v1081
    %v3803 = vunpack.c.l.b16 %v1082
    %v3804 = vunpack.c.h.b16 %v1082
    %v3805 = vunpack.c.l.b16 %v1083
    %v3806 = vunpack.c.h.b16 %v1083
    %v3807 = vunpack.c.l.b16 %v1084
    %v3808 = vunpack.c.h.b16 %v1084
    %v3809 = vunpack.c.l.b16 %v1085
    %v3810 = vunpack.c.h.b16 %v1085
    %v3811 = vunpack.c.l.b16 %v1086
    %v3812 = vunpack.c.h.b16 %v1086
    %v3813 = vunpack.c.l.b16 %v1087
    %v3814 = vunpack.c.h.b16 %v1087
    %v3815 = vunpack.c.l.b16 %v1088
    %v3816 = vunpack.c.h.b16 %v1088
    %v3817 = vunpack.c.l.b16 %v1089
    %v3818 = vunpack.c.h.b16 %v1089
    %v3819 = vunpack.c.l.b16 %v1090
    %v3820 = vunpack.c.h.b16 %v1090
    %v3821 = vunpack.c.l.b16 %v1091
    %v3822 = vunpack.c.h.b16 %v1091
    %v3823 = vunpack.c.l.b16 %v1092
    %v3824 = vunpack.c.h.b16 %v1092
    %v3825 = vunpack.c.l.b16 %v1093
    %v3826 = vunpack.c.h.b16 %v1093
    %v3827 = vunpack.c.l.b16 %v1094
    %v3828 = vunpack.c.h.b16 %v1094
    %v3829 = vunpack.c.l.b16 %v1095
    %v3830 = vunpack.c.h.b16 %v1095
    %v3831 = vunpack.c.l.b16 %v1096
    %v3832 = vunpack.c.h.b16 %v1096
    %v3833 = vunpack.c.l.b16 %v1097
    %v3834 = vunpack.c.h.b16 %v1097
    %v3835 = vunpack.c.l.b16 %v1098
    %v3836 = vunpack.c.h.b16 %v1098
    %v3837 = vunpack.c.l.b16 %v1099
    %v3838 = vunpack.c.h.b16 %v1099
    %v3839 = vunpack.c.l.b16 %v1100
    %v3840 = vunpack.c.h.b16 %v1100
    %v3841 = vunpack.c.l.b16 %v1101
    %v3842 = vunpack.c.h.b16 %v1101
    %v3843 = vunpack.c.l.b16 %v1102
    %v3844 = vunpack.c.h.b16 %v1102
    %v3845 = vunpack.c.l.b16 %v1103
    %v3846 = vunpack.c.h.b16 %v1103
    %v3847 = vunpack.c.l.b16 %v1104
    %v3848 = vunpack.c.h.b16 %v1104
    %v3849 = vunpack.c.l.b16 %v1105
    %v3850 = vunpack.c.h.b16 %v1105
    %v3851 = vunpack.c.l.b16 %v1106
    %v3852 = vunpack.c.h.b16 %v1106
    %v3853 = vunpack.c.l.b16 %v1107
    %v3854 = vunpack.c.h.b16 %v1107
    %v3855 = vunpack.c.l.b16 %v1108
    %v3856 = vunpack.c.h.b16 %v1108
    %v3857 = vunpack.c.l.b16 %v1109
    %v3858 = vunpack.c.h.b16 %v1109
    %v3859 = vunpack.c.l.b16 %v1110
    %v3860 = vunpack.c.h.b16 %v1110
    %v3861 = vunpack.c.l.b16 %v1111
    %v3862 = vunpack.c.h.b16 %v1111
    %v3863 = vunpack.c.l.b16 %v1112
    %v3864 = vunpack.c.h.b16 %v1112
    %v3865 = vunpack.c.l.b16 %v1113
    %v3866 = vunpack.c.h.b16 %v1113
    %v3867 = vunpack.c.l.b16 %v1114
    %v3868 = vunpack.c.h.b16 %v1114
    %v3869 = vunpack.c.l.b16 %v1115
    %v3870 = vunpack.c.h.b16 %v1115
    %v3871 = vunpack.c.l.b16 %v1116
    %v3872 = vunpack.c.h.b16 %v1116
    %v3873 = vunpack.c.l.b16 %v1117
    %v3874 = vunpack.c.h.b16 %v1117
    %v3875 = vunpack.c.l.b16 %v1118
    %v3876 = vunpack.c.h.b16 %v1118
    %v3877 = vunpack.c.l.b16 %v1119
    %v3878 = vunpack.c.h.b16 %v1119
    %v3879 = vunpack.c.l.b16 %v1120
    %v3880 = vunpack.c.h.b16 %v1120
    %v3881 = vunpack.c.l.b16 %v1121
    %v3882 = vunpack.c.h.b16 %v1121
    %v3883 = vunpack.c.l.b16 %v1122
    %v3884 = vunpack.c.h.b16 %v1122
    %v3885 = vunpack.c.l.b16 %v1123
    %v3886 = vunpack.c.h.b16 %v1123
    %v3887 = vunpack.c.l.b16 %v1124
    %v3888 = vunpack.c.h.b16 %v1124
    %v3889 = vunpack.c.l.b16 %v1125
    %v3890 = vunpack.c.h.b16 %v1125
    %v3891 = vunpack.c.l.b16 %v1126
    %v3892 = vunpack.c.h.b16 %v1126
    %v3893 = vunpack.c.l.b16 %v1127
    %v3894 = vunpack.c.h.b16 %v1127
    %v3895 = vunpack.c.l.b16 %v1128
    %v3896 = vunpack.c.h.b16 %v1128
    %v3897 = vunpack.c.l.b16 %v1129
    %v3898 = vunpack.c.h.b16 %v1129
    %v3899 = vunpack.c.l.b16 %v1130
    %v3900 = vunpack.c.h.b16 %v1130
    %v3901 = vunpack.c.l.b16 %v1131
    %v3902 = vunpack.c.h.b16 %v1131
    %v3903 = vunpack.c.l.b16 %v1132
    %v3904 = vunpack.c.h.b16 %v1132
    %v3905 = vunpack.c.l.b16 %v1133
    %v3906 = vunpack.c.h.b16 %v1133
    %v3907 = vunpack.c.l.b16 %v1134
    %v3908 = vunpack.c.h.b16 %v1134
    %v3909 = vunpack.c.l.b16 %v1135
    %v3910 = vunpack.c.h.b16 %v1135
    %v3911 = vunpack.c.l.b16 %v1136
    %v3912 = vunpack.c.h.b16 %v1136
    %v3913 = vunpack.c.l.b16 %v1137
    %v3914 = vunpack.c.h.b16 %v1137
    %v3915 = vunpack.c.l.b16 %v1138
    %v3916 = vunpack.c.h.b16 %v1138
    %v3917 = vunpack.c.l.b16 %v1139
    %v3918 = vunpack.c.h.b16 %v1139
    %v3919 = vunpack.c.l.b16 %v1140
    %v3920 = vunpack.c.h.b16 %v1140
    %v3921 = vunpack.c.l.b16 %v1141
    %v3922 = vunpack.c.h.b16 %v1141
    %v3923 = vunpack.c.l.b16 %v1142
    %v3924 = vunpack.c.h.b16 %v1142
    %v3925 = vunpack.c.l.b16 %v1143
    %v3926 = vunpack.c.h.b16 %v1143
    %v3927 = vunpack.c.l.b16 %v1144
    %v3928 = vunpack.c.h.b16 %v1144
    %v3929 = vunpack.c.l.b16 %v1145
    %v3930 = vunpack.c.h.b16 %v1145
    %v3931 = vunpack.c.l.b16 %v1146
    %v3932 = vunpack.c.h.b16 %v1146
    %v3933 = vunpack.c.l.b16 %v1147
    %v3934 = vunpack.c.h.b16 %v1147
    %v3935 = vunpack.c.l.b16 %v1148
    %v3936 = vunpack.c.h.b16 %v1148
    %v3937 = vunpack.c.l.b16 %v1149
    %v3938 = vunpack.c.h.b16 %v1149
    %v3939 = vunpack.c.l.b16 %v1150
    %v3940 = vunpack.c.h.b16 %v1150
    %v3941 = vunpack.c.l.b16 %v1151
    %v3942 = vunpack.c.h.b16 %v1151
    %v3943 = vunpack.c.l.b16 %v1152
    %v3944 = vunpack.c.h.b16 %v1152
    %v3945 = vunpack.c.l.b16 %v1153
    %v3946 = vunpack.c.h.b16 %v1153
    %v3947 = vunpack.c.l.b16 %v1154
    %v3948 = vunpack.c.h.b16 %v1154
    %v3949 = vunpack.c.l.b16 %v1155
    %v3950 = vunpack.c.h.b16 %v1155
    %v3951 = vunpack.c.l.b16 %v1156
    %v3952 = vunpack.c.h.b16 %v1156
    %v3953 = vunpack.c.l.b16 %v1157
    %v3954 = vunpack.c.h.b16 %v1157
    %v3955 = vunpack.c.l.b16 %v1158
    %v3956 = vunpack.c.h.b16 %v1158
    %v3957 = vunpack.c.l.b16 %v1159
    %v3958 = vunpack.c.h.b16 %v1159
    %v3959 = vunpack.c.l.b16 %v1160
    %v3960 = vunpack.c.h.b16 %v1160
    %v3961 = vunpack.c.l.b16 %v1161
    %v3962 = vunpack.c.h.b16 %v1161
    %v3963 = vunpack.c.l.b16 %v1162
    %v3964 = vunpack.c.h.b16 %v1162
    %v3965 = vunpack.c.l.b16 %v1163
    %v3966 = vunpack.c.h.b16 %v1163
    %v3967 = vunpack.c.l.b16 %v1164
    %v3968 = vunpack.c.h.b16 %v1164
    %v3969 = vunpack.c.l.b16 %v1165
    %v3970 = vunpack.c.h.b16 %v1165
    %v3971 = vunpack.c.l.b16 %v1166
    %v3972 = vunpack.c.h.b16 %v1166
    %v3973 = vunpack.c.l.b16 %v1167
    %v3974 = vunpack.c.h.b16 %v1167
    %v3975 = vunpack.c.l.b16 %v1168
    %v3976 = vunpack.c.h.b16 %v1168
    %v3977 = vunpack.c.l.b16 %v1169
    %v3978 = vunpack.c.h.b16 %v1169
    %v3979 = vunpack.c.l.b16 %v1170
    %v3980 = vunpack.c.h.b16 %v1170
    %v3981 = vunpack.c.l.b16 %v1171
    %v3982 = vunpack.c.h.b16 %v1171
    %v3983 = vunpack.c.l.b16 %v1172
    %v3984 = vunpack.c.h.b16 %v1172
    %v3985 = vunpack.c.l.b16 %v1173
    %v3986 = vunpack.c.h.b16 %v1173
    %v3987 = vunpack.c.l.b16 %v1174
    %v3988 = vunpack.c.h.b16 %v1174
    %v3989 = vunpack.c.l.b16 %v1175
    %v3990 = vunpack.c.h.b16 %v1175
    %v3991 = vunpack.c.l.b16 %v1176
    %v3992 = vunpack.c.h.b16 %v1176
    %v3993 = vunpack.c.l.b16 %v1177
    %v3994 = vunpack.c.h.b16 %v1177
    %v3995 = vunpack.c.l.b16 %v1178
    %v3996 = vunpack.c.h.b16 %v1178
    %v3997 = vunpack.c.l.b16 %v1179
    %v3998 = vunpack.c.h.b16 %v1179
    %v3999 = vunpack.c.l.b16 %v1180
    %v4000 = vunpack.c.h.b16 %v1180
    %v4001 = vunpack.c.l.b16 %v1181
    %v4002 = vunpack.c.h.b16 %v1181
    %v4003 = vunpack.c.l.b16 %v1182
    %v4004 = vunpack.c.h.b16 %v1182
    %v4005 = vunpack.c.l.b16 %v1183
    %v4006 = vunpack.c.h.b16 %v1183
    %v4007 = vunpack.c.l.b16 %v1184
    %v4008 = vunpack.c.h.b16 %v1184
    %v4009 = vunpack.c.l.b16 %v1185
    %v4010 = vunpack.c.h.b16 %v1185
    %v4011 = vunpack.c.l.b16 %v1186
    %v4012 = vunpack.c.h.b16 %v1186
    %v4013 = vunpack.c.l.b16 %v1187
    %v4014 = vunpack.c.h.b16 %v1187
    %v4015 = vunpack.c.l.b16 %v1188
    %v4016 = vunpack.c.h.b16 %v1188
    %v4017 = vunpack.c.l.b16 %v1189
    %v4018 = vunpack.c.h.b16 %v1189
    %v4019 = vunpack.c.l.b16 %v1190
    %v4020 = vunpack.c.h.b16 %v1190
    %v4021 = vunpack.c.l.b16 %v1191
    %v4022 = vunpack.c.h.b16 %v1191
    %v4023 = vunpack.c.l.b16 %v1192
    %v4024 = vunpack.c.h.b16 %v1192
    %v4025 = vunpack.c.l.b16 %v1193
    %v4026 = vunpack.c.h.b16 %v1193
    %v4027 = vunpack.c.l.b16 %v1194
    %v4028 = vunpack.c.h.b16 %v1194
    %v4029 = vunpack.c.l.b16 %v1195
    %v4030 = vunpack.c.h.b16 %v1195
    %v4031 = vunpack.c.l.b16 %v1196
    %v4032 = vunpack.c.h.b16 %v1196
    %v4033 = vunpack.c.l.b16 %v1197
    %v4034 = vunpack.c.h.b16 %v1197
    %v4035 = vunpack.c.l.b16 %v1198
    %v4036 = vunpack.c.h.b16 %v1198
    %v4037 = vunpack.c.l.b16 %v1199
    %v4038 = vunpack.c.h.b16 %v1199
    %v4039 = vunpack.c.l.b16 %v1200
    %v4040 = vunpack.c.h.b16 %v1200
    %v4041 = vunpack.c.l.b16 %v1201
    %v4042 = vunpack.c.h.b16 %v1201
    %v4043 = vunpack.c.l.b16 %v1202
    %v4044 = vunpack.c.h.b16 %v1202
    %v4045 = vunpack.c.l.b16 %v1203
    %v4046 = vunpack.c.h.b16 %v1203
    %v4047 = vunpack.c.l.b16 %v1204
    %v4048 = vunpack.c.h.b16 %v1204
    %v4049 = vunpack.c.l.b16 %v1205
    %v4050 = vunpack.c.h.b16 %v1205
    %v4051 = vunpack.c.l.b16 %v1206
    %v4052 = vunpack.c.h.b16 %v1206
    %v4053 = vunpack.c.l.b16 %v1207
    %v4054 = vunpack.c.h.b16 %v1207
    %v4055 = vunpack.c.l.b16 %v1208
    %v4056 = vunpack.c.h.b16 %v1208
    %v4057 = vunpack.c.l.b16 %v1209
    %v4058 = vunpack.c.h.b16 %v1209
    %v4059 = vunpack.c.l.b16 %v1210
    %v4060 = vunpack.c.h.b16 %v1210
    %v4061 = vunpack.c.l.b16 %v1211
    %v4062 = vunpack.c.h.b16 %v1211
    %v4063 = vunpack.c.l.b16 %v1212
    %v4064 = vunpack.c.h.b16 %v1212
    %v4065 = vunpack.c.l.b16 %v1213
    %v4066 = vunpack.c.h.b16 %v1213
    %v4067 = vunpack.c.l.b16 %v1214
    %v4068 = vunpack.c.h.b16 %v1214
    %v4069 = vunpack.c.l.b16 %v1215
    %v4070 = vunpack.c.h.b16 %v1215
    %v4071 = vunpack.c.l.b16 %v1216
    %v4072 = vunpack.c.h.b16 %v1216
    %v4073 = vunpack.c.l.b16 %v1217
    %v4074 = vunpack.c.h.b16 %v1217
    %v4075 = vunpack.c.l.b16 %v1218
    %v4076 = vunpack.c.h.b16 %v1218
    %v4077 = vunpack.c.l.b16 %v1219
    %v4078 = vunpack.c.h.b16 %v1219
    %v4079 = vunpack.c.l.b16 %v1220
    %v4080 = vunpack.c.h.b16 %v1220
    %v4081 = vunpack.c.l.b16 %v1221
    %v4082 = vunpack.c.h.b16 %v1221
    %v4083 = vunpack.c.l.b16 %v1222
    %v4084 = vunpack.c.h.b16 %v1222
    %v4085 = vunpack.c.l.b16 %v1223
    %v4086 = vunpack.c.h.b16 %v1223
    %v4087 = vunpack.c.l.b16 %v1224
    %v4088 = vunpack.c.h.b16 %v1224
    %v4089 = vunpack.c.l.b16 %v1225
    %v4090 = vunpack.c.h.b16 %v1225
    %v4091 = vunpack.c.l.b16 %v1226
    %v4092 = vunpack.c.h.b16 %v1226
    %v4093 = vunpack.c.l.b16 %v1227
    %v4094 = vunpack.c.h.b16 %v1227
    %v4095 = vunpack.c.l.b16 %v1228
    %v4096 = vunpack.c.h.b16 %v1228
    %v4097 = vunpack.c.l.b16 %v1229
    %v4098 = vunpack.c.h.b16 %v1229
    %v4099 = vunpack.c.l.b16 %v1230
    %v4100 = vunpack.c.h.b16 %v1230
    %v4101 = vunpack.c.l.b16 %v1231
    %v4102 = vunpack.c.h.b16 %v1231
    %v4103 = vunpack.c.l.b16 %v1232
    %v4104 = vunpack.c.h.b16 %v1232
    %v4105 = vunpack.c.l.b16 %v1233
    %v4106 = vunpack.c.h.b16 %v1233
    %v4107 = vunpack.c.l.b16 %v1234
    %v4108 = vunpack.c.h.b16 %v1234
    %v4109 = vunpack.c.l.b16 %v1235
    %v4110 = vunpack.c.h.b16 %v1235
    %v4111 = vunpack.c.l.b16 %v1236
    %v4112 = vunpack.c.h.b16 %v1236
    %v4113 = vunpack.c.l.b16 %v1237
    %v4114 = vunpack.c.h.b16 %v1237
    %v4115 = vunpack.c.l.b16 %v1238
    %v4116 = vunpack.c.h.b16 %v1238
    %v4117 = vunpack.c.l.b16 %v1239
    %v4118 = vunpack.c.h.b16 %v1239
    %v4119 = vunpack.c.l.b16 %v1240
    %v4120 = vunpack.c.h.b16 %v1240
    %v4121 = vunpack.c.l.b16 %v1241
    %v4122 = vunpack.c.h.b16 %v1241
    %v4123 = vunpack.c.l.b16 %v1242
    %v4124 = vunpack.c.h.b16 %v1242
    %v4125 = vunpack.c.l.b16 %v1243
    %v4126 = vunpack.c.h.b16 %v1243
    %v4127 = vunpack.c.l.b16 %v1244
    %v4128 = vunpack.c.h.b16 %v1244
    %v4129 = vunpack.c.l.b16 %v1245
    %v4130 = vunpack.c.h.b16 %v1245
    %v4131 = vunpack.c.l.b16 %v1246
    %v4132 = vunpack.c.h.b16 %v1246
    %v4133 = vunpack.c.l.b16 %v1247
    %v4134 = vunpack.c.h.b16 %v1247
    %v4135 = vunpack.c.l.b16 %v1248
    %v4136 = vunpack.c.h.b16 %v1248
    %v4137 = vunpack.c.l.b16 %v1249
    %v4138 = vunpack.c.h.b16 %v1249
    %v4139 = vunpack.c.l.b16 %v1250
    %v4140 = vunpack.c.h.b16 %v1250
    %v4141 = vunpack.c.l.b16 %v1251
    %v4142 = vunpack.c.h.b16 %v1251
    %v4143 = vunpack.c.l.b16 %v1252
    %v4144 = vunpack.c.h.b16 %v1252
    %v4145 = vunpack.c.l.b16 %v1253
    %v4146 = vunpack.c.h.b16 %v1253
    %v4147 = vunpack.c.l.b16 %v1254
    %v4148 = vunpack.c.h.b16 %v1254
    %v4149 = vunpack.c.l.b16 %v1255
    %v4150 = vunpack.c.h.b16 %v1255
    %v4151 = vunpack.c.l.b16 %v1256
    %v4152 = vunpack.c.h.b16 %v1256
    %v4153 = vunpack.c.l.b16 %v1257
    %v4154 = vunpack.c.h.b16 %v1257
    %v4155 = vunpack.c.l.b16 %v1258
    %v4156 = vunpack.c.h.b16 %v1258
    %v4157 = vunpack.c.l.b16 %v1259
    %v4158 = vunpack.c.h.b16 %v1259
    %v4159 = vunpack.c.l.b16 %v1260
    %v4160 = vunpack.c.h.b16 %v1260
    %v4161 = vunpack.c.l.b16 %v1261
    %v4162 = vunpack.c.h.b16 %v1261
    %v4163 = vunpack.c.l.b16 %v1262
    %v4164 = vunpack.c.h.b16 %v1262
    %v4165 = vunpack.c.l.b16 %v1263
    %v4166 = vunpack.c.h.b16 %v1263
    %v4167 = vunpack.c.l.b16 %v1264
    %v4168 = vunpack.c.h.b16 %v1264
    %v4169 = vunpack.c.l.b16 %v1265
    %v4170 = vunpack.c.h.b16 %v1265
    %v4171 = vunpack.c.l.b16 %v1266
    %v4172 = vunpack.c.h.b16 %v1266
    %v4173 = vunpack.c.l.b16 %v1267
    %v4174 = vunpack.c.h.b16 %v1267
    %v4175 = vunpack.c.l.b16 %v1268
    %v4176 = vunpack.c.h.b16 %v1268
    %v4177 = vunpack.c.l.b16 %v1269
    %v4178 = vunpack.c.h.b16 %v1269
    %v4179 = vunpack.c.l.b16 %v1270
    %v4180 = vunpack.c.h.b16 %v1270
    %v4181 = vunpack.c.l.b16 %v1271
    %v4182 = vunpack.c.h.b16 %v1271
    %v4183 = vunpack.c.l.b16 %v1272
    %v4184 = vunpack.c.h.b16 %v1272
    %v4185 = vunpack.c.l.b16 %v1273
    %v4186 = vunpack.c.h.b16 %v1273
    %v4187 = vunpack.c.l.b16 %v1274
    %v4188 = vunpack.c.h.b16 %v1274
    %v4189 = vunpack.c.l.b16 %v1275
    %v4190 = vunpack.c.h.b16 %v1275
    %v4191 = vunpack.c.l.b16 %v1276
    %v4192 = vunpack.c.h.b16 %v1276
    %v4193 = vunpack.c.l.b16 %v1277
    %v4194 = vunpack.c.h.b16 %v1277
    %v4195 = vunpack.c.l.b16 %v1278
    %v4196 = vunpack.c.h.b16 %v1278
    %v4197 = vunpack.c.l.b16 %v1279
    %v4198 = vunpack.c.h.b16 %v1279
    %v4199 = vunpack.c.l.b16 %v1280
    %v4200 = vunpack.c.h.b16 %v1280
    %v4201 = vunpack.c.l.b16 %v1281
    %v4202 = vunpack.c.h.b16 %v1281
    %v4203 = vunpack.c.l.b16 %v1282
    %v4204 = vunpack.c.h.b16 %v1282
    %v4205 = vunpack.c.l.b16 %v1283
    %v4206 = vunpack.c.h.b16 %v1283
    %v4207 = vunpack.c.l.b16 %v1284
    %v4208 = vunpack.c.h.b16 %v1284
    %v4209 = vunpack.c.l.b16 %v1285
    %v4210 = vunpack.c.h.b16 %v1285
    %v4211 = vunpack.c.l.b16 %v1286
    %v4212 = vunpack.c.h.b16 %v1286
    %v4213 = vunpack.c.l.b16 %v1287
    %v4214 = vunpack.c.h.b16 %v1287
    %v4215 = vunpack.c.l.b16 %v1288
    %v4216 = vunpack.c.h.b16 %v1288
    %v4217 = vunpack.c.l.b16 %v1289
    %v4218 = vunpack.c.h.b16 %v1289
    %v4219 = vunpack.c.l.b16 %v1290
    %v4220 = vunpack.c.h.b16 %v1290
    %v4221 = vunpack.c.l.b16 %v1291
    %v4222 = vunpack.c.h.b16 %v1291
    %v4223 = vunpack.c.l.b16 %v1292
    %v4224 = vunpack.c.h.b16 %v1292
    %v4225 = vunpack.c.l.b16 %v1293
    %v4226 = vunpack.c.h.b16 %v1293
    %v4227 = vunpack.c.l.b16 %v1294
    %v4228 = vunpack.c.h.b16 %v1294
    %v4229 = vunpack.c.l.b16 %v1295
    %v4230 = vunpack.c.h.b16 %v1295
    %v4231 = vunpack.c.l.b16 %v1296
    %v4232 = vunpack.c.h.b16 %v1296
    %v4233 = vunpack.c.l.b16 %v1297
    %v4234 = vunpack.c.h.b16 %v1297
    %v4235 = vunpack.c.l.b16 %v1298
    %v4236 = vunpack.c.h.b16 %v1298
    %v4237 = vunpack.c.l.b16 %v1299
    %v4238 = vunpack.c.h.b16 %v1299
    %v4239 = vunpack.c.l.b16 %v1300
    %v4240 = vunpack.c.h.b16 %v1300
    %v4241 = vunpack.c.l.b16 %v1301
    %v4242 = vunpack.c.h.b16 %v1301
    %v4243 = vunpack.c.l.b16 %v1302
    %v4244 = vunpack.c.h.b16 %v1302
    %v4245 = vunpack.c.l.b16 %v1303
    %v4246 = vunpack.c.h.b16 %v1303
    %v4247 = vunpack.c.l.b16 %v1304
    %v4248 = vunpack.c.h.b16 %v1304
    %v4249 = vunpack.c.l.b16 %v1305
    %v4250 = vunpack.c.h.b16 %v1305
    %v4251 = vunpack.c.l.b16 %v1306
    %v4252 = vunpack.c.h.b16 %v1306
    %v4253 = vunpack.c.l.b16 %v1307
    %v4254 = vunpack.c.h.b16 %v1307
    %v4255 = vunpack.c.l.b16 %v1308
    %v4256 = vunpack.c.h.b16 %v1308
    %v4257 = vunpack.c.l.b16 %v1309
    %v4258 = vunpack.c.h.b16 %v1309
    %v4259 = vunpack.c.l.b16 %v1310
    %v4260 = vunpack.c.h.b16 %v1310
    %v4261 = vunpack.c.l.b16 %v1311
    %v4262 = vunpack.c.h.b16 %v1311
    %v4263 = vunpack.c.l.b16 %v1312
    %v4264 = vunpack.c.h.b16 %v1312
    %v4265 = vunpack.c.l.b16 %v1313
    %v4266 = vunpack.c.h.b16 %v1313
    %v4267 = vunpack.c.l.b16 %v1314
    %v4268 = vunpack.c.h.b16 %v1314
    %v4269 = vunpack.c.l.b16 %v1315
    %v4270 = vunpack.c.h.b16 %v1315
    %v4271 = vunpack.c.l.b16 %v1316
    %v4272 = vunpack.c.h.b16 %v1316
    %v4273 = vunpack.c.l.b16 %v1317
    %v4274 = vunpack.c.h.b16 %v1317
    %v4275 = vunpack.c.l.b16 %v1318
    %v4276 = vunpack.c.h.b16 %v1318
    %v4277 = vunpack.c.l.b16 %v1319
    %v4278 = vunpack.c.h.b16 %v1319
    %v4279 = vunpack.c.l.b16 %v1320
    %v4280 = vunpack.c.h.b16 %v1320
    %v4281 = vunpack.c.l.b16 %v1321
    %v4282 = vunpack.c.h.b16 %v1321
    %v4283 = vunpack.c.l.b16 %v1322
    %v4284 = vunpack.c.h.b16 %v1322
    %v4285 = vunpack.c.l.b16 %v1323
    %v4286 = vunpack.c.h.b16 %v1323
    %v4287 = vunpack.c.l.b16 %v1324
    %v4288 = vunpack.c.h.b16 %v1324
    %v4289 = vunpack.c.l.b16 %v1325
    %v4290 = vunpack.c.h.b16 %v1325
    %v4291 = vunpack.c.l.b16 %v1326
    %v4292 = vunpack.c.h.b16 %v1326
    %v4293 = vunpack.c.l.b16 %v1327
    %v4294 = vunpack.c.h.b16 %v1327
    %v4295 = vunpack.c.l.b16 %v1328
    %v4296 = vunpack.c.h.b16 %v1328
    %v4297 = vunpack.c.l.b16 %v1329
    %v4298 = vunpack.c.h.b16 %v1329
    %v4299 = vunpack.c.l.b16 %v1330
    %v4300 = vunpack.c.h.b16 %v1330
    %v4301 = vunpack.c.l.b16 %v1331
    %v4302 = vunpack.c.h.b16 %v1331
    %v4303 = vunpack.c.l.b16 %v1332
    %v4304 = vunpack.c.h.b16 %v1332
    %v4305 = vunpack.c.l.b16 %v1333
    %v4306 = vunpack.c.h.b16 %v1333
    %v4307 = vunpack.c.l.b16 %v1334
    %v4308 = vunpack.c.h.b16 %v1334
    %v4309 = vunpack.c.l.b16 %v1335
    %v4310 = vunpack.c.h.b16 %v1335
    %v4311 = vunpack.c.l.b16 %v1336
    %v4312 = vunpack.c.h.b16 %v1336
    %v4313 = vunpack.c.l.b16 %v1337
    %v4314 = vunpack.c.h.b16 %v1337
    %v4315 = vunpack.c.l.b16 %v1338
    %v4316 = vunpack.c.h.b16 %v1338
    %v4317 = vunpack.c.l.b16 %v1339
    %v4318 = vunpack.c.h.b16 %v1339
    %v4319 = vunpack.c.l.b16 %v1340
    %v4320 = vunpack.c.h.b16 %v1340
    %v4321 = vunpack.c.l.b16 %v1341
    %v4322 = vunpack.c.h.b16 %v1341
    %v4323 = vunpack.c.l.b16 %v1342
    %v4324 = vunpack.c.h.b16 %v1342
    %v4325 = vunpack.c.l.b16 %v1343
    %v4326 = vunpack.c.h.b16 %v1343
    %v4327 = vunpack.c.l.b16 %v1344
    %v4328 = vunpack.c.h.b16 %v1344
    %v4329 = vunpack.c.l.b16 %v1345
    %v4330 = vunpack.c.h.b16 %v1345
    %v4331 = vunpack.c.l.b16 %v1346
    %v4332 = vunpack.c.h.b16 %v1346
    %v4333 = vunpack.c.l.b16 %v1347
    %v4334 = vunpack.c.h.b16 %v1347
    %v4335 = vunpack.c.l.b16 %v1348
    %v4336 = vunpack.c.h.b16 %v1348
    %v4337 = vunpack.c.l.b16 %v1349
    %v4338 = vunpack.c.h.b16 %v1349
    %v4339 = vunpack.c.l.b16 %v1350
    %v4340 = vunpack.c.h.b16 %v1350
    %v4341 = vunpack.c.l.b16 %v1351
    %v4342 = vunpack.c.h.b16 %v1351
    %v4343 = vunpack.c.l.b16 %v1352
    %v4344 = vunpack.c.h.b16 %v1352
    %v4345 = vunpack.c.l.b16 %v1353
    %v4346 = vunpack.c.h.b16 %v1353
    %v4347 = vunpack.c.l.b16 %v1354
    %v4348 = vunpack.c.h.b16 %v1354
    %v4349 = vunpack.c.l.b16 %v1355
    %v4350 = vunpack.c.h.b16 %v1355
    %v4351 = vunpack.c.l.b16 %v1356
    %v4352 = vunpack.c.h.b16 %v1356
    %v4353 = vunpack.c.l.b16 %v1357
    %v4354 = vunpack.c.h.b16 %v1357
    %v4355 = vunpack.c.l.b16 %v1358
    %v4356 = vunpack.c.h.b16 %v1358
    %v4357 = vunpack.c.l.b16 %v1359
    %v4358 = vunpack.c.h.b16 %v1359
    %v4359 = vunpack.c.l.b16 %v1360
    %v4360 = vunpack.c.h.b16 %v1360
    %v4361 = vunpack.c.l.b16 %v1361
    %v4362 = vunpack.c.h.b16 %v1361
    %v4363 = vunpack.c.l.b16 %v1362
    %v4364 = vunpack.c.h.b16 %v1362
    %v4365 = vunpack.c.l.b16 %v1363
    %v4366 = vunpack.c.h.b16 %v1363
    %v4367 = vunpack.c.l.b16 %v1364
    %v4368 = vunpack.c.h.b16 %v1364
    %v4369 = vunpack.c.l.b16 %v1365
    %v4370 = vunpack.c.h.b16 %v1365
    %v4371 = vunpack.c.l.b16 %v1366
    %v4372 = vunpack.c.h.b16 %v1366
    %v4373 = vunpack.c.l.b16 %v1367
    %v4374 = vunpack.c.h.b16 %v1367
    %v4375 = vunpack.c.l.b16 %v1368
    %v4376 = vunpack.c.h.b16 %v1368
    %v4377 = vunpack.c.l.b16 %v1369
    %v4378 = vunpack.c.h.b16 %v1369
    %v4379 = vunpack.c.l.b16 %v1370
    %v4380 = vunpack.c.h.b16 %v1370
    %v4381 = vunpack.c.l.b16 %v1371
    %v4382 = vunpack.c.h.b16 %v1371
    %v4383 = vunpack.c.l.b16 %v1372
    %v4384 = vunpack.c.h.b16 %v1372
    %v4385 = vunpack.c.l.b16 %v1373
    %v4386 = vunpack.c.h.b16 %v1373
    %v4387 = vunpack.c.l.b16 %v1374
    %v4388 = vunpack.c.h.b16 %v1374
    %v4389 = vunpack.c.l.b16 %v1375
    %v4390 = vunpack.c.h.b16 %v1375
    %v4391 = vunpack.c.l.b16 %v1376
    %v4392 = vunpack.c.h.b16 %v1376
    %v4393 = vunpack.c.l.b16 %v1377
    %v4394 = vunpack.c.h.b16 %v1377
    %v4395 = vunpack.c.l.b16 %v1378
    %v4396 = vunpack.c.h.b16 %v1378
    %v4397 = vunpack.c.l.b16 %v1379
    %v4398 = vunpack.c.h.b16 %v1379
    %v4399 = vunpack.c.l.b16 %v1380
    %v4400 = vunpack.c.h.b16 %v1380
    %v4401 = vunpack.c.l.b16 %v1381
    %v4402 = vunpack.c.h.b16 %v1381
    %v4403 = vunpack.c.l.b16 %v1382
    %v4404 = vunpack.c.h.b16 %v1382
    %v4405 = vunpack.c.l.b16 %v1383
    %v4406 = vunpack.c.h.b16 %v1383
    %v4407 = vunpack.c.l.b16 %v1384
    %v4408 = vunpack.c.h.b16 %v1384
    %v4409 = vunpack.c.l.b16 %v1385
    %v4410 = vunpack.c.h.b16 %v1385
    %v4411 = vunpack.c.l.b16 %v1386
    %v4412 = vunpack.c.h.b16 %v1386
    %v4413 = vunpack.c.l.b16 %v1387
    %v4414 = vunpack.c.h.b16 %v1387
    %v4415 = vunpack.c.l.b16 %v1388
    %v4416 = vunpack.c.h.b16 %v1388
    %v4417 = vunpack.c.l.b16 %v1389
    %v4418 = vunpack.c.h.b16 %v1389
    %v4419 = vunpack.c.l.b16 %v1390
    %v4420 = vunpack.c.h.b16 %v1390
    %v4421 = vunpack.c.l.b16 %v1391
    %v4422 = vunpack.c.h.b16 %v1391
    %v4423 = vunpack.c.l.b16 %v1392
    %v4424 = vunpack.c.h.b16 %v1392
    %v4425 = vunpack.c.l.b16 %v1393
    %v4426 = vunpack.c.h.b16 %v1393
    %v4427 = vunpack.c.l.b16 %v1394
    %v4428 = vunpack.c.h.b16 %v1394
    %v4429 = vunpack.c.l.b16 %v1395
    %v4430 = vunpack.c.h.b16 %v1395
    %v4431 = vunpack.c.l.b16 %v1396
    %v4432 = vunpack.c.h.b16 %v1396
    %v4433 = vunpack.c.l.b16 %v1397
    %v4434 = vunpack.c.h.b16 %v1397
    %v4435 = vunpack.c.l.b16 %v1398
    %v4436 = vunpack.c.h.b16 %v1398
    %v4437 = vunpack.c.l.b16 %v1399
    %v4438 = vunpack.c.h.b16 %v1399
    %v4439 = vunpack.c.l.b16 %v1400
    %v4440 = vunpack.c.h.b16 %v1400
    %v4441 = vunpack.c.l.b16 %v1401
    %v4442 = vunpack.c.h.b16 %v1401
    %v4443 = vunpack.c.l.b16 %v1402
    %v4444 = vunpack.c.h.b16 %v1402
    %v4445 = vunpack.c.l.b16 %v1403
    %v4446 = vunpack.c.h.b16 %v1403
    %v4447 = vunpack.c.l.b16 %v1404
    %v4448 = vunpack.c.h.b16 %v1404
    %v4449 = vunpack.c.l.b16 %v1405
    %v4450 = vunpack.c.h.b16 %v1405
    %v4451 = vunpack.c.l.b16 %v1406
    %v4452 = vunpack.c.h.b16 %v1406
    %v4453 = vunpack.c.l.b16 %v1407
    %v4454 = vunpack.c.h.b16 %v1407
    %v4455 = vunpack.c.l.b16 %v1408
    %v4456 = vunpack.c.h.b16 %v1408
    %v4457 = vunpack.c.l.b16 %v1409
    %v4458 = vunpack.c.h.b16 %v1409
    %v4459 = vunpack.c.l.b16 %v1410
    %v4460 = vunpack.c.h.b16 %v1410
    %v4461 = vunpack.c.l.b16 %v1411
    %v4462 = vunpack.c.h.b16 %v1411
    %v4463 = vunpack.c.l.b16 %v1412
    %v4464 = vunpack.c.h.b16 %v1412
    %v4465 = vunpack.c.l.b16 %v1413
    %v4466 = vunpack.c.h.b16 %v1413
    %v4467 = vunpack.c.l.b16 %v1414
    %v4468 = vunpack.c.h.b16 %v1414
    %v4469 = vunpack.c.l.b16 %v1415
    %v4470 = vunpack.c.h.b16 %v1415
    %v4471 = vunpack.c.l.b16 %v1416
    %v4472 = vunpack.c.h.b16 %v1416
    %v4473 = vunpack.c.l.b16 %v1417
    %v4474 = vunpack.c.h.b16 %v1417
    %v4475 = vunpack.c.l.b16 %v1418
    %v4476 = vunpack.c.h.b16 %v1418
    %v4477 = vunpack.c.l.b16 %v1419
    %v4478 = vunpack.c.h.b16 %v1419
    %v4479 = vunpack.c.l.b16 %v1420
    %v4480 = vunpack.c.h.b16 %v1420
    %v4481 = vunpack.c.l.b16 %v1421
    %v4482 = vunpack.c.h.b16 %v1421
    %v4483 = vunpack.c.l.b16 %v1422
    %v4484 = vunpack.c.h.b16 %v1422
    %v4485 = vunpack.c.l.b16 %v1423
    %v4486 = vunpack.c.h.b16 %v1423
    %v4487 = vunpack.c.l.b16 %v1424
    %v4488 = vunpack.c.h.b16 %v1424
    %v4489 = vunpack.c.l.b16 %v1425
    %v4490 = vunpack.c.h.b16 %v1425
    %v4491 = vunpack.c.l.b16 %v1426
    %v4492 = vunpack.c.h.b16 %v1426
    %v4493 = vunpack.c.l.b16 %v1427
    %v4494 = vunpack.c.h.b16 %v1427
    %v4495 = vunpack.c.l.b16 %v1428
    %v4496 = vunpack.c.h.b16 %v1428
    %v4497 = vunpack.c.l.b16 %v1429
    %v4498 = vunpack.c.h.b16 %v1429
    %v4499 = vunpack.c.l.b16 %v1430
    %v4500 = vunpack.c.h.b16 %v1430
    %v4501 = vunpack.c.l.b16 %v1431
    %v4502 = vunpack.c.h.b16 %v1431
    %v4503 = vunpack.c.l.b16 %v1432
    %v4504 = vunpack.c.h.b16 %v1432
    %v4505 = vpack.c.b16 %v2465, %v2457
    %v4506 = vpack.c.b16 %v2466, %v2458
    %v4507 = vpack.c.b16 %v2467, %v2459
    %v4508 = vpack.c.b16 %v2468, %v2460
    %v4509 = vpack.c.b16 %v2469, %v2461
    %v4510 = vpack.c.b16 %v2470, %v2462
    %v4511 = vpack.c.b16 %v2471, %v2463
    %v4512 = vpack.c.b16 %v2472, %v2464
    %v4513 = vpack.c.b16 %v2481, %v2473
    %v4514 = vpack.c.b16 %v2482, %v2474
    %v4515 = vpack.c.b16 %v2483, %v2475
    %v4516 = vpack.c.b16 %v2484, %v2476
    %v4517 = vpack.c.b16 %v2485, %v2477
    %v4518 = vpack.c.b16 %v2486, %v2478
    %v4519 = vpack.c.b16 %v2487, %v2479
    %v4520 = vpack.c.b16 %v2488, %v2480
    %v4521 = vpack.c.b16 %v2497, %v2489
    %v4522 = vpack.c.b16 %v2498, %v2490
    %v4523 = vpack.c.b16 %v2499, %v2491
    %v4524 = vpack.c.b16 %v2500, %v2492
    %v4525 = vpack.c.b16 %v2501, %v2493
    %v4526 = vpack.c.b16 %v2502, %v2494
    %v4527 = vpack.c.b16 %v2503, %v2495
    %v4528 = vpack.c.b16 %v2504, %v2496
    %v4529 = vpack.c.b16 %v2513, %v2505
    %v4530 = vpack.c.b16 %v2514, %v2506
    %v4531 = vpack.c.b16 %v2515, %v2507
    %v4532 = vpack.c.b16 %v2516, %v2508
    %v4533 = vpack.c.b16 %v2517, %v2509
    %v4534 = vpack.c.b16 %v2518, %v2510
    %v4535 = vpack.c.b16 %v2519, %v2511
    %v4536 = vpack.c.b16 %v2520, %v2512
    %v4537 = vpack.c.b16 %v2529, %v2521
    %v4538 = vpack.c.b16 %v2530, %v2522
    %v4539 = vpack.c.b16 %v2531, %v2523
    %v4540 = vpack.c.b16 %v2532, %v2524
    %v4541 = vpack.c.b16 %v2533, %v2525
    %v4542 = vpack.c.b16 %v2534, %v2526
    %v4543 = vpack.c.b16 %v2535, %v2527
    %v4544 = vpack.c.b16 %v2536, %v2528
    %v4545 = vpack.c.b16 %v2545, %v2537
    %v4546 = vpack.c.b16 %v2546, %v2538
    %v4547 = vpack.c.b16 %v2547, %v2539
    %v4548 = vpack.c.b16 %v2548, %v2540
    %v4549 = vpack.c.b16 %v2549, %v2541
    %v4550 = vpack.c.b16 %v2550, %v2542
    %v4551 = vpack.c.b16 %v2551, %v2543
    %v4552 = vpack.c.b16 %v2552, %v2544
    %v4553 = vpack.c.b16 %v2561, %v2553
    %v4554 = vpack.c.b16 %v2562, %v2554
    %v4555 = vpack.c.b16 %v2563, %v2555
    %v4556 = vpack.c.b16 %v2564, %v2556
    %v4557 = vpack.c.b16 %v2565, %v2557
    %v4558 = vpack.c.b16 %v2566, %v2558
    %v4559 = vpack.c.b16 %v2567, %v2559
    %v4560 = vpack.c.b16 %v2568, %v2560
    %v4561 = vpack.c.b16 %v2577, %v2569
    %v4562 = vpack.c.b16 %v2578, %v2570
    %v4563 = vpack.c.b16 %v2579, %v2571
    %v4564 = vpack.c.b16 %v2580, %v2572
    %v4565 = vpack.c.b16 %v2581, %v2573
    %v4566 = vpack.c.b16 %v2582, %v2574
    %v4567 = vpack.c.b16 %v2583, %v2575
    %v4568 = vpack.c.b16 %v2584, %v2576
    %v4569 = vpack.c.b16 %v2593, %v2585
    %v4570 = vpack.c.b16 %v2594, %v2586
    %v4571 = vpack.c.b16 %v2595, %v2587
    %v4572 = vpack.c.b16 %v2596, %v2588
    %v4573 = vpack.c.b16 %v2597, %v2589
    %v4574 = vpack.c.b16 %v2598, %v2590
    %v4575 = vpack.c.b16 %v2599, %v2591
    %v4576 = vpack.c.b16 %v2600, %v2592
    %v4577 = vpack.c.b16 %v2609, %v2601
    %v4578 = vpack.c.b16 %v2610, %v2602
    %v4579 = vpack.c.b16 %v2611, %v2603
    %v4580 = vpack.c.b16 %v2612, %v2604
    %v4581 = vpack.c.b16 %v2613, %v2605
    %v4582 = vpack.c.b16 %v2614, %v2606
    %v4583 = vpack.c.b16 %v2615, %v2607
    %v4584 = vpack.c.b16 %v2616, %v2608
    %v4585 = vpack.c.b16 %v2625, %v2617
    %v4586 = vpack.c.b16 %v2626, %v2618
    %v4587 = vpack.c.b16 %v2627, %v2619
    %v4588 = vpack.c.b16 %v2628, %v2620
    %v4589 = vpack.c.b16 %v2629, %v2621
    %v4590 = vpack.c.b16 %v2630, %v2622
    %v4591 = vpack.c.b16 %v2631, %v2623
    %v4592 = vpack.c.b16 %v2632, %v2624
    %v4593 = vpack.c.b16 %v2641, %v2633
    %v4594 = vpack.c.b16 %v2642, %v2634
    %v4595 = vpack.c.b16 %v2643, %v2635
    %v4596 = vpack.c.b16 %v2644, %v2636
    %v4597 = vpack.c.b16 %v2645, %v2637
    %v4598 = vpack.c.b16 %v2646, %v2638
    %v4599 = vpack.c.b16 %v2647, %v2639
    %v4600 = vpack.c.b16 %v2648, %v2640
    %v4601 = vpack.c.b16 %v2657, %v2649
    %v4602 = vpack.c.b16 %v2658, %v2650
    %v4603 = vpack.c.b16 %v2659, %v2651
    %v4604 = vpack.c.b16 %v2660, %v2652
    %v4605 = vpack.c.b16 %v2661, %v2653
    %v4606 = vpack.c.b16 %v2662, %v2654
    %v4607 = vpack.c.b16 %v2663, %v2655
    %v4608 = vpack.c.b16 %v2664, %v2656
    %v4609 = vpack.c.b16 %v2673, %v2665
    %v4610 = vpack.c.b16 %v2674, %v2666
    %v4611 = vpack.c.b16 %v2675, %v2667
    %v4612 = vpack.c.b16 %v2676, %v2668
    %v4613 = vpack.c.b16 %v2677, %v2669
    %v4614 = vpack.c.b16 %v2678, %v2670
    %v4615 = vpack.c.b16 %v2679, %v2671
    %v4616 = vpack.c.b16 %v2680, %v2672
    %v4617 = vpack.c.b16 %v2689, %v2681
    %v4618 = vpack.c.b16 %v2690, %v2682
    %v4619 = vpack.c.b16 %v2691, %v2683
    %v4620 = vpack.c.b16 %v2692, %v2684
    %v4621 = vpack.c.b16 %v2693, %v2685
    %v4622 = vpack.c.b16 %v2694, %v2686
    %v4623 = vpack.c.b16 %v2695, %v2687
    %v4624 = vpack.c.b16 %v2696, %v2688
    %v4625 = vpack.c.b16 %v2705, %v2697
    %v4626 = vpack.c.b16 %v2706, %v2698
    %v4627 = vpack.c.b16 %v2707, %v2699
    %v4628 = vpack.c.b16 %v2708, %v2700
    %v4629 = vpack.c.b16 %v2709, %v2701
    %v4630 = vpack.c.b16 %v2710, %v2702
    %v4631 = vpack.c.b16 %v2711, %v2703
    %v4632 = vpack.c.b16 %v2712, %v2704
    %v4633 = vpack.c.b16 %v2721, %v2713
    %v4634 = vpack.c.b16 %v2722, %v2714
    %v4635 = vpack.c.b16 %v2723, %v2715
    %v4636 = vpack.c.b16 %v2724, %v2716
    %v4637 = vpack.c.b16 %v2725, %v2717
    %v4638 = vpack.c.b16 %v2726, %v2718
    %v4639 = vpack.c.b16 %v2727, %v2719
    %v4640 = vpack.c.b16 %v2728, %v2720
    %v4641 = vpack.c.b16 %v2737, %v2729
    %v4642 = vpack.c.b16 %v2738, %v2730
    %v4643 = vpack.c.b16 %v2739, %v2731
    %v4644 = vpack.c.b16 %v2740, %v2732
    %v4645 = vpack.c.b16 %v2741, %v2733
    %v4646 = vpack.c.b16 %v2742, %v2734
    %v4647 = vpack.c.b16 %v2743, %v2735
    %v4648 = vpack.c.b16 %v2744, %v2736
    %v4649 = vpack.c.b16 %v2753, %v2745
    %v4650 = vpack.c.b16 %v2754, %v2746
    %v4651 = vpack.c.b16 %v2755, %v2747
    %v4652 = vpack.c.b16 %v2756, %v2748
    %v4653 = vpack.c.b16 %v2757, %v2749
    %v4654 = vpack.c.b16 %v2758, %v2750
    %v4655 = vpack.c.b16 %v2759, %v2751
    %v4656 = vpack.c.b16 %v2760, %v2752
    %v4657 = vpack.c.b16 %v2769, %v2761
    %v4658 = vpack.c.b16 %v2770, %v2762
    %v4659 = vpack.c.b16 %v2771, %v2763
    %v4660 = vpack.c.b16 %v2772, %v2764
    %v4661 = vpack.c.b16 %v2773, %v2765
    %v4662 = vpack.c.b16 %v2774, %v2766
    %v4663 = vpack.c.b16 %v2775, %v2767
    %v4664 = vpack.c.b16 %v2776, %v2768
    %v4665 = vpack.c.b16 %v2785, %v2777
    %v4666 = vpack.c.b16 %v2786, %v2778
    %v4667 = vpack.c.b16 %v2787, %v2779
    %v4668 = vpack.c.b16 %v2788, %v2780
    %v4669 = vpack.c.b16 %v2789, %v2781
    %v4670 = vpack.c.b16 %v2790, %v2782
    %v4671 = vpack.c.b16 %v2791, %v2783
    %v4672 = vpack.c.b16 %v2792, %v2784
    %v4673 = vpack.c.b16 %v2801, %v2793
    %v4674 = vpack.c.b16 %v2802, %v2794
    %v4675 = vpack.c.b16 %v2803, %v2795
    %v4676 = vpack.c.b16 %v2804, %v2796
    %v4677 = vpack.c.b16 %v2805, %v2797
    %v4678 = vpack.c.b16 %v2806, %v2798
    %v4679 = vpack.c.b16 %v2807, %v2799
    %v4680 = vpack.c.b16 %v2808, %v2800
    %v4681 = vpack.c.b16 %v2817, %v2809
    %v4682 = vpack.c.b16 %v2818, %v2810
    %v4683 = vpack.c.b16 %v2819, %v2811
    %v4684 = vpack.c.b16 %v2820, %v2812
    %v4685 = vpack.c.b16 %v2821, %v2813
    %v4686 = vpack.c.b16 %v2822, %v2814
    %v4687 = vpack.c.b16 %v2823, %v2815
    %v4688 = vpack.c.b16 %v2824, %v2816
    %v4689 = vpack.c.b16 %v2833, %v2825
    %v4690 = vpack.c.b16 %v2834, %v2826
    %v4691 = vpack.c.b16 %v2835, %v2827
    %v4692 = vpack.c.b16 %v2836, %v2828
    %v4693 = vpack.c.b16 %v2837, %v2829
    %v4694 = vpack.c.b16 %v2838, %v2830
    %v4695 = vpack.c.b16 %v2839, %v2831
    %v4696 = vpack.c.b16 %v2840, %v2832
    %v4697 = vpack.c.b16 %v2849, %v2841
    %v4698 = vpack.c.b16 %v2850, %v2842
    %v4699 = vpack.c.b16 %v2851, %v2843
    %v4700 = vpack.c.b16 %v2852, %v2844
    %v4701 = vpack.c.b16 %v2853, %v2845
    %v4702 = vpack.c.b16 %v2854, %v2846
    %v4703 = vpack.c.b16 %v2855, %v2847
    %v4704 = vpack.c.b16 %v2856, %v2848
    %v4705 = vpack.c.b16 %v2865, %v2857
    %v4706 = vpack.c.b16 %v2866, %v2858
    %v4707 = vpack.c.b16 %v2867, %v2859
    %v4708 = vpack.c.b16 %v2868, %v2860
    %v4709 = vpack.c.b16 %v2869, %v2861
    %v4710 = vpack.c.b16 %v2870, %v2862
    %v4711 = vpack.c.b16 %v2871, %v2863
    %v4712 = vpack.c.b16 %v2872, %v2864
    %v4713 = vpack.c.b16 %v2881, %v2873
    %v4714 = vpack.c.b16 %v2882, %v2874
    %v4715 = vpack.c.b16 %v2883, %v2875
    %v4716 = vpack.c.b16 %v2884, %v2876
    %v4717 = vpack.c.b16 %v2885, %v2877
    %v4718 = vpack.c.b16 %v2886, %v2878
    %v4719 = vpack.c.b16 %v2887, %v2879
    %v4720 = vpack.c.b16 %v2888, %v2880
    %v4721 = vpack.c.b16 %v2897, %v2889
    %v4722 = vpack.c.b16 %v2898, %v2890
    %v4723 = vpack.c.b16 %v2899, %v2891
    %v4724 = vpack.c.b16 %v2900, %v2892
    %v4725 = vpack.c.b16 %v2901, %v2893
    %v4726 = vpack.c.b16 %v2902, %v2894
    %v4727 = vpack.c.b16 %v2903, %v2895
    %v4728 = vpack.c.b16 %v2904, %v2896
    %v4729 = vpack.c.b16 %v2913, %v2905
    %v4730 = vpack.c.b16 %v2914, %v2906
    %v4731 = vpack.c.b16 %v2915, %v2907
    %v4732 = vpack.c.b16 %v2916, %v2908
    %v4733 = vpack.c.b16 %v2917, %v2909
    %v4734 = vpack.c.b16 %v2918, %v2910
    %v4735 = vpack.c.b16 %v2919, %v2911
    %v4736 = vpack.c.b16 %v2920, %v2912
    %v4737 = vpack.c.b16 %v2929, %v2921
    %v4738 = vpack.c.b16 %v2930, %v2922
    %v4739 = vpack.c.b16 %v2931, %v2923
    %v4740 = vpack.c.b16 %v2932, %v2924
    %v4741 = vpack.c.b16 %v2933, %v2925
    %v4742 = vpack.c.b16 %v2934, %v2926
    %v4743 = vpack.c.b16 %v2935, %v2927
    %v4744 = vpack.c.b16 %v2936, %v2928
    %v4745 = vpack.c.b16 %v2945, %v2937
    %v4746 = vpack.c.b16 %v2946, %v2938
    %v4747 = vpack.c.b16 %v2947, %v2939
    %v4748 = vpack.c.b16 %v2948, %v2940
    %v4749 = vpack.c.b16 %v2949, %v2941
    %v4750 = vpack.c.b16 %v2950, %v2942
    %v4751 = vpack.c.b16 %v2951, %v2943
    %v4752 = vpack.c.b16 %v2952, %v2944
    %v4753 = vpack.c.b16 %v2961, %v2953
    %v4754 = vpack.c.b16 %v2962, %v2954
    %v4755 = vpack.c.b16 %v2963, %v2955
    %v4756 = vpack.c.b16 %v2964, %v2956
    %v4757 = vpack.c.b16 %v2965, %v2957
    %v4758 = vpack.c.b16 %v2966, %v2958
    %v4759 = vpack.c.b16 %v2967, %v2959
    %v4760 = vpack.c.b16 %v2968, %v2960
    %v4761 = vpack.c.b16 %v2977, %v2969
    %v4762 = vpack.c.b16 %v2978, %v2970
    %v4763 = vpack.c.b16 %v2979, %v2971
    %v4764 = vpack.c.b16 %v2980, %v2972
    %v4765 = vpack.c.b16 %v2981, %v2973
    %v4766 = vpack.c.b16 %v2982, %v2974
    %v4767 = vpack.c.b16 %v2983, %v2975
    %v4768 = vpack.c.b16 %v2984, %v2976
    %v4769 = vpack.c.b16 %v2993, %v2985
    %v4770 = vpack.c.b16 %v2994, %v2986
    %v4771 = vpack.c.b16 %v2995, %v2987
    %v4772 = vpack.c.b16 %v2996, %v2988
    %v4773 = vpack.c.b16 %v2997, %v2989
    %v4774 = vpack.c.b16 %v2998, %v2990
    %v4775 = vpack.c.b16 %v2999, %v2991
    %v4776 = vpack.c.b16 %v3000, %v2992
    %v4777 = vpack.c.b16 %v3009, %v3001
    %v4778 = vpack.c.b16 %v3010, %v3002
    %v4779 = vpack.c.b16 %v3011, %v3003
    %v4780 = vpack.c.b16 %v3012, %v3004
    %v4781 = vpack.c.b16 %v3013, %v3005
    %v4782 = vpack.c.b16 %v3014, %v3006
    %v4783 = vpack.c.b16 %v3015, %v3007
    %v4784 = vpack.c.b16 %v3016, %v3008
    %v4785 = vpack.c.b16 %v3025, %v3017
    %v4786 = vpack.c.b16 %v3026, %v3018
    %v4787 = vpack.c.b16 %v3027, %v3019
    %v4788 = vpack.c.b16 %v3028, %v3020
    %v4789 = vpack.c.b16 %v3029, %v3021
    %v4790 = vpack.c.b16 %v3030, %v3022
    %v4791 = vpack.c.b16 %v3031, %v3023
    %v4792 = vpack.c.b16 %v3032, %v3024
    %v4793 = vpack.c.b16 %v3041, %v3033
    %v4794 = vpack.c.b16 %v3042, %v3034
    %v4795 = vpack.c.b16 %v3043, %v3035
    %v4796 = vpack.c.b16 %v3044, %v3036
    %v4797 = vpack.c.b16 %v3045, %v3037
    %v4798 = vpack.c.b16 %v3046, %v3038
    %v4799 = vpack.c.b16 %v3047, %v3039
    %v4800 = vpack.c.b16 %v3048, %v3040
    %v4801 = vpack.c.b16 %v3057, %v3049
    %v4802 = vpack.c.b16 %v3058, %v3050
    %v4803 = vpack.c.b16 %v3059, %v3051
    %v4804 = vpack.c.b16 %v3060, %v3052
    %v4805 = vpack.c.b16 %v3061, %v3053
    %v4806 = vpack.c.b16 %v3062, %v3054
    %v4807 = vpack.c.b16 %v3063, %v3055
    %v4808 = vpack.c.b16 %v3064, %v3056
    %v4809 = vpack.c.b16 %v3073, %v3065
    %v4810 = vpack.c.b16 %v3074, %v3066
    %v4811 = vpack.c.b16 %v3075, %v3067
    %v4812 = vpack.c.b16 %v3076, %v3068
    %v4813 = vpack.c.b16 %v3077, %v3069
    %v4814 = vpack.c.b16 %v3078, %v3070
    %v4815 = vpack.c.b16 %v3079, %v3071
    %v4816 = vpack.c.b16 %v3080, %v3072
    %v4817 = vpack.c.b16 %v3089, %v3081
    %v4818 = vpack.c.b16 %v3090, %v3082
    %v4819 = vpack.c.b16 %v3091, %v3083
    %v4820 = vpack.c.b16 %v3092, %v3084
    %v4821 = vpack.c.b16 %v3093, %v3085
    %v4822 = vpack.c.b16 %v3094, %v3086
    %v4823 = vpack.c.b16 %v3095, %v3087
    %v4824 = vpack.c.b16 %v3096, %v3088
    %v4825 = vpack.c.b16 %v3105, %v3097
    %v4826 = vpack.c.b16 %v3106, %v3098
    %v4827 = vpack.c.b16 %v3107, %v3099
    %v4828 = vpack.c.b16 %v3108, %v3100
    %v4829 = vpack.c.b16 %v3109, %v3101
    %v4830 = vpack.c.b16 %v3110, %v3102
    %v4831 = vpack.c.b16 %v3111, %v3103
    %v4832 = vpack.c.b16 %v3112, %v3104
    %v4833 = vpack.c.b16 %v3121, %v3113
    %v4834 = vpack.c.b16 %v3122, %v3114
    %v4835 = vpack.c.b16 %v3123, %v3115
    %v4836 = vpack.c.b16 %v3124, %v3116
    %v4837 = vpack.c.b16 %v3125, %v3117
    %v4838 = vpack.c.b16 %v3126, %v3118
    %v4839 = vpack.c.b16 %v3127, %v3119
    %v4840 = vpack.c.b16 %v3128, %v3120
    %v4841 = vpack.c.b16 %v3137, %v3129
    %v4842 = vpack.c.b16 %v3138, %v3130
    %v4843 = vpack.c.b16 %v3139, %v3131
    %v4844 = vpack.c.b16 %v3140, %v3132
    %v4845 = vpack.c.b16 %v3141, %v3133
    %v4846 = vpack.c.b16 %v3142, %v3134
    %v4847 = vpack.c.b16 %v3143, %v3135
    %v4848 = vpack.c.b16 %v3144, %v3136
    %v4849 = vpack.c.b16 %v3153, %v3145
    %v4850 = vpack.c.b16 %v3154, %v3146
    %v4851 = vpack.c.b16 %v3155, %v3147
    %v4852 = vpack.c.b16 %v3156, %v3148
    %v4853 = vpack.c.b16 %v3157, %v3149
    %v4854 = vpack.c.b16 %v3158, %v3150
    %v4855 = vpack.c.b16 %v3159, %v3151
    %v4856 = vpack.c.b16 %v3160, %v3152
    %v4857 = vpack.c.b16 %v3169, %v3161
    %v4858 = vpack.c.b16 %v3170, %v3162
    %v4859 = vpack.c.b16 %v3171, %v3163
    %v4860 = vpack.c.b16 %v3172, %v3164
    %v4861 = vpack.c.b16 %v3173, %v3165
    %v4862 = vpack.c.b16 %v3174, %v3166
    %v4863 = vpack.c.b16 %v3175, %v3167
    %v4864 = vpack.c.b16 %v3176, %v3168
    %v4865 = vpack.c.b16 %v3185, %v3177
    %v4866 = vpack.c.b16 %v3186, %v3178
    %v4867 = vpack.c.b16 %v3187, %v3179
    %v4868 = vpack.c.b16 %v3188, %v3180
    %v4869 = vpack.c.b16 %v3189, %v3181
    %v4870 = vpack.c.b16 %v3190, %v3182
    %v4871 = vpack.c.b16 %v3191, %v3183
    %v4872 = vpack.c.b16 %v3192, %v3184
    %v4873 = vpack.c.b16 %v3201, %v3193
    %v4874 = vpack.c.b16 %v3202, %v3194
    %v4875 = vpack.c.b16 %v3203, %v3195
    %v4876 = vpack.c.b16 %v3204, %v3196
    %v4877 = vpack.c.b16 %v3205, %v3197
    %v4878 = vpack.c.b16 %v3206, %v3198
    %v4879 = vpack.c.b16 %v3207, %v3199
    %v4880 = vpack.c.b16 %v3208, %v3200
    %v4881 = vpack.c.b16 %v3217, %v3209
    %v4882 = vpack.c.b16 %v3218, %v3210
    %v4883 = vpack.c.b16 %v3219, %v3211
    %v4884 = vpack.c.b16 %v3220, %v3212
    %v4885 = vpack.c.b16 %v3221, %v3213
    %v4886 = vpack.c.b16 %v3222, %v3214
    %v4887 = vpack.c.b16 %v3223, %v3215
    %v4888 = vpack.c.b16 %v3224, %v3216
    %v4889 = vpack.c.b16 %v3233, %v3225
    %v4890 = vpack.c.b16 %v3234, %v3226
    %v4891 = vpack.c.b16 %v3235, %v3227
    %v4892 = vpack.c.b16 %v3236, %v3228
    %v4893 = vpack.c.b16 %v3237, %v3229
    %v4894 = vpack.c.b16 %v3238, %v3230
    %v4895 = vpack.c.b16 %v3239, %v3231
    %v4896 = vpack.c.b16 %v3240, %v3232
    %v4897 = vpack.c.b16 %v3249, %v3241
    %v4898 = vpack.c.b16 %v3250, %v3242
    %v4899 = vpack.c.b16 %v3251, %v3243
    %v4900 = vpack.c.b16 %v3252, %v3244
    %v4901 = vpack.c.b16 %v3253, %v3245
    %v4902 = vpack.c.b16 %v3254, %v3246
    %v4903 = vpack.c.b16 %v3255, %v3247
    %v4904 = vpack.c.b16 %v3256, %v3248
    %v4905 = vpack.c.b16 %v3265, %v3257
    %v4906 = vpack.c.b16 %v3266, %v3258
    %v4907 = vpack.c.b16 %v3267, %v3259
    %v4908 = vpack.c.b16 %v3268, %v3260
    %v4909 = vpack.c.b16 %v3269, %v3261
    %v4910 = vpack.c.b16 %v3270, %v3262
    %v4911 = vpack.c.b16 %v3271, %v3263
    %v4912 = vpack.c.b16 %v3272, %v3264
    %v4913 = vpack.c.b16 %v3281, %v3273
    %v4914 = vpack.c.b16 %v3282, %v3274
    %v4915 = vpack.c.b16 %v3283, %v3275
    %v4916 = vpack.c.b16 %v3284, %v3276
    %v4917 = vpack.c.b16 %v3285, %v3277
    %v4918 = vpack.c.b16 %v3286, %v3278
    %v4919 = vpack.c.b16 %v3287, %v3279
    %v4920 = vpack.c.b16 %v3288, %v3280
    %v4921 = vpack.c.b16 %v3297, %v3289
    %v4922 = vpack.c.b16 %v3298, %v3290
    %v4923 = vpack.c.b16 %v3299, %v3291
    %v4924 = vpack.c.b16 %v3300, %v3292
    %v4925 = vpack.c.b16 %v3301, %v3293
    %v4926 = vpack.c.b16 %v3302, %v3294
    %v4927 = vpack.c.b16 %v3303, %v3295
    %v4928 = vpack.c.b16 %v3304, %v3296
    %v4929 = vpack.c.b16 %v3313, %v3305
    %v4930 = vpack.c.b16 %v3314, %v3306
    %v4931 = vpack.c.b16 %v3315, %v3307
    %v4932 = vpack.c.b16 %v3316, %v3308
    %v4933 = vpack.c.b16 %v3317, %v3309
    %v4934 = vpack.c.b16 %v3318, %v3310
    %v4935 = vpack.c.b16 %v3319, %v3311
    %v4936 = vpack.c.b16 %v3320, %v3312
    %v4937 = vpack.c.b16 %v3329, %v3321
    %v4938 = vpack.c.b16 %v3330, %v3322
    %v4939 = vpack.c.b16 %v3331, %v3323
    %v4940 = vpack.c.b16 %v3332, %v3324
    %v4941 = vpack.c.b16 %v3333, %v3325
    %v4942 = vpack.c.b16 %v3334, %v3326
    %v4943 = vpack.c.b16 %v3335, %v3327
    %v4944 = vpack.c.b16 %v3336, %v3328
    %v4945 = vpack.c.b16 %v3345, %v3337
    %v4946 = vpack.c.b16 %v3346, %v3338
    %v4947 = vpack.c.b16 %v3347, %v3339
    %v4948 = vpack.c.b16 %v3348, %v3340
    %v4949 = vpack.c.b16 %v3349, %v3341
    %v4950 = vpack.c.b16 %v3350, %v3342
    %v4951 = vpack.c.b16 %v3351, %v3343
    %v4952 = vpack.c.b16 %v3352, %v3344
    %v4953 = vpack.c.b16 %v3361, %v3353
    %v4954 = vpack.c.b16 %v3362, %v3354
    %v4955 = vpack.c.b16 %v3363, %v3355
    %v4956 = vpack.c.b16 %v3364, %v3356
    %v4957 = vpack.c.b16 %v3365, %v3357
    %v4958 = vpack.c.b16 %v3366, %v3358
    %v4959 = vpack.c.b16 %v3367, %v3359
    %v4960 = vpack.c.b16 %v3368, %v3360
    %v4961 = vpack.c.b16 %v3377, %v3369
    %v4962 = vpack.c.b16 %v3378, %v3370
    %v4963 = vpack.c.b16 %v3379, %v3371
    %v4964 = vpack.c.b16 %v3380, %v3372
    %v4965 = vpack.c.b16 %v3381, %v3373
    %v4966 = vpack.c.b16 %v3382, %v3374
    %v4967 = vpack.c.b16 %v3383, %v3375
    %v4968 = vpack.c.b16 %v3384, %v3376
    %v4969 = vpack.c.b16 %v3393, %v3385
    %v4970 = vpack.c.b16 %v3394, %v3386
    %v4971 = vpack.c.b16 %v3395, %v3387
    %v4972 = vpack.c.b16 %v3396, %v3388
    %v4973 = vpack.c.b16 %v3397, %v3389
    %v4974 = vpack.c.b16 %v3398, %v3390
    %v4975 = vpack.c.b16 %v3399, %v3391
    %v4976 = vpack.c.b16 %v3400, %v3392
    %v4977 = vpack.c.b16 %v3409, %v3401
    %v4978 = vpack.c.b16 %v3410, %v3402
    %v4979 = vpack.c.b16 %v3411, %v3403
    %v4980 = vpack.c.b16 %v3412, %v3404
    %v4981 = vpack.c.b16 %v3413, %v3405
    %v4982 = vpack.c.b16 %v3414, %v3406
    %v4983 = vpack.c.b16 %v3415, %v3407
    %v4984 = vpack.c.b16 %v3416, %v3408
    %v4985 = vpack.c.b16 %v3425, %v3417
    %v4986 = vpack.c.b16 %v3426, %v3418
    %v4987 = vpack.c.b16 %v3427, %v3419
    %v4988 = vpack.c.b16 %v3428, %v3420
    %v4989 = vpack.c.b16 %v3429, %v3421
    %v4990 = vpack.c.b16 %v3430, %v3422
    %v4991 = vpack.c.b16 %v3431, %v3423
    %v4992 = vpack.c.b16 %v3432, %v3424
    %v4993 = vpack.c.b16 %v3441, %v3433
    %v4994 = vpack.c.b16 %v3442, %v3434
    %v4995 = vpack.c.b16 %v3443, %v3435
    %v4996 = vpack.c.b16 %v3444, %v3436
    %v4997 = vpack.c.b16 %v3445, %v3437
    %v4998 = vpack.c.b16 %v3446, %v3438
    %v4999 = vpack.c.b16 %v3447, %v3439
    %v5000 = vpack.c.b16 %v3448, %v3440
    %v5001 = vpack.c.b16 %v3457, %v3449
    %v5002 = vpack.c.b16 %v3458, %v3450
    %v5003 = vpack.c.b16 %v3459, %v3451
    %v5004 = vpack.c.b16 %v3460, %v3452
    %v5005 = vpack.c.b16 %v3461, %v3453
    %v5006 = vpack.c.b16 %v3462, %v3454
    %v5007 = vpack.c.b16 %v3463, %v3455
    %v5008 = vpack.c.b16 %v3464, %v3456
    %v5009 = vpack.c.b16 %v3473, %v3465
    %v5010 = vpack.c.b16 %v3474, %v3466
    %v5011 = vpack.c.b16 %v3475, %v3467
    %v5012 = vpack.c.b16 %v3476, %v3468
    %v5013 = vpack.c.b16 %v3477, %v3469
    %v5014 = vpack.c.b16 %v3478, %v3470
    %v5015 = vpack.c.b16 %v3479, %v3471
    %v5016 = vpack.c.b16 %v3480, %v3472
    %v5017 = vpack.c.b16 %v3489, %v3481
    %v5018 = vpack.c.b16 %v3490, %v3482
    %v5019 = vpack.c.b16 %v3491, %v3483
    %v5020 = vpack.c.b16 %v3492, %v3484
    %v5021 = vpack.c.b16 %v3493, %v3485
    %v5022 = vpack.c.b16 %v3494, %v3486
    %v5023 = vpack.c.b16 %v3495, %v3487
    %v5024 = vpack.c.b16 %v3496, %v3488
    %v5025 = vpack.c.b16 %v3505, %v3497
    %v5026 = vpack.c.b16 %v3506, %v3498
    %v5027 = vpack.c.b16 %v3507, %v3499
    %v5028 = vpack.c.b16 %v3508, %v3500
    %v5029 = vpack.c.b16 %v3509, %v3501
    %v5030 = vpack.c.b16 %v3510, %v3502
    %v5031 = vpack.c.b16 %v3511, %v3503
    %v5032 = vpack.c.b16 %v3512, %v3504
    %v5033 = vpack.c.b16 %v3521, %v3513
    %v5034 = vpack.c.b16 %v3522, %v3514
    %v5035 = vpack.c.b16 %v3523, %v3515
    %v5036 = vpack.c.b16 %v3524, %v3516
    %v5037 = vpack.c.b16 %v3525, %v3517
    %v5038 = vpack.c.b16 %v3526, %v3518
    %v5039 = vpack.c.b16 %v3527, %v3519
    %v5040 = vpack.c.b16 %v3528, %v3520
    %v5041 = vpack.c.b16 %v3537, %v3529
    %v5042 = vpack.c.b16 %v3538, %v3530
    %v5043 = vpack.c.b16 %v3539, %v3531
    %v5044 = vpack.c.b16 %v3540, %v3532
    %v5045 = vpack.c.b16 %v3541, %v3533
    %v5046 = vpack.c.b16 %v3542, %v3534
    %v5047 = vpack.c.b16 %v3543, %v3535
    %v5048 = vpack.c.b16 %v3544, %v3536
    %v5049 = vpack.c.b16 %v3553, %v3545
    %v5050 = vpack.c.b16 %v3554, %v3546
    %v5051 = vpack.c.b16 %v3555, %v3547
    %v5052 = vpack.c.b16 %v3556, %v3548
    %v5053 = vpack.c.b16 %v3557, %v3549
    %v5054 = vpack.c.b16 %v3558, %v3550
    %v5055 = vpack.c.b16 %v3559, %v3551
    %v5056 = vpack.c.b16 %v3560, %v3552
    %v5057 = vpack.c.b16 %v3569, %v3561
    %v5058 = vpack.c.b16 %v3570, %v3562
    %v5059 = vpack.c.b16 %v3571, %v3563
    %v5060 = vpack.c.b16 %v3572, %v3564
    %v5061 = vpack.c.b16 %v3573, %v3565
    %v5062 = vpack.c.b16 %v3574, %v3566
    %v5063 = vpack.c.b16 %v3575, %v3567
    %v5064 = vpack.c.b16 %v3576, %v3568
    %v5065 = vpack.c.b16 %v3585, %v3577
    %v5066 = vpack.c.b16 %v3586, %v3578
    %v5067 = vpack.c.b16 %v3587, %v3579
    %v5068 = vpack.c.b16 %v3588, %v3580
    %v5069 = vpack.c.b16 %v3589, %v3581
    %v5070 = vpack.c.b16 %v3590, %v3582
    %v5071 = vpack.c.b16 %v3591, %v3583
    %v5072 = vpack.c.b16 %v3592, %v3584
    %v5073 = vpack.c.b16 %v3601, %v3593
    %v5074 = vpack.c.b16 %v3602, %v3594
    %v5075 = vpack.c.b16 %v3603, %v3595
    %v5076 = vpack.c.b16 %v3604, %v3596
    %v5077 = vpack.c.b16 %v3605, %v3597
    %v5078 = vpack.c.b16 %v3606, %v3598
    %v5079 = vpack.c.b16 %v3607, %v3599
    %v5080 = vpack.c.b16 %v3608, %v3600
    %v5081 = vpack.c.b16 %v3617, %v3609
    %v5082 = vpack.c.b16 %v3618, %v3610
    %v5083 = vpack.c.b16 %v3619, %v3611
    %v5084 = vpack.c.b16 %v3620, %v3612
    %v5085 = vpack.c.b16 %v3621, %v3613
    %v5086 = vpack.c.b16 %v3622, %v3614
    %v5087 = vpack.c.b16 %v3623, %v3615
    %v5088 = vpack.c.b16 %v3624, %v3616
    %v5089 = vpack.c.b16 %v3633, %v3625
    %v5090 = vpack.c.b16 %v3634, %v3626
    %v5091 = vpack.c.b16 %v3635, %v3627
    %v5092 = vpack.c.b16 %v3636, %v3628
    %v5093 = vpack.c.b16 %v3637, %v3629
    %v5094 = vpack.c.b16 %v3638, %v3630
    %v5095 = vpack.c.b16 %v3639, %v3631
    %v5096 = vpack.c.b16 %v3640, %v3632
    %v5097 = vpack.c.b16 %v3649, %v3641
    %v5098 = vpack.c.b16 %v3650, %v3642
    %v5099 = vpack.c.b16 %v3651, %v3643
    %v5100 = vpack.c.b16 %v3652, %v3644
    %v5101 = vpack.c.b16 %v3653, %v3645
    %v5102 = vpack.c.b16 %v3654, %v3646
    %v5103 = vpack.c.b16 %v3655, %v3647
    %v5104 = vpack.c.b16 %v3656, %v3648
    %v5105 = vpack.c.b16 %v3665, %v3657
    %v5106 = vpack.c.b16 %v3666, %v3658
    %v5107 = vpack.c.b16 %v3667, %v3659
    %v5108 = vpack.c.b16 %v3668, %v3660
    %v5109 = vpack.c.b16 %v3669, %v3661
    %v5110 = vpack.c.b16 %v3670, %v3662
    %v5111 = vpack.c.b16 %v3671, %v3663
    %v5112 = vpack.c.b16 %v3672, %v3664
    %v5113 = vpack.c.b16 %v3681, %v3673
    %v5114 = vpack.c.b16 %v3682, %v3674
    %v5115 = vpack.c.b16 %v3683, %v3675
    %v5116 = vpack.c.b16 %v3684, %v3676
    %v5117 = vpack.c.b16 %v3685, %v3677
    %v5118 = vpack.c.b16 %v3686, %v3678
    %v5119 = vpack.c.b16 %v3687, %v3679
    %v5120 = vpack.c.b16 %v3688, %v3680
    %v5121 = vpack.c.b16 %v3697, %v3689
    %v5122 = vpack.c.b16 %v3698, %v3690
    %v5123 = vpack.c.b16 %v3699, %v3691
    %v5124 = vpack.c.b16 %v3700, %v3692
    %v5125 = vpack.c.b16 %v3701, %v3693
    %v5126 = vpack.c.b16 %v3702, %v3694
    %v5127 = vpack.c.b16 %v3703, %v3695
    %v5128 = vpack.c.b16 %v3704, %v3696
    %v5129 = vpack.c.b16 %v3713, %v3705
    %v5130 = vpack.c.b16 %v3714, %v3706
    %v5131 = vpack.c.b16 %v3715, %v3707
    %v5132 = vpack.c.b16 %v3716, %v3708
    %v5133 = vpack.c.b16 %v3717, %v3709
    %v5134 = vpack.c.b16 %v3718, %v3710
    %v5135 = vpack.c.b16 %v3719, %v3711
    %v5136 = vpack.c.b16 %v3720, %v3712
    %v5137 = vpack.c.b16 %v3729, %v3721
    %v5138 = vpack.c.b16 %v3730, %v3722
    %v5139 = vpack.c.b16 %v3731, %v3723
    %v5140 = vpack.c.b16 %v3732, %v3724
    %v5141 = vpack.c.b16 %v3733, %v3725
    %v5142 = vpack.c.b16 %v3734, %v3726
    %v5143 = vpack.c.b16 %v3735, %v3727
    %v5144 = vpack.c.b16 %v3736, %v3728
    %v5145 = vpack.c.b16 %v3745, %v3737
    %v5146 = vpack.c.b16 %v3746, %v3738
    %v5147 = vpack.c.b16 %v3747, %v3739
    %v5148 = vpack.c.b16 %v3748, %v3740
    %v5149 = vpack.c.b16 %v3749, %v3741
    %v5150 = vpack.c.b16 %v3750, %v3742
    %v5151 = vpack.c.b16 %v3751, %v3743
    %v5152 = vpack.c.b16 %v3752, %v3744
    %v5153 = vpack.c.b16 %v3761, %v3753
    %v5154 = vpack.c.b16 %v3762, %v3754
    %v5155 = vpack.c.b16 %v3763, %v3755
    %v5156 = vpack.c.b16 %v3764, %v3756
    %v5157 = vpack.c.b16 %v3765, %v3757
    %v5158 = vpack.c.b16 %v3766, %v3758
    %v5159 = vpack.c.b16 %v3767, %v3759
    %v5160 = vpack.c.b16 %v3768, %v3760
    %v5161 = vpack.c.b16 %v3777, %v3769
    %v5162 = vpack.c.b16 %v3778, %v3770
    %v5163 = vpack.c.b16 %v3779, %v3771
    %v5164 = vpack.c.b16 %v3780, %v3772
    %v5165 = vpack.c.b16 %v3781, %v3773
    %v5166 = vpack.c.b16 %v3782, %v3774
    %v5167 = vpack.c.b16 %v3783, %v3775
    %v5168 = vpack.c.b16 %v3784, %v3776
    %v5169 = vpack.c.b16 %v3793, %v3785
    %v5170 = vpack.c.b16 %v3794, %v3786
    %v5171 = vpack.c.b16 %v3795, %v3787
    %v5172 = vpack.c.b16 %v3796, %v3788
    %v5173 = vpack.c.b16 %v3797, %v3789
    %v5174 = vpack.c.b16 %v3798, %v3790
    %v5175 = vpack.c.b16 %v3799, %v3791
    %v5176 = vpack.c.b16 %v3800, %v3792
    %v5177 = vpack.c.b16 %v3809, %v3801
    %v5178 = vpack.c.b16 %v3810, %v3802
    %v5179 = vpack.c.b16 %v3811, %v3803
    %v5180 = vpack.c.b16 %v3812, %v3804
    %v5181 = vpack.c.b16 %v3813, %v3805
    %v5182 = vpack.c.b16 %v3814, %v3806
    %v5183 = vpack.c.b16 %v3815, %v3807
    %v5184 = vpack.c.b16 %v3816, %v3808
    %v5185 = vpack.c.b16 %v3825, %v3817
    %v5186 = vpack.c.b16 %v3826, %v3818
    %v5187 = vpack.c.b16 %v3827, %v3819
    %v5188 = vpack.c.b16 %v3828, %v3820
    %v5189 = vpack.c.b16 %v3829, %v3821
    %v5190 = vpack.c.b16 %v3830, %v3822
    %v5191 = vpack.c.b16 %v3831, %v3823
    %v5192 = vpack.c.b16 %v3832, %v3824
    %v5193 = vpack.c.b16 %v3841, %v3833
    %v5194 = vpack.c.b16 %v3842, %v3834
    %v5195 = vpack.c.b16 %v3843, %v3835
    %v5196 = vpack.c.b16 %v3844, %v3836
    %v5197 = vpack.c.b16 %v3845, %v3837
    %v5198 = vpack.c.b16 %v3846, %v3838
    %v5199 = vpack.c.b16 %v3847, %v3839
    %v5200 = vpack.c.b16 %v3848, %v3840
    %v5201 = vpack.c.b16 %v3857, %v3849
    %v5202 = vpack.c.b16 %v3858, %v3850
    %v5203 = vpack.c.b16 %v3859, %v3851
    %v5204 = vpack.c.b16 %v3860, %v3852
    %v5205 = vpack.c.b16 %v3861, %v3853
    %v5206 = vpack.c.b16 %v3862, %v3854
    %v5207 = vpack.c.b16 %v3863, %v3855
    %v5208 = vpack.c.b16 %v3864, %v3856
    %v5209 = vpack.c.b16 %v3873, %v3865
    %v5210 = vpack.c.b16 %v3874, %v3866
    %v5211 = vpack.c.b16 %v3875, %v3867
    %v5212 = vpack.c.b16 %v3876, %v3868
    %v5213 = vpack.c.b16 %v3877, %v3869
    %v5214 = vpack.c.b16 %v3878, %v3870
    %v5215 = vpack.c.b16 %v3879, %v3871
    %v5216 = vpack.c.b16 %v3880, %v3872
    %v5217 = vpack.c.b16 %v3889, %v3881
    %v5218 = vpack.c.b16 %v3890, %v3882
    %v5219 = vpack.c.b16 %v3891, %v3883
    %v5220 = vpack.c.b16 %v3892, %v3884
    %v5221 = vpack.c.b16 %v3893, %v3885
    %v5222 = vpack.c.b16 %v3894, %v3886
    %v5223 = vpack.c.b16 %v3895, %v3887
    %v5224 = vpack.c.b16 %v3896, %v3888
    %v5225 = vpack.c.b16 %v3905, %v3897
    %v5226 = vpack.c.b16 %v3906, %v3898
    %v5227 = vpack.c.b16 %v3907, %v3899
    %v5228 = vpack.c.b16 %v3908, %v3900
    %v5229 = vpack.c.b16 %v3909, %v3901
    %v5230 = vpack.c.b16 %v3910, %v3902
    %v5231 = vpack.c.b16 %v3911, %v3903
    %v5232 = vpack.c.b16 %v3912, %v3904
    %v5233 = vpack.c.b16 %v3921, %v3913
    %v5234 = vpack.c.b16 %v3922, %v3914
    %v5235 = vpack.c.b16 %v3923, %v3915
    %v5236 = vpack.c.b16 %v3924, %v3916
    %v5237 = vpack.c.b16 %v3925, %v3917
    %v5238 = vpack.c.b16 %v3926, %v3918
    %v5239 = vpack.c.b16 %v3927, %v3919
    %v5240 = vpack.c.b16 %v3928, %v3920
    %v5241 = vpack.c.b16 %v3937, %v3929
    %v5242 = vpack.c.b16 %v3938, %v3930
    %v5243 = vpack.c.b16 %v3939, %v3931
    %v5244 = vpack.c.b16 %v3940, %v3932
    %v5245 = vpack.c.b16 %v3941, %v3933
    %v5246 = vpack.c.b16 %v3942, %v3934
    %v5247 = vpack.c.b16 %v3943, %v3935
    %v5248 = vpack.c.b16 %v3944, %v3936
    %v5249 = vpack.c.b16 %v3953, %v3945
    %v5250 = vpack.c.b16 %v3954, %v3946
    %v5251 = vpack.c.b16 %v3955, %v3947
    %v5252 = vpack.c.b16 %v3956, %v3948
    %v5253 = vpack.c.b16 %v3957, %v3949
    %v5254 = vpack.c.b16 %v3958, %v3950
    %v5255 = vpack.c.b16 %v3959, %v3951
    %v5256 = vpack.c.b16 %v3960, %v3952
    %v5257 = vpack.c.b16 %v3969, %v3961
    %v5258 = vpack.c.b16 %v3970, %v3962
    %v5259 = vpack.c.b16 %v3971, %v3963
    %v5260 = vpack.c.b16 %v3972, %v3964
    %v5261 = vpack.c.b16 %v3973, %v3965
    %v5262 = vpack.c.b16 %v3974, %v3966
    %v5263 = vpack.c.b16 %v3975, %v3967
    %v5264 = vpack.c.b16 %v3976, %v3968
    %v5265 = vpack.c.b16 %v3985, %v3977
    %v5266 = vpack.c.b16 %v3986, %v3978
    %v5267 = vpack.c.b16 %v3987, %v3979
    %v5268 = vpack.c.b16 %v3988, %v3980
    %v5269 = vpack.c.b16 %v3989, %v3981
    %v5270 = vpack.c.b16 %v3990, %v3982
    %v5271 = vpack.c.b16 %v3991, %v3983
    %v5272 = vpack.c.b16 %v3992, %v3984
    %v5273 = vpack.c.b16 %v4001, %v3993
    %v5274 = vpack.c.b16 %v4002, %v3994
    %v5275 = vpack.c.b16 %v4003, %v3995
    %v5276 = vpack.c.b16 %v4004, %v3996
    %v5277 = vpack.c.b16 %v4005, %v3997
    %v5278 = vpack.c.b16 %v4006, %v3998
    %v5279 = vpack.c.b16 %v4007, %v3999
    %v5280 = vpack.c.b16 %v4008, %v4000
    %v5281 = vpack.c.b16 %v4017, %v4009
    %v5282 = vpack.c.b16 %v4018, %v4010
    %v5283 = vpack.c.b16 %v4019, %v4011
    %v5284 = vpack.c.b16 %v4020, %v4012
    %v5285 = vpack.c.b16 %v4021, %v4013
    %v5286 = vpack.c.b16 %v4022, %v4014
    %v5287 = vpack.c.b16 %v4023, %v4015
    %v5288 = vpack.c.b16 %v4024, %v4016
    %v5289 = vpack.c.b16 %v4033, %v4025
    %v5290 = vpack.c.b16 %v4034, %v4026
    %v5291 = vpack.c.b16 %v4035, %v4027
    %v5292 = vpack.c.b16 %v4036, %v4028
    %v5293 = vpack.c.b16 %v4037, %v4029
    %v5294 = vpack.c.b16 %v4038, %v4030
    %v5295 = vpack.c.b16 %v4039, %v4031
    %v5296 = vpack.c.b16 %v4040, %v4032
    %v5297 = vpack.c.b16 %v4049, %v4041
    %v5298 = vpack.c.b16 %v4050, %v4042
    %v5299 = vpack.c.b16 %v4051, %v4043
    %v5300 = vpack.c.b16 %v4052, %v4044
    %v5301 = vpack.c.b16 %v4053, %v4045
    %v5302 = vpack.c.b16 %v4054, %v4046
    %v5303 = vpack.c.b16 %v4055, %v4047
    %v5304 = vpack.c.b16 %v4056, %v4048
    %v5305 = vpack.c.b16 %v4065, %v4057
    %v5306 = vpack.c.b16 %v4066, %v4058
    %v5307 = vpack.c.b16 %v4067, %v4059
    %v5308 = vpack.c.b16 %v4068, %v4060
    %v5309 = vpack.c.b16 %v4069, %v4061
    %v5310 = vpack.c.b16 %v4070, %v4062
    %v5311 = vpack.c.b16 %v4071, %v4063
    %v5312 = vpack.c.b16 %v4072, %v4064
    %v5313 = vpack.c.b16 %v4081, %v4073
    %v5314 = vpack.c.b16 %v4082, %v4074
    %v5315 = vpack.c.b16 %v4083, %v4075
    %v5316 = vpack.c.b16 %v4084, %v4076
    %v5317 = vpack.c.b16 %v4085, %v4077
    %v5318 = vpack.c.b16 %v4086, %v4078
    %v5319 = vpack.c.b16 %v4087, %v4079
    %v5320 = vpack.c.b16 %v4088, %v4080
    %v5321 = vpack.c.b16 %v4097, %v4089
    %v5322 = vpack.c.b16 %v4098, %v4090
    %v5323 = vpack.c.b16 %v4099, %v4091
    %v5324 = vpack.c.b16 %v4100, %v4092
    %v5325 = vpack.c.b16 %v4101, %v4093
    %v5326 = vpack.c.b16 %v4102, %v4094
    %v5327 = vpack.c.b16 %v4103, %v4095
    %v5328 = vpack.c.b16 %v4104, %v4096
    %v5329 = vpack.c.b16 %v4113, %v4105
    %v5330 = vpack.c.b16 %v4114, %v4106
    %v5331 = vpack.c.b16 %v4115, %v4107
    %v5332 = vpack.c.b16 %v4116, %v4108
    %v5333 = vpack.c.b16 %v4117, %v4109
    %v5334 = vpack.c.b16 %v4118, %v4110
    %v5335 = vpack.c.b16 %v4119, %v4111
    %v5336 = vpack.c.b16 %v4120, %v4112
    %v5337 = vpack.c.b16 %v4129, %v4121
    %v5338 = vpack.c.b16 %v4130, %v4122
    %v5339 = vpack.c.b16 %v4131, %v4123
    %v5340 = vpack.c.b16 %v4132, %v4124
    %v5341 = vpack.c.b16 %v4133, %v4125
    %v5342 = vpack.c.b16 %v4134, %v4126
    %v5343 = vpack.c.b16 %v4135, %v4127
    %v5344 = vpack.c.b16 %v4136, %v4128
    %v5345 = vpack.c.b16 %v4145, %v4137
    %v5346 = vpack.c.b16 %v4146, %v4138
    %v5347 = vpack.c.b16 %v4147, %v4139
    %v5348 = vpack.c.b16 %v4148, %v4140
    %v5349 = vpack.c.b16 %v4149, %v4141
    %v5350 = vpack.c.b16 %v4150, %v4142
    %v5351 = vpack.c.b16 %v4151, %v4143
    %v5352 = vpack.c.b16 %v4152, %v4144
    %v5353 = vpack.c.b16 %v4161, %v4153
    %v5354 = vpack.c.b16 %v4162, %v4154
    %v5355 = vpack.c.b16 %v4163, %v4155
    %v5356 = vpack.c.b16 %v4164, %v4156
    %v5357 = vpack.c.b16 %v4165, %v4157
    %v5358 = vpack.c.b16 %v4166, %v4158
    %v5359 = vpack.c.b16 %v4167, %v4159
    %v5360 = vpack.c.b16 %v4168, %v4160
    %v5361 = vpack.c.b16 %v4177, %v4169
    %v5362 = vpack.c.b16 %v4178, %v4170
    %v5363 = vpack.c.b16 %v4179, %v4171
    %v5364 = vpack.c.b16 %v4180, %v4172
    %v5365 = vpack.c.b16 %v4181, %v4173
    %v5366 = vpack.c.b16 %v4182, %v4174
    %v5367 = vpack.c.b16 %v4183, %v4175
    %v5368 = vpack.c.b16 %v4184, %v4176
    %v5369 = vpack.c.b16 %v4193, %v4185
    %v5370 = vpack.c.b16 %v4194, %v4186
    %v5371 = vpack.c.b16 %v4195, %v4187
    %v5372 = vpack.c.b16 %v4196, %v4188
    %v5373 = vpack.c.b16 %v4197, %v4189
    %v5374 = vpack.c.b16 %v4198, %v4190
    %v5375 = vpack.c.b16 %v4199, %v4191
    %v5376 = vpack.c.b16 %v4200, %v4192
    %v5377 = vpack.c.b16 %v4209, %v4201
    %v5378 = vpack.c.b16 %v4210, %v4202
    %v5379 = vpack.c.b16 %v4211, %v4203
    %v5380 = vpack.c.b16 %v4212, %v4204
    %v5381 = vpack.c.b16 %v4213, %v4205
    %v5382 = vpack.c.b16 %v4214, %v4206
    %v5383 = vpack.c.b16 %v4215, %v4207
    %v5384 = vpack.c.b16 %v4216, %v4208
    %v5385 = vpack.c.b16 %v4225, %v4217
    %v5386 = vpack.c.b16 %v4226, %v4218
    %v5387 = vpack.c.b16 %v4227, %v4219
    %v5388 = vpack.c.b16 %v4228, %v4220
    %v5389 = vpack.c.b16 %v4229, %v4221
    %v5390 = vpack.c.b16 %v4230, %v4222
    %v5391 = vpack.c.b16 %v4231, %v4223
    %v5392 = vpack.c.b16 %v4232, %v4224
    %v5393 = vpack.c.b16 %v4241, %v4233
    %v5394 = vpack.c.b16 %v4242, %v4234
    %v5395 = vpack.c.b16 %v4243, %v4235
    %v5396 = vpack.c.b16 %v4244, %v4236
    %v5397 = vpack.c.b16 %v4245, %v4237
    %v5398 = vpack.c.b16 %v4246, %v4238
    %v5399 = vpack.c.b16 %v4247, %v4239
    %v5400 = vpack.c.b16 %v4248, %v4240
    %v5401 = vpack.c.b16 %v4257, %v4249
    %v5402 = vpack.c.b16 %v4258, %v4250
    %v5403 = vpack.c.b16 %v4259, %v4251
    %v5404 = vpack.c.b16 %v4260, %v4252
    %v5405 = vpack.c.b16 %v4261, %v4253
    %v5406 = vpack.c.b16 %v4262, %v4254
    %v5407 = vpack.c.b16 %v4263, %v4255
    %v5408 = vpack.c.b16 %v4264, %v4256
    %v5409 = vpack.c.b16 %v4273, %v4265
    %v5410 = vpack.c.b16 %v4274, %v4266
    %v5411 = vpack.c.b16 %v4275, %v4267
    %v5412 = vpack.c.b16 %v4276, %v4268
    %v5413 = vpack.c.b16 %v4277, %v4269
    %v5414 = vpack.c.b16 %v4278, %v4270
    %v5415 = vpack.c.b16 %v4279, %v4271
    %v5416 = vpack.c.b16 %v4280, %v4272
    %v5417 = vpack.c.b16 %v4289, %v4281
    %v5418 = vpack.c.b16 %v4290, %v4282
    %v5419 = vpack.c.b16 %v4291, %v4283
    %v5420 = vpack.c.b16 %v4292, %v4284
    %v5421 = vpack.c.b16 %v4293, %v4285
    %v5422 = vpack.c.b16 %v4294, %v4286
    %v5423 = vpack.c.b16 %v4295, %v4287
    %v5424 = vpack.c.b16 %v4296, %v4288
    %v5425 = vpack.c.b16 %v4305, %v4297
    %v5426 = vpack.c.b16 %v4306, %v4298
    %v5427 = vpack.c.b16 %v4307, %v4299
    %v5428 = vpack.c.b16 %v4308, %v4300
    %v5429 = vpack.c.b16 %v4309, %v4301
    %v5430 = vpack.c.b16 %v4310, %v4302
    %v5431 = vpack.c.b16 %v4311, %v4303
    %v5432 = vpack.c.b16 %v4312, %v4304
    %v5433 = vpack.c.b16 %v4321, %v4313
    %v5434 = vpack.c.b16 %v4322, %v4314
    %v5435 = vpack.c.b16 %v4323, %v4315
    %v5436 = vpack.c.b16 %v4324, %v4316
    %v5437 = vpack.c.b16 %v4325, %v4317
    %v5438 = vpack.c.b16 %v4326, %v4318
    %v5439 = vpack.c.b16 %v4327, %v4319
    %v5440 = vpack.c.b16 %v4328, %v4320
    %v5441 = vpack.c.b16 %v4337, %v4329
    %v5442 = vpack.c.b16 %v4338, %v4330
    %v5443 = vpack.c.b16 %v4339, %v4331
    %v5444 = vpack.c.b16 %v4340, %v4332
    %v5445 = vpack.c.b16 %v4341, %v4333
    %v5446 = vpack.c.b16 %v4342, %v4334
    %v5447 = vpack.c.b16 %v4343, %v4335
    %v5448 = vpack.c.b16 %v4344, %v4336
    %v5449 = vpack.c.b16 %v4353, %v4345
    %v5450 = vpack.c.b16 %v4354, %v4346
    %v5451 = vpack.c.b16 %v4355, %v4347
    %v5452 = vpack.c.b16 %v4356, %v4348
    %v5453 = vpack.c.b16 %v4357, %v4349
    %v5454 = vpack.c.b16 %v4358, %v4350
    %v5455 = vpack.c.b16 %v4359, %v4351
    %v5456 = vpack.c.b16 %v4360, %v4352
    %v5457 = vpack.c.b16 %v4369, %v4361
    %v5458 = vpack.c.b16 %v4370, %v4362
    %v5459 = vpack.c.b16 %v4371, %v4363
    %v5460 = vpack.c.b16 %v4372, %v4364
    %v5461 = vpack.c.b16 %v4373, %v4365
    %v5462 = vpack.c.b16 %v4374, %v4366
    %v5463 = vpack.c.b16 %v4375, %v4367
    %v5464 = vpack.c.b16 %v4376, %v4368
    %v5465 = vpack.c.b16 %v4385, %v4377
    %v5466 = vpack.c.b16 %v4386, %v4378
    %v5467 = vpack.c.b16 %v4387, %v4379
    %v5468 = vpack.c.b16 %v4388, %v4380
    %v5469 = vpack.c.b16 %v4389, %v4381
    %v5470 = vpack.c.b16 %v4390, %v4382
    %v5471 = vpack.c.b16 %v4391, %v4383
    %v5472 = vpack.c.b16 %v4392, %v4384
    %v5473 = vpack.c.b16 %v4401, %v4393
    %v5474 = vpack.c.b16 %v4402, %v4394
    %v5475 = vpack.c.b16 %v4403, %v4395
    %v5476 = vpack.c.b16 %v4404, %v4396
    %v5477 = vpack.c.b16 %v4405, %v4397
    %v5478 = vpack.c.b16 %v4406, %v4398
    %v5479 = vpack.c.b16 %v4407, %v4399
    %v5480 = vpack.c.b16 %v4408, %v4400
    %v5481 = vpack.c.b16 %v4417, %v4409
    %v5482 = vpack.c.b16 %v4418, %v4410
    %v5483 = vpack.c.b16 %v4419, %v4411
    %v5484 = vpack.c.b16 %v4420, %v4412
    %v5485 = vpack.c.b16 %v4421, %v4413
    %v5486 = vpack.c.b16 %v4422, %v4414
    %v5487 = vpack.c.b16 %v4423, %v4415
    %v5488 = vpack.c.b16 %v4424, %v4416
    %v5489 = vpack.c.b16 %v4433, %v4425
    %v5490 = vpack.c.b16 %v4434, %v4426
    %v5491 = vpack.c.b16 %v4435, %v4427
    %v5492 = vpack.c.b16 %v4436, %v4428
    %v5493 = vpack.c.b16 %v4437, %v4429
    %v5494 = vpack.c.b16 %v4438, %v4430
    %v5495 = vpack.c.b16 %v4439, %v4431
    %v5496 = vpack.c.b16 %v4440, %v4432
    %v5497 = vpack.c.b16 %v4449, %v4441
    %v5498 = vpack.c.b16 %v4450, %v4442
    %v5499 = vpack.c.b16 %v4451, %v4443
    %v5500 = vpack.c.b16 %v4452, %v4444
    %v5501 = vpack.c.b16 %v4453, %v4445
    %v5502 = vpack.c.b16 %v4454, %v4446
    %v5503 = vpack.c.b16 %v4455, %v4447
    %v5504 = vpack.c.b16 %v4456, %v4448
    %v5505 = vpack.c.b16 %v4465, %v4457
    %v5506 = vpack.c.b16 %v4466, %v4458
    %v5507 = vpack.c.b16 %v4467, %v4459
    %v5508 = vpack.c.b16 %v4468, %v4460
    %v5509 = vpack.c.b16 %v4469, %v4461
    %v5510 = vpack.c.b16 %v4470, %v4462
    %v5511 = vpack.c.b16 %v4471, %v4463
    %v5512 = vpack.c.b16 %v4472, %v4464
    %v5513 = vpack.c.b16 %v4481, %v4473
    %v5514 = vpack.c.b16 %v4482, %v4474
    %v5515 = vpack.c.b16 %v4483, %v4475
    %v5516 = vpack.c.b16 %v4484, %v4476
    %v5517 = vpack.c.b16 %v4485, %v4477
    %v5518 = vpack.c.b16 %v4486, %v4478
    %v5519 = vpack.c.b16 %v4487, %v4479
    %v5520 = vpack.c.b16 %v4488, %v4480
    %v5521 = vpack.c.b16 %v4497, %v4489
    %v5522 = vpack.c.b16 %v4498, %v4490
    %v5523 = vpack.c.b16 %v4499, %v4491
    %v5524 = vpack.c.b16 %v4500, %v4492
    %v5525 = vpack.c.b16 %v4501, %v4493
    %v5526 = vpack.c.b16 %v4502, %v4494
    %v5527 = vpack.c.b16 %v4503, %v4495
    %v5528 = vpack.c.b16 %v4504, %v4496
    %6553 = vmatprep.subr.bf16.mxu0 %v4562
    %6554 = vmatpush1.bf16.msra.mxu0 %v4561
    %6555 = vmatprep.subr.bf16.mxu0 %v4554
    %6556 = vmatpush1.bf16.msra.mxu0 %v4553
    %6557 = vmatprep.subr.bf16.mxu0 %v4546
    %6558 = vmatpush1.bf16.msra.mxu0 %v4545
    %6559 = vmatprep.subr.bf16.mxu0 %v4538
    %6560 = vmatpush1.bf16.msra.mxu0 %v4537
    %6561 = vmatprep.subr.bf16.mxu0 %v4530
    %6562 = vmatpush1.bf16.msra.mxu0 %v4529
    %6563 = vmatprep.subr.bf16.mxu0 %v4522
    %6564 = vmatpush1.bf16.msra.mxu0 %v4521
    %6565 = vmatprep.subr.bf16.mxu0 %v4514
    %6566 = vmatpush1.bf16.msra.mxu0 %v4513
    %6567 = vmatprep.subr.bf16.mxu0 %v4506
    %6568 = vmatpush1.bf16.msra.mxu0 %v4505
    %6569 = vmatprep.subr.bf16.mxu0 %v4626
    %6570 = vmatpush2.bf16.msra.mxu0 %v4625
    %6571 = vmatprep.subr.bf16.mxu0 %v4618
    %6572 = vmatpush2.bf16.msra.mxu0 %v4617
    %6573 = vmatprep.subr.bf16.mxu0 %v4610
    %6574 = vmatpush2.bf16.msra.mxu0 %v4609
    %6575 = vmatprep.subr.bf16.mxu0 %v4602
    %6576 = vmatpush2.bf16.msra.mxu0 %v4601
    %6577 = vmatprep.subr.bf16.mxu0 %v4594
    %6578 = vmatpush2.bf16.msra.mxu0 %v4593
    %6579 = vmatprep.subr.bf16.mxu0 %v4586
    %6580 = vmatpush2.bf16.msra.mxu0 %v4585
    %6581 = vmatprep.subr.bf16.mxu0 %v4578
    %6582 = vmatpush2.bf16.msra.mxu0 %v4577
    %6583 = vmatprep.subr.bf16.mxu0 %v4570
    %6584 = vmatpush2.bf16.msra.mxu0 %v4569
    %6585 = vmatprep.mubr.bf16.mxu0 %v394
    %6586 = vmatmul.mubr.bf16.gmra.mxu0 %v393
    %v6587 = vpop.f32.mrf.mxu0
    %v6588 = vadd.f32 0.0, %v6587
    %v6589 = vpop.f32.mrf.mxu0
    %v6590 = vadd.f32 0.0, %v6589
    %v6591 = vpop.f32.mrf.mxu0
    %v6592 = vpop.f32.mrf.mxu0
    %6593 = vdwg.mxu0
    %6594 = vmatprep.subr.bf16.mxu0 %v4690
    %6595 = vmatpush1.bf16.msra.mxu0 %v4689
    %6596 = vmatprep.subr.bf16.mxu0 %v4682
    %6597 = vmatpush1.bf16.msra.mxu0 %v4681
    %6598 = vmatprep.subr.bf16.mxu0 %v4674
    %6599 = vmatpush1.bf16.msra.mxu0 %v4673
    %6600 = vmatprep.subr.bf16.mxu0 %v4666
    %6601 = vmatpush1.bf16.msra.mxu0 %v4665
    %6602 = vmatprep.subr.bf16.mxu0 %v4658
    %6603 = vmatpush1.bf16.msra.mxu0 %v4657
    %6604 = vmatprep.subr.bf16.mxu0 %v4650
    %6605 = vmatpush1.bf16.msra.mxu0 %v4649
    %6606 = vmatprep.subr.bf16.mxu0 %v4642
    %6607 = vmatpush1.bf16.msra.mxu0 %v4641
    %6608 = vmatprep.subr.bf16.mxu0 %v4634
    %6609 = vmatpush1.bf16.msra.mxu0 %v4633
    %6610 = vmatprep.subr.bf16.mxu0 %v4754
    %6611 = vmatpush2.bf16.msra.mxu0 %v4753
    %6612 = vmatprep.subr.bf16.mxu0 %v4746
    %6613 = vmatpush2.bf16.msra.mxu0 %v4745
    %6614 = vmatprep.subr.bf16.mxu0 %v4738
    %6615 = vmatpush2.bf16.msra.mxu0 %v4737
    %6616 = vmatprep.subr.bf16.mxu0 %v4730
    %6617 = vmatpush2.bf16.msra.mxu0 %v4729
    %6618 = vmatprep.subr.bf16.mxu0 %v4722
    %6619 = vmatpush2.bf16.msra.mxu0 %v4721
    %6620 = vmatprep.subr.bf16.mxu0 %v4714
    %6621 = vmatpush2.bf16.msra.mxu0 %v4713
    %6622 = vmatprep.subr.bf16.mxu0 %v4706
    %6623 = vmatpush2.bf16.msra.mxu0 %v4705
    %6624 = vmatprep.subr.bf16.mxu0 %v4698
    %6625 = vmatpush2.bf16.msra.mxu0 %v4697
    %6626 = vmatprep.mubr.bf16.mxu0 %v396
    %6627 = vmatmul.mubr.bf16.gmra.mxu0 %v395
    %v6628 = vpop.f32.mrf.mxu0
    %v6629 = vadd.f32 %v6588, %v6628
    %v6630 = vpop.f32.mrf.mxu0
    %v6631 = vadd.f32 %v6590, %v6630
    %v6632 = vpop.f32.mrf.mxu0
    %v6633 = vpop.f32.mrf.mxu0
    %6634 = vdwg.mxu0
    %6635 = vmatprep.subr.bf16.mxu0 %v4818
    %6636 = vmatpush1.bf16.msra.mxu0 %v4817
    %6637 = vmatprep.subr.bf16.mxu0 %v4810
    %6638 = vmatpush1.bf16.msra.mxu0 %v4809
    %6639 = vmatprep.subr.bf16.mxu0 %v4802
    %6640 = vmatpush1.bf16.msra.mxu0 %v4801
    %6641 = vmatprep.subr.bf16.mxu0 %v4794
    %6642 = vmatpush1.bf16.msra.mxu0 %v4793
    %6643 = vmatprep.subr.bf16.mxu0 %v4786
    %6644 = vmatpush1.bf16.msra.mxu0 %v4785
    %6645 = vmatprep.subr.bf16.mxu0 %v4778
    %6646 = vmatpush1.bf16.msra.mxu0 %v4777
    %6647 = vmatprep.subr.bf16.mxu0 %v4770
    %6648 = vmatpush1.bf16.msra.mxu0 %v4769
    %6649 = vmatprep.subr.bf16.mxu0 %v4762
    %6650 = vmatpush1.bf16.msra.mxu0 %v4761
    %6651 = vmatprep.subr.bf16.mxu0 %v4882
    %6652 = vmatpush2.bf16.msra.mxu0 %v4881
    %6653 = vmatprep.subr.bf16.mxu0 %v4874
    %6654 = vmatpush2.bf16.msra.mxu0 %v4873
    %6655 = vmatprep.subr.bf16.mxu0 %v4866
    %6656 = vmatpush2.bf16.msra.mxu0 %v4865
    %6657 = vmatprep.subr.bf16.mxu0 %v4858
    %6658 = vmatpush2.bf16.msra.mxu0 %v4857
    %6659 = vmatprep.subr.bf16.mxu0 %v4850
    %6660 = vmatpush2.bf16.msra.mxu0 %v4849
    %6661 = vmatprep.subr.bf16.mxu0 %v4842
    %6662 = vmatpush2.bf16.msra.mxu0 %v4841
    %6663 = vmatprep.subr.bf16.mxu0 %v4834
    %6664 = vmatpush2.bf16.msra.mxu0 %v4833
    %6665 = vmatprep.subr.bf16.mxu0 %v4826
    %6666 = vmatpush2.bf16.msra.mxu0 %v4825
    %6667 = vmatprep.mubr.bf16.mxu0 %v398
    %6668 = vmatmul.mubr.bf16.gmra.mxu0 %v397
    %v6669 = vpop.f32.mrf.mxu0
    %v6670 = vadd.f32 %v6629, %v6669
    %v6671 = vpop.f32.mrf.mxu0
    %v6672 = vadd.f32 %v6631, %v6671
    %v6673 = vpop.f32.mrf.mxu0
    %v6674 = vpop.f32.mrf.mxu0
    %6675 = vdwg.mxu0
    %6676 = vmatprep.subr.bf16.mxu0 %v4946
    %6677 = vmatpush1.bf16.msra.mxu0 %v4945
    %6678 = vmatprep.subr.bf16.mxu0 %v4938
    %6679 = vmatpush1.bf16.msra.mxu0 %v4937
    %6680 = vmatprep.subr.bf16.mxu0 %v4930
    %6681 = vmatpush1.bf16.msra.mxu0 %v4929
    %6682 = vmatprep.subr.bf16.mxu0 %v4922
    %6683 = vmatpush1.bf16.msra.mxu0 %v4921
    %6684 = vmatprep.subr.bf16.mxu0 %v4914
    %6685 = vmatpush1.bf16.msra.mxu0 %v4913
    %6686 = vmatprep.subr.bf16.mxu0 %v4906
    %6687 = vmatpush1.bf16.msra.mxu0 %v4905
    %6688 = vmatprep.subr.bf16.mxu0 %v4898
    %6689 = vmatpush1.bf16.msra.mxu0 %v4897
    %6690 = vmatprep.subr.bf16.mxu0 %v4890
    %6691 = vmatpush1.bf16.msra.mxu0 %v4889
    %6692 = vmatprep.subr.bf16.mxu0 %v5010
    %6693 = vmatpush2.bf16.msra.mxu0 %v5009
    %6694 = vmatprep.subr.bf16.mxu0 %v5002
    %6695 = vmatpush2.bf16.msra.mxu0 %v5001
    %6696 = vmatprep.subr.bf16.mxu0 %v4994
    %6697 = vmatpush2.bf16.msra.mxu0 %v4993
    %6698 = vmatprep.subr.bf16.mxu0 %v4986
    %6699 = vmatpush2.bf16.msra.mxu0 %v4985
    %6700 = vmatprep.subr.bf16.mxu0 %v4978
    %6701 = vmatpush2.bf16.msra.mxu0 %v4977
    %6702 = vmatprep.subr.bf16.mxu0 %v4970
    %6703 = vmatpush2.bf16.msra.mxu0 %v4969
    %6704 = vmatprep.subr.bf16.mxu0 %v4962
    %6705 = vmatpush2.bf16.msra.mxu0 %v4961
    %6706 = vmatprep.subr.bf16.mxu0 %v4954
    %6707 = vmatpush2.bf16.msra.mxu0 %v4953
    %6708 = vmatprep.mubr.bf16.mxu0 %v400
    %6709 = vmatmul.mubr.bf16.gmra.mxu0 %v399
    %v6710 = vpop.f32.mrf.mxu0
    %v6711 = vadd.f32 %v6670, %v6710
    %v6712 = vpop.f32.mrf.mxu0
    %v6713 = vadd.f32 %v6672, %v6712
    %v6714 = vpop.f32.mrf.mxu0
    %v6715 = vpop.f32.mrf.mxu0
    %6716 = vdwg.mxu0
    %6717 = vmatprep.subr.bf16.mxu0 %v5074
    %6718 = vmatpush1.bf16.msra.mxu0 %v5073
    %6719 = vmatprep.subr.bf16.mxu0 %v5066
    %6720 = vmatpush1.bf16.msra.mxu0 %v5065
    %6721 = vmatprep.subr.bf16.mxu0 %v5058
    %6722 = vmatpush1.bf16.msra.mxu0 %v5057
    %6723 = vmatprep.subr.bf16.mxu0 %v5050
    %6724 = vmatpush1.bf16.msra.mxu0 %v5049
    %6725 = vmatprep.subr.bf16.mxu0 %v5042
    %6726 = vmatpush1.bf16.msra.mxu0 %v5041
    %6727 = vmatprep.subr.bf16.mxu0 %v5034
    %6728 = vmatpush1.bf16.msra.mxu0 %v5033
    %6729 = vmatprep.subr.bf16.mxu0 %v5026
    %6730 = vmatpush1.bf16.msra.mxu0 %v5025
    %6731 = vmatprep.subr.bf16.mxu0 %v5018
    %6732 = vmatpush1.bf16.msra.mxu0 %v5017
    %6733 = vmatprep.subr.bf16.mxu0 %v5138
    %6734 = vmatpush2.bf16.msra.mxu0 %v5137
    %6735 = vmatprep.subr.bf16.mxu0 %v5130
    %6736 = vmatpush2.bf16.msra.mxu0 %v5129
    %6737 = vmatprep.subr.bf16.mxu0 %v5122
    %6738 = vmatpush2.bf16.msra.mxu0 %v5121
    %6739 = vmatprep.subr.bf16.mxu0 %v5114
    %6740 = vmatpush2.bf16.msra.mxu0 %v5113
    %6741 = vmatprep.subr.bf16.mxu0 %v5106
    %6742 = vmatpush2.bf16.msra.mxu0 %v5105
    %6743 = vmatprep.subr.bf16.mxu0 %v5098
    %6744 = vmatpush2.bf16.msra.mxu0 %v5097
    %6745 = vmatprep.subr.bf16.mxu0 %v5090
    %6746 = vmatpush2.bf16.msra.mxu0 %v5089
    %6747 = vmatprep.subr.bf16.mxu0 %v5082
    %6748 = vmatpush2.bf16.msra.mxu0 %v5081
    %6749 = vmatprep.mubr.bf16.mxu0 %v402
    %6750 = vmatmul.mubr.bf16.gmra.mxu0 %v401
    %v6751 = vpop.f32.mrf.mxu0
    %v6752 = vadd.f32 %v6711, %v6751
    %v6753 = vpop.f32.mrf.mxu0
    %v6754 = vadd.f32 %v6713, %v6753
    %v6755 = vpop.f32.mrf.mxu0
    %v6756 = vpop.f32.mrf.mxu0
    %6757 = vdwg.mxu0
    %6758 = vmatprep.subr.bf16.mxu0 %v5202
    %6759 = vmatpush1.bf16.msra.mxu0 %v5201
    %6760 = vmatprep.subr.bf16.mxu0 %v5194
    %6761 = vmatpush1.bf16.msra.mxu0 %v5193
    %6762 = vmatprep.subr.bf16.mxu0 %v5186
    %6763 = vmatpush1.bf16.msra.mxu0 %v5185
    %6764 = vmatprep.subr.bf16.mxu0 %v5178
    %6765 = vmatpush1.bf16.msra.mxu0 %v5177
    %6766 = vmatprep.subr.bf16.mxu0 %v5170
    %6767 = vmatpush1.bf16.msra.mxu0 %v5169
    %6768 = vmatprep.subr.bf16.mxu0 %v5162
    %6769 = vmatpush1.bf16.msra.mxu0 %v5161
    %6770 = vmatprep.subr.bf16.mxu0 %v5154
    %6771 = vmatpush1.bf16.msra.mxu0 %v5153
    %6772 = vmatprep.subr.bf16.mxu0 %v5146
    %6773 = vmatpush1.bf16.msra.mxu0 %v5145
    %6774 = vmatprep.subr.bf16.mxu0 %v5266
    %6775 = vmatpush2.bf16.msra.mxu0 %v5265
    %6776 = vmatprep.subr.bf16.mxu0 %v5258
    %6777 = vmatpush2.bf16.msra.mxu0 %v5257
    %6778 = vmatprep.subr.bf16.mxu0 %v5250
    %6779 = vmatpush2.bf16.msra.mxu0 %v5249
    %6780 = vmatprep.subr.bf16.mxu0 %v5242
    %6781 = vmatpush2.bf16.msra.mxu0 %v5241
    %6782 = vmatprep.subr.bf16.mxu0 %v5234
    %6783 = vmatpush2.bf16.msra.mxu0 %v5233
    %6784 = vmatprep.subr.bf16.mxu0 %v5226
    %6785 = vmatpush2.bf16.msra.mxu0 %v5225
    %6786 = vmatprep.subr.bf16.mxu0 %v5218
    %6787 = vmatpush2.bf16.msra.mxu0 %v5217
    %6788 = vmatprep.subr.bf16.mxu0 %v5210
    %6789 = vmatpush2.bf16.msra.mxu0 %v5209
    %6790 = vmatprep.mubr.bf16.mxu0 %v404
    %6791 = vmatmul.mubr.bf16.gmra.mxu0 %v403
    %v6792 = vpop.f32.mrf.mxu0
    %v6793 = vadd.f32 %v6752, %v6792
    %v6794 = vpop.f32.mrf.mxu0
    %v6795 = vadd.f32 %v6754, %v6794
    %v6796 = vpop.f32.mrf.mxu0
    %v6797 = vpop.f32.mrf.mxu0
    %6798 = vdwg.mxu0
    %6799 = vmatprep.subr.bf16.mxu0 %v5330
    %6800 = vmatpush1.bf16.msra.mxu0 %v5329
    %6801 = vmatprep.subr.bf16.mxu0 %v5322
    %6802 = vmatpush1.bf16.msra.mxu0 %v5321
    %6803 = vmatprep.subr.bf16.mxu0 %v5314
    %6804 = vmatpush1.bf16.msra.mxu0 %v5313
    %6805 = vmatprep.subr.bf16.mxu0 %v5306
    %6806 = vmatpush1.bf16.msra.mxu0 %v5305
    %6807 = vmatprep.subr.bf16.mxu0 %v5298
    %6808 = vmatpush1.bf16.msra.mxu0 %v5297
    %6809 = vmatprep.subr.bf16.mxu0 %v5290
    %6810 = vmatpush1.bf16.msra.mxu0 %v5289
    %6811 = vmatprep.subr.bf16.mxu0 %v5282
    %6812 = vmatpush1.bf16.msra.mxu0 %v5281
    %6813 = vmatprep.subr.bf16.mxu0 %v5274
    %6814 = vmatpush1.bf16.msra.mxu0 %v5273
    %6815 = vmatprep.subr.bf16.mxu0 %v5394
    %6816 = vmatpush2.bf16.msra.mxu0 %v5393
    %6817 = vmatprep.subr.bf16.mxu0 %v5386
    %6818 = vmatpush2.bf16.msra.mxu0 %v5385
    %6819 = vmatprep.subr.bf16.mxu0 %v5378
    %6820 = vmatpush2.bf16.msra.mxu0 %v5377
    %6821 = vmatprep.subr.bf16.mxu0 %v5370
    %6822 = vmatpush2.bf16.msra.mxu0 %v5369
    %6823 = vmatprep.subr.bf16.mxu0 %v5362
    %6824 = vmatpush2.bf16.msra.mxu0 %v5361
    %6825 = vmatprep.subr.bf16.mxu0 %v5354
    %6826 = vmatpush2.bf16.msra.mxu0 %v5353
    %6827 = vmatprep.subr.bf16.mxu0 %v5346
    %6828 = vmatpush2.bf16.msra.mxu0 %v5345
    %6829 = vmatprep.subr.bf16.mxu0 %v5338
    %6830 = vmatpush2.bf16.msra.mxu0 %v5337
    %6831 = vmatprep.mubr.bf16.mxu0 %v406
    %6832 = vmatmul.mubr.bf16.gmra.mxu0 %v405
    %v6833 = vpop.f32.mrf.mxu0
    %v6834 = vadd.f32 %v6793, %v6833
    %v6835 = vpop.f32.mrf.mxu0
    %v6836 = vadd.f32 %v6795, %v6835
    %v6837 = vpop.f32.mrf.mxu0
    %v6838 = vpop.f32.mrf.mxu0
    %6839 = vdwg.mxu0
    %6840 = vmatprep.subr.bf16.mxu0 %v5458
    %6841 = vmatpush1.bf16.msra.mxu0 %v5457
    %6842 = vmatprep.subr.bf16.mxu0 %v5450
    %6843 = vmatpush1.bf16.msra.mxu0 %v5449
    %6844 = vmatprep.subr.bf16.mxu0 %v5442
    %6845 = vmatpush1.bf16.msra.mxu0 %v5441
    %6846 = vmatprep.subr.bf16.mxu0 %v5434
    %6847 = vmatpush1.bf16.msra.mxu0 %v5433
    %6848 = vmatprep.subr.bf16.mxu0 %v5426
    %6849 = vmatpush1.bf16.msra.mxu0 %v5425
    %6850 = vmatprep.subr.bf16.mxu0 %v5418
    %6851 = vmatpush1.bf16.msra.mxu0 %v5417
    %6852 = vmatprep.subr.bf16.mxu0 %v5410
    %6853 = vmatpush1.bf16.msra.mxu0 %v5409
    %6854 = vmatprep.subr.bf16.mxu0 %v5402
    %6855 = vmatpush1.bf16.msra.mxu0 %v5401
    %6856 = vmatprep.subr.bf16.mxu0 %v5522
    %6857 = vmatpush2.bf16.msra.mxu0 %v5521
    %6858 = vmatprep.subr.bf16.mxu0 %v5514
    %6859 = vmatpush2.bf16.msra.mxu0 %v5513
    %6860 = vmatprep.subr.bf16.mxu0 %v5506
    %6861 = vmatpush2.bf16.msra.mxu0 %v5505
    %6862 = vmatprep.subr.bf16.mxu0 %v5498
    %6863 = vmatpush2.bf16.msra.mxu0 %v5497
    %6864 = vmatprep.subr.bf16.mxu0 %v5490
    %6865 = vmatpush2.bf16.msra.mxu0 %v5489
    %6866 = vmatprep.subr.bf16.mxu0 %v5482
    %6867 = vmatpush2.bf16.msra.mxu0 %v5481
    %6868 = vmatprep.subr.bf16.mxu0 %v5474
    %6869 = vmatpush2.bf16.msra.mxu0 %v5473
    %6870 = vmatprep.subr.bf16.mxu0 %v5466
    %6871 = vmatpush2.bf16.msra.mxu0 %v5465
    %6872 = vmatprep.mubr.bf16.mxu0 %v408
    %6873 = vmatmul.mubr.bf16.gmra.mxu0 %v407
    %v6874 = vpop.f32.mrf.mxu0
    %v6875 = vadd.f32 %v6834, %v6874
    %v6876 = vpop.f32.mrf.mxu0
    %v6877 = vadd.f32 %v6836, %v6876
    %v6878 = vpop.f32.mrf.mxu0
    %v6879 = vpop.f32.mrf.mxu0
    %6880 = vdwg.mxu0
    %6881 = vmatprep.subr.bf16.mxu0 %v4564
    %6882 = vmatpush1.bf16.msra.mxu0 %v4563
    %6883 = vmatprep.subr.bf16.mxu0 %v4556
    %6884 = vmatpush1.bf16.msra.mxu0 %v4555
    %6885 = vmatprep.subr.bf16.mxu0 %v4548
    %6886 = vmatpush1.bf16.msra.mxu0 %v4547
    %6887 = vmatprep.subr.bf16.mxu0 %v4540
    %6888 = vmatpush1.bf16.msra.mxu0 %v4539
    %6889 = vmatprep.subr.bf16.mxu0 %v4532
    %6890 = vmatpush1.bf16.msra.mxu0 %v4531
    %6891 = vmatprep.subr.bf16.mxu0 %v4524
    %6892 = vmatpush1.bf16.msra.mxu0 %v4523
    %6893 = vmatprep.subr.bf16.mxu0 %v4516
    %6894 = vmatpush1.bf16.msra.mxu0 %v4515
    %6895 = vmatprep.subr.bf16.mxu0 %v4508
    %6896 = vmatpush1.bf16.msra.mxu0 %v4507
    %6897 = vmatprep.subr.bf16.mxu0 %v4628
    %6898 = vmatpush2.bf16.msra.mxu0 %v4627
    %6899 = vmatprep.subr.bf16.mxu0 %v4620
    %6900 = vmatpush2.bf16.msra.mxu0 %v4619
    %6901 = vmatprep.subr.bf16.mxu0 %v4612
    %6902 = vmatpush2.bf16.msra.mxu0 %v4611
    %6903 = vmatprep.subr.bf16.mxu0 %v4604
    %6904 = vmatpush2.bf16.msra.mxu0 %v4603
    %6905 = vmatprep.subr.bf16.mxu0 %v4596
    %6906 = vmatpush2.bf16.msra.mxu0 %v4595
    %6907 = vmatprep.subr.bf16.mxu0 %v4588
    %6908 = vmatpush2.bf16.msra.mxu0 %v4587
    %6909 = vmatprep.subr.bf16.mxu0 %v4580
    %6910 = vmatpush2.bf16.msra.mxu0 %v4579
    %6911 = vmatprep.subr.bf16.mxu0 %v4572
    %6912 = vmatpush2.bf16.msra.mxu0 %v4571
    %6913 = vmatprep.mubr.bf16.mxu0 %v394
    %6914 = vmatmul.mubr.bf16.gmra.mxu0 %v393
    %v6915 = vpop.f32.mrf.mxu0
    %v6916 = vadd.f32 0.0, %v6915
    %v6917 = vpop.f32.mrf.mxu0
    %v6918 = vadd.f32 0.0, %v6917
    %v6919 = vpop.f32.mrf.mxu0
    %v6920 = vpop.f32.mrf.mxu0
    %6921 = vdwg.mxu0
    %6922 = vmatprep.subr.bf16.mxu0 %v4692
    %6923 = vmatpush1.bf16.msra.mxu0 %v4691
    %6924 = vmatprep.subr.bf16.mxu0 %v4684
    %6925 = vmatpush1.bf16.msra.mxu0 %v4683
    %6926 = vmatprep.subr.bf16.mxu0 %v4676
    %6927 = vmatpush1.bf16.msra.mxu0 %v4675
    %6928 = vmatprep.subr.bf16.mxu0 %v4668
    %6929 = vmatpush1.bf16.msra.mxu0 %v4667
    %6930 = vmatprep.subr.bf16.mxu0 %v4660
    %6931 = vmatpush1.bf16.msra.mxu0 %v4659
    %6932 = vmatprep.subr.bf16.mxu0 %v4652
    %6933 = vmatpush1.bf16.msra.mxu0 %v4651
    %6934 = vmatprep.subr.bf16.mxu0 %v4644
    %6935 = vmatpush1.bf16.msra.mxu0 %v4643
    %6936 = vmatprep.subr.bf16.mxu0 %v4636
    %6937 = vmatpush1.bf16.msra.mxu0 %v4635
    %6938 = vmatprep.subr.bf16.mxu0 %v4756
    %6939 = vmatpush2.bf16.msra.mxu0 %v4755
    %6940 = vmatprep.subr.bf16.mxu0 %v4748
    %6941 = vmatpush2.bf16.msra.mxu0 %v4747
    %6942 = vmatprep.subr.bf16.mxu0 %v4740
    %6943 = vmatpush2.bf16.msra.mxu0 %v4739
    %6944 = vmatprep.subr.bf16.mxu0 %v4732
    %6945 = vmatpush2.bf16.msra.mxu0 %v4731
    %6946 = vmatprep.subr.bf16.mxu0 %v4724
    %6947 = vmatpush2.bf16.msra.mxu0 %v4723
    %6948 = vmatprep.subr.bf16.mxu0 %v4716
    %6949 = vmatpush2.bf16.msra.mxu0 %v4715
    %6950 = vmatprep.subr.bf16.mxu0 %v4708
    %6951 = vmatpush2.bf16.msra.mxu0 %v4707
    %6952 = vmatprep.subr.bf16.mxu0 %v4700
    %6953 = vmatpush2.bf16.msra.mxu0 %v4699
    %6954 = vmatprep.mubr.bf16.mxu0 %v396
    %6955 = vmatmul.mubr.bf16.gmra.mxu0 %v395
    %v6956 = vpop.f32.mrf.mxu0
    %v6957 = vadd.f32 %v6916, %v6956
    %v6958 = vpop.f32.mrf.mxu0
    %v6959 = vadd.f32 %v6918, %v6958
    %v6960 = vpop.f32.mrf.mxu0
    %v6961 = vpop.f32.mrf.mxu0
    %6962 = vdwg.mxu0
    %6963 = vmatprep.subr.bf16.mxu0 %v4820
    %6964 = vmatpush1.bf16.msra.mxu0 %v4819
    %6965 = vmatprep.subr.bf16.mxu0 %v4812
    %6966 = vmatpush1.bf16.msra.mxu0 %v4811
    %6967 = vmatprep.subr.bf16.mxu0 %v4804
    %6968 = vmatpush1.bf16.msra.mxu0 %v4803
    %6969 = vmatprep.subr.bf16.mxu0 %v4796
    %6970 = vmatpush1.bf16.msra.mxu0 %v4795
    %6971 = vmatprep.subr.bf16.mxu0 %v4788
    %6972 = vmatpush1.bf16.msra.mxu0 %v4787
    %6973 = vmatprep.subr.bf16.mxu0 %v4780
    %6974 = vmatpush1.bf16.msra.mxu0 %v4779
    %6975 = vmatprep.subr.bf16.mxu0 %v4772
    %6976 = vmatpush1.bf16.msra.mxu0 %v4771
    %6977 = vmatprep.subr.bf16.mxu0 %v4764
    %6978 = vmatpush1.bf16.msra.mxu0 %v4763
    %6979 = vmatprep.subr.bf16.mxu0 %v4884
    %6980 = vmatpush2.bf16.msra.mxu0 %v4883
    %6981 = vmatprep.subr.bf16.mxu0 %v4876
    %6982 = vmatpush2.bf16.msra.mxu0 %v4875
    %6983 = vmatprep.subr.bf16.mxu0 %v4868
    %6984 = vmatpush2.bf16.msra.mxu0 %v4867
    %6985 = vmatprep.subr.bf16.mxu0 %v4860
    %6986 = vmatpush2.bf16.msra.mxu0 %v4859
    %6987 = vmatprep.subr.bf16.mxu0 %v4852
    %6988 = vmatpush2.bf16.msra.mxu0 %v4851
    %6989 = vmatprep.subr.bf16.mxu0 %v4844
    %6990 = vmatpush2.bf16.msra.mxu0 %v4843
    %6991 = vmatprep.subr.bf16.mxu0 %v4836
    %6992 = vmatpush2.bf16.msra.mxu0 %v4835
    %6993 = vmatprep.subr.bf16.mxu0 %v4828
    %6994 = vmatpush2.bf16.msra.mxu0 %v4827
    %6995 = vmatprep.mubr.bf16.mxu0 %v398
    %6996 = vmatmul.mubr.bf16.gmra.mxu0 %v397
    %v6997 = vpop.f32.mrf.mxu0
    %v6998 = vadd.f32 %v6957, %v6997
    %v6999 = vpop.f32.mrf.mxu0
    %v7000 = vadd.f32 %v6959, %v6999
    %v7001 = vpop.f32.mrf.mxu0
    %v7002 = vpop.f32.mrf.mxu0
    %7003 = vdwg.mxu0
    %7004 = vmatprep.subr.bf16.mxu0 %v4948
    %7005 = vmatpush1.bf16.msra.mxu0 %v4947
    %7006 = vmatprep.subr.bf16.mxu0 %v4940
    %7007 = vmatpush1.bf16.msra.mxu0 %v4939
    %7008 = vmatprep.subr.bf16.mxu0 %v4932
    %7009 = vmatpush1.bf16.msra.mxu0 %v4931
    %7010 = vmatprep.subr.bf16.mxu0 %v4924
    %7011 = vmatpush1.bf16.msra.mxu0 %v4923
    %7012 = vmatprep.subr.bf16.mxu0 %v4916
    %7013 = vmatpush1.bf16.msra.mxu0 %v4915
    %7014 = vmatprep.subr.bf16.mxu0 %v4908
    %7015 = vmatpush1.bf16.msra.mxu0 %v4907
    %7016 = vmatprep.subr.bf16.mxu0 %v4900
    %7017 = vmatpush1.bf16.msra.mxu0 %v4899
    %7018 = vmatprep.subr.bf16.mxu0 %v4892
    %7019 = vmatpush1.bf16.msra.mxu0 %v4891
    %7020 = vmatprep.subr.bf16.mxu0 %v5012
    %7021 = vmatpush2.bf16.msra.mxu0 %v5011
    %7022 = vmatprep.subr.bf16.mxu0 %v5004
    %7023 = vmatpush2.bf16.msra.mxu0 %v5003
    %7024 = vmatprep.subr.bf16.mxu0 %v4996
    %7025 = vmatpush2.bf16.msra.mxu0 %v4995
    %7026 = vmatprep.subr.bf16.mxu0 %v4988
    %7027 = vmatpush2.bf16.msra.mxu0 %v4987
    %7028 = vmatprep.subr.bf16.mxu0 %v4980
    %7029 = vmatpush2.bf16.msra.mxu0 %v4979
    %7030 = vmatprep.subr.bf16.mxu0 %v4972
    %7031 = vmatpush2.bf16.msra.mxu0 %v4971
    %7032 = vmatprep.subr.bf16.mxu0 %v4964
    %7033 = vmatpush2.bf16.msra.mxu0 %v4963
    %7034 = vmatprep.subr.bf16.mxu0 %v4956
    %7035 = vmatpush2.bf16.msra.mxu0 %v4955
    %7036 = vmatprep.mubr.bf16.mxu0 %v400
    %7037 = vmatmul.mubr.bf16.gmra.mxu0 %v399
    %v7038 = vpop.f32.mrf.mxu0
    %v7039 = vadd.f32 %v6998, %v7038
    %v7040 = vpop.f32.mrf.mxu0
    %v7041 = vadd.f32 %v7000, %v7040
    %v7042 = vpop.f32.mrf.mxu0
    %v7043 = vpop.f32.mrf.mxu0
    %7044 = vdwg.mxu0
    %7045 = vmatprep.subr.bf16.mxu0 %v5076
    %7046 = vmatpush1.bf16.msra.mxu0 %v5075
    %7047 = vmatprep.subr.bf16.mxu0 %v5068
    %7048 = vmatpush1.bf16.msra.mxu0 %v5067
    %7049 = vmatprep.subr.bf16.mxu0 %v5060
    %7050 = vmatpush1.bf16.msra.mxu0 %v5059
    %7051 = vmatprep.subr.bf16.mxu0 %v5052
    %7052 = vmatpush1.bf16.msra.mxu0 %v5051
    %7053 = vmatprep.subr.bf16.mxu0 %v5044
    %7054 = vmatpush1.bf16.msra.mxu0 %v5043
    %7055 = vmatprep.subr.bf16.mxu0 %v5036
    %7056 = vmatpush1.bf16.msra.mxu0 %v5035
    %7057 = vmatprep.subr.bf16.mxu0 %v5028
    %7058 = vmatpush1.bf16.msra.mxu0 %v5027
    %7059 = vmatprep.subr.bf16.mxu0 %v5020
    %7060 = vmatpush1.bf16.msra.mxu0 %v5019
    %7061 = vmatprep.subr.bf16.mxu0 %v5140
    %7062 = vmatpush2.bf16.msra.mxu0 %v5139
    %7063 = vmatprep.subr.bf16.mxu0 %v5132
    %7064 = vmatpush2.bf16.msra.mxu0 %v5131
    %7065 = vmatprep.subr.bf16.mxu0 %v5124
    %7066 = vmatpush2.bf16.msra.mxu0 %v5123
    %7067 = vmatprep.subr.bf16.mxu0 %v5116
    %7068 = vmatpush2.bf16.msra.mxu0 %v5115
    %7069 = vmatprep.subr.bf16.mxu0 %v5108
    %7070 = vmatpush2.bf16.msra.mxu0 %v5107
    %7071 = vmatprep.subr.bf16.mxu0 %v5100
    %7072 = vmatpush2.bf16.msra.mxu0 %v5099
    %7073 = vmatprep.subr.bf16.mxu0 %v5092
    %7074 = vmatpush2.bf16.msra.mxu0 %v5091
    %7075 = vmatprep.subr.bf16.mxu0 %v5084
    %7076 = vmatpush2.bf16.msra.mxu0 %v5083
    %7077 = vmatprep.mubr.bf16.mxu0 %v402
    %7078 = vmatmul.mubr.bf16.gmra.mxu0 %v401
    %v7079 = vpop.f32.mrf.mxu0
    %v7080 = vadd.f32 %v7039, %v7079
    %v7081 = vpop.f32.mrf.mxu0
    %v7082 = vadd.f32 %v7041, %v7081
    %v7083 = vpop.f32.mrf.mxu0
    %v7084 = vpop.f32.mrf.mxu0
    %7085 = vdwg.mxu0
    %7086 = vmatprep.subr.bf16.mxu0 %v5204
    %7087 = vmatpush1.bf16.msra.mxu0 %v5203
    %7088 = vmatprep.subr.bf16.mxu0 %v5196
    %7089 = vmatpush1.bf16.msra.mxu0 %v5195
    %7090 = vmatprep.subr.bf16.mxu0 %v5188
    %7091 = vmatpush1.bf16.msra.mxu0 %v5187
    %7092 = vmatprep.subr.bf16.mxu0 %v5180
    %7093 = vmatpush1.bf16.msra.mxu0 %v5179
    %7094 = vmatprep.subr.bf16.mxu0 %v5172
    %7095 = vmatpush1.bf16.msra.mxu0 %v5171
    %7096 = vmatprep.subr.bf16.mxu0 %v5164
    %7097 = vmatpush1.bf16.msra.mxu0 %v5163
    %7098 = vmatprep.subr.bf16.mxu0 %v5156
    %7099 = vmatpush1.bf16.msra.mxu0 %v5155
    %7100 = vmatprep.subr.bf16.mxu0 %v5148
    %7101 = vmatpush1.bf16.msra.mxu0 %v5147
    %7102 = vmatprep.subr.bf16.mxu0 %v5268
    %7103 = vmatpush2.bf16.msra.mxu0 %v5267
    %7104 = vmatprep.subr.bf16.mxu0 %v5260
    %7105 = vmatpush2.bf16.msra.mxu0 %v5259
    %7106 = vmatprep.subr.bf16.mxu0 %v5252
    %7107 = vmatpush2.bf16.msra.mxu0 %v5251
    %7108 = vmatprep.subr.bf16.mxu0 %v5244
    %7109 = vmatpush2.bf16.msra.mxu0 %v5243
    %7110 = vmatprep.subr.bf16.mxu0 %v5236
    %7111 = vmatpush2.bf16.msra.mxu0 %v5235
    %7112 = vmatprep.subr.bf16.mxu0 %v5228
    %7113 = vmatpush2.bf16.msra.mxu0 %v5227
    %7114 = vmatprep.subr.bf16.mxu0 %v5220
    %7115 = vmatpush2.bf16.msra.mxu0 %v5219
    %7116 = vmatprep.subr.bf16.mxu0 %v5212
    %7117 = vmatpush2.bf16.msra.mxu0 %v5211
    %7118 = vmatprep.mubr.bf16.mxu0 %v404
    %7119 = vmatmul.mubr.bf16.gmra.mxu0 %v403
    %v7120 = vpop.f32.mrf.mxu0
    %v7121 = vadd.f32 %v7080, %v7120
    %v7122 = vpop.f32.mrf.mxu0
    %v7123 = vadd.f32 %v7082, %v7122
    %v7124 = vpop.f32.mrf.mxu0
    %v7125 = vpop.f32.mrf.mxu0
    %7126 = vdwg.mxu0
    %7127 = vmatprep.subr.bf16.mxu0 %v5332
    %7128 = vmatpush1.bf16.msra.mxu0 %v5331
    %7129 = vmatprep.subr.bf16.mxu0 %v5324
    %7130 = vmatpush1.bf16.msra.mxu0 %v5323
    %7131 = vmatprep.subr.bf16.mxu0 %v5316
    %7132 = vmatpush1.bf16.msra.mxu0 %v5315
    %7133 = vmatprep.subr.bf16.mxu0 %v5308
    %7134 = vmatpush1.bf16.msra.mxu0 %v5307
    %7135 = vmatprep.subr.bf16.mxu0 %v5300
    %7136 = vmatpush1.bf16.msra.mxu0 %v5299
    %7137 = vmatprep.subr.bf16.mxu0 %v5292
    %7138 = vmatpush1.bf16.msra.mxu0 %v5291
    %7139 = vmatprep.subr.bf16.mxu0 %v5284
    %7140 = vmatpush1.bf16.msra.mxu0 %v5283
    %7141 = vmatprep.subr.bf16.mxu0 %v5276
    %7142 = vmatpush1.bf16.msra.mxu0 %v5275
    %7143 = vmatprep.subr.bf16.mxu0 %v5396
    %7144 = vmatpush2.bf16.msra.mxu0 %v5395
    %7145 = vmatprep.subr.bf16.mxu0 %v5388
    %7146 = vmatpush2.bf16.msra.mxu0 %v5387
    %7147 = vmatprep.subr.bf16.mxu0 %v5380
    %7148 = vmatpush2.bf16.msra.mxu0 %v5379
    %7149 = vmatprep.subr.bf16.mxu0 %v5372
    %7150 = vmatpush2.bf16.msra.mxu0 %v5371
    %7151 = vmatprep.subr.bf16.mxu0 %v5364
    %7152 = vmatpush2.bf16.msra.mxu0 %v5363
    %7153 = vmatprep.subr.bf16.mxu0 %v5356
    %7154 = vmatpush2.bf16.msra.mxu0 %v5355
    %7155 = vmatprep.subr.bf16.mxu0 %v5348
    %7156 = vmatpush2.bf16.msra.mxu0 %v5347
    %7157 = vmatprep.subr.bf16.mxu0 %v5340
    %7158 = vmatpush2.bf16.msra.mxu0 %v5339
    %7159 = vmatprep.mubr.bf16.mxu0 %v406
    %7160 = vmatmul.mubr.bf16.gmra.mxu0 %v405
    %v7161 = vpop.f32.mrf.mxu0
    %v7162 = vadd.f32 %v7121, %v7161
    %v7163 = vpop.f32.mrf.mxu0
    %v7164 = vadd.f32 %v7123, %v7163
    %v7165 = vpop.f32.mrf.mxu0
    %v7166 = vpop.f32.mrf.mxu0
    %7167 = vdwg.mxu0
    %7168 = vmatprep.subr.bf16.mxu0 %v5460
    %7169 = vmatpush1.bf16.msra.mxu0 %v5459
    %7170 = vmatprep.subr.bf16.mxu0 %v5452
    %7171 = vmatpush1.bf16.msra.mxu0 %v5451
    %7172 = vmatprep.subr.bf16.mxu0 %v5444
    %7173 = vmatpush1.bf16.msra.mxu0 %v5443
    %7174 = vmatprep.subr.bf16.mxu0 %v5436
    %7175 = vmatpush1.bf16.msra.mxu0 %v5435
    %7176 = vmatprep.subr.bf16.mxu0 %v5428
    %7177 = vmatpush1.bf16.msra.mxu0 %v5427
    %7178 = vmatprep.subr.bf16.mxu0 %v5420
    %7179 = vmatpush1.bf16.msra.mxu0 %v5419
    %7180 = vmatprep.subr.bf16.mxu0 %v5412
    %7181 = vmatpush1.bf16.msra.mxu0 %v5411
    %7182 = vmatprep.subr.bf16.mxu0 %v5404
    %7183 = vmatpush1.bf16.msra.mxu0 %v5403
    %7184 = vmatprep.subr.bf16.mxu0 %v5524
    %7185 = vmatpush2.bf16.msra.mxu0 %v5523
    %7186 = vmatprep.subr.bf16.mxu0 %v5516
    %7187 = vmatpush2.bf16.msra.mxu0 %v5515
    %7188 = vmatprep.subr.bf16.mxu0 %v5508
    %7189 = vmatpush2.bf16.msra.mxu0 %v5507
    %7190 = vmatprep.subr.bf16.mxu0 %v5500
    %7191 = vmatpush2.bf16.msra.mxu0 %v5499
    %7192 = vmatprep.subr.bf16.mxu0 %v5492
    %7193 = vmatpush2.bf16.msra.mxu0 %v5491
    %7194 = vmatprep.subr.bf16.mxu0 %v5484
    %7195 = vmatpush2.bf16.msra.mxu0 %v5483
    %7196 = vmatprep.subr.bf16.mxu0 %v5476
    %7197 = vmatpush2.bf16.msra.mxu0 %v5475
    %7198 = vmatprep.subr.bf16.mxu0 %v5468
    %7199 = vmatpush2.bf16.msra.mxu0 %v5467
    %7200 = vmatprep.mubr.bf16.mxu0 %v408
    %7201 = vmatmul.mubr.bf16.gmra.mxu0 %v407
    %v7202 = vpop.f32.mrf.mxu0
    %v7203 = vadd.f32 %v7162, %v7202
    %v7204 = vpop.f32.mrf.mxu0
    %v7205 = vadd.f32 %v7164, %v7204
    %v7206 = vpop.f32.mrf.mxu0
    %v7207 = vpop.f32.mrf.mxu0
    %7208 = vdwg.mxu0
    %7209 = vmatprep.subr.bf16.mxu0 %v4566
    %7210 = vmatpush1.bf16.msra.mxu0 %v4565
    %7211 = vmatprep.subr.bf16.mxu0 %v4558
    %7212 = vmatpush1.bf16.msra.mxu0 %v4557
    %7213 = vmatprep.subr.bf16.mxu0 %v4550
    %7214 = vmatpush1.bf16.msra.mxu0 %v4549
    %7215 = vmatprep.subr.bf16.mxu0 %v4542
    %7216 = vmatpush1.bf16.msra.mxu0 %v4541
    %7217 = vmatprep.subr.bf16.mxu0 %v4534
    %7218 = vmatpush1.bf16.msra.mxu0 %v4533
    %7219 = vmatprep.subr.bf16.mxu0 %v4526
    %7220 = vmatpush1.bf16.msra.mxu0 %v4525
    %7221 = vmatprep.subr.bf16.mxu0 %v4518
    %7222 = vmatpush1.bf16.msra.mxu0 %v4517
    %7223 = vmatprep.subr.bf16.mxu0 %v4510
    %7224 = vmatpush1.bf16.msra.mxu0 %v4509
    %7225 = vmatprep.subr.bf16.mxu0 %v4630
    %7226 = vmatpush2.bf16.msra.mxu0 %v4629
    %7227 = vmatprep.subr.bf16.mxu0 %v4622
    %7228 = vmatpush2.bf16.msra.mxu0 %v4621
    %7229 = vmatprep.subr.bf16.mxu0 %v4614
    %7230 = vmatpush2.bf16.msra.mxu0 %v4613
    %7231 = vmatprep.subr.bf16.mxu0 %v4606
    %7232 = vmatpush2.bf16.msra.mxu0 %v4605
    %7233 = vmatprep.subr.bf16.mxu0 %v4598
    %7234 = vmatpush2.bf16.msra.mxu0 %v4597
    %7235 = vmatprep.subr.bf16.mxu0 %v4590
    %7236 = vmatpush2.bf16.msra.mxu0 %v4589
    %7237 = vmatprep.subr.bf16.mxu0 %v4582
    %7238 = vmatpush2.bf16.msra.mxu0 %v4581
    %7239 = vmatprep.subr.bf16.mxu0 %v4574
    %7240 = vmatpush2.bf16.msra.mxu0 %v4573
    %7241 = vmatprep.mubr.bf16.mxu0 %v394
    %7242 = vmatmul.mubr.bf16.gmra.mxu0 %v393
    %v7243 = vpop.f32.mrf.mxu0
    %v7244 = vadd.f32 0.0, %v7243
    %v7245 = vpop.f32.mrf.mxu0
    %v7246 = vadd.f32 0.0, %v7245
    %v7247 = vpop.f32.mrf.mxu0
    %v7248 = vpop.f32.mrf.mxu0
    %7249 = vdwg.mxu0
    %7250 = vmatprep.subr.bf16.mxu0 %v4694
    %7251 = vmatpush1.bf16.msra.mxu0 %v4693
    %7252 = vmatprep.subr.bf16.mxu0 %v4686
    %7253 = vmatpush1.bf16.msra.mxu0 %v4685
    %7254 = vmatprep.subr.bf16.mxu0 %v4678
    %7255 = vmatpush1.bf16.msra.mxu0 %v4677
    %7256 = vmatprep.subr.bf16.mxu0 %v4670
    %7257 = vmatpush1.bf16.msra.mxu0 %v4669
    %7258 = vmatprep.subr.bf16.mxu0 %v4662
    %7259 = vmatpush1.bf16.msra.mxu0 %v4661
    %7260 = vmatprep.subr.bf16.mxu0 %v4654
    %7261 = vmatpush1.bf16.msra.mxu0 %v4653
    %7262 = vmatprep.subr.bf16.mxu0 %v4646
    %7263 = vmatpush1.bf16.msra.mxu0 %v4645
    %7264 = vmatprep.subr.bf16.mxu0 %v4638
    %7265 = vmatpush1.bf16.msra.mxu0 %v4637
    %7266 = vmatprep.subr.bf16.mxu0 %v4758
    %7267 = vmatpush2.bf16.msra.mxu0 %v4757
    %7268 = vmatprep.subr.bf16.mxu0 %v4750
    %7269 = vmatpush2.bf16.msra.mxu0 %v4749
    %7270 = vmatprep.subr.bf16.mxu0 %v4742
    %7271 = vmatpush2.bf16.msra.mxu0 %v4741
    %7272 = vmatprep.subr.bf16.mxu0 %v4734
    %7273 = vmatpush2.bf16.msra.mxu0 %v4733
    %7274 = vmatprep.subr.bf16.mxu0 %v4726
    %7275 = vmatpush2.bf16.msra.mxu0 %v4725
    %7276 = vmatprep.subr.bf16.mxu0 %v4718
    %7277 = vmatpush2.bf16.msra.mxu0 %v4717
    %7278 = vmatprep.subr.bf16.mxu0 %v4710
    %7279 = vmatpush2.bf16.msra.mxu0 %v4709
    %7280 = vmatprep.subr.bf16.mxu0 %v4702
    %7281 = vmatpush2.bf16.msra.mxu0 %v4701
    %7282 = vmatprep.mubr.bf16.mxu0 %v396
    %7283 = vmatmul.mubr.bf16.gmra.mxu0 %v395
    %v7284 = vpop.f32.mrf.mxu0
    %v7285 = vadd.f32 %v7244, %v7284
    %v7286 = vpop.f32.mrf.mxu0
    %v7287 = vadd.f32 %v7246, %v7286
    %v7288 = vpop.f32.mrf.mxu0
    %v7289 = vpop.f32.mrf.mxu0
    %7290 = vdwg.mxu0
    %7291 = vmatprep.subr.bf16.mxu0 %v4822
    %7292 = vmatpush1.bf16.msra.mxu0 %v4821
    %7293 = vmatprep.subr.bf16.mxu0 %v4814
    %7294 = vmatpush1.bf16.msra.mxu0 %v4813
    %7295 = vmatprep.subr.bf16.mxu0 %v4806
    %7296 = vmatpush1.bf16.msra.mxu0 %v4805
    %7297 = vmatprep.subr.bf16.mxu0 %v4798
    %7298 = vmatpush1.bf16.msra.mxu0 %v4797
    %7299 = vmatprep.subr.bf16.mxu0 %v4790
    %7300 = vmatpush1.bf16.msra.mxu0 %v4789
    %7301 = vmatprep.subr.bf16.mxu0 %v4782
    %7302 = vmatpush1.bf16.msra.mxu0 %v4781
    %7303 = vmatprep.subr.bf16.mxu0 %v4774
    %7304 = vmatpush1.bf16.msra.mxu0 %v4773
    %7305 = vmatprep.subr.bf16.mxu0 %v4766
    %7306 = vmatpush1.bf16.msra.mxu0 %v4765
    %7307 = vmatprep.subr.bf16.mxu0 %v4886
    %7308 = vmatpush2.bf16.msra.mxu0 %v4885
    %7309 = vmatprep.subr.bf16.mxu0 %v4878
    %7310 = vmatpush2.bf16.msra.mxu0 %v4877
    %7311 = vmatprep.subr.bf16.mxu0 %v4870
    %7312 = vmatpush2.bf16.msra.mxu0 %v4869
    %7313 = vmatprep.subr.bf16.mxu0 %v4862
    %7314 = vmatpush2.bf16.msra.mxu0 %v4861
    %7315 = vmatprep.subr.bf16.mxu0 %v4854
    %7316 = vmatpush2.bf16.msra.mxu0 %v4853
    %7317 = vmatprep.subr.bf16.mxu0 %v4846
    %7318 = vmatpush2.bf16.msra.mxu0 %v4845
    %7319 = vmatprep.subr.bf16.mxu0 %v4838
    %7320 = vmatpush2.bf16.msra.mxu0 %v4837
    %7321 = vmatprep.subr.bf16.mxu0 %v4830
    %7322 = vmatpush2.bf16.msra.mxu0 %v4829
    %7323 = vmatprep.mubr.bf16.mxu0 %v398
    %7324 = vmatmul.mubr.bf16.gmra.mxu0 %v397
    %v7325 = vpop.f32.mrf.mxu0
    %v7326 = vadd.f32 %v7285, %v7325
    %v7327 = vpop.f32.mrf.mxu0
    %v7328 = vadd.f32 %v7287, %v7327
    %v7329 = vpop.f32.mrf.mxu0
    %v7330 = vpop.f32.mrf.mxu0
    %7331 = vdwg.mxu0
    %7332 = vmatprep.subr.bf16.mxu0 %v4950
    %7333 = vmatpush1.bf16.msra.mxu0 %v4949
    %7334 = vmatprep.subr.bf16.mxu0 %v4942
    %7335 = vmatpush1.bf16.msra.mxu0 %v4941
    %7336 = vmatprep.subr.bf16.mxu0 %v4934
    %7337 = vmatpush1.bf16.msra.mxu0 %v4933
    %7338 = vmatprep.subr.bf16.mxu0 %v4926
    %7339 = vmatpush1.bf16.msra.mxu0 %v4925
    %7340 = vmatprep.subr.bf16.mxu0 %v4918
    %7341 = vmatpush1.bf16.msra.mxu0 %v4917
    %7342 = vmatprep.subr.bf16.mxu0 %v4910
    %7343 = vmatpush1.bf16.msra.mxu0 %v4909
    %7344 = vmatprep.subr.bf16.mxu0 %v4902
    %7345 = vmatpush1.bf16.msra.mxu0 %v4901
    %7346 = vmatprep.subr.bf16.mxu0 %v4894
    %7347 = vmatpush1.bf16.msra.mxu0 %v4893
    %7348 = vmatprep.subr.bf16.mxu0 %v5014
    %7349 = vmatpush2.bf16.msra.mxu0 %v5013
    %7350 = vmatprep.subr.bf16.mxu0 %v5006
    %7351 = vmatpush2.bf16.msra.mxu0 %v5005
    %7352 = vmatprep.subr.bf16.mxu0 %v4998
    %7353 = vmatpush2.bf16.msra.mxu0 %v4997
    %7354 = vmatprep.subr.bf16.mxu0 %v4990
    %7355 = vmatpush2.bf16.msra.mxu0 %v4989
    %7356 = vmatprep.subr.bf16.mxu0 %v4982
    %7357 = vmatpush2.bf16.msra.mxu0 %v4981
    %7358 = vmatprep.subr.bf16.mxu0 %v4974
    %7359 = vmatpush2.bf16.msra.mxu0 %v4973
    %7360 = vmatprep.subr.bf16.mxu0 %v4966
    %7361 = vmatpush2.bf16.msra.mxu0 %v4965
    %7362 = vmatprep.subr.bf16.mxu0 %v4958
    %7363 = vmatpush2.bf16.msra.mxu0 %v4957
    %7364 = vmatprep.mubr.bf16.mxu0 %v400
    %7365 = vmatmul.mubr.bf16.gmra.mxu0 %v399
    %v7366 = vpop.f32.mrf.mxu0
    %v7367 = vadd.f32 %v7326, %v7366
    %v7368 = vpop.f32.mrf.mxu0
    %v7369 = vadd.f32 %v7328, %v7368
    %v7370 = vpop.f32.mrf.mxu0
    %v7371 = vpop.f32.mrf.mxu0
    %7372 = vdwg.mxu0
    %7373 = vmatprep.subr.bf16.mxu0 %v5078
    %7374 = vmatpush1.bf16.msra.mxu0 %v5077
    %7375 = vmatprep.subr.bf16.mxu0 %v5070
    %7376 = vmatpush1.bf16.msra.mxu0 %v5069
    %7377 = vmatprep.subr.bf16.mxu0 %v5062
    %7378 = vmatpush1.bf16.msra.mxu0 %v5061
    %7379 = vmatprep.subr.bf16.mxu0 %v5054
    %7380 = vmatpush1.bf16.msra.mxu0 %v5053
    %7381 = vmatprep.subr.bf16.mxu0 %v5046
    %7382 = vmatpush1.bf16.msra.mxu0 %v5045
    %7383 = vmatprep.subr.bf16.mxu0 %v5038
    %7384 = vmatpush1.bf16.msra.mxu0 %v5037
    %7385 = vmatprep.subr.bf16.mxu0 %v5030
    %7386 = vmatpush1.bf16.msra.mxu0 %v5029
    %7387 = vmatprep.subr.bf16.mxu0 %v5022
    %7388 = vmatpush1.bf16.msra.mxu0 %v5021
    %7389 = vmatprep.subr.bf16.mxu0 %v5142
    %7390 = vmatpush2.bf16.msra.mxu0 %v5141
    %7391 = vmatprep.subr.bf16.mxu0 %v5134
    %7392 = vmatpush2.bf16.msra.mxu0 %v5133
    %7393 = vmatprep.subr.bf16.mxu0 %v5126
    %7394 = vmatpush2.bf16.msra.mxu0 %v5125
    %7395 = vmatprep.subr.bf16.mxu0 %v5118
    %7396 = vmatpush2.bf16.msra.mxu0 %v5117
    %7397 = vmatprep.subr.bf16.mxu0 %v5110
    %7398 = vmatpush2.bf16.msra.mxu0 %v5109
    %7399 = vmatprep.subr.bf16.mxu0 %v5102
    %7400 = vmatpush2.bf16.msra.mxu0 %v5101
    %7401 = vmatprep.subr.bf16.mxu0 %v5094
    %7402 = vmatpush2.bf16.msra.mxu0 %v5093
    %7403 = vmatprep.subr.bf16.mxu0 %v5086
    %7404 = vmatpush2.bf16.msra.mxu0 %v5085
    %7405 = vmatprep.mubr.bf16.mxu0 %v402
    %7406 = vmatmul.mubr.bf16.gmra.mxu0 %v401
    %v7407 = vpop.f32.mrf.mxu0
    %v7408 = vadd.f32 %v7367, %v7407
    %v7409 = vpop.f32.mrf.mxu0
    %v7410 = vadd.f32 %v7369, %v7409
    %v7411 = vpop.f32.mrf.mxu0
    %v7412 = vpop.f32.mrf.mxu0
    %7413 = vdwg.mxu0
    %7414 = vmatprep.subr.bf16.mxu0 %v5206
    %7415 = vmatpush1.bf16.msra.mxu0 %v5205
    %7416 = vmatprep.subr.bf16.mxu0 %v5198
    %7417 = vmatpush1.bf16.msra.mxu0 %v5197
    %7418 = vmatprep.subr.bf16.mxu0 %v5190
    %7419 = vmatpush1.bf16.msra.mxu0 %v5189
    %7420 = vmatprep.subr.bf16.mxu0 %v5182
    %7421 = vmatpush1.bf16.msra.mxu0 %v5181
    %7422 = vmatprep.subr.bf16.mxu0 %v5174
    %7423 = vmatpush1.bf16.msra.mxu0 %v5173
    %7424 = vmatprep.subr.bf16.mxu0 %v5166
    %7425 = vmatpush1.bf16.msra.mxu0 %v5165
    %7426 = vmatprep.subr.bf16.mxu0 %v5158
    %7427 = vmatpush1.bf16.msra.mxu0 %v5157
    %7428 = vmatprep.subr.bf16.mxu0 %v5150
    %7429 = vmatpush1.bf16.msra.mxu0 %v5149
    %7430 = vmatprep.subr.bf16.mxu0 %v5270
    %7431 = vmatpush2.bf16.msra.mxu0 %v5269
    %7432 = vmatprep.subr.bf16.mxu0 %v5262
    %7433 = vmatpush2.bf16.msra.mxu0 %v5261
    %7434 = vmatprep.subr.bf16.mxu0 %v5254
    %7435 = vmatpush2.bf16.msra.mxu0 %v5253
    %7436 = vmatprep.subr.bf16.mxu0 %v5246
    %7437 = vmatpush2.bf16.msra.mxu0 %v5245
    %7438 = vmatprep.subr.bf16.mxu0 %v5238
    %7439 = vmatpush2.bf16.msra.mxu0 %v5237
    %7440 = vmatprep.subr.bf16.mxu0 %v5230
    %7441 = vmatpush2.bf16.msra.mxu0 %v5229
    %7442 = vmatprep.subr.bf16.mxu0 %v5222
    %7443 = vmatpush2.bf16.msra.mxu0 %v5221
    %7444 = vmatprep.subr.bf16.mxu0 %v5214
    %7445 = vmatpush2.bf16.msra.mxu0 %v5213
    %7446 = vmatprep.mubr.bf16.mxu0 %v404
    %7447 = vmatmul.mubr.bf16.gmra.mxu0 %v403
    %v7448 = vpop.f32.mrf.mxu0
    %v7449 = vadd.f32 %v7408, %v7448
    %v7450 = vpop.f32.mrf.mxu0
    %v7451 = vadd.f32 %v7410, %v7450
    %v7452 = vpop.f32.mrf.mxu0
    %v7453 = vpop.f32.mrf.mxu0
    %7454 = vdwg.mxu0
    %7455 = vmatprep.subr.bf16.mxu0 %v5334
    %7456 = vmatpush1.bf16.msra.mxu0 %v5333
    %7457 = vmatprep.subr.bf16.mxu0 %v5326
    %7458 = vmatpush1.bf16.msra.mxu0 %v5325
    %7459 = vmatprep.subr.bf16.mxu0 %v5318
    %7460 = vmatpush1.bf16.msra.mxu0 %v5317
    %7461 = vmatprep.subr.bf16.mxu0 %v5310
    %7462 = vmatpush1.bf16.msra.mxu0 %v5309
    %7463 = vmatprep.subr.bf16.mxu0 %v5302
    %7464 = vmatpush1.bf16.msra.mxu0 %v5301
    %7465 = vmatprep.subr.bf16.mxu0 %v5294
    %7466 = vmatpush1.bf16.msra.mxu0 %v5293
    %7467 = vmatprep.subr.bf16.mxu0 %v5286
    %7468 = vmatpush1.bf16.msra.mxu0 %v5285
    %7469 = vmatprep.subr.bf16.mxu0 %v5278
    %7470 = vmatpush1.bf16.msra.mxu0 %v5277
    %7471 = vmatprep.subr.bf16.mxu0 %v5398
    %7472 = vmatpush2.bf16.msra.mxu0 %v5397
    %7473 = vmatprep.subr.bf16.mxu0 %v5390
    %7474 = vmatpush2.bf16.msra.mxu0 %v5389
    %7475 = vmatprep.subr.bf16.mxu0 %v5382
    %7476 = vmatpush2.bf16.msra.mxu0 %v5381
    %7477 = vmatprep.subr.bf16.mxu0 %v5374
    %7478 = vmatpush2.bf16.msra.mxu0 %v5373
    %7479 = vmatprep.subr.bf16.mxu0 %v5366
    %7480 = vmatpush2.bf16.msra.mxu0 %v5365
    %7481 = vmatprep.subr.bf16.mxu0 %v5358
    %7482 = vmatpush2.bf16.msra.mxu0 %v5357
    %7483 = vmatprep.subr.bf16.mxu0 %v5350
    %7484 = vmatpush2.bf16.msra.mxu0 %v5349
    %7485 = vmatprep.subr.bf16.mxu0 %v5342
    %7486 = vmatpush2.bf16.msra.mxu0 %v5341
    %7487 = vmatprep.mubr.bf16.mxu0 %v406
    %7488 = vmatmul.mubr.bf16.gmra.mxu0 %v405
    %v7489 = vpop.f32.mrf.mxu0
    %v7490 = vadd.f32 %v7449, %v7489
    %v7491 = vpop.f32.mrf.mxu0
    %v7492 = vadd.f32 %v7451, %v7491
    %v7493 = vpop.f32.mrf.mxu0
    %v7494 = vpop.f32.mrf.mxu0
    %7495 = vdwg.mxu0
    %7496 = vmatprep.subr.bf16.mxu0 %v5462
    %7497 = vmatpush1.bf16.msra.mxu0 %v5461
    %7498 = vmatprep.subr.bf16.mxu0 %v5454
    %7499 = vmatpush1.bf16.msra.mxu0 %v5453
    %7500 = vmatprep.subr.bf16.mxu0 %v5446
    %7501 = vmatpush1.bf16.msra.mxu0 %v5445
    %7502 = vmatprep.subr.bf16.mxu0 %v5438
    %7503 = vmatpush1.bf16.msra.mxu0 %v5437
    %7504 = vmatprep.subr.bf16.mxu0 %v5430
    %7505 = vmatpush1.bf16.msra.mxu0 %v5429
    %7506 = vmatprep.subr.bf16.mxu0 %v5422
    %7507 = vmatpush1.bf16.msra.mxu0 %v5421
    %7508 = vmatprep.subr.bf16.mxu0 %v5414
    %7509 = vmatpush1.bf16.msra.mxu0 %v5413
    %7510 = vmatprep.subr.bf16.mxu0 %v5406
    %7511 = vmatpush1.bf16.msra.mxu0 %v5405
    %7512 = vmatprep.subr.bf16.mxu0 %v5526
    %7513 = vmatpush2.bf16.msra.mxu0 %v5525
    %7514 = vmatprep.subr.bf16.mxu0 %v5518
    %7515 = vmatpush2.bf16.msra.mxu0 %v5517
    %7516 = vmatprep.subr.bf16.mxu0 %v5510
    %7517 = vmatpush2.bf16.msra.mxu0 %v5509
    %7518 = vmatprep.subr.bf16.mxu0 %v5502
    %7519 = vmatpush2.bf16.msra.mxu0 %v5501
    %7520 = vmatprep.subr.bf16.mxu0 %v5494
    %7521 = vmatpush2.bf16.msra.mxu0 %v5493
    %7522 = vmatprep.subr.bf16.mxu0 %v5486
    %7523 = vmatpush2.bf16.msra.mxu0 %v5485
    %7524 = vmatprep.subr.bf16.mxu0 %v5478
    %7525 = vmatpush2.bf16.msra.mxu0 %v5477
    %7526 = vmatprep.subr.bf16.mxu0 %v5470
    %7527 = vmatpush2.bf16.msra.mxu0 %v5469
    %7528 = vmatprep.mubr.bf16.mxu0 %v408
    %7529 = vmatmul.mubr.bf16.gmra.mxu0 %v407
    %v7530 = vpop.f32.mrf.mxu0
    %v7531 = vadd.f32 %v7490, %v7530
    %v7532 = vpop.f32.mrf.mxu0
    %v7533 = vadd.f32 %v7492, %v7532
    %v7534 = vpop.f32.mrf.mxu0
    %v7535 = vpop.f32.mrf.mxu0
    %7536 = vdwg.mxu0
    %7537 = vmatprep.subr.bf16.mxu0 %v4568
    %7538 = vmatpush1.bf16.msra.mxu0 %v4567
    %7539 = vmatprep.subr.bf16.mxu0 %v4560
    %7540 = vmatpush1.bf16.msra.mxu0 %v4559
    %7541 = vmatprep.subr.bf16.mxu0 %v4552
    %7542 = vmatpush1.bf16.msra.mxu0 %v4551
    %7543 = vmatprep.subr.bf16.mxu0 %v4544
    %7544 = vmatpush1.bf16.msra.mxu0 %v4543
    %7545 = vmatprep.subr.bf16.mxu0 %v4536
    %7546 = vmatpush1.bf16.msra.mxu0 %v4535
    %7547 = vmatprep.subr.bf16.mxu0 %v4528
    %7548 = vmatpush1.bf16.msra.mxu0 %v4527
    %7549 = vmatprep.subr.bf16.mxu0 %v4520
    %7550 = vmatpush1.bf16.msra.mxu0 %v4519
    %7551 = vmatprep.subr.bf16.mxu0 %v4512
    %7552 = vmatpush1.bf16.msra.mxu0 %v4511
    %7553 = vmatprep.subr.bf16.mxu0 %v4632
    %7554 = vmatpush2.bf16.msra.mxu0 %v4631
    %7555 = vmatprep.subr.bf16.mxu0 %v4624
    %7556 = vmatpush2.bf16.msra.mxu0 %v4623
    %7557 = vmatprep.subr.bf16.mxu0 %v4616
    %7558 = vmatpush2.bf16.msra.mxu0 %v4615
    %7559 = vmatprep.subr.bf16.mxu0 %v4608
    %7560 = vmatpush2.bf16.msra.mxu0 %v4607
    %7561 = vmatprep.subr.bf16.mxu0 %v4600
    %7562 = vmatpush2.bf16.msra.mxu0 %v4599
    %7563 = vmatprep.subr.bf16.mxu0 %v4592
    %7564 = vmatpush2.bf16.msra.mxu0 %v4591
    %7565 = vmatprep.subr.bf16.mxu0 %v4584
    %7566 = vmatpush2.bf16.msra.mxu0 %v4583
    %7567 = vmatprep.subr.bf16.mxu0 %v4576
    %7568 = vmatpush2.bf16.msra.mxu0 %v4575
    %7569 = vmatprep.mubr.bf16.mxu0 %v394
    %7570 = vmatmul.mubr.bf16.gmra.mxu0 %v393
    %v7571 = vpop.f32.mrf.mxu0
    %v7572 = vadd.f32 0.0, %v7571
    %v7573 = vpop.f32.mrf.mxu0
    %v7574 = vadd.f32 0.0, %v7573
    %v7575 = vpop.f32.mrf.mxu0
    %v7576 = vpop.f32.mrf.mxu0
    %7577 = vdwg.mxu0
    %7578 = vmatprep.subr.bf16.mxu0 %v4696
    %7579 = vmatpush1.bf16.msra.mxu0 %v4695
    %7580 = vmatprep.subr.bf16.mxu0 %v4688
    %7581 = vmatpush1.bf16.msra.mxu0 %v4687
    %7582 = vmatprep.subr.bf16.mxu0 %v4680
    %7583 = vmatpush1.bf16.msra.mxu0 %v4679
    %7584 = vmatprep.subr.bf16.mxu0 %v4672
    %7585 = vmatpush1.bf16.msra.mxu0 %v4671
    %7586 = vmatprep.subr.bf16.mxu0 %v4664
    %7587 = vmatpush1.bf16.msra.mxu0 %v4663
    %7588 = vmatprep.subr.bf16.mxu0 %v4656
    %7589 = vmatpush1.bf16.msra.mxu0 %v4655
    %7590 = vmatprep.subr.bf16.mxu0 %v4648
    %7591 = vmatpush1.bf16.msra.mxu0 %v4647
    %7592 = vmatprep.subr.bf16.mxu0 %v4640
    %7593 = vmatpush1.bf16.msra.mxu0 %v4639
    %7594 = vmatprep.subr.bf16.mxu0 %v4760
    %7595 = vmatpush2.bf16.msra.mxu0 %v4759
    %7596 = vmatprep.subr.bf16.mxu0 %v4752
    %7597 = vmatpush2.bf16.msra.mxu0 %v4751
    %7598 = vmatprep.subr.bf16.mxu0 %v4744
    %7599 = vmatpush2.bf16.msra.mxu0 %v4743
    %7600 = vmatprep.subr.bf16.mxu0 %v4736
    %7601 = vmatpush2.bf16.msra.mxu0 %v4735
    %7602 = vmatprep.subr.bf16.mxu0 %v4728
    %7603 = vmatpush2.bf16.msra.mxu0 %v4727
    %7604 = vmatprep.subr.bf16.mxu0 %v4720
    %7605 = vmatpush2.bf16.msra.mxu0 %v4719
    %7606 = vmatprep.subr.bf16.mxu0 %v4712
    %7607 = vmatpush2.bf16.msra.mxu0 %v4711
    %7608 = vmatprep.subr.bf16.mxu0 %v4704
    %7609 = vmatpush2.bf16.msra.mxu0 %v4703
    %7610 = vmatprep.mubr.bf16.mxu0 %v396
    %7611 = vmatmul.mubr.bf16.gmra.mxu0 %v395
    %v7612 = vpop.f32.mrf.mxu0
    %v7613 = vadd.f32 %v7572, %v7612
    %v7614 = vpop.f32.mrf.mxu0
    %v7615 = vadd.f32 %v7574, %v7614
    %v7616 = vpop.f32.mrf.mxu0
    %v7617 = vpop.f32.mrf.mxu0
    %7618 = vdwg.mxu0
    %7619 = vmatprep.subr.bf16.mxu0 %v4824
    %7620 = vmatpush1.bf16.msra.mxu0 %v4823
    %7621 = vmatprep.subr.bf16.mxu0 %v4816
    %7622 = vmatpush1.bf16.msra.mxu0 %v4815
    %7623 = vmatprep.subr.bf16.mxu0 %v4808
    %7624 = vmatpush1.bf16.msra.mxu0 %v4807
    %7625 = vmatprep.subr.bf16.mxu0 %v4800
    %7626 = vmatpush1.bf16.msra.mxu0 %v4799
    %7627 = vmatprep.subr.bf16.mxu0 %v4792
    %7628 = vmatpush1.bf16.msra.mxu0 %v4791
    %7629 = vmatprep.subr.bf16.mxu0 %v4784
    %7630 = vmatpush1.bf16.msra.mxu0 %v4783
    %7631 = vmatprep.subr.bf16.mxu0 %v4776
    %7632 = vmatpush1.bf16.msra.mxu0 %v4775
    %7633 = vmatprep.subr.bf16.mxu0 %v4768
    %7634 = vmatpush1.bf16.msra.mxu0 %v4767
    %7635 = vmatprep.subr.bf16.mxu0 %v4888
    %7636 = vmatpush2.bf16.msra.mxu0 %v4887
    %7637 = vmatprep.subr.bf16.mxu0 %v4880
    %7638 = vmatpush2.bf16.msra.mxu0 %v4879
    %7639 = vmatprep.subr.bf16.mxu0 %v4872
    %7640 = vmatpush2.bf16.msra.mxu0 %v4871
    %7641 = vmatprep.subr.bf16.mxu0 %v4864
    %7642 = vmatpush2.bf16.msra.mxu0 %v4863
    %7643 = vmatprep.subr.bf16.mxu0 %v4856
    %7644 = vmatpush2.bf16.msra.mxu0 %v4855
    %7645 = vmatprep.subr.bf16.mxu0 %v4848
    %7646 = vmatpush2.bf16.msra.mxu0 %v4847
    %7647 = vmatprep.subr.bf16.mxu0 %v4840
    %7648 = vmatpush2.bf16.msra.mxu0 %v4839
    %7649 = vmatprep.subr.bf16.mxu0 %v4832
    %7650 = vmatpush2.bf16.msra.mxu0 %v4831
    %7651 = vmatprep.mubr.bf16.mxu0 %v398
    %7652 = vmatmul.mubr.bf16.gmra.mxu0 %v397
    %v7653 = vpop.f32.mrf.mxu0
    %v7654 = vadd.f32 %v7613, %v7653
    %v7655 = vpop.f32.mrf.mxu0
    %v7656 = vadd.f32 %v7615, %v7655
    %v7657 = vpop.f32.mrf.mxu0
    %v7658 = vpop.f32.mrf.mxu0
    %7659 = vdwg.mxu0
    %7660 = vmatprep.subr.bf16.mxu0 %v4952
    %7661 = vmatpush1.bf16.msra.mxu0 %v4951
    %7662 = vmatprep.subr.bf16.mxu0 %v4944
    %7663 = vmatpush1.bf16.msra.mxu0 %v4943
    %7664 = vmatprep.subr.bf16.mxu0 %v4936
    %7665 = vmatpush1.bf16.msra.mxu0 %v4935
    %7666 = vmatprep.subr.bf16.mxu0 %v4928
    %7667 = vmatpush1.bf16.msra.mxu0 %v4927
    %7668 = vmatprep.subr.bf16.mxu0 %v4920
    %7669 = vmatpush1.bf16.msra.mxu0 %v4919
    %7670 = vmatprep.subr.bf16.mxu0 %v4912
    %7671 = vmatpush1.bf16.msra.mxu0 %v4911
    %7672 = vmatprep.subr.bf16.mxu0 %v4904
    %7673 = vmatpush1.bf16.msra.mxu0 %v4903
    %7674 = vmatprep.subr.bf16.mxu0 %v4896
    %7675 = vmatpush1.bf16.msra.mxu0 %v4895
    %7676 = vmatprep.subr.bf16.mxu0 %v5016
    %7677 = vmatpush2.bf16.msra.mxu0 %v5015
    %7678 = vmatprep.subr.bf16.mxu0 %v5008
    %7679 = vmatpush2.bf16.msra.mxu0 %v5007
    %7680 = vmatprep.subr.bf16.mxu0 %v5000
    %7681 = vmatpush2.bf16.msra.mxu0 %v4999
    %7682 = vmatprep.subr.bf16.mxu0 %v4992
    %7683 = vmatpush2.bf16.msra.mxu0 %v4991
    %7684 = vmatprep.subr.bf16.mxu0 %v4984
    %7685 = vmatpush2.bf16.msra.mxu0 %v4983
    %7686 = vmatprep.subr.bf16.mxu0 %v4976
    %7687 = vmatpush2.bf16.msra.mxu0 %v4975
    %7688 = vmatprep.subr.bf16.mxu0 %v4968
    %7689 = vmatpush2.bf16.msra.mxu0 %v4967
    %7690 = vmatprep.subr.bf16.mxu0 %v4960
    %7691 = vmatpush2.bf16.msra.mxu0 %v4959
    %7692 = vmatprep.mubr.bf16.mxu0 %v400
    %7693 = vmatmul.mubr.bf16.gmra.mxu0 %v399
    %v7694 = vpop.f32.mrf.mxu0
    %v7695 = vadd.f32 %v7654, %v7694
    %v7696 = vpop.f32.mrf.mxu0
    %v7697 = vadd.f32 %v7656, %v7696
    %v7698 = vpop.f32.mrf.mxu0
    %v7699 = vpop.f32.mrf.mxu0
    %7700 = vdwg.mxu0
    %7701 = vmatprep.subr.bf16.mxu0 %v5080
    %7702 = vmatpush1.bf16.msra.mxu0 %v5079
    %7703 = vmatprep.subr.bf16.mxu0 %v5072
    %7704 = vmatpush1.bf16.msra.mxu0 %v5071
    %7705 = vmatprep.subr.bf16.mxu0 %v5064
    %7706 = vmatpush1.bf16.msra.mxu0 %v5063
    %7707 = vmatprep.subr.bf16.mxu0 %v5056
    %7708 = vmatpush1.bf16.msra.mxu0 %v5055
    %7709 = vmatprep.subr.bf16.mxu0 %v5048
    %7710 = vmatpush1.bf16.msra.mxu0 %v5047
    %7711 = vmatprep.subr.bf16.mxu0 %v5040
    %7712 = vmatpush1.bf16.msra.mxu0 %v5039
    %7713 = vmatprep.subr.bf16.mxu0 %v5032
    %7714 = vmatpush1.bf16.msra.mxu0 %v5031
    %7715 = vmatprep.subr.bf16.mxu0 %v5024
    %7716 = vmatpush1.bf16.msra.mxu0 %v5023
    %7717 = vmatprep.subr.bf16.mxu0 %v5144
    %7718 = vmatpush2.bf16.msra.mxu0 %v5143
    %7719 = vmatprep.subr.bf16.mxu0 %v5136
    %7720 = vmatpush2.bf16.msra.mxu0 %v5135
    %7721 = vmatprep.subr.bf16.mxu0 %v5128
    %7722 = vmatpush2.bf16.msra.mxu0 %v5127
    %7723 = vmatprep.subr.bf16.mxu0 %v5120
    %7724 = vmatpush2.bf16.msra.mxu0 %v5119
    %7725 = vmatprep.subr.bf16.mxu0 %v5112
    %7726 = vmatpush2.bf16.msra.mxu0 %v5111
    %7727 = vmatprep.subr.bf16.mxu0 %v5104
    %7728 = vmatpush2.bf16.msra.mxu0 %v5103
    %7729 = vmatprep.subr.bf16.mxu0 %v5096
    %7730 = vmatpush2.bf16.msra.mxu0 %v5095
    %7731 = vmatprep.subr.bf16.mxu0 %v5088
    %7732 = vmatpush2.bf16.msra.mxu0 %v5087
    %7733 = vmatprep.mubr.bf16.mxu0 %v402
    %7734 = vmatmul.mubr.bf16.gmra.mxu0 %v401
    %v7735 = vpop.f32.mrf.mxu0
    %v7736 = vadd.f32 %v7695, %v7735
    %v7737 = vpop.f32.mrf.mxu0
    %v7738 = vadd.f32 %v7697, %v7737
    %v7739 = vpop.f32.mrf.mxu0
    %v7740 = vpop.f32.mrf.mxu0
    %7741 = vdwg.mxu0
    %7742 = vmatprep.subr.bf16.mxu0 %v5208
    %7743 = vmatpush1.bf16.msra.mxu0 %v5207
    %7744 = vmatprep.subr.bf16.mxu0 %v5200
    %7745 = vmatpush1.bf16.msra.mxu0 %v5199
    %7746 = vmatprep.subr.bf16.mxu0 %v5192
    %7747 = vmatpush1.bf16.msra.mxu0 %v5191
    %7748 = vmatprep.subr.bf16.mxu0 %v5184
    %7749 = vmatpush1.bf16.msra.mxu0 %v5183
    %7750 = vmatprep.subr.bf16.mxu0 %v5176
    %7751 = vmatpush1.bf16.msra.mxu0 %v5175
    %7752 = vmatprep.subr.bf16.mxu0 %v5168
    %7753 = vmatpush1.bf16.msra.mxu0 %v5167
    %7754 = vmatprep.subr.bf16.mxu0 %v5160
    %7755 = vmatpush1.bf16.msra.mxu0 %v5159
    %7756 = vmatprep.subr.bf16.mxu0 %v5152
    %7757 = vmatpush1.bf16.msra.mxu0 %v5151
    %7758 = vmatprep.subr.bf16.mxu0 %v5272
    %7759 = vmatpush2.bf16.msra.mxu0 %v5271
    %7760 = vmatprep.subr.bf16.mxu0 %v5264
    %7761 = vmatpush2.bf16.msra.mxu0 %v5263
    %7762 = vmatprep.subr.bf16.mxu0 %v5256
    %7763 = vmatpush2.bf16.msra.mxu0 %v5255
    %7764 = vmatprep.subr.bf16.mxu0 %v5248
    %7765 = vmatpush2.bf16.msra.mxu0 %v5247
    %7766 = vmatprep.subr.bf16.mxu0 %v5240
    %7767 = vmatpush2.bf16.msra.mxu0 %v5239
    %7768 = vmatprep.subr.bf16.mxu0 %v5232
    %7769 = vmatpush2.bf16.msra.mxu0 %v5231
    %7770 = vmatprep.subr.bf16.mxu0 %v5224
    %7771 = vmatpush2.bf16.msra.mxu0 %v5223
    %7772 = vmatprep.subr.bf16.mxu0 %v5216
    %7773 = vmatpush2.bf16.msra.mxu0 %v5215
    %7774 = vmatprep.mubr.bf16.mxu0 %v404
    %7775 = vmatmul.mubr.bf16.gmra.mxu0 %v403
    %v7776 = vpop.f32.mrf.mxu0
    %v7777 = vadd.f32 %v7736, %v7776
    %v7778 = vpop.f32.mrf.mxu0
    %v7779 = vadd.f32 %v7738, %v7778
    %v7780 = vpop.f32.mrf.mxu0
    %v7781 = vpop.f32.mrf.mxu0
    %7782 = vdwg.mxu0
    %7783 = vmatprep.subr.bf16.mxu0 %v5336
    %7784 = vmatpush1.bf16.msra.mxu0 %v5335
    %7785 = vmatprep.subr.bf16.mxu0 %v5328
    %7786 = vmatpush1.bf16.msra.mxu0 %v5327
    %7787 = vmatprep.subr.bf16.mxu0 %v5320
    %7788 = vmatpush1.bf16.msra.mxu0 %v5319
    %7789 = vmatprep.subr.bf16.mxu0 %v5312
    %7790 = vmatpush1.bf16.msra.mxu0 %v5311
    %7791 = vmatprep.subr.bf16.mxu0 %v5304
    %7792 = vmatpush1.bf16.msra.mxu0 %v5303
    %7793 = vmatprep.subr.bf16.mxu0 %v5296
    %7794 = vmatpush1.bf16.msra.mxu0 %v5295
    %7795 = vmatprep.subr.bf16.mxu0 %v5288
    %7796 = vmatpush1.bf16.msra.mxu0 %v5287
    %7797 = vmatprep.subr.bf16.mxu0 %v5280
    %7798 = vmatpush1.bf16.msra.mxu0 %v5279
    %7799 = vmatprep.subr.bf16.mxu0 %v5400
    %7800 = vmatpush2.bf16.msra.mxu0 %v5399
    %7801 = vmatprep.subr.bf16.mxu0 %v5392
    %7802 = vmatpush2.bf16.msra.mxu0 %v5391
    %7803 = vmatprep.subr.bf16.mxu0 %v5384
    %7804 = vmatpush2.bf16.msra.mxu0 %v5383
    %7805 = vmatprep.subr.bf16.mxu0 %v5376
    %7806 = vmatpush2.bf16.msra.mxu0 %v5375
    %7807 = vmatprep.subr.bf16.mxu0 %v5368
    %7808 = vmatpush2.bf16.msra.mxu0 %v5367
    %7809 = vmatprep.subr.bf16.mxu0 %v5360
    %7810 = vmatpush2.bf16.msra.mxu0 %v5359
    %7811 = vmatprep.subr.bf16.mxu0 %v5352
    %7812 = vmatpush2.bf16.msra.mxu0 %v5351
    %7813 = vmatprep.subr.bf16.mxu0 %v5344
    %7814 = vmatpush2.bf16.msra.mxu0 %v5343
    %7815 = vmatprep.mubr.bf16.mxu0 %v406
    %7816 = vmatmul.mubr.bf16.gmra.mxu0 %v405
    %v7817 = vpop.f32.mrf.mxu0
    %v7818 = vadd.f32 %v7777, %v7817
    %v7819 = vpop.f32.mrf.mxu0
    %v7820 = vadd.f32 %v7779, %v7819
    %v7821 = vpop.f32.mrf.mxu0
    %v7822 = vpop.f32.mrf.mxu0
    %7823 = vdwg.mxu0
    %7824 = vmatprep.subr.bf16.mxu0 %v5464
    %7825 = vmatpush1.bf16.msra.mxu0 %v5463
    %7826 = vmatprep.subr.bf16.mxu0 %v5456
    %7827 = vmatpush1.bf16.msra.mxu0 %v5455
    %7828 = vmatprep.subr.bf16.mxu0 %v5448
    %7829 = vmatpush1.bf16.msra.mxu0 %v5447
    %7830 = vmatprep.subr.bf16.mxu0 %v5440
    %7831 = vmatpush1.bf16.msra.mxu0 %v5439
    %7832 = vmatprep.subr.bf16.mxu0 %v5432
    %7833 = vmatpush1.bf16.msra.mxu0 %v5431
    %7834 = vmatprep.subr.bf16.mxu0 %v5424
    %7835 = vmatpush1.bf16.msra.mxu0 %v5423
    %7836 = vmatprep.subr.bf16.mxu0 %v5416
    %7837 = vmatpush1.bf16.msra.mxu0 %v5415
    %7838 = vmatprep.subr.bf16.mxu0 %v5408
    %7839 = vmatpush1.bf16.msra.mxu0 %v5407
    %7840 = vmatprep.subr.bf16.mxu0 %v5528
    %7841 = vmatpush2.bf16.msra.mxu0 %v5527
    %7842 = vmatprep.subr.bf16.mxu0 %v5520
    %7843 = vmatpush2.bf16.msra.mxu0 %v5519
    %7844 = vmatprep.subr.bf16.mxu0 %v5512
    %7845 = vmatpush2.bf16.msra.mxu0 %v5511
    %7846 = vmatprep.subr.bf16.mxu0 %v5504
    %7847 = vmatpush2.bf16.msra.mxu0 %v5503
    %7848 = vmatprep.subr.bf16.mxu0 %v5496
    %7849 = vmatpush2.bf16.msra.mxu0 %v5495
    %7850 = vmatprep.subr.bf16.mxu0 %v5488
    %7851 = vmatpush2.bf16.msra.mxu0 %v5487
    %7852 = vmatprep.subr.bf16.mxu0 %v5480
    %7853 = vmatpush2.bf16.msra.mxu0 %v5479
    %7854 = vmatprep.subr.bf16.mxu0 %v5472
    %7855 = vmatpush2.bf16.msra.mxu0 %v5471
    %7856 = vmatprep.mubr.bf16.mxu0 %v408
    %7857 = vmatmul.mubr.bf16.gmra.mxu0 %v407
    %v7858 = vpop.f32.mrf.mxu0
    %v7859 = vadd.f32 %v7818, %v7858
    %v7860 = vpop.f32.mrf.mxu0
    %v7861 = vadd.f32 %v7820, %v7860
    %v7862 = vpop.f32.mrf.mxu0
    %v7863 = vpop.f32.mrf.mxu0
    %7864 = vdwg.mxu0
    %v7865 = vadd.f32 %v385, %v6875
    %v7866 = vadd.f32 %v386, %v6877
    %v7867 = vadd.f32 %v387, %v7203
    %v7868 = vadd.f32 %v388, %v7205
    %v7869 = vadd.f32 %v389, %v7531
    %v7870 = vadd.f32 %v390, %v7533
    %v7871 = vadd.f32 %v391, %v7859
    %v7872 = vadd.f32 %v392, %v7861
    %7873 = vst [vmem:[#allocation14] sm:$0xff] %v7865
    %7874 = vst [vmem:[#allocation14 + $0x8] sm:$0xff] %v7866
    %7875 = vst [vmem:[#allocation14 + $0x10] sm:$0xff] %v7867
    %7876 = vst [vmem:[#allocation14 + $0x18] sm:$0xff] %v7868
    %7877 = vst [vmem:[#allocation14 + $0x20] sm:$0xff] %v7869
    %7878 = vst [vmem:[#allocation14 + $0x28] sm:$0xff] %v7870
    %7879 = vst [vmem:[#allocation14 + $0x30] sm:$0xff] %v7871
    %7880 = vst [vmem:[#allocation14 + $0x38] sm:$0xff] %v7872
    // Predicated region
    $region54: #{tpu_custom_call.1} parent=1 // pred_check
      _
    $region55: #{tpu_custom_call.1} parent=1 // pred_check_branch
      %7882 = sbr.rel (0) target = $region57
    $region56: #{tpu_custom_call.1} parent=1 // pred_region
      %s7884 = ssub.s32 2048, 2048
      %7885 = vsyncadd [#allocation4], %s7884
      %s7887 = sshll.u32 [#allocation13], 4
      %s7888 = int_to_ptr.vmem [resolvable:$true] %s7887
      %7890 = dma.vmem_to_hbm [thread:$0]  %s7888, 2048, %s6, [#allocation4]
    $region57: #{tpu_custom_call.1} parent=1 // pred_fallthru
      _
    // Predicated region
    $region58: #{tpu_custom_call.1} parent=1 // pred_check
      _
    $region59: #{tpu_custom_call.1} parent=1 // pred_check_branch
      %7892 = sbr.rel (0) target = $region61
    $region60: #{tpu_custom_call.1} parent=1 // pred_region
      %s7894 = ssub.s32 1024, 1024
      %7895 = vsyncadd [#allocation15], %s7894
      %s7897 = sshll.u32 [#allocation14], 4
      %s7898 = int_to_ptr.vmem [resolvable:$true] %s7897
      %7900 = dma.vmem_to_hbm [thread:$0]  %s7898, 1024, %s7, [#allocation15]
    $region61: #{tpu_custom_call.1} parent=1 // pred_fallthru
      _
    // Predicated region
    $region62: #{tpu_custom_call.1} parent=1 // pred_check
      _
    $region63: #{tpu_custom_call.1} parent=1 // pred_check_branch
      %7902 = sbr.rel (0) target = $region65
    $region64: #{tpu_custom_call.1} parent=1 // pred_region
      %7903 = dma.done [#allocation4], 2048
    $region65: #{tpu_custom_call.1} parent=1 // pred_fallthru
      _
    // Predicated region
    $region66: #{tpu_custom_call.1} parent=1 // pred_check
      _
    $region67: #{tpu_custom_call.1} parent=1 // pred_check_branch
      %7905 = sbr.rel (0) target = $region69
    $region68: #{tpu_custom_call.1} parent=1 // pred_region
      %7906 = dma.done [#allocation15], 1024
    $region69: #{tpu_custom_call.1} parent=1 // pred_fallthru
      _
    %7907 = vsyncpa [#allocation3], 1
    %7908 = vsyncpa [#allocation6], 1
    %7909 = vsyncpa [#allocation9], 1
    %7910 = vsyncpa [#allocation12], 1
    %7911 = vsyncpa [#allocation4], 1
    %7912 = vsyncpa [#allocation15], 1

</llo_original>
